<compile_context>
chip_gen: v6e
topology: v6e:2x2x1
jax: 0.10.0
libtpu: 0.0.40
codegen_flags: <defaults>
</compile_context>

<pallas_src>
import functools

import jax
import jax.numpy as jnp
from jax.experimental import pallas as pl
from jax.experimental.pallas import tpu as pltpu

BN_EPS = 1e-5
LANE = 128


def _round_up(x, m):
    return ((x + m - 1) // m) * m


# ----------------------------------------------------------------------------
# Pallas kernel: K-tiled (patches @ weights) with f32 accumulator, fused
# per-channel scale/bias + activation epilogue, lane-dense (128-padded) output.
# ----------------------------------------------------------------------------
def _fused_matmul_kernel(a_ref, b_ref, scale_ref, bias_ref, o_ref, acc_ref, *, act):
    @pl.when(pl.program_id(1) == 0)
    def _init():
        acc_ref[...] = jnp.zeros_like(acc_ref)

    acc_ref[...] += jnp.dot(a_ref[...], b_ref[...],
                            preferred_element_type=jnp.float32)

    @pl.when(pl.program_id(1) == pl.num_programs(1) - 1)
    def _epilogue():
        y = acc_ref[...] * scale_ref[...] + bias_ref[...]
        if act == "leaky_relu":
            y = jnp.where(y > 0, y, 0.2 * y)
        elif act == "tanh":
            y = jnp.tanh(y)
        o_ref[...] = y.astype(o_ref.dtype)


def _choose_tm(M):
    if M >= 1024:
        return 512
    if M >= 256:
        return 256
    if M >= 64:
        return 64          # keeps >= 2 M-tiles for the mid-size layers (v7x 2 TCs)
    return None            # tiny M: single full (padded) block


def _choose_tk(K):
    if K <= 1024 or K % LANE != 0:
        return K
    for cand in (1024, 512, 256, 128):
        if K % cand == 0:
            return cand
    return K


def fused_matmul(a, b, scale, bias, act="none"):
    """a: (M, K) bf16 patches; b: (K, Cp) bf16 weights (Cp % 128 == 0);
    scale/bias: (1, Cp) f32. Returns (M, Cp) f32."""
    M, K = a.shape
    K2, Cp = b.shape
    assert K == K2 and Cp % LANE == 0

    tm = _choose_tm(M)
    if tm is None:                       # tiny M: pad to one full block
        tm = _round_up(M, 16)
        if tm != M:
            a = jnp.pad(a, ((0, tm - M), (0, 0)))
    Mp = a.shape[0]
    nm = pl.cdiv(Mp, tm)                 # ragged last block handled by Pallas

    tk = _choose_tk(K)
    nk = K // tk

    # explicit scoped-VMEM budget (double-buffered bf16 A/B tiles, f32 out + acc)
    est = (2 * tm * tk * 2 + 2 * tk * Cp * 2 + 2 * tm * Cp * 4
           + tm * Cp * 4 + 4 * Cp * 4)
    vmem_limit = int(min(max(4 * est, 32 * 1024 * 1024), 56 * 1024 * 1024))

    out = pl.pallas_call(
        functools.partial(_fused_matmul_kernel, act=act),
        out_shape=jax.ShapeDtypeStruct((Mp, Cp), jnp.float32),
        grid=(nm, nk),
        in_specs=[
            pl.BlockSpec((tm, tk), lambda i, k: (i, k)),    # patch tile (bf16)
            pl.BlockSpec((tk, Cp), lambda i, k: (k, 0)),    # weight tile (bf16)
            pl.BlockSpec((1, Cp), lambda i, k: (0, 0)),     # per-channel scale
            pl.BlockSpec((1, Cp), lambda i, k: (0, 0)),     # per-channel bias
        ],
        out_specs=pl.BlockSpec((tm, Cp), lambda i, k: (i, 0)),
        scratch_shapes=[pltpu.VMEM((tm, Cp), jnp.float32)],
        compiler_params=pltpu.CompilerParams(
            dimension_semantics=("parallel", "arbitrary"),
            vmem_limit_bytes=vmem_limit),
    )(a, b, scale, bias)
    return out[:M]


# ----------------------------------------------------------------------------
# JAX glue: patch extraction, skip concat.
# ----------------------------------------------------------------------------
def im2col(x, K, stride, pad):
    """NHWC -> (N*Ho*Wo, K*K*C) patch matrix, entries ordered (kh, kw, c)."""
    N, H, W, C = x.shape
    if pad:
        x = jnp.pad(x, ((0, 0), (pad, pad), (pad, pad), (0, 0)))
    Ho = (H + 2 * pad - K) // stride + 1
    Wo = (W + 2 * pad - K) // stride + 1
    cols = [x[:, kh:kh + stride * Ho:stride, kw:kw + stride * Wo:stride, :]
            for kh in range(K) for kw in range(K)]
    A = jnp.concatenate(cols, axis=-1)              # (N, Ho, Wo, K*K*C)
    return A.reshape(N * Ho * Wo, K * K * C), (N, Ho, Wo)


def concat_nhwc(x1, x2):
    """Pad x1 to x2's spatial size, concat channels (x1 first) — matches `concat`."""
    dY = x2.shape[1] - x1.shape[1]
    dX = x2.shape[2] - x1.shape[2]
    if dY or dX:
        x1 = jnp.pad(x1, ((0, 0), (dY // 2, dY - dY // 2),
                          (dX // 2, dX - dX // 2), (0, 0)))
    return jnp.concatenate([x1, x2], axis=-1)


# ----------------------------------------------------------------------------
# Blocks (use pre-prepared weights from prepare_params)
# ----------------------------------------------------------------------------
def down_block(x, pp):
    """Conv2d(k=4, s=2, p=1) [+ folded BN] + LeakyReLU(0.2)."""
    A, (N, Ho, Wo) = im2col(x.astype(jnp.bfloat16), K=4, stride=2, pad=1)
    y = fused_matmul(A, pp["w"], pp["scale"], pp["bias"], act="leaky_relu")
    C = pp["cout"]
    return y[:, :C].reshape(N, Ho, Wo, C)


def up_block(x, pp, act="none"):
    """ConvTranspose2d(k=4, s=2, p=1) [+ folded BN] via 4-phase polyphase conv."""
    N, Hi, Wi, _ = x.shape
    xp = jnp.pad(x.astype(jnp.bfloat16), ((0, 0), (1, 1), (1, 1), (0, 0)))
    A, (_, Ha, Wa) = im2col(xp, K=2, stride=1, pad=0)   # Ha = Hi+1, Wa = Wi+1
    y = fused_matmul(A, pp["w"], pp["scale"], pp["bias"], act=act)
    C = pp["cout"]
    Y = y[:, :4 * C].reshape(N, Ha, Wa, 2, 2, C)        # (n, a, b, ry, rx, c)
    # out[n, 2i+ry, 2j+rx, c] = Y[n, i+ry, j+rx, ry, rx, c]
    rows = []
    for ry in range(2):
        cols = [Y[:, ry:ry + Hi, rx:rx + Wi, ry, rx, :] for rx in range(2)]
        rows.append(jnp.stack(cols, axis=3))            # (N, Hi, Wi, 2, C)
    out = jnp.stack(rows, axis=2)                       # (N, Hi, 2, Wi, 2, C)
    return out.reshape(N, 2 * Hi, 2 * Wi, C)


# ----------------------------------------------------------------------------
# One-time parameter preparation (hoisted out of the forward pass)
# ----------------------------------------------------------------------------
def _fold_bn(bias, gamma, beta):
    # eval-mode BatchNorm with running_mean=0, running_var=1
    s = gamma / jnp.sqrt(1.0 + BN_EPS)
    return s, bias * s + beta


def _pad_and_cast(w2d, scale, bias):
    cols = w2d.shape[1]
    cp = _round_up(cols, LANE)
    if cp != cols:
        w2d = jnp.pad(w2d, ((0, 0), (0, cp - cols)))
        scale = jnp.pad(scale, (0, cp - cols))
        bias = jnp.pad(bias, (0, cp - cols))
    return (w2d.astype(jnp.bfloat16),
            scale.reshape(1, cp).astype(jnp.float32),
            bias.reshape(1, cp).astype(jnp.float32))


def prepare_conv(p, batchnorm):
    Wc, b = p["w"], p["b"]                         # (Cout, Cin, 4, 4)
    Cout, Cin, K, _ = Wc.shape
    Wm = jnp.transpose(Wc, (2, 3, 1, 0)).reshape(K * K * Cin, Cout)
    if batchnorm:
        s, beff = _fold_bn(b, p["gamma"], p["beta"])
    else:
        s, beff = jnp.ones_like(b), b
    w, sc, bi = _pad_and_cast(Wm, s, beff)
    return {"w": w, "scale": sc, "bias": bi, "cout": int(Cout)}


def prepare_deconv(p, batchnorm):
    Wt, b = p["w"], p["b"]                         # (Cin, Cout, 4, 4)
    Cin, Cout, K, _ = Wt.shape                     # K == 4
    # polyphase weights: B[(dy,dx,ci),(ry,rx,co)] = Wt[ci, co, 3-ry-2dy, 3-rx-2dx]
    Wf = jnp.flip(Wt, axis=(2, 3)).reshape(Cin, Cout, 2, 2, 2, 2)
    Bm = jnp.transpose(Wf, (2, 4, 0, 3, 5, 1)).reshape(4 * Cin, 4 * Cout)
    if batchnorm:
        s, beff = _fold_bn(b, p["gamma"], p["beta"])
    else:
        s, beff = jnp.ones_like(b), b
    w, sc, bi = _pad_and_cast(Bm, jnp.tile(s, 4), jnp.tile(beff, 4))
    return {"w": w, "scale": sc, "bias": bi, "cout": int(Cout)}


ENC_BN = [False, True, True, True, True, True]


def prepare_params(params):
    return {
        "encoders": [prepare_conv(p, bn)
                     for p, bn in zip(params["encoders"], ENC_BN)],
        "decoders": [prepare_deconv(p, True) for p in params["decoders"]],
        "final": prepare_deconv(params["final"], False),
    }


# ----------------------------------------------------------------------------
# UNet forward (NCHW in / NCHW out)
# ----------------------------------------------------------------------------
def unet_forward(x_nchw, prepped):
    x = jnp.transpose(x_nchw, (0, 2, 3, 1))        # NCHW -> NHWC
    skips = []
    for pp in prepped["encoders"]:
        x = down_block(x, pp)
        skips.append(x)
    skips = list(reversed(skips[:-1]))
    decs = prepped["decoders"]
    for pp, skip in zip(decs[:-1], skips):
        x = up_block(x, pp, act="none")            # reference decoder applies no ReLU
        x = concat_nhwc(x, skip)
    x = up_block(x, decs[-1], act="none")
    x = up_block(x, prepped["final"], act="tanh")  # final deconv + tanh fused
    return jnp.transpose(x, (0, 3, 1, 2))          # NHWC -> NCHW


# ----------------------------------------------------------------------------
# Deterministic parameter init (shapes match the PyTorch module)
# ----------------------------------------------------------------------------
def init_params(key, in_ch, out_ch, F):
    enc_cfg = [(in_ch, F), (F, 2 * F), (2 * F, 4 * F),
               (4 * F, 8 * F), (8 * F, 8 * F), (8 * F, 8 * F)]
    dec_cfg = [(8 * F, 8 * F), (16 * F, 8 * F), (16 * F, 4 * F),
               (8 * F, 2 * F), (4 * F, F)]
    params = {"encoders": [], "decoders": []}
    for ci, co in enc_cfg:
        key, k1, k2, k3, k4 = jax.random.split(key, 5)
        params["encoders"].append({
            "w": 0.05 * jax.random.normal(k1, (co, ci, 4, 4), jnp.float32),
            "b": 0.05 * jax.random.normal(k2, (co,), jnp.float32),
            "gamma": 1.0 + 0.1 * jax.random.normal(k3, (co,), jnp.float32),
            "beta": 0.1 * jax.random.normal(k4, (co,), jnp.float32),
        })
    for ci, co in dec_cfg:
        key, k1, k2, k3, k4 = jax.random.split(key, 5)
        params["decoders"].append({
            "w": 0.05 * jax.random.normal(k1, (ci, co, 4, 4), jnp.float32),
            "b": 0.05 * jax.random.normal(k2, (co,), jnp.float32),
            "gamma": 1.0 + 0.1 * jax.random.normal(k3, (co,), jnp.float32),
            "beta": 0.1 * jax.random.normal(k4, (co,), jnp.float32),
        })
    key, k1, k2 = jax.random.split(key, 3)
    params["final"] = {
        "w": 0.05 * jax.random.normal(k1, (F, out_ch, 4, 4), jnp.float32),
        "b": 0.05 * jax.random.normal(k2, (out_ch,), jnp.float32),
    }
    return params


if __name__ == "__main__":
    key = jax.random.PRNGKey(0)
    kx, kp = jax.random.split(key)

    N, C, H, W = 2, 3, 64, 64   # 64 spatial -> 6 stride-2 downsamples reach 1x1
    FEATURES = 8
    OUT_CH = 3

    x = jax.random.normal(kx, (N, C, H, W), jnp.float32)
    params = init_params(kp, C, OUT_CH, FEATURES)

    prepped = prepare_params(params)                  # one-time weight prep
    fwd = jax.jit(lambda inp: unet_forward(inp, prepped))

    y = jax.block_until_ready(fwd(x))

    assert y.shape == (N, OUT_CH, H, W), y.shape
    assert bool(jnp.all(jnp.isfinite(y)))
    assert bool(jnp.all(jnp.abs(y) <= 1.0))           # tanh output range
    print("KERNEL_OK")
</pallas_src>

<mosaic_0001>
module attributes {stable_mosaic.version = 11 : i64} {
  func.func @_fused_matmul_kernel(%arg0: i32, %arg1: i32, %arg2: memref<512x48xbf16, #tpu.memory_space<vmem>>, %arg3: memref<48x128xbf16, #tpu.memory_space<vmem>>, %arg4: memref<1x128xf32, #tpu.memory_space<vmem>>, %arg5: memref<1x128xf32, #tpu.memory_space<vmem>>, %arg6: memref<512x128xf32, #tpu.memory_space<vmem>>, %arg7: memref<512x128xf32, #tpu.memory_space<vmem>>) attributes {dimension_semantics = [#tpu.dimension_semantics<parallel>, #tpu.dimension_semantics<arbitrary>], iteration_bounds = array<i64: 4, 1>, scalar_prefetch = 0 : i64, scratch_operands = 1 : i64, tpu.core_type = #tpu.core_type<tc>, window_params = [{transform_indices = @transform_0, window_bounds = array<i64: 512, 48>}, {transform_indices = @transform_1, window_bounds = array<i64: 48, 128>}, {pipeline_mode = #tpu.pipeline_mode<synchronous>, transform_indices = @transform_2, window_bounds = array<i64: 1, 128>}, {pipeline_mode = #tpu.pipeline_mode<synchronous>, transform_indices = @transform_3, window_bounds = array<i64: 1, 128>}, {transform_indices = @transform_4, window_bounds = array<i64: 512, 128>}]} {
    %c0_i32 = arith.constant 0 : i32
    %0 = arith.cmpi eq, %arg1, %c0_i32 : i32
    %1 = arith.extui %0 : i1 to i32
    %c0_i32_0 = arith.constant 0 : i32
    %2 = arith.cmpi ne, %1, %c0_i32_0 : i32
    scf.if %2 {
      %cst_10 = arith.constant 0.000000e+00 : f32
      %12 = vector.broadcast %cst_10 : f32 to vector<512x128xf32>
      %c0_11 = arith.constant 0 : index
      %c0_12 = arith.constant 0 : index
      %13 = vector.load %arg7[%c0_11, %c0_12] : memref<512x128xf32, #tpu.memory_space<vmem>>, vector<512x128xf32>
      tpu.vector_store %arg7[%c0_11, %c0_12], %12 {strides = array<i32>} : memref<512x128xf32, #tpu.memory_space<vmem>>, vector<512x128xf32>,
    } else {
    }
    %c0 = arith.constant 0 : index
    %c0_1 = arith.constant 0 : index
    %3 = vector.load %arg7[%c0, %c0_1] : memref<512x128xf32, #tpu.memory_space<vmem>>, vector<512x128xf32>
    %c0_2 = arith.constant 0 : index
    %c0_3 = arith.constant 0 : index
    %4 = vector.load %arg2[%c0_2, %c0_3] : memref<512x48xbf16, #tpu.memory_space<vmem>>, vector<512x48xbf16>
    %c0_4 = arith.constant 0 : index
    %c0_5 = arith.constant 0 : index
    %5 = vector.load %arg3[%c0_4, %c0_5] : memref<48x128xbf16, #tpu.memory_space<vmem>>, vector<48x128xbf16>
    %cst = arith.constant dense<0.000000e+00> : vector<512x128xf32>
    %6 = tpu.matmul %4, %5, %cst {dimension_numbers = #tpu.dot_dimension_numbers<[1], [0], [0], [1], [0, 0, 1, 1], [], []>} : vector<512x48xbf16>, vector<48x128xbf16>, vector<512x128xf32> -> vector<512x128xf32>
    %7 = arith.addf %3, %6 : vector<512x128xf32>
    %c0_6 = arith.constant 0 : index
    %c0_7 = arith.constant 0 : index
    %8 = vector.load %arg7[%c0_6, %c0_7] : memref<512x128xf32, #tpu.memory_space<vmem>>, vector<512x128xf32>
    tpu.vector_store %arg7[%c0_6, %c0_7], %7 {strides = array<i32>} : memref<512x128xf32, #tpu.memory_space<vmem>>, vector<512x128xf32>,
    %c0_i32_8 = arith.constant 0 : i32
    %9 = arith.cmpi eq, %arg1, %c0_i32_8 : i32
    %10 = arith.extui %9 : i1 to i32
    %c0_i32_9 = arith.constant 0 : i32
    %11 = arith.cmpi ne, %10, %c0_i32_9 : i32
    scf.if %11 {
      %c0_10 = arith.constant 0 : index
      %c0_11 = arith.constant 0 : index
      %12 = vector.load %arg7[%c0_10, %c0_11] : memref<512x128xf32, #tpu.memory_space<vmem>>, vector<512x128xf32>
      %c0_12 = arith.constant 0 : index
      %c0_13 = arith.constant 0 : index
      %13 = vector.load %arg4[%c0_12, %c0_13] : memref<1x128xf32, #tpu.memory_space<vmem>>, vector<1x128xf32>
      %14 = vector.broadcast %13 : vector<1x128xf32> to vector<512x128xf32>
      %15 = arith.mulf %12, %14 : vector<512x128xf32>
      %c0_14 = arith.constant 0 : index
      %c0_15 = arith.constant 0 : index
      %16 = vector.load %arg5[%c0_14, %c0_15] : memref<1x128xf32, #tpu.memory_space<vmem>>, vector<1x128xf32>
      %17 = vector.broadcast %16 : vector<1x128xf32> to vector<512x128xf32>
      %18 = arith.addf %15, %17 : vector<512x128xf32>
      %cst_16 = arith.constant 0.000000e+00 : f32
      %19 = vector.broadcast %cst_16 : f32 to vector<512x128xf32>
      %20 = arith.cmpf ogt, %18, %19 : vector<512x128xf32>
      %cst_17 = arith.constant 2.000000e-01 : f32
      %21 = vector.broadcast %cst_17 : f32 to vector<512x128xf32>
      %22 = arith.mulf %21, %18 : vector<512x128xf32>
      %23 = arith.select %20, %18, %22 : vector<512x128xi1>, vector<512x128xf32>
      %c0_18 = arith.constant 0 : index
      %c0_19 = arith.constant 0 : index
      %24 = vector.load %arg6[%c0_18, %c0_19] : memref<512x128xf32, #tpu.memory_space<vmem>>, vector<512x128xf32>
      tpu.vector_store %arg6[%c0_18, %c0_19], %23 {strides = array<i32>} : memref<512x128xf32, #tpu.memory_space<vmem>>, vector<512x128xf32>,
    } else {
    }
    return
  }
  func.func @transform_0(%arg0: i32, %arg1: i32) -> (i32, i32) {
    %c0_i32 = arith.constant 0 : i32
    return %arg0, %arg1 : i32, i32
  }
  func.func @transform_1(%arg0: i32, %arg1: i32) -> (i32, i32) {
    %c0_i32 = arith.constant 0 : i32
    %c0_i32_0 = arith.constant 0 : i32
    return %arg1, %c0_i32 : i32, i32
  }
  func.func @transform_2(%arg0: i32, %arg1: i32) -> (i32, i32) {
    %c0_i32 = arith.constant 0 : i32
    %c0_i32_0 = arith.constant 0 : i32
    %c0_i32_1 = arith.constant 0 : i32
    return %c0_i32, %c0_i32_0 : i32, i32
  }
  func.func @transform_3(%arg0: i32, %arg1: i32) -> (i32, i32) {
    %c0_i32 = arith.constant 0 : i32
    %c0_i32_0 = arith.constant 0 : i32
    %c0_i32_1 = arith.constant 0 : i32
    return %c0_i32, %c0_i32_0 : i32, i32
  }
  func.func @transform_4(%arg0: i32, %arg1: i32) -> (i32, i32) {
    %c0_i32 = arith.constant 0 : i32
    %c0_i32_0 = arith.constant 0 : i32
    return %arg0, %c0_i32 : i32, i32
  }
}

module attributes {stable_mosaic.version = 11 : i64} {
  func.func @_fused_matmul_kernel(%arg0: i32, %arg1: i32, %arg2: memref<256x128xbf16, #tpu.memory_space<vmem>>, %arg3: memref<128x128xbf16, #tpu.memory_space<vmem>>, %arg4: memref<1x128xf32, #tpu.memory_space<vmem>>, %arg5: memref<1x128xf32, #tpu.memory_space<vmem>>, %arg6: memref<256x128xf32, #tpu.memory_space<vmem>>, %arg7: memref<256x128xf32, #tpu.memory_space<vmem>>) attributes {dimension_semantics = [#tpu.dimension_semantics<parallel>, #tpu.dimension_semantics<arbitrary>], iteration_bounds = array<i64: 2, 1>, scalar_prefetch = 0 : i64, scratch_operands = 1 : i64, tpu.core_type = #tpu.core_type<tc>, window_params = [{transform_indices = @transform_0, window_bounds = array<i64: 256, 128>}, {transform_indices = @transform_1, window_bounds = array<i64: 128, 128>}, {pipeline_mode = #tpu.pipeline_mode<synchronous>, transform_indices = @transform_2, window_bounds = array<i64: 1, 128>}, {pipeline_mode = #tpu.pipeline_mode<synchronous>, transform_indices = @transform_3, window_bounds = array<i64: 1, 128>}, {transform_indices = @transform_4, window_bounds = array<i64: 256, 128>}]} {
    %c0_i32 = arith.constant 0 : i32
    %0 = arith.cmpi eq, %arg1, %c0_i32 : i32
    %1 = arith.extui %0 : i1 to i32
    %c0_i32_0 = arith.constant 0 : i32
    %2 = arith.cmpi ne, %1, %c0_i32_0 : i32
    scf.if %2 {
      %cst_10 = arith.constant 0.000000e+00 : f32
      %12 = vector.broadcast %cst_10 : f32 to vector<256x128xf32>
      %c0_11 = arith.constant 0 : index
      %c0_12 = arith.constant 0 : index
      %13 = vector.load %arg7[%c0_11, %c0_12] : memref<256x128xf32, #tpu.memory_space<vmem>>, vector<256x128xf32>
      tpu.vector_store %arg7[%c0_11, %c0_12], %12 {strides = array<i32>} : memref<256x128xf32, #tpu.memory_space<vmem>>, vector<256x128xf32>,
    } else {
    }
    %c0 = arith.constant 0 : index
    %c0_1 = arith.constant 0 : index
    %3 = vector.load %arg7[%c0, %c0_1] : memref<256x128xf32, #tpu.memory_space<vmem>>, vector<256x128xf32>
    %c0_2 = arith.constant 0 : index
    %c0_3 = arith.constant 0 : index
    %4 = vector.load %arg2[%c0_2, %c0_3] : memref<256x128xbf16, #tpu.memory_space<vmem>>, vector<256x128xbf16>
    %c0_4 = arith.constant 0 : index
    %c0_5 = arith.constant 0 : index
    %5 = vector.load %arg3[%c0_4, %c0_5] : memref<128x128xbf16, #tpu.memory_space<vmem>>, vector<128x128xbf16>
    %cst = arith.constant dense<0.000000e+00> : vector<256x128xf32>
    %6 = tpu.matmul %4, %5, %cst {dimension_numbers = #tpu.dot_dimension_numbers<[1], [0], [0], [1], [0, 0, 1, 1], [], []>} : vector<256x128xbf16>, vector<128x128xbf16>, vector<256x128xf32> -> vector<256x128xf32>
    %7 = arith.addf %3, %6 : vector<256x128xf32>
    %c0_6 = arith.constant 0 : index
    %c0_7 = arith.constant 0 : index
    %8 = vector.load %arg7[%c0_6, %c0_7] : memref<256x128xf32, #tpu.memory_space<vmem>>, vector<256x128xf32>
    tpu.vector_store %arg7[%c0_6, %c0_7], %7 {strides = array<i32>} : memref<256x128xf32, #tpu.memory_space<vmem>>, vector<256x128xf32>,
    %c0_i32_8 = arith.constant 0 : i32
    %9 = arith.cmpi eq, %arg1, %c0_i32_8 : i32
    %10 = arith.extui %9 : i1 to i32
    %c0_i32_9 = arith.constant 0 : i32
    %11 = arith.cmpi ne, %10, %c0_i32_9 : i32
    scf.if %11 {
      %c0_10 = arith.constant 0 : index
      %c0_11 = arith.constant 0 : index
      %12 = vector.load %arg7[%c0_10, %c0_11] : memref<256x128xf32, #tpu.memory_space<vmem>>, vector<256x128xf32>
      %c0_12 = arith.constant 0 : index
      %c0_13 = arith.constant 0 : index
      %13 = vector.load %arg4[%c0_12, %c0_13] : memref<1x128xf32, #tpu.memory_space<vmem>>, vector<1x128xf32>
      %14 = vector.broadcast %13 : vector<1x128xf32> to vector<256x128xf32>
      %15 = arith.mulf %12, %14 : vector<256x128xf32>
      %c0_14 = arith.constant 0 : index
      %c0_15 = arith.constant 0 : index
      %16 = vector.load %arg5[%c0_14, %c0_15] : memref<1x128xf32, #tpu.memory_space<vmem>>, vector<1x128xf32>
      %17 = vector.broadcast %16 : vector<1x128xf32> to vector<256x128xf32>
      %18 = arith.addf %15, %17 : vector<256x128xf32>
      %cst_16 = arith.constant 0.000000e+00 : f32
      %19 = vector.broadcast %cst_16 : f32 to vector<256x128xf32>
      %20 = arith.cmpf ogt, %18, %19 : vector<256x128xf32>
      %cst_17 = arith.constant 2.000000e-01 : f32
      %21 = vector.broadcast %cst_17 : f32 to vector<256x128xf32>
      %22 = arith.mulf %21, %18 : vector<256x128xf32>
      %23 = arith.select %20, %18, %22 : vector<256x128xi1>, vector<256x128xf32>
      %c0_18 = arith.constant 0 : index
      %c0_19 = arith.constant 0 : index
      %24 = vector.load %arg6[%c0_18, %c0_19] : memref<256x128xf32, #tpu.memory_space<vmem>>, vector<256x128xf32>
      tpu.vector_store %arg6[%c0_18, %c0_19], %23 {strides = array<i32>} : memref<256x128xf32, #tpu.memory_space<vmem>>, vector<256x128xf32>,
    } else {
    }
    return
  }
  func.func @transform_0(%arg0: i32, %arg1: i32) -> (i32, i32) {
    %c0_i32 = arith.constant 0 : i32
    return %arg0, %arg1 : i32, i32
  }
  func.func @transform_1(%arg0: i32, %arg1: i32) -> (i32, i32) {
    %c0_i32 = arith.constant 0 : i32
    %c0_i32_0 = arith.constant 0 : i32
    return %arg1, %c0_i32 : i32, i32
  }
  func.func @transform_2(%arg0: i32, %arg1: i32) -> (i32, i32) {
    %c0_i32 = arith.constant 0 : i32
    %c0_i32_0 = arith.constant 0 : i32
    %c0_i32_1 = arith.constant 0 : i32
    return %c0_i32, %c0_i32_0 : i32, i32
  }
  func.func @transform_3(%arg0: i32, %arg1: i32) -> (i32, i32) {
    %c0_i32 = arith.constant 0 : i32
    %c0_i32_0 = arith.constant 0 : i32
    %c0_i32_1 = arith.constant 0 : i32
    return %c0_i32, %c0_i32_0 : i32, i32
  }
  func.func @transform_4(%arg0: i32, %arg1: i32) -> (i32, i32) {
    %c0_i32 = arith.constant 0 : i32
    %c0_i32_0 = arith.constant 0 : i32
    return %arg0, %c0_i32 : i32, i32
  }
}

module attributes {stable_mosaic.version = 11 : i64} {
  func.func @_fused_matmul_kernel(%arg0: i32, %arg1: i32, %arg2: memref<64x256xbf16, #tpu.memory_space<vmem>>, %arg3: memref<256x128xbf16, #tpu.memory_space<vmem>>, %arg4: memref<1x128xf32, #tpu.memory_space<vmem>>, %arg5: memref<1x128xf32, #tpu.memory_space<vmem>>, %arg6: memref<64x128xf32, #tpu.memory_space<vmem>>, %arg7: memref<64x128xf32, #tpu.memory_space<vmem>>) attributes {dimension_semantics = [#tpu.dimension_semantics<parallel>, #tpu.dimension_semantics<arbitrary>], iteration_bounds = array<i64: 2, 1>, scalar_prefetch = 0 : i64, scratch_operands = 1 : i64, tpu.core_type = #tpu.core_type<tc>, window_params = [{transform_indices = @transform_0, window_bounds = array<i64: 64, 256>}, {transform_indices = @transform_1, window_bounds = array<i64: 256, 128>}, {pipeline_mode = #tpu.pipeline_mode<synchronous>, transform_indices = @transform_2, window_bounds = array<i64: 1, 128>}, {pipeline_mode = #tpu.pipeline_mode<synchronous>, transform_indices = @transform_3, window_bounds = array<i64: 1, 128>}, {transform_indices = @transform_4, window_bounds = array<i64: 64, 128>}]} {
    %c0_i32 = arith.constant 0 : i32
    %0 = arith.cmpi eq, %arg1, %c0_i32 : i32
    %1 = arith.extui %0 : i1 to i32
    %c0_i32_0 = arith.constant 0 : i32
    %2 = arith.cmpi ne, %1, %c0_i32_0 : i32
    scf.if %2 {
      %cst_10 = arith.constant 0.000000e+00 : f32
      %12 = vector.broadcast %cst_10 : f32 to vector<64x128xf32>
      %c0_11 = arith.constant 0 : index
      %c0_12 = arith.constant 0 : index
      %13 = vector.load %arg7[%c0_11, %c0_12] : memref<64x128xf32, #tpu.memory_space<vmem>>, vector<64x128xf32>
      tpu.vector_store %arg7[%c0_11, %c0_12], %12 {strides = array<i32>} : memref<64x128xf32, #tpu.memory_space<vmem>>, vector<64x128xf32>,
    } else {
    }
    %c0 = arith.constant 0 : index
    %c0_1 = arith.constant 0 : index
    %3 = vector.load %arg7[%c0, %c0_1] : memref<64x128xf32, #tpu.memory_space<vmem>>, vector<64x128xf32>
    %c0_2 = arith.constant 0 : index
    %c0_3 = arith.constant 0 : index
    %4 = vector.load %arg2[%c0_2, %c0_3] : memref<64x256xbf16, #tpu.memory_space<vmem>>, vector<64x256xbf16>
    %c0_4 = arith.constant 0 : index
    %c0_5 = arith.constant 0 : index
    %5 = vector.load %arg3[%c0_4, %c0_5] : memref<256x128xbf16, #tpu.memory_space<vmem>>, vector<256x128xbf16>
    %cst = arith.constant dense<0.000000e+00> : vector<64x128xf32>
    %6 = tpu.matmul %4, %5, %cst {dimension_numbers = #tpu.dot_dimension_numbers<[1], [0], [0], [1], [0, 0, 1, 1], [], []>} : vector<64x256xbf16>, vector<256x128xbf16>, vector<64x128xf32> -> vector<64x128xf32>
    %7 = arith.addf %3, %6 : vector<64x128xf32>
    %c0_6 = arith.constant 0 : index
    %c0_7 = arith.constant 0 : index
    %8 = vector.load %arg7[%c0_6, %c0_7] : memref<64x128xf32, #tpu.memory_space<vmem>>, vector<64x128xf32>
    tpu.vector_store %arg7[%c0_6, %c0_7], %7 {strides = array<i32>} : memref<64x128xf32, #tpu.memory_space<vmem>>, vector<64x128xf32>,
    %c0_i32_8 = arith.constant 0 : i32
    %9 = arith.cmpi eq, %arg1, %c0_i32_8 : i32
    %10 = arith.extui %9 : i1 to i32
    %c0_i32_9 = arith.constant 0 : i32
    %11 = arith.cmpi ne, %10, %c0_i32_9 : i32
    scf.if %11 {
      %c0_10 = arith.constant 0 : index
      %c0_11 = arith.constant 0 : index
      %12 = vector.load %arg7[%c0_10, %c0_11] : memref<64x128xf32, #tpu.memory_space<vmem>>, vector<64x128xf32>
      %c0_12 = arith.constant 0 : index
      %c0_13 = arith.constant 0 : index
      %13 = vector.load %arg4[%c0_12, %c0_13] : memref<1x128xf32, #tpu.memory_space<vmem>>, vector<1x128xf32>
      %14 = vector.broadcast %13 : vector<1x128xf32> to vector<64x128xf32>
      %15 = arith.mulf %12, %14 : vector<64x128xf32>
      %c0_14 = arith.constant 0 : index
      %c0_15 = arith.constant 0 : index
      %16 = vector.load %arg5[%c0_14, %c0_15] : memref<1x128xf32, #tpu.memory_space<vmem>>, vector<1x128xf32>
      %17 = vector.broadcast %16 : vector<1x128xf32> to vector<64x128xf32>
      %18 = arith.addf %15, %17 : vector<64x128xf32>
      %cst_16 = arith.constant 0.000000e+00 : f32
      %19 = vector.broadcast %cst_16 : f32 to vector<64x128xf32>
      %20 = arith.cmpf ogt, %18, %19 : vector<64x128xf32>
      %cst_17 = arith.constant 2.000000e-01 : f32
      %21 = vector.broadcast %cst_17 : f32 to vector<64x128xf32>
      %22 = arith.mulf %21, %18 : vector<64x128xf32>
      %23 = arith.select %20, %18, %22 : vector<64x128xi1>, vector<64x128xf32>
      %c0_18 = arith.constant 0 : index
      %c0_19 = arith.constant 0 : index
      %24 = vector.load %arg6[%c0_18, %c0_19] : memref<64x128xf32, #tpu.memory_space<vmem>>, vector<64x128xf32>
      tpu.vector_store %arg6[%c0_18, %c0_19], %23 {strides = array<i32>} : memref<64x128xf32, #tpu.memory_space<vmem>>, vector<64x128xf32>,
    } else {
    }
    return
  }
  func.func @transform_0(%arg0: i32, %arg1: i32) -> (i32, i32) {
    %c0_i32 = arith.constant 0 : i32
    return %arg0, %arg1 : i32, i32
  }
  func.func @transform_1(%arg0: i32, %arg1: i32) -> (i32, i32) {
    %c0_i32 = arith.constant 0 : i32
    %c0_i32_0 = arith.constant 0 : i32
    return %arg1, %c0_i32 : i32, i32
  }
  func.func @transform_2(%arg0: i32, %arg1: i32) -> (i32, i32) {
    %c0_i32 = arith.constant 0 : i32
    %c0_i32_0 = arith.constant 0 : i32
    %c0_i32_1 = arith.constant 0 : i32
    return %c0_i32, %c0_i32_0 : i32, i32
  }
  func.func @transform_3(%arg0: i32, %arg1: i32) -> (i32, i32) {
    %c0_i32 = arith.constant 0 : i32
    %c0_i32_0 = arith.constant 0 : i32
    %c0_i32_1 = arith.constant 0 : i32
    return %c0_i32, %c0_i32_0 : i32, i32
  }
  func.func @transform_4(%arg0: i32, %arg1: i32) -> (i32, i32) {
    %c0_i32 = arith.constant 0 : i32
    %c0_i32_0 = arith.constant 0 : i32
    return %arg0, %c0_i32 : i32, i32
  }
}

module attributes {stable_mosaic.version = 11 : i64} {
  func.func @_fused_matmul_kernel(%arg0: i32, %arg1: i32, %arg2: memref<32x512xbf16, #tpu.memory_space<vmem>>, %arg3: memref<512x128xbf16, #tpu.memory_space<vmem>>, %arg4: memref<1x128xf32, #tpu.memory_space<vmem>>, %arg5: memref<1x128xf32, #tpu.memory_space<vmem>>, %arg6: memref<32x128xf32, #tpu.memory_space<vmem>>, %arg7: memref<32x128xf32, #tpu.memory_space<vmem>>) attributes {dimension_semantics = [#tpu.dimension_semantics<parallel>, #tpu.dimension_semantics<arbitrary>], iteration_bounds = array<i64: 1, 1>, scalar_prefetch = 0 : i64, scratch_operands = 1 : i64, tpu.core_type = #tpu.core_type<tc>, window_params = [{transform_indices = @transform_0, window_bounds = array<i64: 32, 512>}, {transform_indices = @transform_1, window_bounds = array<i64: 512, 128>}, {pipeline_mode = #tpu.pipeline_mode<synchronous>, transform_indices = @transform_2, window_bounds = array<i64: 1, 128>}, {pipeline_mode = #tpu.pipeline_mode<synchronous>, transform_indices = @transform_3, window_bounds = array<i64: 1, 128>}, {transform_indices = @transform_4, window_bounds = array<i64: 32, 128>}]} {
    %c0_i32 = arith.constant 0 : i32
    %0 = arith.cmpi eq, %arg1, %c0_i32 : i32
    %1 = arith.extui %0 : i1 to i32
    %c0_i32_0 = arith.constant 0 : i32
    %2 = arith.cmpi ne, %1, %c0_i32_0 : i32
    scf.if %2 {
      %cst_10 = arith.constant 0.000000e+00 : f32
      %12 = vector.broadcast %cst_10 : f32 to vector<32x128xf32>
      %c0_11 = arith.constant 0 : index
      %c0_12 = arith.constant 0 : index
      %13 = vector.load %arg7[%c0_11, %c0_12] : memref<32x128xf32, #tpu.memory_space<vmem>>, vector<32x128xf32>
      tpu.vector_store %arg7[%c0_11, %c0_12], %12 {strides = array<i32>} : memref<32x128xf32, #tpu.memory_space<vmem>>, vector<32x128xf32>,
    } else {
    }
    %c0 = arith.constant 0 : index
    %c0_1 = arith.constant 0 : index
    %3 = vector.load %arg7[%c0, %c0_1] : memref<32x128xf32, #tpu.memory_space<vmem>>, vector<32x128xf32>
    %c0_2 = arith.constant 0 : index
    %c0_3 = arith.constant 0 : index
    %4 = vector.load %arg2[%c0_2, %c0_3] : memref<32x512xbf16, #tpu.memory_space<vmem>>, vector<32x512xbf16>
    %c0_4 = arith.constant 0 : index
    %c0_5 = arith.constant 0 : index
    %5 = vector.load %arg3[%c0_4, %c0_5] : memref<512x128xbf16, #tpu.memory_space<vmem>>, vector<512x128xbf16>
    %cst = arith.constant dense<0.000000e+00> : vector<32x128xf32>
    %6 = tpu.matmul %4, %5, %cst {dimension_numbers = #tpu.dot_dimension_numbers<[1], [0], [0], [1], [0, 0, 1, 1], [], []>} : vector<32x512xbf16>, vector<512x128xbf16>, vector<32x128xf32> -> vector<32x128xf32>
    %7 = arith.addf %3, %6 : vector<32x128xf32>
    %c0_6 = arith.constant 0 : index
    %c0_7 = arith.constant 0 : index
    %8 = vector.load %arg7[%c0_6, %c0_7] : memref<32x128xf32, #tpu.memory_space<vmem>>, vector<32x128xf32>
    tpu.vector_store %arg7[%c0_6, %c0_7], %7 {strides = array<i32>} : memref<32x128xf32, #tpu.memory_space<vmem>>, vector<32x128xf32>,
    %c0_i32_8 = arith.constant 0 : i32
    %9 = arith.cmpi eq, %arg1, %c0_i32_8 : i32
    %10 = arith.extui %9 : i1 to i32
    %c0_i32_9 = arith.constant 0 : i32
    %11 = arith.cmpi ne, %10, %c0_i32_9 : i32
    scf.if %11 {
      %c0_10 = arith.constant 0 : index
      %c0_11 = arith.constant 0 : index
      %12 = vector.load %arg7[%c0_10, %c0_11] : memref<32x128xf32, #tpu.memory_space<vmem>>, vector<32x128xf32>
      %c0_12 = arith.constant 0 : index
      %c0_13 = arith.constant 0 : index
      %13 = vector.load %arg4[%c0_12, %c0_13] : memref<1x128xf32, #tpu.memory_space<vmem>>, vector<1x128xf32>
      %14 = vector.broadcast %13 : vector<1x128xf32> to vector<32x128xf32>
      %15 = arith.mulf %12, %14 : vector<32x128xf32>
      %c0_14 = arith.constant 0 : index
      %c0_15 = arith.constant 0 : index
      %16 = vector.load %arg5[%c0_14, %c0_15] : memref<1x128xf32, #tpu.memory_space<vmem>>, vector<1x128xf32>
      %17 = vector.broadcast %16 : vector<1x128xf32> to vector<32x128xf32>
      %18 = arith.addf %15, %17 : vector<32x128xf32>
      %cst_16 = arith.constant 0.000000e+00 : f32
      %19 = vector.broadcast %cst_16 : f32 to vector<32x128xf32>
      %20 = arith.cmpf ogt, %18, %19 : vector<32x128xf32>
      %cst_17 = arith.constant 2.000000e-01 : f32
      %21 = vector.broadcast %cst_17 : f32 to vector<32x128xf32>
      %22 = arith.mulf %21, %18 : vector<32x128xf32>
      %23 = arith.select %20, %18, %22 : vector<32x128xi1>, vector<32x128xf32>
      %c0_18 = arith.constant 0 : index
      %c0_19 = arith.constant 0 : index
      %24 = vector.load %arg6[%c0_18, %c0_19] : memref<32x128xf32, #tpu.memory_space<vmem>>, vector<32x128xf32>
      tpu.vector_store %arg6[%c0_18, %c0_19], %23 {strides = array<i32>} : memref<32x128xf32, #tpu.memory_space<vmem>>, vector<32x128xf32>,
    } else {
    }
    return
  }
  func.func @transform_0(%arg0: i32, %arg1: i32) -> (i32, i32) {
    %c0_i32 = arith.constant 0 : i32
    return %arg0, %arg1 : i32, i32
  }
  func.func @transform_1(%arg0: i32, %arg1: i32) -> (i32, i32) {
    %c0_i32 = arith.constant 0 : i32
    %c0_i32_0 = arith.constant 0 : i32
    return %arg1, %c0_i32 : i32, i32
  }
  func.func @transform_2(%arg0: i32, %arg1: i32) -> (i32, i32) {
    %c0_i32 = arith.constant 0 : i32
    %c0_i32_0 = arith.constant 0 : i32
    %c0_i32_1 = arith.constant 0 : i32
    return %c0_i32, %c0_i32_0 : i32, i32
  }
  func.func @transform_3(%arg0: i32, %arg1: i32) -> (i32, i32) {
    %c0_i32 = arith.constant 0 : i32
    %c0_i32_0 = arith.constant 0 : i32
    %c0_i32_1 = arith.constant 0 : i32
    return %c0_i32, %c0_i32_0 : i32, i32
  }
  func.func @transform_4(%arg0: i32, %arg1: i32) -> (i32, i32) {
    %c0_i32 = arith.constant 0 : i32
    %c0_i32_0 = arith.constant 0 : i32
    return %arg0, %c0_i32 : i32, i32
  }
}

module attributes {stable_mosaic.version = 11 : i64} {
  func.func @_fused_matmul_kernel(%arg0: i32, %arg1: i32, %arg2: memref<16x1024xbf16, #tpu.memory_space<vmem>>, %arg3: memref<1024x128xbf16, #tpu.memory_space<vmem>>, %arg4: memref<1x128xf32, #tpu.memory_space<vmem>>, %arg5: memref<1x128xf32, #tpu.memory_space<vmem>>, %arg6: memref<16x128xf32, #tpu.memory_space<vmem>>, %arg7: memref<16x128xf32, #tpu.memory_space<vmem>>) attributes {dimension_semantics = [#tpu.dimension_semantics<parallel>, #tpu.dimension_semantics<arbitrary>], iteration_bounds = array<i64: 1, 1>, scalar_prefetch = 0 : i64, scratch_operands = 1 : i64, tpu.core_type = #tpu.core_type<tc>, window_params = [{transform_indices = @transform_0, window_bounds = array<i64: 16, 1024>}, {transform_indices = @transform_1, window_bounds = array<i64: 1024, 128>}, {pipeline_mode = #tpu.pipeline_mode<synchronous>, transform_indices = @transform_2, window_bounds = array<i64: 1, 128>}, {pipeline_mode = #tpu.pipeline_mode<synchronous>, transform_indices = @transform_3, window_bounds = array<i64: 1, 128>}, {transform_indices = @transform_4, window_bounds = array<i64: 16, 128>}]} {
    %c0_i32 = arith.constant 0 : i32
    %0 = arith.cmpi eq, %arg1, %c0_i32 : i32
    %1 = arith.extui %0 : i1 to i32
    %c0_i32_0 = arith.constant 0 : i32
    %2 = arith.cmpi ne, %1, %c0_i32_0 : i32
    scf.if %2 {
      %cst_10 = arith.constant 0.000000e+00 : f32
      %12 = vector.broadcast %cst_10 : f32 to vector<16x128xf32>
      %c0_11 = arith.constant 0 : index
      %c0_12 = arith.constant 0 : index
      %13 = vector.load %arg7[%c0_11, %c0_12] : memref<16x128xf32, #tpu.memory_space<vmem>>, vector<16x128xf32>
      tpu.vector_store %arg7[%c0_11, %c0_12], %12 {strides = array<i32>} : memref<16x128xf32, #tpu.memory_space<vmem>>, vector<16x128xf32>,
    } else {
    }
    %c0 = arith.constant 0 : index
    %c0_1 = arith.constant 0 : index
    %3 = vector.load %arg7[%c0, %c0_1] : memref<16x128xf32, #tpu.memory_space<vmem>>, vector<16x128xf32>
    %c0_2 = arith.constant 0 : index
    %c0_3 = arith.constant 0 : index
    %4 = vector.load %arg2[%c0_2, %c0_3] : memref<16x1024xbf16, #tpu.memory_space<vmem>>, vector<16x1024xbf16>
    %c0_4 = arith.constant 0 : index
    %c0_5 = arith.constant 0 : index
    %5 = vector.load %arg3[%c0_4, %c0_5] : memref<1024x128xbf16, #tpu.memory_space<vmem>>, vector<1024x128xbf16>
    %cst = arith.constant dense<0.000000e+00> : vector<16x128xf32>
    %6 = tpu.matmul %4, %5, %cst {dimension_numbers = #tpu.dot_dimension_numbers<[1], [0], [0], [1], [0, 0, 1, 1], [], []>} : vector<16x1024xbf16>, vector<1024x128xbf16>, vector<16x128xf32> -> vector<16x128xf32>
    %7 = arith.addf %3, %6 : vector<16x128xf32>
    %c0_6 = arith.constant 0 : index
    %c0_7 = arith.constant 0 : index
    %8 = vector.load %arg7[%c0_6, %c0_7] : memref<16x128xf32, #tpu.memory_space<vmem>>, vector<16x128xf32>
    tpu.vector_store %arg7[%c0_6, %c0_7], %7 {strides = array<i32>} : memref<16x128xf32, #tpu.memory_space<vmem>>, vector<16x128xf32>,
    %c0_i32_8 = arith.constant 0 : i32
    %9 = arith.cmpi eq, %arg1, %c0_i32_8 : i32
    %10 = arith.extui %9 : i1 to i32
    %c0_i32_9 = arith.constant 0 : i32
    %11 = arith.cmpi ne, %10, %c0_i32_9 : i32
    scf.if %11 {
      %c0_10 = arith.constant 0 : index
      %c0_11 = arith.constant 0 : index
      %12 = vector.load %arg7[%c0_10, %c0_11] : memref<16x128xf32, #tpu.memory_space<vmem>>, vector<16x128xf32>
      %c0_12 = arith.constant 0 : index
      %c0_13 = arith.constant 0 : index
      %13 = vector.load %arg4[%c0_12, %c0_13] : memref<1x128xf32, #tpu.memory_space<vmem>>, vector<1x128xf32>
      %14 = vector.broadcast %13 : vector<1x128xf32> to vector<16x128xf32>
      %15 = arith.mulf %12, %14 : vector<16x128xf32>
      %c0_14 = arith.constant 0 : index
      %c0_15 = arith.constant 0 : index
      %16 = vector.load %arg5[%c0_14, %c0_15] : memref<1x128xf32, #tpu.memory_space<vmem>>, vector<1x128xf32>
      %17 = vector.broadcast %16 : vector<1x128xf32> to vector<16x128xf32>
      %18 = arith.addf %15, %17 : vector<16x128xf32>
      %cst_16 = arith.constant 0.000000e+00 : f32
      %19 = vector.broadcast %cst_16 : f32 to vector<16x128xf32>
      %20 = arith.cmpf ogt, %18, %19 : vector<16x128xf32>
      %cst_17 = arith.constant 2.000000e-01 : f32
      %21 = vector.broadcast %cst_17 : f32 to vector<16x128xf32>
      %22 = arith.mulf %21, %18 : vector<16x128xf32>
      %23 = arith.select %20, %18, %22 : vector<16x128xi1>, vector<16x128xf32>
      %c0_18 = arith.constant 0 : index
      %c0_19 = arith.constant 0 : index
      %24 = vector.load %arg6[%c0_18, %c0_19] : memref<16x128xf32, #tpu.memory_space<vmem>>, vector<16x128xf32>
      tpu.vector_store %arg6[%c0_18, %c0_19], %23 {strides = array<i32>} : memref<16x128xf32, #tpu.memory_space<vmem>>, vector<16x128xf32>,
    } else {
    }
    return
  }
  func.func @transform_0(%arg0: i32, %arg1: i32) -> (i32, i32) {
    %c0_i32 = arith.constant 0 : i32
    return %arg0, %arg1 : i32, i32
  }
  func.func @transform_1(%arg0: i32, %arg1: i32) -> (i32, i32) {
    %c0_i32 = arith.constant 0 : i32
    %c0_i32_0 = arith.constant 0 : i32
    return %arg1, %c0_i32 : i32, i32
  }
  func.func @transform_2(%arg0: i32, %arg1: i32) -> (i32, i32) {
    %c0_i32 = arith.constant 0 : i32
    %c0_i32_0 = arith.constant 0 : i32
    %c0_i32_1 = arith.constant 0 : i32
    return %c0_i32, %c0_i32_0 : i32, i32
  }
  func.func @transform_3(%arg0: i32, %arg1: i32) -> (i32, i32) {
    %c0_i32 = arith.constant 0 : i32
    %c0_i32_0 = arith.constant 0 : i32
    %c0_i32_1 = arith.constant 0 : i32
    return %c0_i32, %c0_i32_0 : i32, i32
  }
  func.func @transform_4(%arg0: i32, %arg1: i32) -> (i32, i32) {
    %c0_i32 = arith.constant 0 : i32
    %c0_i32_0 = arith.constant 0 : i32
    return %arg0, %c0_i32 : i32, i32
  }
}

module attributes {stable_mosaic.version = 11 : i64} {
  func.func @_fused_matmul_kernel(%arg0: i32, %arg1: i32, %arg2: memref<16x256xbf16, #tpu.memory_space<vmem>>, %arg3: memref<256x256xbf16, #tpu.memory_space<vmem>>, %arg4: memref<1x256xf32, #tpu.memory_space<vmem>>, %arg5: memref<1x256xf32, #tpu.memory_space<vmem>>, %arg6: memref<16x256xf32, #tpu.memory_space<vmem>>, %arg7: memref<16x256xf32, #tpu.memory_space<vmem>>) attributes {dimension_semantics = [#tpu.dimension_semantics<parallel>, #tpu.dimension_semantics<arbitrary>], iteration_bounds = array<i64: 1, 1>, scalar_prefetch = 0 : i64, scratch_operands = 1 : i64, tpu.core_type = #tpu.core_type<tc>, window_params = [{transform_indices = @transform_0, window_bounds = array<i64: 16, 256>}, {transform_indices = @transform_1, window_bounds = array<i64: 256, 256>}, {pipeline_mode = #tpu.pipeline_mode<synchronous>, transform_indices = @transform_2, window_bounds = array<i64: 1, 256>}, {pipeline_mode = #tpu.pipeline_mode<synchronous>, transform_indices = @transform_3, window_bounds = array<i64: 1, 256>}, {transform_indices = @transform_4, window_bounds = array<i64: 16, 256>}]} {
    %c0_i32 = arith.constant 0 : i32
    %0 = arith.cmpi eq, %arg1, %c0_i32 : i32
    %1 = arith.extui %0 : i1 to i32
    %c0_i32_0 = arith.constant 0 : i32
    %2 = arith.cmpi ne, %1, %c0_i32_0 : i32
    scf.if %2 {
      %cst_10 = arith.constant 0.000000e+00 : f32
      %12 = vector.broadcast %cst_10 : f32 to vector<16x256xf32>
      %c0_11 = arith.constant 0 : index
      %c0_12 = arith.constant 0 : index
      %13 = vector.load %arg7[%c0_11, %c0_12] : memref<16x256xf32, #tpu.memory_space<vmem>>, vector<16x256xf32>
      tpu.vector_store %arg7[%c0_11, %c0_12], %12 {strides = array<i32>} : memref<16x256xf32, #tpu.memory_space<vmem>>, vector<16x256xf32>,
    } else {
    }
    %c0 = arith.constant 0 : index
    %c0_1 = arith.constant 0 : index
    %3 = vector.load %arg7[%c0, %c0_1] : memref<16x256xf32, #tpu.memory_space<vmem>>, vector<16x256xf32>
    %c0_2 = arith.constant 0 : index
    %c0_3 = arith.constant 0 : index
    %4 = vector.load %arg2[%c0_2, %c0_3] : memref<16x256xbf16, #tpu.memory_space<vmem>>, vector<16x256xbf16>
    %c0_4 = arith.constant 0 : index
    %c0_5 = arith.constant 0 : index
    %5 = vector.load %arg3[%c0_4, %c0_5] : memref<256x256xbf16, #tpu.memory_space<vmem>>, vector<256x256xbf16>
    %cst = arith.constant dense<0.000000e+00> : vector<16x256xf32>
    %6 = tpu.matmul %4, %5, %cst {dimension_numbers = #tpu.dot_dimension_numbers<[1], [0], [0], [1], [0, 0, 1, 1], [], []>} : vector<16x256xbf16>, vector<256x256xbf16>, vector<16x256xf32> -> vector<16x256xf32>
    %7 = arith.addf %3, %6 : vector<16x256xf32>
    %c0_6 = arith.constant 0 : index
    %c0_7 = arith.constant 0 : index
    %8 = vector.load %arg7[%c0_6, %c0_7] : memref<16x256xf32, #tpu.memory_space<vmem>>, vector<16x256xf32>
    tpu.vector_store %arg7[%c0_6, %c0_7], %7 {strides = array<i32>} : memref<16x256xf32, #tpu.memory_space<vmem>>, vector<16x256xf32>,
    %c0_i32_8 = arith.constant 0 : i32
    %9 = arith.cmpi eq, %arg1, %c0_i32_8 : i32
    %10 = arith.extui %9 : i1 to i32
    %c0_i32_9 = arith.constant 0 : i32
    %11 = arith.cmpi ne, %10, %c0_i32_9 : i32
    scf.if %11 {
      %c0_10 = arith.constant 0 : index
      %c0_11 = arith.constant 0 : index
      %12 = vector.load %arg7[%c0_10, %c0_11] : memref<16x256xf32, #tpu.memory_space<vmem>>, vector<16x256xf32>
      %c0_12 = arith.constant 0 : index
      %c0_13 = arith.constant 0 : index
      %13 = vector.load %arg4[%c0_12, %c0_13] : memref<1x256xf32, #tpu.memory_space<vmem>>, vector<1x256xf32>
      %14 = vector.broadcast %13 : vector<1x256xf32> to vector<16x256xf32>
      %15 = arith.mulf %12, %14 : vector<16x256xf32>
      %c0_14 = arith.constant 0 : index
      %c0_15 = arith.constant 0 : index
      %16 = vector.load %arg5[%c0_14, %c0_15] : memref<1x256xf32, #tpu.memory_space<vmem>>, vector<1x256xf32>
      %17 = vector.broadcast %16 : vector<1x256xf32> to vector<16x256xf32>
      %18 = arith.addf %15, %17 : vector<16x256xf32>
      %c0_16 = arith.constant 0 : index
      %c0_17 = arith.constant 0 : index
      %19 = vector.load %arg6[%c0_16, %c0_17] : memref<16x256xf32, #tpu.memory_space<vmem>>, vector<16x256xf32>
      tpu.vector_store %arg6[%c0_16, %c0_17], %18 {strides = array<i32>} : memref<16x256xf32, #tpu.memory_space<vmem>>, vector<16x256xf32>,
    } else {
    }
    return
  }
  func.func @transform_0(%arg0: i32, %arg1: i32) -> (i32, i32) {
    %c0_i32 = arith.constant 0 : i32
    return %arg0, %arg1 : i32, i32
  }
  func.func @transform_1(%arg0: i32, %arg1: i32) -> (i32, i32) {
    %c0_i32 = arith.constant 0 : i32
    %c0_i32_0 = arith.constant 0 : i32
    return %arg1, %c0_i32 : i32, i32
  }
  func.func @transform_2(%arg0: i32, %arg1: i32) -> (i32, i32) {
    %c0_i32 = arith.constant 0 : i32
    %c0_i32_0 = arith.constant 0 : i32
    %c0_i32_1 = arith.constant 0 : i32
    return %c0_i32, %c0_i32_0 : i32, i32
  }
  func.func @transform_3(%arg0: i32, %arg1: i32) -> (i32, i32) {
    %c0_i32 = arith.constant 0 : i32
    %c0_i32_0 = arith.constant 0 : i32
    %c0_i32_1 = arith.constant 0 : i32
    return %c0_i32, %c0_i32_0 : i32, i32
  }
  func.func @transform_4(%arg0: i32, %arg1: i32) -> (i32, i32) {
    %c0_i32 = arith.constant 0 : i32
    %c0_i32_0 = arith.constant 0 : i32
    return %arg0, %c0_i32 : i32, i32
  }
}

module attributes {stable_mosaic.version = 11 : i64} {
  func.func @_fused_matmul_kernel(%arg0: i32, %arg1: i32, %arg2: memref<32x512xbf16, #tpu.memory_space<vmem>>, %arg3: memref<512x256xbf16, #tpu.memory_space<vmem>>, %arg4: memref<1x256xf32, #tpu.memory_space<vmem>>, %arg5: memref<1x256xf32, #tpu.memory_space<vmem>>, %arg6: memref<32x256xf32, #tpu.memory_space<vmem>>, %arg7: memref<32x256xf32, #tpu.memory_space<vmem>>) attributes {dimension_semantics = [#tpu.dimension_semantics<parallel>, #tpu.dimension_semantics<arbitrary>], iteration_bounds = array<i64: 1, 1>, scalar_prefetch = 0 : i64, scratch_operands = 1 : i64, tpu.core_type = #tpu.core_type<tc>, window_params = [{transform_indices = @transform_0, window_bounds = array<i64: 32, 512>}, {transform_indices = @transform_1, window_bounds = array<i64: 512, 256>}, {pipeline_mode = #tpu.pipeline_mode<synchronous>, transform_indices = @transform_2, window_bounds = array<i64: 1, 256>}, {pipeline_mode = #tpu.pipeline_mode<synchronous>, transform_indices = @transform_3, window_bounds = array<i64: 1, 256>}, {transform_indices = @transform_4, window_bounds = array<i64: 32, 256>}]} {
    %c0_i32 = arith.constant 0 : i32
    %0 = arith.cmpi eq, %arg1, %c0_i32 : i32
    %1 = arith.extui %0 : i1 to i32
    %c0_i32_0 = arith.constant 0 : i32
    %2 = arith.cmpi ne, %1, %c0_i32_0 : i32
    scf.if %2 {
      %cst_10 = arith.constant 0.000000e+00 : f32
      %12 = vector.broadcast %cst_10 : f32 to vector<32x256xf32>
      %c0_11 = arith.constant 0 : index
      %c0_12 = arith.constant 0 : index
      %13 = vector.load %arg7[%c0_11, %c0_12] : memref<32x256xf32, #tpu.memory_space<vmem>>, vector<32x256xf32>
      tpu.vector_store %arg7[%c0_11, %c0_12], %12 {strides = array<i32>} : memref<32x256xf32, #tpu.memory_space<vmem>>, vector<32x256xf32>,
    } else {
    }
    %c0 = arith.constant 0 : index
    %c0_1 = arith.constant 0 : index
    %3 = vector.load %arg7[%c0, %c0_1] : memref<32x256xf32, #tpu.memory_space<vmem>>, vector<32x256xf32>
    %c0_2 = arith.constant 0 : index
    %c0_3 = arith.constant 0 : index
    %4 = vector.load %arg2[%c0_2, %c0_3] : memref<32x512xbf16, #tpu.memory_space<vmem>>, vector<32x512xbf16>
    %c0_4 = arith.constant 0 : index
    %c0_5 = arith.constant 0 : index
    %5 = vector.load %arg3[%c0_4, %c0_5] : memref<512x256xbf16, #tpu.memory_space<vmem>>, vector<512x256xbf16>
    %cst = arith.constant dense<0.000000e+00> : vector<32x256xf32>
    %6 = tpu.matmul %4, %5, %cst {dimension_numbers = #tpu.dot_dimension_numbers<[1], [0], [0], [1], [0, 0, 1, 1], [], []>} : vector<32x512xbf16>, vector<512x256xbf16>, vector<32x256xf32> -> vector<32x256xf32>
    %7 = arith.addf %3, %6 : vector<32x256xf32>
    %c0_6 = arith.constant 0 : index
    %c0_7 = arith.constant 0 : index
    %8 = vector.load %arg7[%c0_6, %c0_7] : memref<32x256xf32, #tpu.memory_space<vmem>>, vector<32x256xf32>
    tpu.vector_store %arg7[%c0_6, %c0_7], %7 {strides = array<i32>} : memref<32x256xf32, #tpu.memory_space<vmem>>, vector<32x256xf32>,
    %c0_i32_8 = arith.constant 0 : i32
    %9 = arith.cmpi eq, %arg1, %c0_i32_8 : i32
    %10 = arith.extui %9 : i1 to i32
    %c0_i32_9 = arith.constant 0 : i32
    %11 = arith.cmpi ne, %10, %c0_i32_9 : i32
    scf.if %11 {
      %c0_10 = arith.constant 0 : index
      %c0_11 = arith.constant 0 : index
      %12 = vector.load %arg7[%c0_10, %c0_11] : memref<32x256xf32, #tpu.memory_space<vmem>>, vector<32x256xf32>
      %c0_12 = arith.constant 0 : index
      %c0_13 = arith.constant 0 : index
      %13 = vector.load %arg4[%c0_12, %c0_13] : memref<1x256xf32, #tpu.memory_space<vmem>>, vector<1x256xf32>
      %14 = vector.broadcast %13 : vector<1x256xf32> to vector<32x256xf32>
      %15 = arith.mulf %12, %14 : vector<32x256xf32>
      %c0_14 = arith.constant 0 : index
      %c0_15 = arith.constant 0 : index
      %16 = vector.load %arg5[%c0_14, %c0_15] : memref<1x256xf32, #tpu.memory_space<vmem>>, vector<1x256xf32>
      %17 = vector.broadcast %16 : vector<1x256xf32> to vector<32x256xf32>
      %18 = arith.addf %15, %17 : vector<32x256xf32>
      %c0_16 = arith.constant 0 : index
      %c0_17 = arith.constant 0 : index
      %19 = vector.load %arg6[%c0_16, %c0_17] : memref<32x256xf32, #tpu.memory_space<vmem>>, vector<32x256xf32>
      tpu.vector_store %arg6[%c0_16, %c0_17], %18 {strides = array<i32>} : memref<32x256xf32, #tpu.memory_space<vmem>>, vector<32x256xf32>,
    } else {
    }
    return
  }
  func.func @transform_0(%arg0: i32, %arg1: i32) -> (i32, i32) {
    %c0_i32 = arith.constant 0 : i32
    return %arg0, %arg1 : i32, i32
  }
  func.func @transform_1(%arg0: i32, %arg1: i32) -> (i32, i32) {
    %c0_i32 = arith.constant 0 : i32
    %c0_i32_0 = arith.constant 0 : i32
    return %arg1, %c0_i32 : i32, i32
  }
  func.func @transform_2(%arg0: i32, %arg1: i32) -> (i32, i32) {
    %c0_i32 = arith.constant 0 : i32
    %c0_i32_0 = arith.constant 0 : i32
    %c0_i32_1 = arith.constant 0 : i32
    return %c0_i32, %c0_i32_0 : i32, i32
  }
  func.func @transform_3(%arg0: i32, %arg1: i32) -> (i32, i32) {
    %c0_i32 = arith.constant 0 : i32
    %c0_i32_0 = arith.constant 0 : i32
    %c0_i32_1 = arith.constant 0 : i32
    return %c0_i32, %c0_i32_0 : i32, i32
  }
  func.func @transform_4(%arg0: i32, %arg1: i32) -> (i32, i32) {
    %c0_i32 = arith.constant 0 : i32
    %c0_i32_0 = arith.constant 0 : i32
    return %arg0, %c0_i32 : i32, i32
  }
}

module attributes {stable_mosaic.version = 11 : i64} {
  func.func @_fused_matmul_kernel(%arg0: i32, %arg1: i32, %arg2: memref<64x512xbf16, #tpu.memory_space<vmem>>, %arg3: memref<512x128xbf16, #tpu.memory_space<vmem>>, %arg4: memref<1x128xf32, #tpu.memory_space<vmem>>, %arg5: memref<1x128xf32, #tpu.memory_space<vmem>>, %arg6: memref<64x128xf32, #tpu.memory_space<vmem>>, %arg7: memref<64x128xf32, #tpu.memory_space<vmem>>) attributes {dimension_semantics = [#tpu.dimension_semantics<parallel>, #tpu.dimension_semantics<arbitrary>], iteration_bounds = array<i64: 1, 1>, scalar_prefetch = 0 : i64, scratch_operands = 1 : i64, tpu.core_type = #tpu.core_type<tc>, window_params = [{transform_indices = @transform_0, window_bounds = array<i64: 64, 512>}, {transform_indices = @transform_1, window_bounds = array<i64: 512, 128>}, {pipeline_mode = #tpu.pipeline_mode<synchronous>, transform_indices = @transform_2, window_bounds = array<i64: 1, 128>}, {pipeline_mode = #tpu.pipeline_mode<synchronous>, transform_indices = @transform_3, window_bounds = array<i64: 1, 128>}, {transform_indices = @transform_4, window_bounds = array<i64: 64, 128>}]} {
    %c0_i32 = arith.constant 0 : i32
    %0 = arith.cmpi eq, %arg1, %c0_i32 : i32
    %1 = arith.extui %0 : i1 to i32
    %c0_i32_0 = arith.constant 0 : i32
    %2 = arith.cmpi ne, %1, %c0_i32_0 : i32
    scf.if %2 {
      %cst_10 = arith.constant 0.000000e+00 : f32
      %12 = vector.broadcast %cst_10 : f32 to vector<64x128xf32>
      %c0_11 = arith.constant 0 : index
      %c0_12 = arith.constant 0 : index
      %13 = vector.load %arg7[%c0_11, %c0_12] : memref<64x128xf32, #tpu.memory_space<vmem>>, vector<64x128xf32>
      tpu.vector_store %arg7[%c0_11, %c0_12], %12 {strides = array<i32>} : memref<64x128xf32, #tpu.memory_space<vmem>>, vector<64x128xf32>,
    } else {
    }
    %c0 = arith.constant 0 : index
    %c0_1 = arith.constant 0 : index
    %3 = vector.load %arg7[%c0, %c0_1] : memref<64x128xf32, #tpu.memory_space<vmem>>, vector<64x128xf32>
    %c0_2 = arith.constant 0 : index
    %c0_3 = arith.constant 0 : index
    %4 = vector.load %arg2[%c0_2, %c0_3] : memref<64x512xbf16, #tpu.memory_space<vmem>>, vector<64x512xbf16>
    %c0_4 = arith.constant 0 : index
    %c0_5 = arith.constant 0 : index
    %5 = vector.load %arg3[%c0_4, %c0_5] : memref<512x128xbf16, #tpu.memory_space<vmem>>, vector<512x128xbf16>
    %cst = arith.constant dense<0.000000e+00> : vector<64x128xf32>
    %6 = tpu.matmul %4, %5, %cst {dimension_numbers = #tpu.dot_dimension_numbers<[1], [0], [0], [1], [0, 0, 1, 1], [], []>} : vector<64x512xbf16>, vector<512x128xbf16>, vector<64x128xf32> -> vector<64x128xf32>
    %7 = arith.addf %3, %6 : vector<64x128xf32>
    %c0_6 = arith.constant 0 : index
    %c0_7 = arith.constant 0 : index
    %8 = vector.load %arg7[%c0_6, %c0_7] : memref<64x128xf32, #tpu.memory_space<vmem>>, vector<64x128xf32>
    tpu.vector_store %arg7[%c0_6, %c0_7], %7 {strides = array<i32>} : memref<64x128xf32, #tpu.memory_space<vmem>>, vector<64x128xf32>,
    %c0_i32_8 = arith.constant 0 : i32
    %9 = arith.cmpi eq, %arg1, %c0_i32_8 : i32
    %10 = arith.extui %9 : i1 to i32
    %c0_i32_9 = arith.constant 0 : i32
    %11 = arith.cmpi ne, %10, %c0_i32_9 : i32
    scf.if %11 {
      %c0_10 = arith.constant 0 : index
      %c0_11 = arith.constant 0 : index
      %12 = vector.load %arg7[%c0_10, %c0_11] : memref<64x128xf32, #tpu.memory_space<vmem>>, vector<64x128xf32>
      %c0_12 = arith.constant 0 : index
      %c0_13 = arith.constant 0 : index
      %13 = vector.load %arg4[%c0_12, %c0_13] : memref<1x128xf32, #tpu.memory_space<vmem>>, vector<1x128xf32>
      %14 = vector.broadcast %13 : vector<1x128xf32> to vector<64x128xf32>
      %15 = arith.mulf %12, %14 : vector<64x128xf32>
      %c0_14 = arith.constant 0 : index
      %c0_15 = arith.constant 0 : index
      %16 = vector.load %arg5[%c0_14, %c0_15] : memref<1x128xf32, #tpu.memory_space<vmem>>, vector<1x128xf32>
      %17 = vector.broadcast %16 : vector<1x128xf32> to vector<64x128xf32>
      %18 = arith.addf %15, %17 : vector<64x128xf32>
      %c0_16 = arith.constant 0 : index
      %c0_17 = arith.constant 0 : index
      %19 = vector.load %arg6[%c0_16, %c0_17] : memref<64x128xf32, #tpu.memory_space<vmem>>, vector<64x128xf32>
      tpu.vector_store %arg6[%c0_16, %c0_17], %18 {strides = array<i32>} : memref<64x128xf32, #tpu.memory_space<vmem>>, vector<64x128xf32>,
    } else {
    }
    return
  }
  func.func @transform_0(%arg0: i32, %arg1: i32) -> (i32, i32) {
    %c0_i32 = arith.constant 0 : i32
    return %arg0, %arg1 : i32, i32
  }
  func.func @transform_1(%arg0: i32, %arg1: i32) -> (i32, i32) {
    %c0_i32 = arith.constant 0 : i32
    %c0_i32_0 = arith.constant 0 : i32
    return %arg1, %c0_i32 : i32, i32
  }
  func.func @transform_2(%arg0: i32, %arg1: i32) -> (i32, i32) {
    %c0_i32 = arith.constant 0 : i32
    %c0_i32_0 = arith.constant 0 : i32
    %c0_i32_1 = arith.constant 0 : i32
    return %c0_i32, %c0_i32_0 : i32, i32
  }
  func.func @transform_3(%arg0: i32, %arg1: i32) -> (i32, i32) {
    %c0_i32 = arith.constant 0 : i32
    %c0_i32_0 = arith.constant 0 : i32
    %c0_i32_1 = arith.constant 0 : i32
    return %c0_i32, %c0_i32_0 : i32, i32
  }
  func.func @transform_4(%arg0: i32, %arg1: i32) -> (i32, i32) {
    %c0_i32 = arith.constant 0 : i32
    %c0_i32_0 = arith.constant 0 : i32
    return %arg0, %c0_i32 : i32, i32
  }
}

module attributes {stable_mosaic.version = 11 : i64} {
  func.func @_fused_matmul_kernel(%arg0: i32, %arg1: i32, %arg2: memref<64x256xbf16, #tpu.memory_space<vmem>>, %arg3: memref<256x128xbf16, #tpu.memory_space<vmem>>, %arg4: memref<1x128xf32, #tpu.memory_space<vmem>>, %arg5: memref<1x128xf32, #tpu.memory_space<vmem>>, %arg6: memref<64x128xf32, #tpu.memory_space<vmem>>, %arg7: memref<64x128xf32, #tpu.memory_space<vmem>>) attributes {dimension_semantics = [#tpu.dimension_semantics<parallel>, #tpu.dimension_semantics<arbitrary>], iteration_bounds = array<i64: 3, 1>, scalar_prefetch = 0 : i64, scratch_operands = 1 : i64, tpu.core_type = #tpu.core_type<tc>, window_params = [{transform_indices = @transform_0, window_bounds = array<i64: 64, 256>}, {transform_indices = @transform_1, window_bounds = array<i64: 256, 128>}, {pipeline_mode = #tpu.pipeline_mode<synchronous>, transform_indices = @transform_2, window_bounds = array<i64: 1, 128>}, {pipeline_mode = #tpu.pipeline_mode<synchronous>, transform_indices = @transform_3, window_bounds = array<i64: 1, 128>}, {transform_indices = @transform_4, window_bounds = array<i64: 64, 128>}]} {
    %c0_i32 = arith.constant 0 : i32
    %0 = arith.cmpi eq, %arg1, %c0_i32 : i32
    %1 = arith.extui %0 : i1 to i32
    %c0_i32_0 = arith.constant 0 : i32
    %2 = arith.cmpi ne, %1, %c0_i32_0 : i32
    scf.if %2 {
      %cst_10 = arith.constant 0.000000e+00 : f32
      %12 = vector.broadcast %cst_10 : f32 to vector<64x128xf32>
      %c0_11 = arith.constant 0 : index
      %c0_12 = arith.constant 0 : index
      %13 = vector.load %arg7[%c0_11, %c0_12] : memref<64x128xf32, #tpu.memory_space<vmem>>, vector<64x128xf32>
      tpu.vector_store %arg7[%c0_11, %c0_12], %12 {strides = array<i32>} : memref<64x128xf32, #tpu.memory_space<vmem>>, vector<64x128xf32>,
    } else {
    }
    %c0 = arith.constant 0 : index
    %c0_1 = arith.constant 0 : index
    %3 = vector.load %arg7[%c0, %c0_1] : memref<64x128xf32, #tpu.memory_space<vmem>>, vector<64x128xf32>
    %c0_2 = arith.constant 0 : index
    %c0_3 = arith.constant 0 : index
    %4 = vector.load %arg2[%c0_2, %c0_3] : memref<64x256xbf16, #tpu.memory_space<vmem>>, vector<64x256xbf16>
    %c0_4 = arith.constant 0 : index
    %c0_5 = arith.constant 0 : index
    %5 = vector.load %arg3[%c0_4, %c0_5] : memref<256x128xbf16, #tpu.memory_space<vmem>>, vector<256x128xbf16>
    %cst = arith.constant dense<0.000000e+00> : vector<64x128xf32>
    %6 = tpu.matmul %4, %5, %cst {dimension_numbers = #tpu.dot_dimension_numbers<[1], [0], [0], [1], [0, 0, 1, 1], [], []>} : vector<64x256xbf16>, vector<256x128xbf16>, vector<64x128xf32> -> vector<64x128xf32>
    %7 = arith.addf %3, %6 : vector<64x128xf32>
    %c0_6 = arith.constant 0 : index
    %c0_7 = arith.constant 0 : index
    %8 = vector.load %arg7[%c0_6, %c0_7] : memref<64x128xf32, #tpu.memory_space<vmem>>, vector<64x128xf32>
    tpu.vector_store %arg7[%c0_6, %c0_7], %7 {strides = array<i32>} : memref<64x128xf32, #tpu.memory_space<vmem>>, vector<64x128xf32>,
    %c0_i32_8 = arith.constant 0 : i32
    %9 = arith.cmpi eq, %arg1, %c0_i32_8 : i32
    %10 = arith.extui %9 : i1 to i32
    %c0_i32_9 = arith.constant 0 : i32
    %11 = arith.cmpi ne, %10, %c0_i32_9 : i32
    scf.if %11 {
      %c0_10 = arith.constant 0 : index
      %c0_11 = arith.constant 0 : index
      %12 = vector.load %arg7[%c0_10, %c0_11] : memref<64x128xf32, #tpu.memory_space<vmem>>, vector<64x128xf32>
      %c0_12 = arith.constant 0 : index
      %c0_13 = arith.constant 0 : index
      %13 = vector.load %arg4[%c0_12, %c0_13] : memref<1x128xf32, #tpu.memory_space<vmem>>, vector<1x128xf32>
      %14 = vector.broadcast %13 : vector<1x128xf32> to vector<64x128xf32>
      %15 = arith.mulf %12, %14 : vector<64x128xf32>
      %c0_14 = arith.constant 0 : index
      %c0_15 = arith.constant 0 : index
      %16 = vector.load %arg5[%c0_14, %c0_15] : memref<1x128xf32, #tpu.memory_space<vmem>>, vector<1x128xf32>
      %17 = vector.broadcast %16 : vector<1x128xf32> to vector<64x128xf32>
      %18 = arith.addf %15, %17 : vector<64x128xf32>
      %c0_16 = arith.constant 0 : index
      %c0_17 = arith.constant 0 : index
      %19 = vector.load %arg6[%c0_16, %c0_17] : memref<64x128xf32, #tpu.memory_space<vmem>>, vector<64x128xf32>
      tpu.vector_store %arg6[%c0_16, %c0_17], %18 {strides = array<i32>} : memref<64x128xf32, #tpu.memory_space<vmem>>, vector<64x128xf32>,
    } else {
    }
    return
  }
  func.func @transform_0(%arg0: i32, %arg1: i32) -> (i32, i32) {
    %c0_i32 = arith.constant 0 : i32
    return %arg0, %arg1 : i32, i32
  }
  func.func @transform_1(%arg0: i32, %arg1: i32) -> (i32, i32) {
    %c0_i32 = arith.constant 0 : i32
    %c0_i32_0 = arith.constant 0 : i32
    return %arg1, %c0_i32 : i32, i32
  }
  func.func @transform_2(%arg0: i32, %arg1: i32) -> (i32, i32) {
    %c0_i32 = arith.constant 0 : i32
    %c0_i32_0 = arith.constant 0 : i32
    %c0_i32_1 = arith.constant 0 : i32
    return %c0_i32, %c0_i32_0 : i32, i32
  }
  func.func @transform_3(%arg0: i32, %arg1: i32) -> (i32, i32) {
    %c0_i32 = arith.constant 0 : i32
    %c0_i32_0 = arith.constant 0 : i32
    %c0_i32_1 = arith.constant 0 : i32
    return %c0_i32, %c0_i32_0 : i32, i32
  }
  func.func @transform_4(%arg0: i32, %arg1: i32) -> (i32, i32) {
    %c0_i32 = arith.constant 0 : i32
    %c0_i32_0 = arith.constant 0 : i32
    return %arg0, %c0_i32 : i32, i32
  }
}

module attributes {stable_mosaic.version = 11 : i64} {
  func.func @_fused_matmul_kernel(%arg0: i32, %arg1: i32, %arg2: memref<256x128xbf16, #tpu.memory_space<vmem>>, %arg3: memref<128x128xbf16, #tpu.memory_space<vmem>>, %arg4: memref<1x128xf32, #tpu.memory_space<vmem>>, %arg5: memref<1x128xf32, #tpu.memory_space<vmem>>, %arg6: memref<256x128xf32, #tpu.memory_space<vmem>>, %arg7: memref<256x128xf32, #tpu.memory_space<vmem>>) attributes {dimension_semantics = [#tpu.dimension_semantics<parallel>, #tpu.dimension_semantics<arbitrary>], iteration_bounds = array<i64: 3, 1>, scalar_prefetch = 0 : i64, scratch_operands = 1 : i64, tpu.core_type = #tpu.core_type<tc>, window_params = [{transform_indices = @transform_0, window_bounds = array<i64: 256, 128>}, {transform_indices = @transform_1, window_bounds = array<i64: 128, 128>}, {pipeline_mode = #tpu.pipeline_mode<synchronous>, transform_indices = @transform_2, window_bounds = array<i64: 1, 128>}, {pipeline_mode = #tpu.pipeline_mode<synchronous>, transform_indices = @transform_3, window_bounds = array<i64: 1, 128>}, {transform_indices = @transform_4, window_bounds = array<i64: 256, 128>}]} {
    %c0_i32 = arith.constant 0 : i32
    %0 = arith.cmpi eq, %arg1, %c0_i32 : i32
    %1 = arith.extui %0 : i1 to i32
    %c0_i32_0 = arith.constant 0 : i32
    %2 = arith.cmpi ne, %1, %c0_i32_0 : i32
    scf.if %2 {
      %cst_10 = arith.constant 0.000000e+00 : f32
      %12 = vector.broadcast %cst_10 : f32 to vector<256x128xf32>
      %c0_11 = arith.constant 0 : index
      %c0_12 = arith.constant 0 : index
      %13 = vector.load %arg7[%c0_11, %c0_12] : memref<256x128xf32, #tpu.memory_space<vmem>>, vector<256x128xf32>
      tpu.vector_store %arg7[%c0_11, %c0_12], %12 {strides = array<i32>} : memref<256x128xf32, #tpu.memory_space<vmem>>, vector<256x128xf32>,
    } else {
    }
    %c0 = arith.constant 0 : index
    %c0_1 = arith.constant 0 : index
    %3 = vector.load %arg7[%c0, %c0_1] : memref<256x128xf32, #tpu.memory_space<vmem>>, vector<256x128xf32>
    %c0_2 = arith.constant 0 : index
    %c0_3 = arith.constant 0 : index
    %4 = vector.load %arg2[%c0_2, %c0_3] : memref<256x128xbf16, #tpu.memory_space<vmem>>, vector<256x128xbf16>
    %c0_4 = arith.constant 0 : index
    %c0_5 = arith.constant 0 : index
    %5 = vector.load %arg3[%c0_4, %c0_5] : memref<128x128xbf16, #tpu.memory_space<vmem>>, vector<128x128xbf16>
    %cst = arith.constant dense<0.000000e+00> : vector<256x128xf32>
    %6 = tpu.matmul %4, %5, %cst {dimension_numbers = #tpu.dot_dimension_numbers<[1], [0], [0], [1], [0, 0, 1, 1], [], []>} : vector<256x128xbf16>, vector<128x128xbf16>, vector<256x128xf32> -> vector<256x128xf32>
    %7 = arith.addf %3, %6 : vector<256x128xf32>
    %c0_6 = arith.constant 0 : index
    %c0_7 = arith.constant 0 : index
    %8 = vector.load %arg7[%c0_6, %c0_7] : memref<256x128xf32, #tpu.memory_space<vmem>>, vector<256x128xf32>
    tpu.vector_store %arg7[%c0_6, %c0_7], %7 {strides = array<i32>} : memref<256x128xf32, #tpu.memory_space<vmem>>, vector<256x128xf32>,
    %c0_i32_8 = arith.constant 0 : i32
    %9 = arith.cmpi eq, %arg1, %c0_i32_8 : i32
    %10 = arith.extui %9 : i1 to i32
    %c0_i32_9 = arith.constant 0 : i32
    %11 = arith.cmpi ne, %10, %c0_i32_9 : i32
    scf.if %11 {
      %c0_10 = arith.constant 0 : index
      %c0_11 = arith.constant 0 : index
      %12 = vector.load %arg7[%c0_10, %c0_11] : memref<256x128xf32, #tpu.memory_space<vmem>>, vector<256x128xf32>
      %c0_12 = arith.constant 0 : index
      %c0_13 = arith.constant 0 : index
      %13 = vector.load %arg4[%c0_12, %c0_13] : memref<1x128xf32, #tpu.memory_space<vmem>>, vector<1x128xf32>
      %14 = vector.broadcast %13 : vector<1x128xf32> to vector<256x128xf32>
      %15 = arith.mulf %12, %14 : vector<256x128xf32>
      %c0_14 = arith.constant 0 : index
      %c0_15 = arith.constant 0 : index
      %16 = vector.load %arg5[%c0_14, %c0_15] : memref<1x128xf32, #tpu.memory_space<vmem>>, vector<1x128xf32>
      %17 = vector.broadcast %16 : vector<1x128xf32> to vector<256x128xf32>
      %18 = arith.addf %15, %17 : vector<256x128xf32>
      %c0_16 = arith.constant 0 : index
      %c0_17 = arith.constant 0 : index
      %19 = vector.load %arg6[%c0_16, %c0_17] : memref<256x128xf32, #tpu.memory_space<vmem>>, vector<256x128xf32>
      tpu.vector_store %arg6[%c0_16, %c0_17], %18 {strides = array<i32>} : memref<256x128xf32, #tpu.memory_space<vmem>>, vector<256x128xf32>,
    } else {
    }
    return
  }
  func.func @transform_0(%arg0: i32, %arg1: i32) -> (i32, i32) {
    %c0_i32 = arith.constant 0 : i32
    return %arg0, %arg1 : i32, i32
  }
  func.func @transform_1(%arg0: i32, %arg1: i32) -> (i32, i32) {
    %c0_i32 = arith.constant 0 : i32
    %c0_i32_0 = arith.constant 0 : i32
    return %arg1, %c0_i32 : i32, i32
  }
  func.func @transform_2(%arg0: i32, %arg1: i32) -> (i32, i32) {
    %c0_i32 = arith.constant 0 : i32
    %c0_i32_0 = arith.constant 0 : i32
    %c0_i32_1 = arith.constant 0 : i32
    return %c0_i32, %c0_i32_0 : i32, i32
  }
  func.func @transform_3(%arg0: i32, %arg1: i32) -> (i32, i32) {
    %c0_i32 = arith.constant 0 : i32
    %c0_i32_0 = arith.constant 0 : i32
    %c0_i32_1 = arith.constant 0 : i32
    return %c0_i32, %c0_i32_0 : i32, i32
  }
  func.func @transform_4(%arg0: i32, %arg1: i32) -> (i32, i32) {
    %c0_i32 = arith.constant 0 : i32
    %c0_i32_0 = arith.constant 0 : i32
    return %arg0, %c0_i32 : i32, i32
  }
}

module attributes {stable_mosaic.version = 11 : i64} {
  func.func @_fused_matmul_kernel(%arg0: i32, %arg1: i32, %arg2: memref<512x32xbf16, #tpu.memory_space<vmem>>, %arg3: memref<32x128xbf16, #tpu.memory_space<vmem>>, %arg4: memref<1x128xf32, #tpu.memory_space<vmem>>, %arg5: memref<1x128xf32, #tpu.memory_space<vmem>>, %arg6: memref<512x128xf32, #tpu.memory_space<vmem>>, %arg7: memref<512x128xf32, #tpu.memory_space<vmem>>) attributes {dimension_semantics = [#tpu.dimension_semantics<parallel>, #tpu.dimension_semantics<arbitrary>], iteration_bounds = array<i64: 5, 1>, scalar_prefetch = 0 : i64, scratch_operands = 1 : i64, tpu.core_type = #tpu.core_type<tc>, window_params = [{transform_indices = @transform_0, window_bounds = array<i64: 512, 32>}, {transform_indices = @transform_1, window_bounds = array<i64: 32, 128>}, {pipeline_mode = #tpu.pipeline_mode<synchronous>, transform_indices = @transform_2, window_bounds = array<i64: 1, 128>}, {pipeline_mode = #tpu.pipeline_mode<synchronous>, transform_indices = @transform_3, window_bounds = array<i64: 1, 128>}, {transform_indices = @transform_4, window_bounds = array<i64: 512, 128>}]} {
    %c0_i32 = arith.constant 0 : i32
    %0 = arith.cmpi eq, %arg1, %c0_i32 : i32
    %1 = arith.extui %0 : i1 to i32
    %c0_i32_0 = arith.constant 0 : i32
    %2 = arith.cmpi ne, %1, %c0_i32_0 : i32
    scf.if %2 {
      %cst_10 = arith.constant 0.000000e+00 : f32
      %12 = vector.broadcast %cst_10 : f32 to vector<512x128xf32>
      %c0_11 = arith.constant 0 : index
      %c0_12 = arith.constant 0 : index
      %13 = vector.load %arg7[%c0_11, %c0_12] : memref<512x128xf32, #tpu.memory_space<vmem>>, vector<512x128xf32>
      tpu.vector_store %arg7[%c0_11, %c0_12], %12 {strides = array<i32>} : memref<512x128xf32, #tpu.memory_space<vmem>>, vector<512x128xf32>,
    } else {
    }
    %c0 = arith.constant 0 : index
    %c0_1 = arith.constant 0 : index
    %3 = vector.load %arg7[%c0, %c0_1] : memref<512x128xf32, #tpu.memory_space<vmem>>, vector<512x128xf32>
    %c0_2 = arith.constant 0 : index
    %c0_3 = arith.constant 0 : index
    %4 = vector.load %arg2[%c0_2, %c0_3] : memref<512x32xbf16, #tpu.memory_space<vmem>>, vector<512x32xbf16>
    %c0_4 = arith.constant 0 : index
    %c0_5 = arith.constant 0 : index
    %5 = vector.load %arg3[%c0_4, %c0_5] : memref<32x128xbf16, #tpu.memory_space<vmem>>, vector<32x128xbf16>
    %cst = arith.constant dense<0.000000e+00> : vector<512x128xf32>
    %6 = tpu.matmul %4, %5, %cst {dimension_numbers = #tpu.dot_dimension_numbers<[1], [0], [0], [1], [0, 0, 1, 1], [], []>} : vector<512x32xbf16>, vector<32x128xbf16>, vector<512x128xf32> -> vector<512x128xf32>
    %7 = arith.addf %3, %6 : vector<512x128xf32>
    %c0_6 = arith.constant 0 : index
    %c0_7 = arith.constant 0 : index
    %8 = vector.load %arg7[%c0_6, %c0_7] : memref<512x128xf32, #tpu.memory_space<vmem>>, vector<512x128xf32>
    tpu.vector_store %arg7[%c0_6, %c0_7], %7 {strides = array<i32>} : memref<512x128xf32, #tpu.memory_space<vmem>>, vector<512x128xf32>,
    %c0_i32_8 = arith.constant 0 : i32
    %9 = arith.cmpi eq, %arg1, %c0_i32_8 : i32
    %10 = arith.extui %9 : i1 to i32
    %c0_i32_9 = arith.constant 0 : i32
    %11 = arith.cmpi ne, %10, %c0_i32_9 : i32
    scf.if %11 {
      %c0_10 = arith.constant 0 : index
      %c0_11 = arith.constant 0 : index
      %12 = vector.load %arg7[%c0_10, %c0_11] : memref<512x128xf32, #tpu.memory_space<vmem>>, vector<512x128xf32>
      %c0_12 = arith.constant 0 : index
      %c0_13 = arith.constant 0 : index
      %13 = vector.load %arg4[%c0_12, %c0_13] : memref<1x128xf32, #tpu.memory_space<vmem>>, vector<1x128xf32>
      %14 = vector.broadcast %13 : vector<1x128xf32> to vector<512x128xf32>
      %15 = arith.mulf %12, %14 : vector<512x128xf32>
      %c0_14 = arith.constant 0 : index
      %c0_15 = arith.constant 0 : index
      %16 = vector.load %arg5[%c0_14, %c0_15] : memref<1x128xf32, #tpu.memory_space<vmem>>, vector<1x128xf32>
      %17 = vector.broadcast %16 : vector<1x128xf32> to vector<512x128xf32>
      %18 = arith.addf %15, %17 : vector<512x128xf32>
      %19 = math.tanh %18 : vector<512x128xf32>
      %c0_16 = arith.constant 0 : index
      %c0_17 = arith.constant 0 : index
      %20 = vector.load %arg6[%c0_16, %c0_17] : memref<512x128xf32, #tpu.memory_space<vmem>>, vector<512x128xf32>
      tpu.vector_store %arg6[%c0_16, %c0_17], %19 {strides = array<i32>} : memref<512x128xf32, #tpu.memory_space<vmem>>, vector<512x128xf32>,
    } else {
    }
    return
  }
  func.func @transform_0(%arg0: i32, %arg1: i32) -> (i32, i32) {
    %c0_i32 = arith.constant 0 : i32
    return %arg0, %arg1 : i32, i32
  }
  func.func @transform_1(%arg0: i32, %arg1: i32) -> (i32, i32) {
    %c0_i32 = arith.constant 0 : i32
    %c0_i32_0 = arith.constant 0 : i32
    return %arg1, %c0_i32 : i32, i32
  }
  func.func @transform_2(%arg0: i32, %arg1: i32) -> (i32, i32) {
    %c0_i32 = arith.constant 0 : i32
    %c0_i32_0 = arith.constant 0 : i32
    %c0_i32_1 = arith.constant 0 : i32
    return %c0_i32, %c0_i32_0 : i32, i32
  }
  func.func @transform_3(%arg0: i32, %arg1: i32) -> (i32, i32) {
    %c0_i32 = arith.constant 0 : i32
    %c0_i32_0 = arith.constant 0 : i32
    %c0_i32_1 = arith.constant 0 : i32
    return %c0_i32, %c0_i32_0 : i32, i32
  }
  func.func @transform_4(%arg0: i32, %arg1: i32) -> (i32, i32) {
    %c0_i32 = arith.constant 0 : i32
    %c0_i32_0 = arith.constant 0 : i32
    return %arg0, %c0_i32 : i32, i32
  }
}

</mosaic_0001>

<llo_original>
// kernel: _lambda_.12
$region0: #{_lambda_.12}
  #allocation0 [shape = 'u32[]', space=smem, size = 0x4, offset = 0x4, fixed_abs, tag = 'smem constant byte address 0x4 - core index']
  #allocation1 [shape = 'u32[144,128]{1,0:T(1,128)}', space=vmem, size = 0x12000, scoped, tag = 'internal scratch']
  #allocation2 [shape = 'f32[512,128]{1,0:T(8,128)}', space=vmem, size = 0x40000, scoped, tag = 'scratch operand']
  %s0 = inlined_call_operand.vmem [shape: bf16[2048,48], index: 0, kind: input, shape index: {}]
  %s1 = inlined_call_operand.hbm [shape: bf16[48,128], index: 1, kind: input, shape index: {}]
  %s2 = inlined_call_operand.hbm [shape: f32[1,128], index: 2, kind: input, shape index: {}]
  %s3 = inlined_call_operand.hbm [shape: f32[1,128], index: 3, kind: input, shape index: {}]
  %s4 = inlined_call_operand.vmem [shape: f32[2048,128], index: 4, kind: output, shape index: {}]
  %s5 = sld [smem:[#allocation0]]
  $region69: #{_lambda_.12} parent=0
    _
  %s7 = ssub.s32 1, %s5
  %s8 = scalar_select 0, %s7, %s5
  $region1: #{_lambda_.12} parent=0
    #allocation3 [shape = 'u8[12288]{0}', space=vmem, size = 0x3000, scoped, tag = 'input window, operand 1, single buffered']
    #allocation4 [shape = 's32[2]{0}', space=sflag, size = 0x8, scoped, tag = 'scoped memory for _lambda_.12']
    #allocation5 [shape = 'u8[512]{0}', space=vmem, size = 0x400, scoped, tag = 'input window, operand 2, single buffered']
    #allocation6 [shape = 's32[1]{0}', space=sflag, size = 0x4, scoped, tag = 'scoped memory for _lambda_.12']
    #allocation7 [shape = 'u8[512]{0}', space=vmem, size = 0x400, scoped, tag = 'input window, operand 3, single buffered']
    %9 = vsyncpa [#allocation4], 0
    %10 = vsyncpa [#allocation6], 0
    loop: start=0, step=1, limit=6
    $region2: #{_lambda_.12} parent=1 // loop_pre_header
      _
    $region3: #{_lambda_.12} parent=1 // loop_header
      %s12 = sphi 0, %s16
      %p13 = scmp.ge.s32.totalorder %s12, 6
      %s19 = sphi 0, %s31
      %s20 = sphi 0, %s27
      %s21 = sphi 0, %s19
      %s22 = sphi 0, %s20
      %s23 = sphi 0, %s21
      %s24 = sphi 0, %s22
      %s36 = sphi 0, %s38
      %s39 = sphi 0, %s36
      %s40 = sphi 0, %s39
      %s56 = sphi 0, %s40
      %s62 = sphi 0, %s64
      %s65 = sphi 0, %s62
      %s66 = sphi 0, %s65
      %s82 = sphi 0, %s66
      %s86 = sphi 0, %s86
      %s88 = sphi 0, %s86
      %s89 = sphi 0, %s88
      %s103 = sphi 0, %s89
      %s107 = sphi 0, %s107
      %s109 = sphi 0, %s107
      %s110 = sphi 0, %s109
      %s124 = sphi 0, %s110
      %s130 = sphi 0, %s132
      %s133 = sphi 0, %s130
      %s134 = sphi 0, %s133
      %s150 = sphi 0, %s134
    $region4: #{_lambda_.12} parent=1 // loop_header_branch
      %15 = sbr.rel (%p13) target = $region8
    $region5: #{_lambda_.12} parent=1 // loop_body
      %s17 = ssub.s32 %s12, 1
      %s18 = ssub.s32 %s12, 2
      %s25 = sadd.s32 1, %s20
      %p26 = scmp.ge.s32.totalorder %s25, 1
      %s27 = scalar_select %p26, 0, %s25
      %s28 = sadd.s32 1, %s19
      %s29 = scalar_select %p26, %s28, %s19
      %p30 = scmp.ge.s32.totalorder %s29, 4
      %s31 = scalar_select %p30, 0, %s29
      %s32 = ssub.s32 %s19, %s31
      %s33 = ssub.s32 %s20, %s27
      %s34 = sor.u32 %s32, %s33
      %p35 = scmp.eq.s32.totalorder %s34, 0
      %s37 = sadd.s32 %s36, 1
      %s38 = scalar_select %p35, %s36, %s37
      %p41 = pneg %p35
      %p42 = scmp.eq.s32.totalorder %s12, 3
      %p43 = por %p41, %p42
      %p44 = scmp.ne.s32.totalorder %s36, %s39
      %p45 = scmp.eq.s32.totalorder %s12, 0
      %p46 = por %p44, %p45
      %p47 = scmp.ne.s32.totalorder %s36, %s39
      %p48 = scmp.eq.s32.totalorder %s17, 3
      %p49 = por %p47, %p48
      %p50 = scmp.ne.s32.totalorder %s39, %s40
      %p51 = scmp.eq.s32.totalorder %s17, 0
      %p52 = por %p50, %p51
      %p53 = scmp.ne.s32.totalorder %s39, %s40
      %p54 = scmp.eq.s32.totalorder %s18, 3
      %p55 = por %p53, %p54
      %p57 = scmp.ne.s32.totalorder %s40, %s56
      %p58 = scmp.eq.s32.totalorder %s18, 0
      %p59 = por %p57, %p58
      %s60 = ssub.s32 %s20, %s27
      %p61 = scmp.eq.s32.totalorder %s60, 0
      %s63 = sadd.s32 %s62, 1
      %s64 = scalar_select %p61, %s62, %s63
      %p67 = pneg %p61
      %p68 = scmp.eq.s32.totalorder %s12, 3
      %p69 = por %p67, %p68
      %p70 = scmp.ne.s32.totalorder %s62, %s65
      %p71 = scmp.eq.s32.totalorder %s12, 0
      %p72 = por %p70, %p71
      %p73 = scmp.ne.s32.totalorder %s62, %s65
      %p74 = scmp.eq.s32.totalorder %s17, 3
      %p75 = por %p73, %p74
      %p76 = scmp.ne.s32.totalorder %s65, %s66
      %p77 = scmp.eq.s32.totalorder %s17, 0
      %p78 = por %p76, %p77
      %p79 = scmp.ne.s32.totalorder %s65, %s66
      %p80 = scmp.eq.s32.totalorder %s18, 3
      %p81 = por %p79, %p80
      %p83 = scmp.ne.s32.totalorder %s66, %s82
      %p84 = scmp.eq.s32.totalorder %s18, 0
      %p85 = por %p83, %p84
      %s87 = sadd.s32 %s86, 1
      %p90 = scmp.eq.s32.totalorder %s12, 3
      %p91 = scmp.ne.s32.totalorder %s86, %s88
      %p92 = scmp.eq.s32.totalorder %s12, 0
      %p93 = por %p91, %p92
      %p94 = scmp.ne.s32.totalorder %s86, %s88
      %p95 = scmp.eq.s32.totalorder %s17, 3
      %p96 = por %p94, %p95
      %p97 = scmp.ne.s32.totalorder %s88, %s89
      %p98 = scmp.eq.s32.totalorder %s17, 0
      %p99 = por %p97, %p98
      %p100 = scmp.ne.s32.totalorder %s88, %s89
      %p101 = scmp.eq.s32.totalorder %s18, 3
      %p102 = por %p100, %p101
      %p104 = scmp.ne.s32.totalorder %s89, %s103
      %p105 = scmp.eq.s32.totalorder %s18, 0
      %p106 = por %p104, %p105
      %s108 = sadd.s32 %s107, 1
      %p111 = scmp.eq.s32.totalorder %s12, 3
      %p112 = scmp.ne.s32.totalorder %s107, %s109
      %p113 = scmp.eq.s32.totalorder %s12, 0
      %p114 = por %p112, %p113
      %p115 = scmp.ne.s32.totalorder %s107, %s109
      %p116 = scmp.eq.s32.totalorder %s17, 3
      %p117 = por %p115, %p116
      %p118 = scmp.ne.s32.totalorder %s109, %s110
      %p119 = scmp.eq.s32.totalorder %s17, 0
      %p120 = por %p118, %p119
      %p121 = scmp.ne.s32.totalorder %s109, %s110
      %p122 = scmp.eq.s32.totalorder %s18, 3
      %p123 = por %p121, %p122
      %p125 = scmp.ne.s32.totalorder %s110, %s124
      %p126 = scmp.eq.s32.totalorder %s18, 0
      %p127 = por %p125, %p126
      %s128 = ssub.s32 %s19, %s31
      %p129 = scmp.eq.s32.totalorder %s128, 0
      %s131 = sadd.s32 %s130, 1
      %s132 = scalar_select %p129, %s130, %s131
      %p135 = pneg %p129
      %p136 = scmp.eq.s32.totalorder %s12, 3
      %p137 = por %p135, %p136
      %p138 = scmp.ne.s32.totalorder %s130, %s133
      %p139 = scmp.eq.s32.totalorder %s12, 0
      %p140 = por %p138, %p139
      %p141 = scmp.ne.s32.totalorder %s130, %s133
      %p142 = scmp.eq.s32.totalorder %s17, 3
      %p143 = por %p141, %p142
      %p144 = scmp.ne.s32.totalorder %s133, %s134
      %p145 = scmp.eq.s32.totalorder %s17, 0
      %p146 = por %p144, %p145
      %p147 = scmp.ne.s32.totalorder %s133, %s134
      %p148 = scmp.eq.s32.totalorder %s18, 3
      %p149 = por %p147, %p148
      %p151 = scmp.ne.s32.totalorder %s134, %s150
      %p152 = scmp.eq.s32.totalorder %s18, 0
      %p153 = por %p151, %p152
      %p154 = scmp.le.s32.totalorder 1, %s12
      %p155 = scmp.lt.s32.totalorder %s12, 5
      %p156 = pnand %p154, %p155
      %p157 = pneg %p156
      // Predicated region
      $region9: #{_lambda_.12} parent=5 // pred_check
        _
      $region10: #{_lambda_.12} parent=5 // pred_check_branch
        %159 = sbr.rel (%p156) target = $region12
      $region11: #{_lambda_.12} parent=5 // pred_region
        %s160 = ssub.s32 %s12, 1
        // Predicated region
        $region13: #{_lambda_.12} parent=11 // pred_check
          %p161 = pneg %p78
        $region14: #{_lambda_.12} parent=11 // pred_check_branch
          %163 = sbr.rel (%p161) target = $region16
        $region15: #{_lambda_.12} parent=11 // pred_region
          %s164 = smul.u32 6, %s22
          %s166 = ssub.s32 384, 384
          %167 = vsyncadd [#allocation4], %s166
          %s168 = smul.addr %s164, 64
          %s169 = scalar_lea.hbm %s1, %s168
          %s170 = sshll.u32 [#allocation3], 4
          %s171 = int_to_ptr.vmem [resolvable:$true] %s170
          %176 = dma.hbm_to_vmem [thread:$0]  %s169, 384, %s171, [#allocation4], 64, 64, 4
        $region16: #{_lambda_.12} parent=11 // pred_fallthru
          _
        // Predicated region
        $region17: #{_lambda_.12} parent=11 // pred_check
          %p177 = pneg %p99
        $region18: #{_lambda_.12} parent=11 // pred_check_branch
          %179 = sbr.rel (%p177) target = $region20
        $region19: #{_lambda_.12} parent=11 // pred_region
          %s181 = ssub.s32 16, 16
          %182 = vsyncadd [#allocation6], %s181
          %s184 = sshll.u32 [#allocation5], 4
          %s185 = int_to_ptr.vmem [resolvable:$true] %s184
          %187 = dma.hbm_to_vmem [thread:$0]  %s2, 16, %s185, [#allocation6]
        $region20: #{_lambda_.12} parent=11 // pred_fallthru
          _
        // Predicated region
        $region21: #{_lambda_.12} parent=11 // pred_check
          %p188 = pneg %p120
        $region22: #{_lambda_.12} parent=11 // pred_check_branch
          %190 = sbr.rel (%p188) target = $region24
        $region23: #{_lambda_.12} parent=11 // pred_region
          %s192 = ssub.s32 16, 16
          %193 = vsyncadd [#allocation6], %s192
          %s195 = sshll.u32 [#allocation7], 4
          %s196 = int_to_ptr.vmem [resolvable:$true] %s195
          %198 = dma.hbm_to_vmem [thread:$0]  %s3, 16, %s196, [#allocation6]
        $region24: #{_lambda_.12} parent=11 // pred_fallthru
          _
      $region12: #{_lambda_.12} parent=5 // pred_fallthru
        _
      %p199 = scmp.lt.s32.totalorder %s12, 4
      // Predicated region
      $region25: #{_lambda_.12} parent=5 // pred_check
        %p200 = pneg %p199
      $region26: #{_lambda_.12} parent=5 // pred_check_branch
        %202 = sbr.rel (%p200) target = $region28
      $region27: #{_lambda_.12} parent=5 // pred_region
        // Predicated region
        $region29: #{_lambda_.12} parent=27 // pred_check
          %p203 = pneg %p46
        $region30: #{_lambda_.12} parent=27 // pred_check_branch
          %205 = sbr.rel (%p203) target = $region32
        $region31: #{_lambda_.12} parent=27 // pred_region
          %s206 = smul.u32 64, %s19
          %p207 = scmp.lt.s32.totalorder %s206, 255
          %s208 = scalar_select %p207, %s206, 255
          %p209 = scmp.lt.s32.totalorder %s20, 0
          %s210 = scalar_select %p209, %s20, 0
          %s211 = sadd.s32 %s210, %s208
          %s212 = smul.addr %s211, 4
          %s213 = scalar_lea.vmem %s0, %s212
          %s214 = smul.u32 64, %s19
        $region32: #{_lambda_.12} parent=27 // pred_fallthru
          _
      $region28: #{_lambda_.12} parent=5 // pred_fallthru
        _
      %p215 = scmp.le.s32.totalorder 1, %s12
      %p216 = scmp.lt.s32.totalorder %s12, 5
      %p217 = pnand %p215, %p216
      %p218 = pneg %p217
      // Predicated region
      $region33: #{_lambda_.12} parent=5 // pred_check
        _
      $region34: #{_lambda_.12} parent=5 // pred_check_branch
        %220 = sbr.rel (%p217) target = $region36
      $region35: #{_lambda_.12} parent=5 // pred_region
        %s221 = ssub.s32 %s12, 1
        // Predicated region
        $region37: #{_lambda_.12} parent=35 // pred_check
          %p222 = pneg %p78
        $region38: #{_lambda_.12} parent=35 // pred_check_branch
          %224 = sbr.rel (%p222) target = $region40
        $region39: #{_lambda_.12} parent=35 // pred_region
          %225 = dma.done [#allocation4], 384
        $region40: #{_lambda_.12} parent=35 // pred_fallthru
          _
        // Predicated region
        $region41: #{_lambda_.12} parent=35 // pred_check
          %p226 = pneg %p99
        $region42: #{_lambda_.12} parent=35 // pred_check_branch
          %228 = sbr.rel (%p226) target = $region44
        $region43: #{_lambda_.12} parent=35 // pred_region
          %229 = dma.done [#allocation6], 16
        $region44: #{_lambda_.12} parent=35 // pred_fallthru
          _
        // Predicated region
        $region45: #{_lambda_.12} parent=35 // pred_check
          %p230 = pneg %p120
        $region46: #{_lambda_.12} parent=35 // pred_check_branch
          %232 = sbr.rel (%p230) target = $region48
        $region47: #{_lambda_.12} parent=35 // pred_region
          %233 = dma.done [#allocation6], 16
        $region48: #{_lambda_.12} parent=35 // pred_fallthru
          _
        %s234 = smul.u32 64, %s21
        %p235 = scmp.lt.s32.totalorder %s234, 255
        %s236 = scalar_select %p235, %s234, 255
        %p237 = scmp.lt.s32.totalorder %s22, 0
        %s238 = scalar_select %p237, %s22, 0
        %s239 = sadd.s32 %s238, %s236
        %s240 = smul.addr %s239, 4
        %s241 = scalar_lea.vmem %s0, %s240
        %p242 = pneg %p52
        %p243 = pneg %p49
        %p244 = pneg %p78
        %p245 = pneg %p75
        %p246 = pneg %p99
        %p247 = pneg %p96
        %p248 = pneg %p120
        %p249 = pneg %p117
        %p250 = pneg %p146
        %p251 = pneg %p143
        %s252 = smul.u32 64, %s21
        %p253 = scmp.lt.s32.totalorder %s252, 255
        %s254 = scalar_select %p253, %s252, 255
        %s255 = smul.addr %s254, 8
        %s256 = scalar_lea.vmem %s4, %s255
        %s257 = smul.u32 64, %s21
        %p258 = scmp.lt.s32.totalorder %s257, 255
        %s259 = scalar_select %p258, %s257, 255
        %p260 = scmp.lt.s32.totalorder %s22, 0
        %s261 = scalar_select %p260, %s22, 0
        %s262 = sadd.s32 %s261, %s259
        %s263 = smul.addr %s262, 4
        %s264 = scalar_lea.vmem %s0, %s263
        %s265 = smul.u32 64, %s21
        %s266 = smul.u32 6, %s22
        %s267 = smul.u32 64, %s21
        %p268 = scmp.lt.s32.totalorder %s267, 255
        %s269 = scalar_select %p268, %s267, 255
        %s270 = smul.addr %s269, 8
        %s271 = scalar_lea.vmem %s4, %s270
        %s272 = smul.u32 64, %s21
        %p274 = scmp.eq.s32.totalorder %s22, 0
        // Predicated region
        $region49: #{_lambda_.12} parent=35 // pred_check
          %p275 = pneg %p274
        $region50: #{_lambda_.12} parent=35 // pred_check_branch
          %277 = sbr.rel (%p275) target = $region52
        $region51: #{_lambda_.12} parent=35 // pred_region
          %278 = vst [vmem:[#allocation2] sm:$0xff] 0.0
          %279 = vst [vmem:[#allocation2 + $0x8] sm:$0xff] 0.0
          %280 = vst [vmem:[#allocation2 + $0x10] sm:$0xff] 0.0
          %281 = vst [vmem:[#allocation2 + $0x18] sm:$0xff] 0.0
          %282 = vst [vmem:[#allocation2 + $0x20] sm:$0xff] 0.0
          %283 = vst [vmem:[#allocation2 + $0x28] sm:$0xff] 0.0
          %284 = vst [vmem:[#allocation2 + $0x30] sm:$0xff] 0.0
          %285 = vst [vmem:[#allocation2 + $0x38] sm:$0xff] 0.0
          %286 = vst [vmem:[#allocation2 + $0x40] sm:$0xff] 0.0
          %287 = vst [vmem:[#allocation2 + $0x48] sm:$0xff] 0.0
          %288 = vst [vmem:[#allocation2 + $0x50] sm:$0xff] 0.0
          %289 = vst [vmem:[#allocation2 + $0x58] sm:$0xff] 0.0
          %290 = vst [vmem:[#allocation2 + $0x60] sm:$0xff] 0.0
          %291 = vst [vmem:[#allocation2 + $0x68] sm:$0xff] 0.0
          %292 = vst [vmem:[#allocation2 + $0x70] sm:$0xff] 0.0
          %293 = vst [vmem:[#allocation2 + $0x78] sm:$0xff] 0.0
          %294 = vst [vmem:[#allocation2 + $0x80] sm:$0xff] 0.0
          %295 = vst [vmem:[#allocation2 + $0x88] sm:$0xff] 0.0
          %296 = vst [vmem:[#allocation2 + $0x90] sm:$0xff] 0.0
          %297 = vst [vmem:[#allocation2 + $0x98] sm:$0xff] 0.0
          %298 = vst [vmem:[#allocation2 + $0xa0] sm:$0xff] 0.0
          %299 = vst [vmem:[#allocation2 + $0xa8] sm:$0xff] 0.0
          %300 = vst [vmem:[#allocation2 + $0xb0] sm:$0xff] 0.0
          %301 = vst [vmem:[#allocation2 + $0xb8] sm:$0xff] 0.0
          %302 = vst [vmem:[#allocation2 + $0xc0] sm:$0xff] 0.0
          %303 = vst [vmem:[#allocation2 + $0xc8] sm:$0xff] 0.0
          %304 = vst [vmem:[#allocation2 + $0xd0] sm:$0xff] 0.0
          %305 = vst [vmem:[#allocation2 + $0xd8] sm:$0xff] 0.0
          %306 = vst [vmem:[#allocation2 + $0xe0] sm:$0xff] 0.0
          %307 = vst [vmem:[#allocation2 + $0xe8] sm:$0xff] 0.0
          %308 = vst [vmem:[#allocation2 + $0xf0] sm:$0xff] 0.0
          %309 = vst [vmem:[#allocation2 + $0xf8] sm:$0xff] 0.0
          %310 = vst [vmem:[#allocation2 + $0x100] sm:$0xff] 0.0
          %311 = vst [vmem:[#allocation2 + $0x108] sm:$0xff] 0.0
          %312 = vst [vmem:[#allocation2 + $0x110] sm:$0xff] 0.0
          %313 = vst [vmem:[#allocation2 + $0x118] sm:$0xff] 0.0
          %314 = vst [vmem:[#allocation2 + $0x120] sm:$0xff] 0.0
          %315 = vst [vmem:[#allocation2 + $0x128] sm:$0xff] 0.0
          %316 = vst [vmem:[#allocation2 + $0x130] sm:$0xff] 0.0
          %317 = vst [vmem:[#allocation2 + $0x138] sm:$0xff] 0.0
          %318 = vst [vmem:[#allocation2 + $0x140] sm:$0xff] 0.0
          %319 = vst [vmem:[#allocation2 + $0x148] sm:$0xff] 0.0
          %320 = vst [vmem:[#allocation2 + $0x150] sm:$0xff] 0.0
          %321 = vst [vmem:[#allocation2 + $0x158] sm:$0xff] 0.0
          %322 = vst [vmem:[#allocation2 + $0x160] sm:$0xff] 0.0
          %323 = vst [vmem:[#allocation2 + $0x168] sm:$0xff] 0.0
          %324 = vst [vmem:[#allocation2 + $0x170] sm:$0xff] 0.0
          %325 = vst [vmem:[#allocation2 + $0x178] sm:$0xff] 0.0
          %326 = vst [vmem:[#allocation2 + $0x180] sm:$0xff] 0.0
          %327 = vst [vmem:[#allocation2 + $0x188] sm:$0xff] 0.0
          %328 = vst [vmem:[#allocation2 + $0x190] sm:$0xff] 0.0
          %329 = vst [vmem:[#allocation2 + $0x198] sm:$0xff] 0.0
          %330 = vst [vmem:[#allocation2 + $0x1a0] sm:$0xff] 0.0
          %331 = vst [vmem:[#allocation2 + $0x1a8] sm:$0xff] 0.0
          %332 = vst [vmem:[#allocation2 + $0x1b0] sm:$0xff] 0.0
          %333 = vst [vmem:[#allocation2 + $0x1b8] sm:$0xff] 0.0
          %334 = vst [vmem:[#allocation2 + $0x1c0] sm:$0xff] 0.0
          %335 = vst [vmem:[#allocation2 + $0x1c8] sm:$0xff] 0.0
          %336 = vst [vmem:[#allocation2 + $0x1d0] sm:$0xff] 0.0
          %337 = vst [vmem:[#allocation2 + $0x1d8] sm:$0xff] 0.0
          %338 = vst [vmem:[#allocation2 + $0x1e0] sm:$0xff] 0.0
          %339 = vst [vmem:[#allocation2 + $0x1e8] sm:$0xff] 0.0
          %340 = vst [vmem:[#allocation2 + $0x1f0] sm:$0xff] 0.0
          %341 = vst [vmem:[#allocation2 + $0x1f8] sm:$0xff] 0.0
        $region52: #{_lambda_.12} parent=35 // pred_fallthru
          _
        %v342 = vld [vmem:[#allocation2] sm:$0xff]
        %v343 = vld [vmem:[#allocation2 + $0x8] sm:$0xff]
        %v344 = vld [vmem:[#allocation2 + $0x10] sm:$0xff]
        %v345 = vld [vmem:[#allocation2 + $0x18] sm:$0xff]
        %v346 = vld [vmem:[#allocation2 + $0x20] sm:$0xff]
        %v347 = vld [vmem:[#allocation2 + $0x28] sm:$0xff]
        %v348 = vld [vmem:[#allocation2 + $0x30] sm:$0xff]
        %v349 = vld [vmem:[#allocation2 + $0x38] sm:$0xff]
        %v350 = vld [vmem:[#allocation2 + $0x40] sm:$0xff]
        %v351 = vld [vmem:[#allocation2 + $0x48] sm:$0xff]
        %v352 = vld [vmem:[#allocation2 + $0x50] sm:$0xff]
        %v353 = vld [vmem:[#allocation2 + $0x58] sm:$0xff]
        %v354 = vld [vmem:[#allocation2 + $0x60] sm:$0xff]
        %v355 = vld [vmem:[#allocation2 + $0x68] sm:$0xff]
        %v356 = vld [vmem:[#allocation2 + $0x70] sm:$0xff]
        %v357 = vld [vmem:[#allocation2 + $0x78] sm:$0xff]
        %v358 = vld [vmem:[#allocation2 + $0x80] sm:$0xff]
        %v359 = vld [vmem:[#allocation2 + $0x88] sm:$0xff]
        %v360 = vld [vmem:[#allocation2 + $0x90] sm:$0xff]
        %v361 = vld [vmem:[#allocation2 + $0x98] sm:$0xff]
        %v362 = vld [vmem:[#allocation2 + $0xa0] sm:$0xff]
        %v363 = vld [vmem:[#allocation2 + $0xa8] sm:$0xff]
        %v364 = vld [vmem:[#allocation2 + $0xb0] sm:$0xff]
        %v365 = vld [vmem:[#allocation2 + $0xb8] sm:$0xff]
        %v366 = vld [vmem:[#allocation2 + $0xc0] sm:$0xff]
        %v367 = vld [vmem:[#allocation2 + $0xc8] sm:$0xff]
        %v368 = vld [vmem:[#allocation2 + $0xd0] sm:$0xff]
        %v369 = vld [vmem:[#allocation2 + $0xd8] sm:$0xff]
        %v370 = vld [vmem:[#allocation2 + $0xe0] sm:$0xff]
        %v371 = vld [vmem:[#allocation2 + $0xe8] sm:$0xff]
        %v372 = vld [vmem:[#allocation2 + $0xf0] sm:$0xff]
        %v373 = vld [vmem:[#allocation2 + $0xf8] sm:$0xff]
        %v374 = vld [vmem:[#allocation2 + $0x100] sm:$0xff]
        %v375 = vld [vmem:[#allocation2 + $0x108] sm:$0xff]
        %v376 = vld [vmem:[#allocation2 + $0x110] sm:$0xff]
        %v377 = vld [vmem:[#allocation2 + $0x118] sm:$0xff]
        %v378 = vld [vmem:[#allocation2 + $0x120] sm:$0xff]
        %v379 = vld [vmem:[#allocation2 + $0x128] sm:$0xff]
        %v380 = vld [vmem:[#allocation2 + $0x130] sm:$0xff]
        %v381 = vld [vmem:[#allocation2 + $0x138] sm:$0xff]
        %v382 = vld [vmem:[#allocation2 + $0x140] sm:$0xff]
        %v383 = vld [vmem:[#allocation2 + $0x148] sm:$0xff]
        %v384 = vld [vmem:[#allocation2 + $0x150] sm:$0xff]
        %v385 = vld [vmem:[#allocation2 + $0x158] sm:$0xff]
        %v386 = vld [vmem:[#allocation2 + $0x160] sm:$0xff]
        %v387 = vld [vmem:[#allocation2 + $0x168] sm:$0xff]
        %v388 = vld [vmem:[#allocation2 + $0x170] sm:$0xff]
        %v389 = vld [vmem:[#allocation2 + $0x178] sm:$0xff]
        %v390 = vld [vmem:[#allocation2 + $0x180] sm:$0xff]
        %v391 = vld [vmem:[#allocation2 + $0x188] sm:$0xff]
        %v392 = vld [vmem:[#allocation2 + $0x190] sm:$0xff]
        %v393 = vld [vmem:[#allocation2 + $0x198] sm:$0xff]
        %v394 = vld [vmem:[#allocation2 + $0x1a0] sm:$0xff]
        %v395 = vld [vmem:[#allocation2 + $0x1a8] sm:$0xff]
        %v396 = vld [vmem:[#allocation2 + $0x1b0] sm:$0xff]
        %v397 = vld [vmem:[#allocation2 + $0x1b8] sm:$0xff]
        %v398 = vld [vmem:[#allocation2 + $0x1c0] sm:$0xff]
        %v399 = vld [vmem:[#allocation2 + $0x1c8] sm:$0xff]
        %v400 = vld [vmem:[#allocation2 + $0x1d0] sm:$0xff]
        %v401 = vld [vmem:[#allocation2 + $0x1d8] sm:$0xff]
        %v402 = vld [vmem:[#allocation2 + $0x1e0] sm:$0xff]
        %v403 = vld [vmem:[#allocation2 + $0x1e8] sm:$0xff]
        %v404 = vld [vmem:[#allocation2 + $0x1f0] sm:$0xff]
        %v405 = vld [vmem:[#allocation2 + $0x1f8] sm:$0xff]
        %v406 = vld [vmem:[%s264] sm:$0xf]
        %v407 = vld [vmem:[%s264 + $0x4] sm:$0xf]
        %v408 = vld [vmem:[%s264 + $0x8] sm:$0xf]
        %v409 = vld [vmem:[%s264 + $0xc] sm:$0xf]
        %v410 = vld [vmem:[%s264 + $0x10] sm:$0xf]
        %v411 = vld [vmem:[%s264 + $0x14] sm:$0xf]
        %v412 = vld [vmem:[%s264 + $0x18] sm:$0xf]
        %v413 = vld [vmem:[%s264 + $0x1c] sm:$0xf]
        %v414 = vld [vmem:[%s264 + $0x20] sm:$0xf]
        %v415 = vld [vmem:[%s264 + $0x24] sm:$0xf]
        %v416 = vld [vmem:[%s264 + $0x28] sm:$0xf]
        %v417 = vld [vmem:[%s264 + $0x2c] sm:$0xf]
        %v418 = vld [vmem:[%s264 + $0x30] sm:$0xf]
        %v419 = vld [vmem:[%s264 + $0x34] sm:$0xf]
        %v420 = vld [vmem:[%s264 + $0x38] sm:$0xf]
        %v421 = vld [vmem:[%s264 + $0x3c] sm:$0xf]
        %v422 = vld [vmem:[%s264 + $0x40] sm:$0xf]
        %v423 = vld [vmem:[%s264 + $0x44] sm:$0xf]
        %v424 = vld [vmem:[%s264 + $0x48] sm:$0xf]
        %v425 = vld [vmem:[%s264 + $0x4c] sm:$0xf]
        %v426 = vld [vmem:[%s264 + $0x50] sm:$0xf]
        %v427 = vld [vmem:[%s264 + $0x54] sm:$0xf]
        %v428 = vld [vmem:[%s264 + $0x58] sm:$0xf]
        %v429 = vld [vmem:[%s264 + $0x5c] sm:$0xf]
        %v430 = vld [vmem:[%s264 + $0x60] sm:$0xf]
        %v431 = vld [vmem:[%s264 + $0x64] sm:$0xf]
        %v432 = vld [vmem:[%s264 + $0x68] sm:$0xf]
        %v433 = vld [vmem:[%s264 + $0x6c] sm:$0xf]
        %v434 = vld [vmem:[%s264 + $0x70] sm:$0xf]
        %v435 = vld [vmem:[%s264 + $0x74] sm:$0xf]
        %v436 = vld [vmem:[%s264 + $0x78] sm:$0xf]
        %v437 = vld [vmem:[%s264 + $0x7c] sm:$0xf]
        %v438 = vld [vmem:[%s264 + $0x80] sm:$0xf]
        %v439 = vld [vmem:[%s264 + $0x84] sm:$0xf]
        %v440 = vld [vmem:[%s264 + $0x88] sm:$0xf]
        %v441 = vld [vmem:[%s264 + $0x8c] sm:$0xf]
        %v442 = vld [vmem:[%s264 + $0x90] sm:$0xf]
        %v443 = vld [vmem:[%s264 + $0x94] sm:$0xf]
        %v444 = vld [vmem:[%s264 + $0x98] sm:$0xf]
        %v445 = vld [vmem:[%s264 + $0x9c] sm:$0xf]
        %v446 = vld [vmem:[%s264 + $0xa0] sm:$0xf]
        %v447 = vld [vmem:[%s264 + $0xa4] sm:$0xf]
        %v448 = vld [vmem:[%s264 + $0xa8] sm:$0xf]
        %v449 = vld [vmem:[%s264 + $0xac] sm:$0xf]
        %v450 = vld [vmem:[%s264 + $0xb0] sm:$0xf]
        %v451 = vld [vmem:[%s264 + $0xb4] sm:$0xf]
        %v452 = vld [vmem:[%s264 + $0xb8] sm:$0xf]
        %v453 = vld [vmem:[%s264 + $0xbc] sm:$0xf]
        %v454 = vld [vmem:[%s264 + $0xc0] sm:$0xf]
        %v455 = vld [vmem:[%s264 + $0xc4] sm:$0xf]
        %v456 = vld [vmem:[%s264 + $0xc8] sm:$0xf]
        %v457 = vld [vmem:[%s264 + $0xcc] sm:$0xf]
        %v458 = vld [vmem:[%s264 + $0xd0] sm:$0xf]
        %v459 = vld [vmem:[%s264 + $0xd4] sm:$0xf]
        %v460 = vld [vmem:[%s264 + $0xd8] sm:$0xf]
        %v461 = vld [vmem:[%s264 + $0xdc] sm:$0xf]
        %v462 = vld [vmem:[%s264 + $0xe0] sm:$0xf]
        %v463 = vld [vmem:[%s264 + $0xe4] sm:$0xf]
        %v464 = vld [vmem:[%s264 + $0xe8] sm:$0xf]
        %v465 = vld [vmem:[%s264 + $0xec] sm:$0xf]
        %v466 = vld [vmem:[%s264 + $0xf0] sm:$0xf]
        %v467 = vld [vmem:[%s264 + $0xf4] sm:$0xf]
        %v468 = vld [vmem:[%s264 + $0xf8] sm:$0xf]
        %v469 = vld [vmem:[%s264 + $0xfc] sm:$0xf]
        %v470 = vld [vmem:[#allocation3] sm:$0xf]
        %v471 = vld [vmem:[#allocation3 + $0x4] sm:$0xf]
        %v472 = vld [vmem:[#allocation3 + $0x8] sm:$0xf]
        %v473 = vld [vmem:[#allocation3 + $0xc] sm:$0xf]
        %v474 = vld [vmem:[#allocation3 + $0x10] sm:$0xf]
        %v475 = vld [vmem:[#allocation3 + $0x14] sm:$0xf]
        %v540 = vunpack.c.l.b16 %v406
        %v541 = vunpack.c.l.b16 %v407
        %v542 = vunpack.c.l.b16 %v408
        %v543 = vunpack.c.l.b16 %v409
        %v544 = vunpack.c.l.b16 %v410
        %v545 = vunpack.c.l.b16 %v411
        %v546 = vunpack.c.l.b16 %v412
        %v547 = vunpack.c.l.b16 %v413
        %v548 = vunpack.c.l.b16 %v414
        %v549 = vunpack.c.l.b16 %v415
        %v550 = vunpack.c.l.b16 %v416
        %v551 = vunpack.c.l.b16 %v417
        %v552 = vunpack.c.l.b16 %v418
        %v553 = vunpack.c.l.b16 %v419
        %v554 = vunpack.c.l.b16 %v420
        %v555 = vunpack.c.l.b16 %v421
        %v556 = vunpack.c.l.b16 %v422
        %v557 = vunpack.c.l.b16 %v423
        %v558 = vunpack.c.l.b16 %v424
        %v559 = vunpack.c.l.b16 %v425
        %v560 = vunpack.c.l.b16 %v426
        %v561 = vunpack.c.l.b16 %v427
        %v562 = vunpack.c.l.b16 %v428
        %v563 = vunpack.c.l.b16 %v429
        %v564 = vunpack.c.l.b16 %v430
        %v565 = vunpack.c.l.b16 %v431
        %v566 = vunpack.c.l.b16 %v432
        %v567 = vunpack.c.l.b16 %v433
        %v568 = vunpack.c.l.b16 %v434
        %v569 = vunpack.c.l.b16 %v435
        %v570 = vunpack.c.l.b16 %v436
        %v571 = vunpack.c.l.b16 %v437
        %v572 = vunpack.c.l.b16 %v438
        %v573 = vunpack.c.l.b16 %v439
        %v574 = vunpack.c.l.b16 %v440
        %v575 = vunpack.c.l.b16 %v441
        %v576 = vunpack.c.l.b16 %v442
        %v577 = vunpack.c.l.b16 %v443
        %v578 = vunpack.c.l.b16 %v444
        %v579 = vunpack.c.l.b16 %v445
        %v580 = vunpack.c.l.b16 %v446
        %v581 = vunpack.c.l.b16 %v447
        %v582 = vunpack.c.l.b16 %v448
        %v583 = vunpack.c.l.b16 %v449
        %v584 = vunpack.c.l.b16 %v450
        %v585 = vunpack.c.l.b16 %v451
        %v586 = vunpack.c.l.b16 %v452
        %v587 = vunpack.c.l.b16 %v453
        %v588 = vunpack.c.l.b16 %v454
        %v589 = vunpack.c.l.b16 %v455
        %v590 = vunpack.c.l.b16 %v456
        %v591 = vunpack.c.l.b16 %v457
        %v592 = vunpack.c.l.b16 %v458
        %v593 = vunpack.c.l.b16 %v459
        %v594 = vunpack.c.l.b16 %v460
        %v595 = vunpack.c.l.b16 %v461
        %v596 = vunpack.c.l.b16 %v462
        %v597 = vunpack.c.l.b16 %v463
        %v598 = vunpack.c.l.b16 %v464
        %v599 = vunpack.c.l.b16 %v465
        %v600 = vunpack.c.l.b16 %v466
        %v601 = vunpack.c.l.b16 %v467
        %v602 = vunpack.c.l.b16 %v468
        %v603 = vunpack.c.l.b16 %v469
        %v604 = vpack.c.b16 %v541, %v540
        %v605 = vpack.c.b16 %v543, %v542
        %v606 = vpack.c.b16 %v545, %v544
        %v607 = vpack.c.b16 %v547, %v546
        %v608 = vpack.c.b16 %v549, %v548
        %v609 = vpack.c.b16 %v551, %v550
        %v610 = vpack.c.b16 %v553, %v552
        %v611 = vpack.c.b16 %v555, %v554
        %v612 = vpack.c.b16 %v557, %v556
        %v613 = vpack.c.b16 %v559, %v558
        %v614 = vpack.c.b16 %v561, %v560
        %v615 = vpack.c.b16 %v563, %v562
        %v616 = vpack.c.b16 %v565, %v564
        %v617 = vpack.c.b16 %v567, %v566
        %v618 = vpack.c.b16 %v569, %v568
        %v619 = vpack.c.b16 %v571, %v570
        %v620 = vpack.c.b16 %v573, %v572
        %v621 = vpack.c.b16 %v575, %v574
        %v622 = vpack.c.b16 %v577, %v576
        %v623 = vpack.c.b16 %v579, %v578
        %v624 = vpack.c.b16 %v581, %v580
        %v625 = vpack.c.b16 %v583, %v582
        %v626 = vpack.c.b16 %v585, %v584
        %v627 = vpack.c.b16 %v587, %v586
        %v628 = vpack.c.b16 %v589, %v588
        %v629 = vpack.c.b16 %v591, %v590
        %v630 = vpack.c.b16 %v593, %v592
        %v631 = vpack.c.b16 %v595, %v594
        %v632 = vpack.c.b16 %v597, %v596
        %v633 = vpack.c.b16 %v599, %v598
        %v634 = vpack.c.b16 %v601, %v600
        %v635 = vpack.c.b16 %v603, %v602
        %v642 = vunpack.c.l.b16 %v470
        %v643 = vunpack.c.l.b16 %v471
        %v644 = vunpack.c.l.b16 %v472
        %v645 = vunpack.c.l.b16 %v473
        %v646 = vunpack.c.l.b16 %v474
        %v647 = vunpack.c.l.b16 %v475
        %v648 = vpack.c.b16 %v643, %v642
        %v649 = vpack.c.b16 %v645, %v644
        %v650 = vpack.c.b16 %v647, %v646
        %vm654 = vcmask 392192
        %v656 = vsel %vm654, %v604, 0
        %v659 = vsel %vm654, %v605, 0
        %v662 = vsel %vm654, %v606, 0
        %v665 = vsel %vm654, %v607, 0
        %v668 = vsel %vm654, %v608, 0
        %v671 = vsel %vm654, %v609, 0
        %v674 = vsel %vm654, %v610, 0
        %v677 = vsel %vm654, %v611, 0
        %v680 = vsel %vm654, %v612, 0
        %v683 = vsel %vm654, %v613, 0
        %v686 = vsel %vm654, %v614, 0
        %v689 = vsel %vm654, %v615, 0
        %v692 = vsel %vm654, %v616, 0
        %v695 = vsel %vm654, %v617, 0
        %v698 = vsel %vm654, %v618, 0
        %v701 = vsel %vm654, %v619, 0
        %v704 = vsel %vm654, %v620, 0
        %v707 = vsel %vm654, %v621, 0
        %v710 = vsel %vm654, %v622, 0
        %v713 = vsel %vm654, %v623, 0
        %v716 = vsel %vm654, %v624, 0
        %v719 = vsel %vm654, %v625, 0
        %v722 = vsel %vm654, %v626, 0
        %v725 = vsel %vm654, %v627, 0
        %v728 = vsel %vm654, %v628, 0
        %v731 = vsel %vm654, %v629, 0
        %v734 = vsel %vm654, %v630, 0
        %v737 = vsel %vm654, %v631, 0
        %v740 = vsel %vm654, %v632, 0
        %v743 = vsel %vm654, %v633, 0
        %v746 = vsel %vm654, %v634, 0
        %v749 = vsel %vm654, %v635, 0
        %751 = vmatprep.subr.bf16.mxu0 0
        %752 = vmatpush1.bf16.msra.mxu0 0
        %753 = vmatprep.subr.bf16.mxu0 0
        %754 = vmatpush1.bf16.msra.mxu0 0
        %755 = vmatprep.subr.bf16.mxu0 0
        %756 = vmatpush1.bf16.msra.mxu0 0
        %757 = vmatprep.subr.bf16.mxu0 0
        %758 = vmatpush1.bf16.msra.mxu0 0
        %759 = vmatprep.subr.bf16.mxu0 0
        %760 = vmatpush1.bf16.msra.mxu0 0
        %761 = vmatprep.subr.bf16.mxu0 0
        %762 = vmatpush1.bf16.msra.mxu0 %v650
        %763 = vmatprep.subr.bf16.mxu0 0
        %764 = vmatpush1.bf16.msra.mxu0 %v649
        %765 = vmatprep.subr.bf16.mxu0 0
        %766 = vmatpush1.bf16.msra.mxu0 %v648
        %767 = vmatprep.subr.bf16.mxu0 0
        %768 = vmatpush2.bf16.msra.mxu0 0
        %769 = vmatprep.subr.bf16.mxu0 0
        %770 = vmatpush2.bf16.msra.mxu0 0
        %771 = vmatprep.subr.bf16.mxu0 0
        %772 = vmatpush2.bf16.msra.mxu0 0
        %773 = vmatprep.subr.bf16.mxu0 0
        %774 = vmatpush2.bf16.msra.mxu0 0
        %775 = vmatprep.subr.bf16.mxu0 0
        %776 = vmatpush2.bf16.msra.mxu0 0
        %777 = vmatprep.subr.bf16.mxu0 0
        %778 = vmatpush2.bf16.msra.mxu0 0
        %779 = vmatprep.subr.bf16.mxu0 0
        %780 = vmatpush2.bf16.msra.mxu0 0
        %781 = vmatprep.subr.bf16.mxu0 0
        %782 = vmatpush2.bf16.msra.mxu0 0
        %783 = vmatprep.mubr.bf16.mxu0 0
        %784 = vmatmul.mubr.bf16.gmra.mxu0 %v656
        %v785 = vpop.f32.mrf.mxu0
        %v786 = vadd.f32 0.0, %v785
        %v787 = vpop.f32.mrf.mxu0
        %v788 = vpop.f32.mrf.mxu0
        %v789 = vadd.f32 0.0, %v788
        %v790 = vpop.f32.mrf.mxu0
        %791 = vmatprep.mubr.bf16.mxu0 0
        %792 = vmatmul.mubr.bf16.gmra.mxu0 %v659
        %v793 = vpop.f32.mrf.mxu0
        %v794 = vadd.f32 0.0, %v793
        %v795 = vpop.f32.mrf.mxu0
        %v796 = vpop.f32.mrf.mxu0
        %v797 = vadd.f32 0.0, %v796
        %v798 = vpop.f32.mrf.mxu0
        %799 = vmatprep.mubr.bf16.mxu0 0
        %800 = vmatmul.mubr.bf16.gmra.mxu0 %v662
        %v801 = vpop.f32.mrf.mxu0
        %v802 = vadd.f32 0.0, %v801
        %v803 = vpop.f32.mrf.mxu0
        %v804 = vpop.f32.mrf.mxu0
        %v805 = vadd.f32 0.0, %v804
        %v806 = vpop.f32.mrf.mxu0
        %807 = vmatprep.mubr.bf16.mxu0 0
        %808 = vmatmul.mubr.bf16.gmra.mxu0 %v665
        %v809 = vpop.f32.mrf.mxu0
        %v810 = vadd.f32 0.0, %v809
        %v811 = vpop.f32.mrf.mxu0
        %v812 = vpop.f32.mrf.mxu0
        %v813 = vadd.f32 0.0, %v812
        %v814 = vpop.f32.mrf.mxu0
        %815 = vmatprep.mubr.bf16.mxu0 0
        %816 = vmatmul.mubr.bf16.gmra.mxu0 %v668
        %v817 = vpop.f32.mrf.mxu0
        %v818 = vadd.f32 0.0, %v817
        %v819 = vpop.f32.mrf.mxu0
        %v820 = vpop.f32.mrf.mxu0
        %v821 = vadd.f32 0.0, %v820
        %v822 = vpop.f32.mrf.mxu0
        %823 = vmatprep.mubr.bf16.mxu0 0
        %824 = vmatmul.mubr.bf16.gmra.mxu0 %v671
        %v825 = vpop.f32.mrf.mxu0
        %v826 = vadd.f32 0.0, %v825
        %v827 = vpop.f32.mrf.mxu0
        %v828 = vpop.f32.mrf.mxu0
        %v829 = vadd.f32 0.0, %v828
        %v830 = vpop.f32.mrf.mxu0
        %831 = vmatprep.mubr.bf16.mxu0 0
        %832 = vmatmul.mubr.bf16.gmra.mxu0 %v674
        %v833 = vpop.f32.mrf.mxu0
        %v834 = vadd.f32 0.0, %v833
        %v835 = vpop.f32.mrf.mxu0
        %v836 = vpop.f32.mrf.mxu0
        %v837 = vadd.f32 0.0, %v836
        %v838 = vpop.f32.mrf.mxu0
        %839 = vmatprep.mubr.bf16.mxu0 0
        %840 = vmatmul.mubr.bf16.gmra.mxu0 %v677
        %v841 = vpop.f32.mrf.mxu0
        %v842 = vadd.f32 0.0, %v841
        %v843 = vpop.f32.mrf.mxu0
        %v844 = vpop.f32.mrf.mxu0
        %v845 = vadd.f32 0.0, %v844
        %v846 = vpop.f32.mrf.mxu0
        %847 = vmatprep.mubr.bf16.mxu0 0
        %848 = vmatmul.mubr.bf16.gmra.mxu0 %v680
        %v849 = vpop.f32.mrf.mxu0
        %v850 = vadd.f32 0.0, %v849
        %v851 = vpop.f32.mrf.mxu0
        %v852 = vpop.f32.mrf.mxu0
        %v853 = vadd.f32 0.0, %v852
        %v854 = vpop.f32.mrf.mxu0
        %855 = vmatprep.mubr.bf16.mxu0 0
        %856 = vmatmul.mubr.bf16.gmra.mxu0 %v683
        %v857 = vpop.f32.mrf.mxu0
        %v858 = vadd.f32 0.0, %v857
        %v859 = vpop.f32.mrf.mxu0
        %v860 = vpop.f32.mrf.mxu0
        %v861 = vadd.f32 0.0, %v860
        %v862 = vpop.f32.mrf.mxu0
        %863 = vmatprep.mubr.bf16.mxu0 0
        %864 = vmatmul.mubr.bf16.gmra.mxu0 %v686
        %v865 = vpop.f32.mrf.mxu0
        %v866 = vadd.f32 0.0, %v865
        %v867 = vpop.f32.mrf.mxu0
        %v868 = vpop.f32.mrf.mxu0
        %v869 = vadd.f32 0.0, %v868
        %v870 = vpop.f32.mrf.mxu0
        %871 = vmatprep.mubr.bf16.mxu0 0
        %872 = vmatmul.mubr.bf16.gmra.mxu0 %v689
        %v873 = vpop.f32.mrf.mxu0
        %v874 = vadd.f32 0.0, %v873
        %v875 = vpop.f32.mrf.mxu0
        %v876 = vpop.f32.mrf.mxu0
        %v877 = vadd.f32 0.0, %v876
        %v878 = vpop.f32.mrf.mxu0
        %879 = vmatprep.mubr.bf16.mxu0 0
        %880 = vmatmul.mubr.bf16.gmra.mxu0 %v692
        %v881 = vpop.f32.mrf.mxu0
        %v882 = vadd.f32 0.0, %v881
        %v883 = vpop.f32.mrf.mxu0
        %v884 = vpop.f32.mrf.mxu0
        %v885 = vadd.f32 0.0, %v884
        %v886 = vpop.f32.mrf.mxu0
        %887 = vmatprep.mubr.bf16.mxu0 0
        %888 = vmatmul.mubr.bf16.gmra.mxu0 %v695
        %v889 = vpop.f32.mrf.mxu0
        %v890 = vadd.f32 0.0, %v889
        %v891 = vpop.f32.mrf.mxu0
        %v892 = vpop.f32.mrf.mxu0
        %v893 = vadd.f32 0.0, %v892
        %v894 = vpop.f32.mrf.mxu0
        %895 = vmatprep.mubr.bf16.mxu0 0
        %896 = vmatmul.mubr.bf16.gmra.mxu0 %v698
        %v897 = vpop.f32.mrf.mxu0
        %v898 = vadd.f32 0.0, %v897
        %v899 = vpop.f32.mrf.mxu0
        %v900 = vpop.f32.mrf.mxu0
        %v901 = vadd.f32 0.0, %v900
        %v902 = vpop.f32.mrf.mxu0
        %903 = vmatprep.mubr.bf16.mxu0 0
        %904 = vmatmul.mubr.bf16.gmra.mxu0 %v701
        %v905 = vpop.f32.mrf.mxu0
        %v906 = vadd.f32 0.0, %v905
        %v907 = vpop.f32.mrf.mxu0
        %v908 = vpop.f32.mrf.mxu0
        %v909 = vadd.f32 0.0, %v908
        %v910 = vpop.f32.mrf.mxu0
        %911 = vmatprep.mubr.bf16.mxu0 0
        %912 = vmatmul.mubr.bf16.gmra.mxu0 %v704
        %v913 = vpop.f32.mrf.mxu0
        %v914 = vadd.f32 0.0, %v913
        %v915 = vpop.f32.mrf.mxu0
        %v916 = vpop.f32.mrf.mxu0
        %v917 = vadd.f32 0.0, %v916
        %v918 = vpop.f32.mrf.mxu0
        %919 = vmatprep.mubr.bf16.mxu0 0
        %920 = vmatmul.mubr.bf16.gmra.mxu0 %v707
        %v921 = vpop.f32.mrf.mxu0
        %v922 = vadd.f32 0.0, %v921
        %v923 = vpop.f32.mrf.mxu0
        %v924 = vpop.f32.mrf.mxu0
        %v925 = vadd.f32 0.0, %v924
        %v926 = vpop.f32.mrf.mxu0
        %927 = vmatprep.mubr.bf16.mxu0 0
        %928 = vmatmul.mubr.bf16.gmra.mxu0 %v710
        %v929 = vpop.f32.mrf.mxu0
        %v930 = vadd.f32 0.0, %v929
        %v931 = vpop.f32.mrf.mxu0
        %v932 = vpop.f32.mrf.mxu0
        %v933 = vadd.f32 0.0, %v932
        %v934 = vpop.f32.mrf.mxu0
        %935 = vmatprep.mubr.bf16.mxu0 0
        %936 = vmatmul.mubr.bf16.gmra.mxu0 %v713
        %v937 = vpop.f32.mrf.mxu0
        %v938 = vadd.f32 0.0, %v937
        %v939 = vpop.f32.mrf.mxu0
        %v940 = vpop.f32.mrf.mxu0
        %v941 = vadd.f32 0.0, %v940
        %v942 = vpop.f32.mrf.mxu0
        %943 = vmatprep.mubr.bf16.mxu0 0
        %944 = vmatmul.mubr.bf16.gmra.mxu0 %v716
        %v945 = vpop.f32.mrf.mxu0
        %v946 = vadd.f32 0.0, %v945
        %v947 = vpop.f32.mrf.mxu0
        %v948 = vpop.f32.mrf.mxu0
        %v949 = vadd.f32 0.0, %v948
        %v950 = vpop.f32.mrf.mxu0
        %951 = vmatprep.mubr.bf16.mxu0 0
        %952 = vmatmul.mubr.bf16.gmra.mxu0 %v719
        %v953 = vpop.f32.mrf.mxu0
        %v954 = vadd.f32 0.0, %v953
        %v955 = vpop.f32.mrf.mxu0
        %v956 = vpop.f32.mrf.mxu0
        %v957 = vadd.f32 0.0, %v956
        %v958 = vpop.f32.mrf.mxu0
        %959 = vmatprep.mubr.bf16.mxu0 0
        %960 = vmatmul.mubr.bf16.gmra.mxu0 %v722
        %v961 = vpop.f32.mrf.mxu0
        %v962 = vadd.f32 0.0, %v961
        %v963 = vpop.f32.mrf.mxu0
        %v964 = vpop.f32.mrf.mxu0
        %v965 = vadd.f32 0.0, %v964
        %v966 = vpop.f32.mrf.mxu0
        %967 = vmatprep.mubr.bf16.mxu0 0
        %968 = vmatmul.mubr.bf16.gmra.mxu0 %v725
        %v969 = vpop.f32.mrf.mxu0
        %v970 = vadd.f32 0.0, %v969
        %v971 = vpop.f32.mrf.mxu0
        %v972 = vpop.f32.mrf.mxu0
        %v973 = vadd.f32 0.0, %v972
        %v974 = vpop.f32.mrf.mxu0
        %975 = vmatprep.mubr.bf16.mxu0 0
        %976 = vmatmul.mubr.bf16.gmra.mxu0 %v728
        %v977 = vpop.f32.mrf.mxu0
        %v978 = vadd.f32 0.0, %v977
        %v979 = vpop.f32.mrf.mxu0
        %v980 = vpop.f32.mrf.mxu0
        %v981 = vadd.f32 0.0, %v980
        %v982 = vpop.f32.mrf.mxu0
        %983 = vmatprep.mubr.bf16.mxu0 0
        %984 = vmatmul.mubr.bf16.gmra.mxu0 %v731
        %v985 = vpop.f32.mrf.mxu0
        %v986 = vadd.f32 0.0, %v985
        %v987 = vpop.f32.mrf.mxu0
        %v988 = vpop.f32.mrf.mxu0
        %v989 = vadd.f32 0.0, %v988
        %v990 = vpop.f32.mrf.mxu0
        %991 = vmatprep.mubr.bf16.mxu0 0
        %992 = vmatmul.mubr.bf16.gmra.mxu0 %v734
        %v993 = vpop.f32.mrf.mxu0
        %v994 = vadd.f32 0.0, %v993
        %v995 = vpop.f32.mrf.mxu0
        %v996 = vpop.f32.mrf.mxu0
        %v997 = vadd.f32 0.0, %v996
        %v998 = vpop.f32.mrf.mxu0
        %999 = vmatprep.mubr.bf16.mxu0 0
        %1000 = vmatmul.mubr.bf16.gmra.mxu0 %v737
        %v1001 = vpop.f32.mrf.mxu0
        %v1002 = vadd.f32 0.0, %v1001
        %v1003 = vpop.f32.mrf.mxu0
        %v1004 = vpop.f32.mrf.mxu0
        %v1005 = vadd.f32 0.0, %v1004
        %v1006 = vpop.f32.mrf.mxu0
        %1007 = vmatprep.mubr.bf16.mxu0 0
        %1008 = vmatmul.mubr.bf16.gmra.mxu0 %v740
        %v1009 = vpop.f32.mrf.mxu0
        %v1010 = vadd.f32 0.0, %v1009
        %v1011 = vpop.f32.mrf.mxu0
        %v1012 = vpop.f32.mrf.mxu0
        %v1013 = vadd.f32 0.0, %v1012
        %v1014 = vpop.f32.mrf.mxu0
        %1015 = vmatprep.mubr.bf16.mxu0 0
        %1016 = vmatmul.mubr.bf16.gmra.mxu0 %v743
        %v1017 = vpop.f32.mrf.mxu0
        %v1018 = vadd.f32 0.0, %v1017
        %v1019 = vpop.f32.mrf.mxu0
        %v1020 = vpop.f32.mrf.mxu0
        %v1021 = vadd.f32 0.0, %v1020
        %v1022 = vpop.f32.mrf.mxu0
        %1023 = vmatprep.mubr.bf16.mxu0 0
        %1024 = vmatmul.mubr.bf16.gmra.mxu0 %v746
        %v1025 = vpop.f32.mrf.mxu0
        %v1026 = vadd.f32 0.0, %v1025
        %v1027 = vpop.f32.mrf.mxu0
        %v1028 = vpop.f32.mrf.mxu0
        %v1029 = vadd.f32 0.0, %v1028
        %v1030 = vpop.f32.mrf.mxu0
        %1031 = vmatprep.mubr.bf16.mxu0 0
        %1032 = vmatmul.mubr.bf16.gmra.mxu0 %v749
        %v1033 = vpop.f32.mrf.mxu0
        %v1034 = vadd.f32 0.0, %v1033
        %v1035 = vpop.f32.mrf.mxu0
        %v1036 = vpop.f32.mrf.mxu0
        %v1037 = vadd.f32 0.0, %v1036
        %v1038 = vpop.f32.mrf.mxu0
        %1039 = vdwg.mxu0
        %v1040 = vadd.f32 %v342, %v786
        %v1041 = vadd.f32 %v343, %v789
        %v1042 = vadd.f32 %v344, %v794
        %v1043 = vadd.f32 %v345, %v797
        %v1044 = vadd.f32 %v346, %v802
        %v1045 = vadd.f32 %v347, %v805
        %v1046 = vadd.f32 %v348, %v810
        %v1047 = vadd.f32 %v349, %v813
        %v1048 = vadd.f32 %v350, %v818
        %v1049 = vadd.f32 %v351, %v821
        %v1050 = vadd.f32 %v352, %v826
        %v1051 = vadd.f32 %v353, %v829
        %v1052 = vadd.f32 %v354, %v834
        %v1053 = vadd.f32 %v355, %v837
        %v1054 = vadd.f32 %v356, %v842
        %v1055 = vadd.f32 %v357, %v845
        %v1056 = vadd.f32 %v358, %v850
        %v1057 = vadd.f32 %v359, %v853
        %v1058 = vadd.f32 %v360, %v858
        %v1059 = vadd.f32 %v361, %v861
        %v1060 = vadd.f32 %v362, %v866
        %v1061 = vadd.f32 %v363, %v869
        %v1062 = vadd.f32 %v364, %v874
        %v1063 = vadd.f32 %v365, %v877
        %v1064 = vadd.f32 %v366, %v882
        %v1065 = vadd.f32 %v367, %v885
        %v1066 = vadd.f32 %v368, %v890
        %v1067 = vadd.f32 %v369, %v893
        %v1068 = vadd.f32 %v370, %v898
        %v1069 = vadd.f32 %v371, %v901
        %v1070 = vadd.f32 %v372, %v906
        %v1071 = vadd.f32 %v373, %v909
        %v1072 = vadd.f32 %v374, %v914
        %v1073 = vadd.f32 %v375, %v917
        %v1074 = vadd.f32 %v376, %v922
        %v1075 = vadd.f32 %v377, %v925
        %v1076 = vadd.f32 %v378, %v930
        %v1077 = vadd.f32 %v379, %v933
        %v1078 = vadd.f32 %v380, %v938
        %v1079 = vadd.f32 %v381, %v941
        %v1080 = vadd.f32 %v382, %v946
        %v1081 = vadd.f32 %v383, %v949
        %v1082 = vadd.f32 %v384, %v954
        %v1083 = vadd.f32 %v385, %v957
        %v1084 = vadd.f32 %v386, %v962
        %v1085 = vadd.f32 %v387, %v965
        %v1086 = vadd.f32 %v388, %v970
        %v1087 = vadd.f32 %v389, %v973
        %v1088 = vadd.f32 %v390, %v978
        %v1089 = vadd.f32 %v391, %v981
        %v1090 = vadd.f32 %v392, %v986
        %v1091 = vadd.f32 %v393, %v989
        %v1092 = vadd.f32 %v394, %v994
        %v1093 = vadd.f32 %v395, %v997
        %v1094 = vadd.f32 %v396, %v1002
        %v1095 = vadd.f32 %v397, %v1005
        %v1096 = vadd.f32 %v398, %v1010
        %v1097 = vadd.f32 %v399, %v1013
        %v1098 = vadd.f32 %v400, %v1018
        %v1099 = vadd.f32 %v401, %v1021
        %v1100 = vadd.f32 %v402, %v1026
        %v1101 = vadd.f32 %v403, %v1029
        %v1102 = vadd.f32 %v404, %v1034
        %v1103 = vadd.f32 %v405, %v1037
        %1104 = vst [vmem:[#allocation2] sm:$0xff] %v1040
        %1105 = vst [vmem:[#allocation2 + $0x8] sm:$0xff] %v1041
        %1106 = vst [vmem:[#allocation2 + $0x10] sm:$0xff] %v1042
        %1107 = vst [vmem:[#allocation2 + $0x18] sm:$0xff] %v1043
        %1108 = vst [vmem:[#allocation2 + $0x20] sm:$0xff] %v1044
        %1109 = vst [vmem:[#allocation2 + $0x28] sm:$0xff] %v1045
        %1110 = vst [vmem:[#allocation2 + $0x30] sm:$0xff] %v1046
        %1111 = vst [vmem:[#allocation2 + $0x38] sm:$0xff] %v1047
        %1112 = vst [vmem:[#allocation2 + $0x40] sm:$0xff] %v1048
        %1113 = vst [vmem:[#allocation2 + $0x48] sm:$0xff] %v1049
        %1114 = vst [vmem:[#allocation2 + $0x50] sm:$0xff] %v1050
        %1115 = vst [vmem:[#allocation2 + $0x58] sm:$0xff] %v1051
        %1116 = vst [vmem:[#allocation2 + $0x60] sm:$0xff] %v1052
        %1117 = vst [vmem:[#allocation2 + $0x68] sm:$0xff] %v1053
        %1118 = vst [vmem:[#allocation2 + $0x70] sm:$0xff] %v1054
        %1119 = vst [vmem:[#allocation2 + $0x78] sm:$0xff] %v1055
        %1120 = vst [vmem:[#allocation2 + $0x80] sm:$0xff] %v1056
        %1121 = vst [vmem:[#allocation2 + $0x88] sm:$0xff] %v1057
        %1122 = vst [vmem:[#allocation2 + $0x90] sm:$0xff] %v1058
        %1123 = vst [vmem:[#allocation2 + $0x98] sm:$0xff] %v1059
        %1124 = vst [vmem:[#allocation2 + $0xa0] sm:$0xff] %v1060
        %1125 = vst [vmem:[#allocation2 + $0xa8] sm:$0xff] %v1061
        %1126 = vst [vmem:[#allocation2 + $0xb0] sm:$0xff] %v1062
        %1127 = vst [vmem:[#allocation2 + $0xb8] sm:$0xff] %v1063
        %1128 = vst [vmem:[#allocation2 + $0xc0] sm:$0xff] %v1064
        %1129 = vst [vmem:[#allocation2 + $0xc8] sm:$0xff] %v1065
        %1130 = vst [vmem:[#allocation2 + $0xd0] sm:$0xff] %v1066
        %1131 = vst [vmem:[#allocation2 + $0xd8] sm:$0xff] %v1067
        %1132 = vst [vmem:[#allocation2 + $0xe0] sm:$0xff] %v1068
        %1133 = vst [vmem:[#allocation2 + $0xe8] sm:$0xff] %v1069
        %1134 = vst [vmem:[#allocation2 + $0xf0] sm:$0xff] %v1070
        %1135 = vst [vmem:[#allocation2 + $0xf8] sm:$0xff] %v1071
        %1136 = vst [vmem:[#allocation2 + $0x100] sm:$0xff] %v1072
        %1137 = vst [vmem:[#allocation2 + $0x108] sm:$0xff] %v1073
        %1138 = vst [vmem:[#allocation2 + $0x110] sm:$0xff] %v1074
        %1139 = vst [vmem:[#allocation2 + $0x118] sm:$0xff] %v1075
        %1140 = vst [vmem:[#allocation2 + $0x120] sm:$0xff] %v1076
        %1141 = vst [vmem:[#allocation2 + $0x128] sm:$0xff] %v1077
        %1142 = vst [vmem:[#allocation2 + $0x130] sm:$0xff] %v1078
        %1143 = vst [vmem:[#allocation2 + $0x138] sm:$0xff] %v1079
        %1144 = vst [vmem:[#allocation2 + $0x140] sm:$0xff] %v1080
        %1145 = vst [vmem:[#allocation2 + $0x148] sm:$0xff] %v1081
        %1146 = vst [vmem:[#allocation2 + $0x150] sm:$0xff] %v1082
        %1147 = vst [vmem:[#allocation2 + $0x158] sm:$0xff] %v1083
        %1148 = vst [vmem:[#allocation2 + $0x160] sm:$0xff] %v1084
        %1149 = vst [vmem:[#allocation2 + $0x168] sm:$0xff] %v1085
        %1150 = vst [vmem:[#allocation2 + $0x170] sm:$0xff] %v1086
        %1151 = vst [vmem:[#allocation2 + $0x178] sm:$0xff] %v1087
        %1152 = vst [vmem:[#allocation2 + $0x180] sm:$0xff] %v1088
        %1153 = vst [vmem:[#allocation2 + $0x188] sm:$0xff] %v1089
        %1154 = vst [vmem:[#allocation2 + $0x190] sm:$0xff] %v1090
        %1155 = vst [vmem:[#allocation2 + $0x198] sm:$0xff] %v1091
        %1156 = vst [vmem:[#allocation2 + $0x1a0] sm:$0xff] %v1092
        %1157 = vst [vmem:[#allocation2 + $0x1a8] sm:$0xff] %v1093
        %1158 = vst [vmem:[#allocation2 + $0x1b0] sm:$0xff] %v1094
        %1159 = vst [vmem:[#allocation2 + $0x1b8] sm:$0xff] %v1095
        %1160 = vst [vmem:[#allocation2 + $0x1c0] sm:$0xff] %v1096
        %1161 = vst [vmem:[#allocation2 + $0x1c8] sm:$0xff] %v1097
        %1162 = vst [vmem:[#allocation2 + $0x1d0] sm:$0xff] %v1098
        %1163 = vst [vmem:[#allocation2 + $0x1d8] sm:$0xff] %v1099
        %1164 = vst [vmem:[#allocation2 + $0x1e0] sm:$0xff] %v1100
        %1165 = vst [vmem:[#allocation2 + $0x1e8] sm:$0xff] %v1101
        %1166 = vst [vmem:[#allocation2 + $0x1f0] sm:$0xff] %v1102
        %1167 = vst [vmem:[#allocation2 + $0x1f8] sm:$0xff] %v1103
        // Predicated region
        $region53: #{_lambda_.12} parent=35 // pred_check
          %p1168 = pneg %p274
        $region54: #{_lambda_.12} parent=35 // pred_check_branch
          %1170 = sbr.rel (%p1168) target = $region56
        $region55: #{_lambda_.12} parent=35 // pred_region
          %v1171 = vld [vmem:[#allocation2] sm:$0xff]
          %v1172 = vld [vmem:[#allocation2 + $0x8] sm:$0xff]
          %v1173 = vld [vmem:[#allocation2 + $0x10] sm:$0xff]
          %v1174 = vld [vmem:[#allocation2 + $0x18] sm:$0xff]
          %v1175 = vld [vmem:[#allocation2 + $0x20] sm:$0xff]
          %v1176 = vld [vmem:[#allocation2 + $0x28] sm:$0xff]
          %v1177 = vld [vmem:[#allocation2 + $0x30] sm:$0xff]
          %v1178 = vld [vmem:[#allocation2 + $0x38] sm:$0xff]
          %v1179 = vld [vmem:[#allocation2 + $0x40] sm:$0xff]
          %v1180 = vld [vmem:[#allocation2 + $0x48] sm:$0xff]
          %v1181 = vld [vmem:[#allocation2 + $0x50] sm:$0xff]
          %v1182 = vld [vmem:[#allocation2 + $0x58] sm:$0xff]
          %v1183 = vld [vmem:[#allocation2 + $0x60] sm:$0xff]
          %v1184 = vld [vmem:[#allocation2 + $0x68] sm:$0xff]
          %v1185 = vld [vmem:[#allocation2 + $0x70] sm:$0xff]
          %v1186 = vld [vmem:[#allocation2 + $0x78] sm:$0xff]
          %v1187 = vld [vmem:[#allocation2 + $0x80] sm:$0xff]
          %v1188 = vld [vmem:[#allocation2 + $0x88] sm:$0xff]
          %v1189 = vld [vmem:[#allocation2 + $0x90] sm:$0xff]
          %v1190 = vld [vmem:[#allocation2 + $0x98] sm:$0xff]
          %v1191 = vld [vmem:[#allocation2 + $0xa0] sm:$0xff]
          %v1192 = vld [vmem:[#allocation2 + $0xa8] sm:$0xff]
          %v1193 = vld [vmem:[#allocation2 + $0xb0] sm:$0xff]
          %v1194 = vld [vmem:[#allocation2 + $0xb8] sm:$0xff]
          %v1195 = vld [vmem:[#allocation2 + $0xc0] sm:$0xff]
          %v1196 = vld [vmem:[#allocation2 + $0xc8] sm:$0xff]
          %v1197 = vld [vmem:[#allocation2 + $0xd0] sm:$0xff]
          %v1198 = vld [vmem:[#allocation2 + $0xd8] sm:$0xff]
          %v1199 = vld [vmem:[#allocation2 + $0xe0] sm:$0xff]
          %v1200 = vld [vmem:[#allocation2 + $0xe8] sm:$0xff]
          %v1201 = vld [vmem:[#allocation2 + $0xf0] sm:$0xff]
          %v1202 = vld [vmem:[#allocation2 + $0xf8] sm:$0xff]
          %v1203 = vld [vmem:[#allocation2 + $0x100] sm:$0xff]
          %v1204 = vld [vmem:[#allocation2 + $0x108] sm:$0xff]
          %v1205 = vld [vmem:[#allocation2 + $0x110] sm:$0xff]
          %v1206 = vld [vmem:[#allocation2 + $0x118] sm:$0xff]
          %v1207 = vld [vmem:[#allocation2 + $0x120] sm:$0xff]
          %v1208 = vld [vmem:[#allocation2 + $0x128] sm:$0xff]
          %v1209 = vld [vmem:[#allocation2 + $0x130] sm:$0xff]
          %v1210 = vld [vmem:[#allocation2 + $0x138] sm:$0xff]
          %v1211 = vld [vmem:[#allocation2 + $0x140] sm:$0xff]
          %v1212 = vld [vmem:[#allocation2 + $0x148] sm:$0xff]
          %v1213 = vld [vmem:[#allocation2 + $0x150] sm:$0xff]
          %v1214 = vld [vmem:[#allocation2 + $0x158] sm:$0xff]
          %v1215 = vld [vmem:[#allocation2 + $0x160] sm:$0xff]
          %v1216 = vld [vmem:[#allocation2 + $0x168] sm:$0xff]
          %v1217 = vld [vmem:[#allocation2 + $0x170] sm:$0xff]
          %v1218 = vld [vmem:[#allocation2 + $0x178] sm:$0xff]
          %v1219 = vld [vmem:[#allocation2 + $0x180] sm:$0xff]
          %v1220 = vld [vmem:[#allocation2 + $0x188] sm:$0xff]
          %v1221 = vld [vmem:[#allocation2 + $0x190] sm:$0xff]
          %v1222 = vld [vmem:[#allocation2 + $0x198] sm:$0xff]
          %v1223 = vld [vmem:[#allocation2 + $0x1a0] sm:$0xff]
          %v1224 = vld [vmem:[#allocation2 + $0x1a8] sm:$0xff]
          %v1225 = vld [vmem:[#allocation2 + $0x1b0] sm:$0xff]
          %v1226 = vld [vmem:[#allocation2 + $0x1b8] sm:$0xff]
          %v1227 = vld [vmem:[#allocation2 + $0x1c0] sm:$0xff]
          %v1228 = vld [vmem:[#allocation2 + $0x1c8] sm:$0xff]
          %v1229 = vld [vmem:[#allocation2 + $0x1d0] sm:$0xff]
          %v1230 = vld [vmem:[#allocation2 + $0x1d8] sm:$0xff]
          %v1231 = vld [vmem:[#allocation2 + $0x1e0] sm:$0xff]
          %v1232 = vld [vmem:[#allocation2 + $0x1e8] sm:$0xff]
          %v1233 = vld [vmem:[#allocation2 + $0x1f0] sm:$0xff]
          %v1234 = vld [vmem:[#allocation2 + $0x1f8] sm:$0xff]
          %v1235 = vld [vmem:[#allocation5] sm:$0x1]
          %v1237 = vlaneseq
          %v1238 = vshrl.u32 %v1237, 7
          %v1239 = vsub.s32 0, %v1238
          %v1240 = vrot.slane %v1235, %v1239
          %v1242 = vmul.f32 %v1171, %v1240
          %v1243 = vmul.f32 %v1172, %v1240
          %v1244 = vmul.f32 %v1173, %v1240
          %v1245 = vmul.f32 %v1174, %v1240
          %v1246 = vmul.f32 %v1175, %v1240
          %v1247 = vmul.f32 %v1176, %v1240
          %v1248 = vmul.f32 %v1177, %v1240
          %v1249 = vmul.f32 %v1178, %v1240
          %v1250 = vmul.f32 %v1179, %v1240
          %v1251 = vmul.f32 %v1180, %v1240
          %v1252 = vmul.f32 %v1181, %v1240
          %v1253 = vmul.f32 %v1182, %v1240
          %v1254 = vmul.f32 %v1183, %v1240
          %v1255 = vmul.f32 %v1184, %v1240
          %v1256 = vmul.f32 %v1185, %v1240
          %v1257 = vmul.f32 %v1186, %v1240
          %v1258 = vmul.f32 %v1187, %v1240
          %v1259 = vmul.f32 %v1188, %v1240
          %v1260 = vmul.f32 %v1189, %v1240
          %v1261 = vmul.f32 %v1190, %v1240
          %v1262 = vmul.f32 %v1191, %v1240
          %v1263 = vmul.f32 %v1192, %v1240
          %v1264 = vmul.f32 %v1193, %v1240
          %v1265 = vmul.f32 %v1194, %v1240
          %v1266 = vmul.f32 %v1195, %v1240
          %v1267 = vmul.f32 %v1196, %v1240
          %v1268 = vmul.f32 %v1197, %v1240
          %v1269 = vmul.f32 %v1198, %v1240
          %v1270 = vmul.f32 %v1199, %v1240
          %v1271 = vmul.f32 %v1200, %v1240
          %v1272 = vmul.f32 %v1201, %v1240
          %v1273 = vmul.f32 %v1202, %v1240
          %v1274 = vmul.f32 %v1203, %v1240
          %v1275 = vmul.f32 %v1204, %v1240
          %v1276 = vmul.f32 %v1205, %v1240
          %v1277 = vmul.f32 %v1206, %v1240
          %v1278 = vmul.f32 %v1207, %v1240
          %v1279 = vmul.f32 %v1208, %v1240
          %v1280 = vmul.f32 %v1209, %v1240
          %v1281 = vmul.f32 %v1210, %v1240
          %v1282 = vmul.f32 %v1211, %v1240
          %v1283 = vmul.f32 %v1212, %v1240
          %v1284 = vmul.f32 %v1213, %v1240
          %v1285 = vmul.f32 %v1214, %v1240
          %v1286 = vmul.f32 %v1215, %v1240
          %v1287 = vmul.f32 %v1216, %v1240
          %v1288 = vmul.f32 %v1217, %v1240
          %v1289 = vmul.f32 %v1218, %v1240
          %v1290 = vmul.f32 %v1219, %v1240
          %v1291 = vmul.f32 %v1220, %v1240
          %v1292 = vmul.f32 %v1221, %v1240
          %v1293 = vmul.f32 %v1222, %v1240
          %v1294 = vmul.f32 %v1223, %v1240
          %v1295 = vmul.f32 %v1224, %v1240
          %v1296 = vmul.f32 %v1225, %v1240
          %v1297 = vmul.f32 %v1226, %v1240
          %v1298 = vmul.f32 %v1227, %v1240
          %v1299 = vmul.f32 %v1228, %v1240
          %v1300 = vmul.f32 %v1229, %v1240
          %v1301 = vmul.f32 %v1230, %v1240
          %v1302 = vmul.f32 %v1231, %v1240
          %v1303 = vmul.f32 %v1232, %v1240
          %v1304 = vmul.f32 %v1233, %v1240
          %v1305 = vmul.f32 %v1234, %v1240
          %v1306 = vld [vmem:[#allocation7] sm:$0x1]
          %v1308 = vlaneseq
          %v1309 = vshrl.u32 %v1308, 7
          %v1310 = vsub.s32 0, %v1309
          %v1311 = vrot.slane %v1306, %v1310
          %v1313 = vadd.f32 %v1242, %v1311
          %v1314 = vadd.f32 %v1243, %v1311
          %v1315 = vadd.f32 %v1244, %v1311
          %v1316 = vadd.f32 %v1245, %v1311
          %v1317 = vadd.f32 %v1246, %v1311
          %v1318 = vadd.f32 %v1247, %v1311
          %v1319 = vadd.f32 %v1248, %v1311
          %v1320 = vadd.f32 %v1249, %v1311
          %v1321 = vadd.f32 %v1250, %v1311
          %v1322 = vadd.f32 %v1251, %v1311
          %v1323 = vadd.f32 %v1252, %v1311
          %v1324 = vadd.f32 %v1253, %v1311
          %v1325 = vadd.f32 %v1254, %v1311
          %v1326 = vadd.f32 %v1255, %v1311
          %v1327 = vadd.f32 %v1256, %v1311
          %v1328 = vadd.f32 %v1257, %v1311
          %v1329 = vadd.f32 %v1258, %v1311
          %v1330 = vadd.f32 %v1259, %v1311
          %v1331 = vadd.f32 %v1260, %v1311
          %v1332 = vadd.f32 %v1261, %v1311
          %v1333 = vadd.f32 %v1262, %v1311
          %v1334 = vadd.f32 %v1263, %v1311
          %v1335 = vadd.f32 %v1264, %v1311
          %v1336 = vadd.f32 %v1265, %v1311
          %v1337 = vadd.f32 %v1266, %v1311
          %v1338 = vadd.f32 %v1267, %v1311
          %v1339 = vadd.f32 %v1268, %v1311
          %v1340 = vadd.f32 %v1269, %v1311
          %v1341 = vadd.f32 %v1270, %v1311
          %v1342 = vadd.f32 %v1271, %v1311
          %v1343 = vadd.f32 %v1272, %v1311
          %v1344 = vadd.f32 %v1273, %v1311
          %v1345 = vadd.f32 %v1274, %v1311
          %v1346 = vadd.f32 %v1275, %v1311
          %v1347 = vadd.f32 %v1276, %v1311
          %v1348 = vadd.f32 %v1277, %v1311
          %v1349 = vadd.f32 %v1278, %v1311
          %v1350 = vadd.f32 %v1279, %v1311
          %v1351 = vadd.f32 %v1280, %v1311
          %v1352 = vadd.f32 %v1281, %v1311
          %v1353 = vadd.f32 %v1282, %v1311
          %v1354 = vadd.f32 %v1283, %v1311
          %v1355 = vadd.f32 %v1284, %v1311
          %v1356 = vadd.f32 %v1285, %v1311
          %v1357 = vadd.f32 %v1286, %v1311
          %v1358 = vadd.f32 %v1287, %v1311
          %v1359 = vadd.f32 %v1288, %v1311
          %v1360 = vadd.f32 %v1289, %v1311
          %v1361 = vadd.f32 %v1290, %v1311
          %v1362 = vadd.f32 %v1291, %v1311
          %v1363 = vadd.f32 %v1292, %v1311
          %v1364 = vadd.f32 %v1293, %v1311
          %v1365 = vadd.f32 %v1294, %v1311
          %v1366 = vadd.f32 %v1295, %v1311
          %v1367 = vadd.f32 %v1296, %v1311
          %v1368 = vadd.f32 %v1297, %v1311
          %v1369 = vadd.f32 %v1298, %v1311
          %v1370 = vadd.f32 %v1299, %v1311
          %v1371 = vadd.f32 %v1300, %v1311
          %v1372 = vadd.f32 %v1301, %v1311
          %v1373 = vadd.f32 %v1302, %v1311
          %v1374 = vadd.f32 %v1303, %v1311
          %v1375 = vadd.f32 %v1304, %v1311
          %v1376 = vadd.f32 %v1305, %v1311
          %vm1377 = vcmp.gt.f32.partialorder %v1313, 0.0
          %vm1378 = vcmp.gt.f32.partialorder %v1314, 0.0
          %vm1379 = vcmp.gt.f32.partialorder %v1315, 0.0
          %vm1380 = vcmp.gt.f32.partialorder %v1316, 0.0
          %vm1381 = vcmp.gt.f32.partialorder %v1317, 0.0
          %vm1382 = vcmp.gt.f32.partialorder %v1318, 0.0
          %vm1383 = vcmp.gt.f32.partialorder %v1319, 0.0
          %vm1384 = vcmp.gt.f32.partialorder %v1320, 0.0
          %vm1385 = vcmp.gt.f32.partialorder %v1321, 0.0
          %vm1386 = vcmp.gt.f32.partialorder %v1322, 0.0
          %vm1387 = vcmp.gt.f32.partialorder %v1323, 0.0
          %vm1388 = vcmp.gt.f32.partialorder %v1324, 0.0
          %vm1389 = vcmp.gt.f32.partialorder %v1325, 0.0
          %vm1390 = vcmp.gt.f32.partialorder %v1326, 0.0
          %vm1391 = vcmp.gt.f32.partialorder %v1327, 0.0
          %vm1392 = vcmp.gt.f32.partialorder %v1328, 0.0
          %vm1393 = vcmp.gt.f32.partialorder %v1329, 0.0
          %vm1394 = vcmp.gt.f32.partialorder %v1330, 0.0
          %vm1395 = vcmp.gt.f32.partialorder %v1331, 0.0
          %vm1396 = vcmp.gt.f32.partialorder %v1332, 0.0
          %vm1397 = vcmp.gt.f32.partialorder %v1333, 0.0
          %vm1398 = vcmp.gt.f32.partialorder %v1334, 0.0
          %vm1399 = vcmp.gt.f32.partialorder %v1335, 0.0
          %vm1400 = vcmp.gt.f32.partialorder %v1336, 0.0
          %vm1401 = vcmp.gt.f32.partialorder %v1337, 0.0
          %vm1402 = vcmp.gt.f32.partialorder %v1338, 0.0
          %vm1403 = vcmp.gt.f32.partialorder %v1339, 0.0
          %vm1404 = vcmp.gt.f32.partialorder %v1340, 0.0
          %vm1405 = vcmp.gt.f32.partialorder %v1341, 0.0
          %vm1406 = vcmp.gt.f32.partialorder %v1342, 0.0
          %vm1407 = vcmp.gt.f32.partialorder %v1343, 0.0
          %vm1408 = vcmp.gt.f32.partialorder %v1344, 0.0
          %vm1409 = vcmp.gt.f32.partialorder %v1345, 0.0
          %vm1410 = vcmp.gt.f32.partialorder %v1346, 0.0
          %vm1411 = vcmp.gt.f32.partialorder %v1347, 0.0
          %vm1412 = vcmp.gt.f32.partialorder %v1348, 0.0
          %vm1413 = vcmp.gt.f32.partialorder %v1349, 0.0
          %vm1414 = vcmp.gt.f32.partialorder %v1350, 0.0
          %vm1415 = vcmp.gt.f32.partialorder %v1351, 0.0
          %vm1416 = vcmp.gt.f32.partialorder %v1352, 0.0
          %vm1417 = vcmp.gt.f32.partialorder %v1353, 0.0
          %vm1418 = vcmp.gt.f32.partialorder %v1354, 0.0
          %vm1419 = vcmp.gt.f32.partialorder %v1355, 0.0
          %vm1420 = vcmp.gt.f32.partialorder %v1356, 0.0
          %vm1421 = vcmp.gt.f32.partialorder %v1357, 0.0
          %vm1422 = vcmp.gt.f32.partialorder %v1358, 0.0
          %vm1423 = vcmp.gt.f32.partialorder %v1359, 0.0
          %vm1424 = vcmp.gt.f32.partialorder %v1360, 0.0
          %vm1425 = vcmp.gt.f32.partialorder %v1361, 0.0
          %vm1426 = vcmp.gt.f32.partialorder %v1362, 0.0
          %vm1427 = vcmp.gt.f32.partialorder %v1363, 0.0
          %vm1428 = vcmp.gt.f32.partialorder %v1364, 0.0
          %vm1429 = vcmp.gt.f32.partialorder %v1365, 0.0
          %vm1430 = vcmp.gt.f32.partialorder %v1366, 0.0
          %vm1431 = vcmp.gt.f32.partialorder %v1367, 0.0
          %vm1432 = vcmp.gt.f32.partialorder %v1368, 0.0
          %vm1433 = vcmp.gt.f32.partialorder %v1369, 0.0
          %vm1434 = vcmp.gt.f32.partialorder %v1370, 0.0
          %vm1435 = vcmp.gt.f32.partialorder %v1371, 0.0
          %vm1436 = vcmp.gt.f32.partialorder %v1372, 0.0
          %vm1437 = vcmp.gt.f32.partialorder %v1373, 0.0
          %vm1438 = vcmp.gt.f32.partialorder %v1374, 0.0
          %vm1439 = vcmp.gt.f32.partialorder %v1375, 0.0
          %vm1440 = vcmp.gt.f32.partialorder %v1376, 0.0
          %v1441 = vmul.f32 %v1313, 0.2
          %v1442 = vmul.f32 %v1314, 0.2
          %v1443 = vmul.f32 %v1315, 0.2
          %v1444 = vmul.f32 %v1316, 0.2
          %v1445 = vmul.f32 %v1317, 0.2
          %v1446 = vmul.f32 %v1318, 0.2
          %v1447 = vmul.f32 %v1319, 0.2
          %v1448 = vmul.f32 %v1320, 0.2
          %v1449 = vmul.f32 %v1321, 0.2
          %v1450 = vmul.f32 %v1322, 0.2
          %v1451 = vmul.f32 %v1323, 0.2
          %v1452 = vmul.f32 %v1324, 0.2
          %v1453 = vmul.f32 %v1325, 0.2
          %v1454 = vmul.f32 %v1326, 0.2
          %v1455 = vmul.f32 %v1327, 0.2
          %v1456 = vmul.f32 %v1328, 0.2
          %v1457 = vmul.f32 %v1329, 0.2
          %v1458 = vmul.f32 %v1330, 0.2
          %v1459 = vmul.f32 %v1331, 0.2
          %v1460 = vmul.f32 %v1332, 0.2
          %v1461 = vmul.f32 %v1333, 0.2
          %v1462 = vmul.f32 %v1334, 0.2
          %v1463 = vmul.f32 %v1335, 0.2
          %v1464 = vmul.f32 %v1336, 0.2
          %v1465 = vmul.f32 %v1337, 0.2
          %v1466 = vmul.f32 %v1338, 0.2
          %v1467 = vmul.f32 %v1339, 0.2
          %v1468 = vmul.f32 %v1340, 0.2
          %v1469 = vmul.f32 %v1341, 0.2
          %v1470 = vmul.f32 %v1342, 0.2
          %v1471 = vmul.f32 %v1343, 0.2
          %v1472 = vmul.f32 %v1344, 0.2
          %v1473 = vmul.f32 %v1345, 0.2
          %v1474 = vmul.f32 %v1346, 0.2
          %v1475 = vmul.f32 %v1347, 0.2
          %v1476 = vmul.f32 %v1348, 0.2
          %v1477 = vmul.f32 %v1349, 0.2
          %v1478 = vmul.f32 %v1350, 0.2
          %v1479 = vmul.f32 %v1351, 0.2
          %v1480 = vmul.f32 %v1352, 0.2
          %v1481 = vmul.f32 %v1353, 0.2
          %v1482 = vmul.f32 %v1354, 0.2
          %v1483 = vmul.f32 %v1355, 0.2
          %v1484 = vmul.f32 %v1356, 0.2
          %v1485 = vmul.f32 %v1357, 0.2
          %v1486 = vmul.f32 %v1358, 0.2
          %v1487 = vmul.f32 %v1359, 0.2
          %v1488 = vmul.f32 %v1360, 0.2
          %v1489 = vmul.f32 %v1361, 0.2
          %v1490 = vmul.f32 %v1362, 0.2
          %v1491 = vmul.f32 %v1363, 0.2
          %v1492 = vmul.f32 %v1364, 0.2
          %v1493 = vmul.f32 %v1365, 0.2
          %v1494 = vmul.f32 %v1366, 0.2
          %v1495 = vmul.f32 %v1367, 0.2
          %v1496 = vmul.f32 %v1368, 0.2
          %v1497 = vmul.f32 %v1369, 0.2
          %v1498 = vmul.f32 %v1370, 0.2
          %v1499 = vmul.f32 %v1371, 0.2
          %v1500 = vmul.f32 %v1372, 0.2
          %v1501 = vmul.f32 %v1373, 0.2
          %v1502 = vmul.f32 %v1374, 0.2
          %v1503 = vmul.f32 %v1375, 0.2
          %v1504 = vmul.f32 %v1376, 0.2
          %v1505 = vsel %vm1377, %v1313, %v1441
          %v1506 = vsel %vm1378, %v1314, %v1442
          %v1507 = vsel %vm1379, %v1315, %v1443
          %v1508 = vsel %vm1380, %v1316, %v1444
          %v1509 = vsel %vm1381, %v1317, %v1445
          %v1510 = vsel %vm1382, %v1318, %v1446
          %v1511 = vsel %vm1383, %v1319, %v1447
          %v1512 = vsel %vm1384, %v1320, %v1448
          %v1513 = vsel %vm1385, %v1321, %v1449
          %v1514 = vsel %vm1386, %v1322, %v1450
          %v1515 = vsel %vm1387, %v1323, %v1451
          %v1516 = vsel %vm1388, %v1324, %v1452
          %v1517 = vsel %vm1389, %v1325, %v1453
          %v1518 = vsel %vm1390, %v1326, %v1454
          %v1519 = vsel %vm1391, %v1327, %v1455
          %v1520 = vsel %vm1392, %v1328, %v1456
          %v1521 = vsel %vm1393, %v1329, %v1457
          %v1522 = vsel %vm1394, %v1330, %v1458
          %v1523 = vsel %vm1395, %v1331, %v1459
          %v1524 = vsel %vm1396, %v1332, %v1460
          %v1525 = vsel %vm1397, %v1333, %v1461
          %v1526 = vsel %vm1398, %v1334, %v1462
          %v1527 = vsel %vm1399, %v1335, %v1463
          %v1528 = vsel %vm1400, %v1336, %v1464
          %v1529 = vsel %vm1401, %v1337, %v1465
          %v1530 = vsel %vm1402, %v1338, %v1466
          %v1531 = vsel %vm1403, %v1339, %v1467
          %v1532 = vsel %vm1404, %v1340, %v1468
          %v1533 = vsel %vm1405, %v1341, %v1469
          %v1534 = vsel %vm1406, %v1342, %v1470
          %v1535 = vsel %vm1407, %v1343, %v1471
          %v1536 = vsel %vm1408, %v1344, %v1472
          %v1537 = vsel %vm1409, %v1345, %v1473
          %v1538 = vsel %vm1410, %v1346, %v1474
          %v1539 = vsel %vm1411, %v1347, %v1475
          %v1540 = vsel %vm1412, %v1348, %v1476
          %v1541 = vsel %vm1413, %v1349, %v1477
          %v1542 = vsel %vm1414, %v1350, %v1478
          %v1543 = vsel %vm1415, %v1351, %v1479
          %v1544 = vsel %vm1416, %v1352, %v1480
          %v1545 = vsel %vm1417, %v1353, %v1481
          %v1546 = vsel %vm1418, %v1354, %v1482
          %v1547 = vsel %vm1419, %v1355, %v1483
          %v1548 = vsel %vm1420, %v1356, %v1484
          %v1549 = vsel %vm1421, %v1357, %v1485
          %v1550 = vsel %vm1422, %v1358, %v1486
          %v1551 = vsel %vm1423, %v1359, %v1487
          %v1552 = vsel %vm1424, %v1360, %v1488
          %v1553 = vsel %vm1425, %v1361, %v1489
          %v1554 = vsel %vm1426, %v1362, %v1490
          %v1555 = vsel %vm1427, %v1363, %v1491
          %v1556 = vsel %vm1428, %v1364, %v1492
          %v1557 = vsel %vm1429, %v1365, %v1493
          %v1558 = vsel %vm1430, %v1366, %v1494
          %v1559 = vsel %vm1431, %v1367, %v1495
          %v1560 = vsel %vm1432, %v1368, %v1496
          %v1561 = vsel %vm1433, %v1369, %v1497
          %v1562 = vsel %vm1434, %v1370, %v1498
          %v1563 = vsel %vm1435, %v1371, %v1499
          %v1564 = vsel %vm1436, %v1372, %v1500
          %v1565 = vsel %vm1437, %v1373, %v1501
          %v1566 = vsel %vm1438, %v1374, %v1502
          %v1567 = vsel %vm1439, %v1375, %v1503
          %v1568 = vsel %vm1440, %v1376, %v1504
          %1569 = vst [vmem:[%s271] sm:$0xff] %v1505
          %1570 = vst [vmem:[%s271 + $0x8] sm:$0xff] %v1506
          %1571 = vst [vmem:[%s271 + $0x10] sm:$0xff] %v1507
          %1572 = vst [vmem:[%s271 + $0x18] sm:$0xff] %v1508
          %1573 = vst [vmem:[%s271 + $0x20] sm:$0xff] %v1509
          %1574 = vst [vmem:[%s271 + $0x28] sm:$0xff] %v1510
          %1575 = vst [vmem:[%s271 + $0x30] sm:$0xff] %v1511
          %1576 = vst [vmem:[%s271 + $0x38] sm:$0xff] %v1512
          %1577 = vst [vmem:[%s271 + $0x40] sm:$0xff] %v1513
          %1578 = vst [vmem:[%s271 + $0x48] sm:$0xff] %v1514
          %1579 = vst [vmem:[%s271 + $0x50] sm:$0xff] %v1515
          %1580 = vst [vmem:[%s271 + $0x58] sm:$0xff] %v1516
          %1581 = vst [vmem:[%s271 + $0x60] sm:$0xff] %v1517
          %1582 = vst [vmem:[%s271 + $0x68] sm:$0xff] %v1518
          %1583 = vst [vmem:[%s271 + $0x70] sm:$0xff] %v1519
          %1584 = vst [vmem:[%s271 + $0x78] sm:$0xff] %v1520
          %1585 = vst [vmem:[%s271 + $0x80] sm:$0xff] %v1521
          %1586 = vst [vmem:[%s271 + $0x88] sm:$0xff] %v1522
          %1587 = vst [vmem:[%s271 + $0x90] sm:$0xff] %v1523
          %1588 = vst [vmem:[%s271 + $0x98] sm:$0xff] %v1524
          %1589 = vst [vmem:[%s271 + $0xa0] sm:$0xff] %v1525
          %1590 = vst [vmem:[%s271 + $0xa8] sm:$0xff] %v1526
          %1591 = vst [vmem:[%s271 + $0xb0] sm:$0xff] %v1527
          %1592 = vst [vmem:[%s271 + $0xb8] sm:$0xff] %v1528
          %1593 = vst [vmem:[%s271 + $0xc0] sm:$0xff] %v1529
          %1594 = vst [vmem:[%s271 + $0xc8] sm:$0xff] %v1530
          %1595 = vst [vmem:[%s271 + $0xd0] sm:$0xff] %v1531
          %1596 = vst [vmem:[%s271 + $0xd8] sm:$0xff] %v1532
          %1597 = vst [vmem:[%s271 + $0xe0] sm:$0xff] %v1533
          %1598 = vst [vmem:[%s271 + $0xe8] sm:$0xff] %v1534
          %1599 = vst [vmem:[%s271 + $0xf0] sm:$0xff] %v1535
          %1600 = vst [vmem:[%s271 + $0xf8] sm:$0xff] %v1536
          %1601 = vst [vmem:[%s271 + $0x100] sm:$0xff] %v1537
          %1602 = vst [vmem:[%s271 + $0x108] sm:$0xff] %v1538
          %1603 = vst [vmem:[%s271 + $0x110] sm:$0xff] %v1539
          %1604 = vst [vmem:[%s271 + $0x118] sm:$0xff] %v1540
          %1605 = vst [vmem:[%s271 + $0x120] sm:$0xff] %v1541
          %1606 = vst [vmem:[%s271 + $0x128] sm:$0xff] %v1542
          %1607 = vst [vmem:[%s271 + $0x130] sm:$0xff] %v1543
          %1608 = vst [vmem:[%s271 + $0x138] sm:$0xff] %v1544
          %1609 = vst [vmem:[%s271 + $0x140] sm:$0xff] %v1545
          %1610 = vst [vmem:[%s271 + $0x148] sm:$0xff] %v1546
          %1611 = vst [vmem:[%s271 + $0x150] sm:$0xff] %v1547
          %1612 = vst [vmem:[%s271 + $0x158] sm:$0xff] %v1548
          %1613 = vst [vmem:[%s271 + $0x160] sm:$0xff] %v1549
          %1614 = vst [vmem:[%s271 + $0x168] sm:$0xff] %v1550
          %1615 = vst [vmem:[%s271 + $0x170] sm:$0xff] %v1551
          %1616 = vst [vmem:[%s271 + $0x178] sm:$0xff] %v1552
          %1617 = vst [vmem:[%s271 + $0x180] sm:$0xff] %v1553
          %1618 = vst [vmem:[%s271 + $0x188] sm:$0xff] %v1554
          %1619 = vst [vmem:[%s271 + $0x190] sm:$0xff] %v1555
          %1620 = vst [vmem:[%s271 + $0x198] sm:$0xff] %v1556
          %1621 = vst [vmem:[%s271 + $0x1a0] sm:$0xff] %v1557
          %1622 = vst [vmem:[%s271 + $0x1a8] sm:$0xff] %v1558
          %1623 = vst [vmem:[%s271 + $0x1b0] sm:$0xff] %v1559
          %1624 = vst [vmem:[%s271 + $0x1b8] sm:$0xff] %v1560
          %1625 = vst [vmem:[%s271 + $0x1c0] sm:$0xff] %v1561
          %1626 = vst [vmem:[%s271 + $0x1c8] sm:$0xff] %v1562
          %1627 = vst [vmem:[%s271 + $0x1d0] sm:$0xff] %v1563
          %1628 = vst [vmem:[%s271 + $0x1d8] sm:$0xff] %v1564
          %1629 = vst [vmem:[%s271 + $0x1e0] sm:$0xff] %v1565
          %1630 = vst [vmem:[%s271 + $0x1e8] sm:$0xff] %v1566
          %1631 = vst [vmem:[%s271 + $0x1f0] sm:$0xff] %v1567
          %1632 = vst [vmem:[%s271 + $0x1f8] sm:$0xff] %v1568
        $region56: #{_lambda_.12} parent=35 // pred_fallthru
          _
        %s1633 = smul.u32 64, %s21
        %p1634 = scmp.lt.s32.totalorder %s1633, 255
        %s1635 = scalar_select %p1634, %s1633, 255
        %s1636 = smul.addr %s1635, 8
        %s1637 = scalar_lea.vmem %s4, %s1636
        // Predicated region
        $region57: #{_lambda_.12} parent=35 // pred_check
          %p1638 = pneg %p143
        $region58: #{_lambda_.12} parent=35 // pred_check_branch
          %1640 = sbr.rel (%p1638) target = $region60
        $region59: #{_lambda_.12} parent=35 // pred_region
          %s1641 = smul.u32 64, %s21
        $region60: #{_lambda_.12} parent=35 // pred_fallthru
          _
      $region36: #{_lambda_.12} parent=5 // pred_fallthru
        _
      %p1642 = scmp.le.s32.totalorder 2, %s12
      // Predicated region
      $region61: #{_lambda_.12} parent=5 // pred_check
        %p1643 = pneg %p1642
      $region62: #{_lambda_.12} parent=5 // pred_check_branch
        %1645 = sbr.rel (%p1643) target = $region64
      $region63: #{_lambda_.12} parent=5 // pred_region
        %s1646 = ssub.s32 %s12, 2
        // Predicated region
        $region65: #{_lambda_.12} parent=63 // pred_check
          %p1647 = pneg %p149
        $region66: #{_lambda_.12} parent=63 // pred_check_branch
          %1649 = sbr.rel (%p1647) target = $region68
        $region67: #{_lambda_.12} parent=63 // pred_region
          %s1650 = smul.u32 64, %s23
          %p1651 = scmp.lt.s32.totalorder %s1650, 255
          %s1652 = scalar_select %p1651, %s1650, 255
          %s1653 = smul.addr %s1652, 8
          %s1654 = scalar_lea.vmem %s4, %s1653
        $region68: #{_lambda_.12} parent=63 // pred_fallthru
          _
      $region64: #{_lambda_.12} parent=5 // pred_fallthru
        _
    $region6: #{_lambda_.12} parent=1 // loop_footer
      %s16 = sadd.s32 1, %s12
    $region7: #{_lambda_.12} parent=1 // loop_footer_branch
      %11 = sbr.rel target = $region3
    $region8: #{_lambda_.12} parent=1 // loop_exit
      _
    %1655 = vsyncpa [#allocation4], 1
    %s1656 = scalar_lea.sflag [#allocation4], 1
    %1657 = vsyncpa %s1656, 1
    %1658 = vsyncpa [#allocation6], 1

// kernel: _lambda_.13
$region0: #{_lambda_.13}
  #allocation0 [shape = 'u32[]', space=smem, size = 0x4, offset = 0x4, fixed_abs, tag = 'smem constant byte address 0x4 - core index']
  #allocation1 [shape = 'u32[144,128]{1,0:T(1,128)}', space=vmem, size = 0x12000, scoped, tag = 'internal scratch']
  #allocation2 [shape = 'f32[256,128]{1,0:T(8,128)}', space=vmem, size = 0x20000, scoped, tag = 'scratch operand']
  %s0 = inlined_call_operand.vmem [shape: bf16[512,128], index: 0, kind: input, shape index: {}]
  %s1 = inlined_call_operand.vmem [shape: bf16[128,128], index: 1, kind: input, shape index: {}]
  %s2 = inlined_call_operand.vmem [shape: f32[1,128], index: 2, kind: input, shape index: {}]
  %s3 = inlined_call_operand.vmem [shape: f32[1,128], index: 3, kind: input, shape index: {}]
  %s4 = inlined_call_operand.vmem [shape: f32[512,128], index: 4, kind: output, shape index: {}]
  %s5 = sld [smem:[#allocation0]]
  $region57: #{_lambda_.13} parent=0
    _
  %s7 = ssub.s32 1, %s5
  %s8 = scalar_select 0, %s7, %s5
  loop: start=0, step=1, limit=4
  $region2: #{_lambda_.13} parent=0 // loop_pre_header
    _
  $region3: #{_lambda_.13} parent=0 // loop_header
    %s10 = sphi 0, %s14
    %p11 = scmp.ge.s32.totalorder %s10, 4
    %s17 = sphi 0, %s29
    %s18 = sphi 0, %s25
    %s19 = sphi 0, %s17
    %s20 = sphi 0, %s18
    %s21 = sphi 0, %s19
    %s22 = sphi 0, %s20
    %s34 = sphi 0, %s36
    %s37 = sphi 0, %s34
    %s38 = sphi 0, %s37
    %s54 = sphi 0, %s38
    %s60 = sphi 0, %s62
    %s63 = sphi 0, %s60
    %s64 = sphi 0, %s63
    %s80 = sphi 0, %s64
    %s84 = sphi 0, %s84
    %s86 = sphi 0, %s84
    %s87 = sphi 0, %s86
    %s101 = sphi 0, %s87
    %s105 = sphi 0, %s105
    %s107 = sphi 0, %s105
    %s108 = sphi 0, %s107
    %s122 = sphi 0, %s108
    %s128 = sphi 0, %s130
    %s131 = sphi 0, %s128
    %s132 = sphi 0, %s131
    %s148 = sphi 0, %s132
  $region4: #{_lambda_.13} parent=0 // loop_header_branch
    %13 = sbr.rel (%p11) target = $region8
  $region5: #{_lambda_.13} parent=0 // loop_body
    %s15 = ssub.s32 %s10, 1
    %s16 = ssub.s32 %s10, 2
    %s23 = sadd.s32 1, %s18
    %p24 = scmp.ge.s32.totalorder %s23, 1
    %s25 = scalar_select %p24, 0, %s23
    %s26 = sadd.s32 1, %s17
    %s27 = scalar_select %p24, %s26, %s17
    %p28 = scmp.ge.s32.totalorder %s27, 2
    %s29 = scalar_select %p28, 0, %s27
    %s30 = ssub.s32 %s17, %s29
    %s31 = ssub.s32 %s18, %s25
    %s32 = sor.u32 %s30, %s31
    %p33 = scmp.eq.s32.totalorder %s32, 0
    %s35 = sadd.s32 %s34, 1
    %s36 = scalar_select %p33, %s34, %s35
    %p39 = pneg %p33
    %p40 = scmp.eq.s32.totalorder %s10, 1
    %p41 = por %p39, %p40
    %p42 = scmp.ne.s32.totalorder %s34, %s37
    %p43 = scmp.eq.s32.totalorder %s10, 0
    %p44 = por %p42, %p43
    %p45 = scmp.ne.s32.totalorder %s34, %s37
    %p46 = scmp.eq.s32.totalorder %s15, 1
    %p47 = por %p45, %p46
    %p48 = scmp.ne.s32.totalorder %s37, %s38
    %p49 = scmp.eq.s32.totalorder %s15, 0
    %p50 = por %p48, %p49
    %p51 = scmp.ne.s32.totalorder %s37, %s38
    %p52 = scmp.eq.s32.totalorder %s16, 1
    %p53 = por %p51, %p52
    %p55 = scmp.ne.s32.totalorder %s38, %s54
    %p56 = scmp.eq.s32.totalorder %s16, 0
    %p57 = por %p55, %p56
    %s58 = ssub.s32 %s18, %s25
    %p59 = scmp.eq.s32.totalorder %s58, 0
    %s61 = sadd.s32 %s60, 1
    %s62 = scalar_select %p59, %s60, %s61
    %p65 = pneg %p59
    %p66 = scmp.eq.s32.totalorder %s10, 1
    %p67 = por %p65, %p66
    %p68 = scmp.ne.s32.totalorder %s60, %s63
    %p69 = scmp.eq.s32.totalorder %s10, 0
    %p70 = por %p68, %p69
    %p71 = scmp.ne.s32.totalorder %s60, %s63
    %p72 = scmp.eq.s32.totalorder %s15, 1
    %p73 = por %p71, %p72
    %p74 = scmp.ne.s32.totalorder %s63, %s64
    %p75 = scmp.eq.s32.totalorder %s15, 0
    %p76 = por %p74, %p75
    %p77 = scmp.ne.s32.totalorder %s63, %s64
    %p78 = scmp.eq.s32.totalorder %s16, 1
    %p79 = por %p77, %p78
    %p81 = scmp.ne.s32.totalorder %s64, %s80
    %p82 = scmp.eq.s32.totalorder %s16, 0
    %p83 = por %p81, %p82
    %s85 = sadd.s32 %s84, 1
    %p88 = scmp.eq.s32.totalorder %s10, 1
    %p89 = scmp.ne.s32.totalorder %s84, %s86
    %p90 = scmp.eq.s32.totalorder %s10, 0
    %p91 = por %p89, %p90
    %p92 = scmp.ne.s32.totalorder %s84, %s86
    %p93 = scmp.eq.s32.totalorder %s15, 1
    %p94 = por %p92, %p93
    %p95 = scmp.ne.s32.totalorder %s86, %s87
    %p96 = scmp.eq.s32.totalorder %s15, 0
    %p97 = por %p95, %p96
    %p98 = scmp.ne.s32.totalorder %s86, %s87
    %p99 = scmp.eq.s32.totalorder %s16, 1
    %p100 = por %p98, %p99
    %p102 = scmp.ne.s32.totalorder %s87, %s101
    %p103 = scmp.eq.s32.totalorder %s16, 0
    %p104 = por %p102, %p103
    %s106 = sadd.s32 %s105, 1
    %p109 = scmp.eq.s32.totalorder %s10, 1
    %p110 = scmp.ne.s32.totalorder %s105, %s107
    %p111 = scmp.eq.s32.totalorder %s10, 0
    %p112 = por %p110, %p111
    %p113 = scmp.ne.s32.totalorder %s105, %s107
    %p114 = scmp.eq.s32.totalorder %s15, 1
    %p115 = por %p113, %p114
    %p116 = scmp.ne.s32.totalorder %s107, %s108
    %p117 = scmp.eq.s32.totalorder %s15, 0
    %p118 = por %p116, %p117
    %p119 = scmp.ne.s32.totalorder %s107, %s108
    %p120 = scmp.eq.s32.totalorder %s16, 1
    %p121 = por %p119, %p120
    %p123 = scmp.ne.s32.totalorder %s108, %s122
    %p124 = scmp.eq.s32.totalorder %s16, 0
    %p125 = por %p123, %p124
    %s126 = ssub.s32 %s17, %s29
    %p127 = scmp.eq.s32.totalorder %s126, 0
    %s129 = sadd.s32 %s128, 1
    %s130 = scalar_select %p127, %s128, %s129
    %p133 = pneg %p127
    %p134 = scmp.eq.s32.totalorder %s10, 1
    %p135 = por %p133, %p134
    %p136 = scmp.ne.s32.totalorder %s128, %s131
    %p137 = scmp.eq.s32.totalorder %s10, 0
    %p138 = por %p136, %p137
    %p139 = scmp.ne.s32.totalorder %s128, %s131
    %p140 = scmp.eq.s32.totalorder %s15, 1
    %p141 = por %p139, %p140
    %p142 = scmp.ne.s32.totalorder %s131, %s132
    %p143 = scmp.eq.s32.totalorder %s15, 0
    %p144 = por %p142, %p143
    %p145 = scmp.ne.s32.totalorder %s131, %s132
    %p146 = scmp.eq.s32.totalorder %s16, 1
    %p147 = por %p145, %p146
    %p149 = scmp.ne.s32.totalorder %s132, %s148
    %p150 = scmp.eq.s32.totalorder %s16, 0
    %p151 = por %p149, %p150
    %p152 = scmp.le.s32.totalorder 1, %s10
    %p153 = scmp.lt.s32.totalorder %s10, 3
    %p154 = pnand %p152, %p153
    %p155 = pneg %p154
    // Predicated region
    $region9: #{_lambda_.13} parent=5 // pred_check
      _
    $region10: #{_lambda_.13} parent=5 // pred_check_branch
      %157 = sbr.rel (%p154) target = $region12
    $region11: #{_lambda_.13} parent=5 // pred_region
      %s158 = ssub.s32 %s10, 1
      // Predicated region
      $region13: #{_lambda_.13} parent=11 // pred_check
        %p159 = pneg %p76
      $region14: #{_lambda_.13} parent=11 // pred_check_branch
        %161 = sbr.rel (%p159) target = $region16
      $region15: #{_lambda_.13} parent=11 // pred_region
        %s162 = smul.u32 16, %s20
        %p163 = scmp.lt.s32.totalorder %s162, 15
        %s164 = scalar_select %p163, %s162, 15
        %s165 = smul.addr %s164, 4
        %s166 = scalar_lea.vmem %s1, %s165
        %s167 = smul.u32 16, %s20
      $region16: #{_lambda_.13} parent=11 // pred_fallthru
        _
      // Predicated region
      $region17: #{_lambda_.13} parent=11 // pred_check
        %p168 = pneg %p97
      $region18: #{_lambda_.13} parent=11 // pred_check_branch
        %170 = sbr.rel (%p168) target = $region20
      $region19: #{_lambda_.13} parent=11 // pred_region
        _
      $region20: #{_lambda_.13} parent=11 // pred_fallthru
        _
      // Predicated region
      $region21: #{_lambda_.13} parent=11 // pred_check
        %p171 = pneg %p118
      $region22: #{_lambda_.13} parent=11 // pred_check_branch
        %173 = sbr.rel (%p171) target = $region24
      $region23: #{_lambda_.13} parent=11 // pred_region
        _
      $region24: #{_lambda_.13} parent=11 // pred_fallthru
        _
    $region12: #{_lambda_.13} parent=5 // pred_fallthru
      _
    %p174 = scmp.lt.s32.totalorder %s10, 2
    // Predicated region
    $region25: #{_lambda_.13} parent=5 // pred_check
      %p175 = pneg %p174
    $region26: #{_lambda_.13} parent=5 // pred_check_branch
      %177 = sbr.rel (%p175) target = $region28
    $region27: #{_lambda_.13} parent=5 // pred_region
      // Predicated region
      $region29: #{_lambda_.13} parent=27 // pred_check
        %p178 = pneg %p44
      $region30: #{_lambda_.13} parent=27 // pred_check_branch
        %180 = sbr.rel (%p178) target = $region32
      $region31: #{_lambda_.13} parent=27 // pred_region
        %s181 = smul.u32 32, %s17
        %p182 = scmp.lt.s32.totalorder %s181, 63
        %s183 = scalar_select %p182, %s181, 63
        %p184 = scmp.lt.s32.totalorder %s18, 0
        %s185 = scalar_select %p184, %s18, 0
        %s186 = sadd.s32 %s185, %s183
        %s187 = smul.addr %s186, 4
        %s188 = scalar_lea.vmem %s0, %s187
        %s189 = smul.u32 32, %s17
      $region32: #{_lambda_.13} parent=27 // pred_fallthru
        _
    $region28: #{_lambda_.13} parent=5 // pred_fallthru
      _
    %p190 = scmp.le.s32.totalorder 1, %s10
    %p191 = scmp.lt.s32.totalorder %s10, 3
    %p192 = pnand %p190, %p191
    %p193 = pneg %p192
    // Predicated region
    $region33: #{_lambda_.13} parent=5 // pred_check
      _
    $region34: #{_lambda_.13} parent=5 // pred_check_branch
      %195 = sbr.rel (%p192) target = $region36
    $region35: #{_lambda_.13} parent=5 // pred_region
      %s196 = ssub.s32 %s10, 1
      %s197 = smul.u32 32, %s19
      %p198 = scmp.lt.s32.totalorder %s197, 63
      %s199 = scalar_select %p198, %s197, 63
      %p200 = scmp.lt.s32.totalorder %s20, 0
      %s201 = scalar_select %p200, %s20, 0
      %s202 = sadd.s32 %s201, %s199
      %s203 = smul.addr %s202, 4
      %s204 = scalar_lea.vmem %s0, %s203
      %p205 = pneg %p50
      %p206 = pneg %p47
      %s207 = smul.u32 16, %s20
      %p208 = scmp.lt.s32.totalorder %s207, 15
      %s209 = scalar_select %p208, %s207, 15
      %s210 = smul.addr %s209, 4
      %s211 = scalar_lea.vmem %s1, %s210
      %p212 = pneg %p76
      %p213 = pneg %p73
      %p214 = pneg %p97
      %p215 = pneg %p94
      %p216 = pneg %p118
      %p217 = pneg %p115
      %p218 = pneg %p144
      %p219 = pneg %p141
      %s220 = smul.u32 32, %s19
      %p221 = scmp.lt.s32.totalorder %s220, 63
      %s222 = scalar_select %p221, %s220, 63
      %s223 = smul.addr %s222, 8
      %s224 = scalar_lea.vmem %s4, %s223
      %s225 = smul.u32 32, %s19
      %p226 = scmp.lt.s32.totalorder %s225, 63
      %s227 = scalar_select %p226, %s225, 63
      %p228 = scmp.lt.s32.totalorder %s20, 0
      %s229 = scalar_select %p228, %s20, 0
      %s230 = sadd.s32 %s229, %s227
      %s231 = smul.addr %s230, 4
      %s232 = scalar_lea.vmem %s0, %s231
      %s233 = smul.u32 32, %s19
      %s234 = smul.u32 16, %s20
      %p235 = scmp.lt.s32.totalorder %s234, 15
      %s236 = scalar_select %p235, %s234, 15
      %s237 = smul.addr %s236, 4
      %s238 = scalar_lea.vmem %s1, %s237
      %s239 = smul.u32 16, %s20
      %s240 = smul.u32 32, %s19
      %p241 = scmp.lt.s32.totalorder %s240, 63
      %s242 = scalar_select %p241, %s240, 63
      %s243 = smul.addr %s242, 8
      %s244 = scalar_lea.vmem %s4, %s243
      %s245 = smul.u32 32, %s19
      %p247 = scmp.eq.s32.totalorder %s20, 0
      // Predicated region
      $region37: #{_lambda_.13} parent=35 // pred_check
        %p248 = pneg %p247
      $region38: #{_lambda_.13} parent=35 // pred_check_branch
        %250 = sbr.rel (%p248) target = $region40
      $region39: #{_lambda_.13} parent=35 // pred_region
        %251 = vst [vmem:[#allocation2] sm:$0xff] 0.0
        %252 = vst [vmem:[#allocation2 + $0x8] sm:$0xff] 0.0
        %253 = vst [vmem:[#allocation2 + $0x10] sm:$0xff] 0.0
        %254 = vst [vmem:[#allocation2 + $0x18] sm:$0xff] 0.0
        %255 = vst [vmem:[#allocation2 + $0x20] sm:$0xff] 0.0
        %256 = vst [vmem:[#allocation2 + $0x28] sm:$0xff] 0.0
        %257 = vst [vmem:[#allocation2 + $0x30] sm:$0xff] 0.0
        %258 = vst [vmem:[#allocation2 + $0x38] sm:$0xff] 0.0
        %259 = vst [vmem:[#allocation2 + $0x40] sm:$0xff] 0.0
        %260 = vst [vmem:[#allocation2 + $0x48] sm:$0xff] 0.0
        %261 = vst [vmem:[#allocation2 + $0x50] sm:$0xff] 0.0
        %262 = vst [vmem:[#allocation2 + $0x58] sm:$0xff] 0.0
        %263 = vst [vmem:[#allocation2 + $0x60] sm:$0xff] 0.0
        %264 = vst [vmem:[#allocation2 + $0x68] sm:$0xff] 0.0
        %265 = vst [vmem:[#allocation2 + $0x70] sm:$0xff] 0.0
        %266 = vst [vmem:[#allocation2 + $0x78] sm:$0xff] 0.0
        %267 = vst [vmem:[#allocation2 + $0x80] sm:$0xff] 0.0
        %268 = vst [vmem:[#allocation2 + $0x88] sm:$0xff] 0.0
        %269 = vst [vmem:[#allocation2 + $0x90] sm:$0xff] 0.0
        %270 = vst [vmem:[#allocation2 + $0x98] sm:$0xff] 0.0
        %271 = vst [vmem:[#allocation2 + $0xa0] sm:$0xff] 0.0
        %272 = vst [vmem:[#allocation2 + $0xa8] sm:$0xff] 0.0
        %273 = vst [vmem:[#allocation2 + $0xb0] sm:$0xff] 0.0
        %274 = vst [vmem:[#allocation2 + $0xb8] sm:$0xff] 0.0
        %275 = vst [vmem:[#allocation2 + $0xc0] sm:$0xff] 0.0
        %276 = vst [vmem:[#allocation2 + $0xc8] sm:$0xff] 0.0
        %277 = vst [vmem:[#allocation2 + $0xd0] sm:$0xff] 0.0
        %278 = vst [vmem:[#allocation2 + $0xd8] sm:$0xff] 0.0
        %279 = vst [vmem:[#allocation2 + $0xe0] sm:$0xff] 0.0
        %280 = vst [vmem:[#allocation2 + $0xe8] sm:$0xff] 0.0
        %281 = vst [vmem:[#allocation2 + $0xf0] sm:$0xff] 0.0
        %282 = vst [vmem:[#allocation2 + $0xf8] sm:$0xff] 0.0
      $region40: #{_lambda_.13} parent=35 // pred_fallthru
        _
      %v283 = vld [vmem:[#allocation2] sm:$0xff]
      %v284 = vld [vmem:[#allocation2 + $0x8] sm:$0xff]
      %v285 = vld [vmem:[#allocation2 + $0x10] sm:$0xff]
      %v286 = vld [vmem:[#allocation2 + $0x18] sm:$0xff]
      %v287 = vld [vmem:[#allocation2 + $0x20] sm:$0xff]
      %v288 = vld [vmem:[#allocation2 + $0x28] sm:$0xff]
      %v289 = vld [vmem:[#allocation2 + $0x30] sm:$0xff]
      %v290 = vld [vmem:[#allocation2 + $0x38] sm:$0xff]
      %v291 = vld [vmem:[#allocation2 + $0x40] sm:$0xff]
      %v292 = vld [vmem:[#allocation2 + $0x48] sm:$0xff]
      %v293 = vld [vmem:[#allocation2 + $0x50] sm:$0xff]
      %v294 = vld [vmem:[#allocation2 + $0x58] sm:$0xff]
      %v295 = vld [vmem:[#allocation2 + $0x60] sm:$0xff]
      %v296 = vld [vmem:[#allocation2 + $0x68] sm:$0xff]
      %v297 = vld [vmem:[#allocation2 + $0x70] sm:$0xff]
      %v298 = vld [vmem:[#allocation2 + $0x78] sm:$0xff]
      %v299 = vld [vmem:[#allocation2 + $0x80] sm:$0xff]
      %v300 = vld [vmem:[#allocation2 + $0x88] sm:$0xff]
      %v301 = vld [vmem:[#allocation2 + $0x90] sm:$0xff]
      %v302 = vld [vmem:[#allocation2 + $0x98] sm:$0xff]
      %v303 = vld [vmem:[#allocation2 + $0xa0] sm:$0xff]
      %v304 = vld [vmem:[#allocation2 + $0xa8] sm:$0xff]
      %v305 = vld [vmem:[#allocation2 + $0xb0] sm:$0xff]
      %v306 = vld [vmem:[#allocation2 + $0xb8] sm:$0xff]
      %v307 = vld [vmem:[#allocation2 + $0xc0] sm:$0xff]
      %v308 = vld [vmem:[#allocation2 + $0xc8] sm:$0xff]
      %v309 = vld [vmem:[#allocation2 + $0xd0] sm:$0xff]
      %v310 = vld [vmem:[#allocation2 + $0xd8] sm:$0xff]
      %v311 = vld [vmem:[#allocation2 + $0xe0] sm:$0xff]
      %v312 = vld [vmem:[#allocation2 + $0xe8] sm:$0xff]
      %v313 = vld [vmem:[#allocation2 + $0xf0] sm:$0xff]
      %v314 = vld [vmem:[#allocation2 + $0xf8] sm:$0xff]
      %v315 = vld [vmem:[%s232] sm:$0xf]
      %v316 = vld [vmem:[%s232 + $0x4] sm:$0xf]
      %v317 = vld [vmem:[%s232 + $0x8] sm:$0xf]
      %v318 = vld [vmem:[%s232 + $0xc] sm:$0xf]
      %v319 = vld [vmem:[%s232 + $0x10] sm:$0xf]
      %v320 = vld [vmem:[%s232 + $0x14] sm:$0xf]
      %v321 = vld [vmem:[%s232 + $0x18] sm:$0xf]
      %v322 = vld [vmem:[%s232 + $0x1c] sm:$0xf]
      %v323 = vld [vmem:[%s232 + $0x20] sm:$0xf]
      %v324 = vld [vmem:[%s232 + $0x24] sm:$0xf]
      %v325 = vld [vmem:[%s232 + $0x28] sm:$0xf]
      %v326 = vld [vmem:[%s232 + $0x2c] sm:$0xf]
      %v327 = vld [vmem:[%s232 + $0x30] sm:$0xf]
      %v328 = vld [vmem:[%s232 + $0x34] sm:$0xf]
      %v329 = vld [vmem:[%s232 + $0x38] sm:$0xf]
      %v330 = vld [vmem:[%s232 + $0x3c] sm:$0xf]
      %v331 = vld [vmem:[%s232 + $0x40] sm:$0xf]
      %v332 = vld [vmem:[%s232 + $0x44] sm:$0xf]
      %v333 = vld [vmem:[%s232 + $0x48] sm:$0xf]
      %v334 = vld [vmem:[%s232 + $0x4c] sm:$0xf]
      %v335 = vld [vmem:[%s232 + $0x50] sm:$0xf]
      %v336 = vld [vmem:[%s232 + $0x54] sm:$0xf]
      %v337 = vld [vmem:[%s232 + $0x58] sm:$0xf]
      %v338 = vld [vmem:[%s232 + $0x5c] sm:$0xf]
      %v339 = vld [vmem:[%s232 + $0x60] sm:$0xf]
      %v340 = vld [vmem:[%s232 + $0x64] sm:$0xf]
      %v341 = vld [vmem:[%s232 + $0x68] sm:$0xf]
      %v342 = vld [vmem:[%s232 + $0x6c] sm:$0xf]
      %v343 = vld [vmem:[%s232 + $0x70] sm:$0xf]
      %v344 = vld [vmem:[%s232 + $0x74] sm:$0xf]
      %v345 = vld [vmem:[%s232 + $0x78] sm:$0xf]
      %v346 = vld [vmem:[%s232 + $0x7c] sm:$0xf]
      %v347 = vld [vmem:[%s238] sm:$0xf]
      %v348 = vld [vmem:[%s238 + $0x4] sm:$0xf]
      %v349 = vld [vmem:[%s238 + $0x8] sm:$0xf]
      %v350 = vld [vmem:[%s238 + $0xc] sm:$0xf]
      %v351 = vld [vmem:[%s238 + $0x10] sm:$0xf]
      %v352 = vld [vmem:[%s238 + $0x14] sm:$0xf]
      %v353 = vld [vmem:[%s238 + $0x18] sm:$0xf]
      %v354 = vld [vmem:[%s238 + $0x1c] sm:$0xf]
      %v355 = vld [vmem:[%s238 + $0x20] sm:$0xf]
      %v356 = vld [vmem:[%s238 + $0x24] sm:$0xf]
      %v357 = vld [vmem:[%s238 + $0x28] sm:$0xf]
      %v358 = vld [vmem:[%s238 + $0x2c] sm:$0xf]
      %v359 = vld [vmem:[%s238 + $0x30] sm:$0xf]
      %v360 = vld [vmem:[%s238 + $0x34] sm:$0xf]
      %v361 = vld [vmem:[%s238 + $0x38] sm:$0xf]
      %v362 = vld [vmem:[%s238 + $0x3c] sm:$0xf]
      %v395 = vunpack.c.l.b16 %v315
      %v396 = vunpack.c.l.b16 %v316
      %v397 = vunpack.c.l.b16 %v317
      %v398 = vunpack.c.l.b16 %v318
      %v399 = vunpack.c.l.b16 %v319
      %v400 = vunpack.c.l.b16 %v320
      %v401 = vunpack.c.l.b16 %v321
      %v402 = vunpack.c.l.b16 %v322
      %v403 = vunpack.c.l.b16 %v323
      %v404 = vunpack.c.l.b16 %v324
      %v405 = vunpack.c.l.b16 %v325
      %v406 = vunpack.c.l.b16 %v326
      %v407 = vunpack.c.l.b16 %v327
      %v408 = vunpack.c.l.b16 %v328
      %v409 = vunpack.c.l.b16 %v329
      %v410 = vunpack.c.l.b16 %v330
      %v411 = vunpack.c.l.b16 %v331
      %v412 = vunpack.c.l.b16 %v332
      %v413 = vunpack.c.l.b16 %v333
      %v414 = vunpack.c.l.b16 %v334
      %v415 = vunpack.c.l.b16 %v335
      %v416 = vunpack.c.l.b16 %v336
      %v417 = vunpack.c.l.b16 %v337
      %v418 = vunpack.c.l.b16 %v338
      %v419 = vunpack.c.l.b16 %v339
      %v420 = vunpack.c.l.b16 %v340
      %v421 = vunpack.c.l.b16 %v341
      %v422 = vunpack.c.l.b16 %v342
      %v423 = vunpack.c.l.b16 %v343
      %v424 = vunpack.c.l.b16 %v344
      %v425 = vunpack.c.l.b16 %v345
      %v426 = vunpack.c.l.b16 %v346
      %v427 = vpack.c.b16 %v396, %v395
      %v428 = vpack.c.b16 %v398, %v397
      %v429 = vpack.c.b16 %v400, %v399
      %v430 = vpack.c.b16 %v402, %v401
      %v431 = vpack.c.b16 %v404, %v403
      %v432 = vpack.c.b16 %v406, %v405
      %v433 = vpack.c.b16 %v408, %v407
      %v434 = vpack.c.b16 %v410, %v409
      %v435 = vpack.c.b16 %v412, %v411
      %v436 = vpack.c.b16 %v414, %v413
      %v437 = vpack.c.b16 %v416, %v415
      %v438 = vpack.c.b16 %v418, %v417
      %v439 = vpack.c.b16 %v420, %v419
      %v440 = vpack.c.b16 %v422, %v421
      %v441 = vpack.c.b16 %v424, %v423
      %v442 = vpack.c.b16 %v426, %v425
      %v475 = vunpack.c.l.b16 %v347
      %v476 = vunpack.c.l.b16 %v348
      %v477 = vunpack.c.l.b16 %v349
      %v478 = vunpack.c.l.b16 %v350
      %v479 = vunpack.c.l.b16 %v351
      %v480 = vunpack.c.l.b16 %v352
      %v481 = vunpack.c.l.b16 %v353
      %v482 = vunpack.c.l.b16 %v354
      %v483 = vunpack.c.l.b16 %v355
      %v484 = vunpack.c.l.b16 %v356
      %v485 = vunpack.c.l.b16 %v357
      %v486 = vunpack.c.l.b16 %v358
      %v487 = vunpack.c.l.b16 %v359
      %v488 = vunpack.c.l.b16 %v360
      %v489 = vunpack.c.l.b16 %v361
      %v490 = vunpack.c.l.b16 %v362
      %v491 = vpack.c.b16 %v476, %v475
      %v492 = vpack.c.b16 %v478, %v477
      %v493 = vpack.c.b16 %v480, %v479
      %v494 = vpack.c.b16 %v482, %v481
      %v495 = vpack.c.b16 %v484, %v483
      %v496 = vpack.c.b16 %v486, %v485
      %v497 = vpack.c.b16 %v488, %v487
      %v498 = vpack.c.b16 %v490, %v489
      %507 = vmatprep.subr.bf16.mxu0 0
      %508 = vmatpush1.bf16.msra.mxu0 %v498
      %509 = vmatprep.subr.bf16.mxu0 0
      %510 = vmatpush1.bf16.msra.mxu0 %v497
      %511 = vmatprep.subr.bf16.mxu0 0
      %512 = vmatpush1.bf16.msra.mxu0 %v496
      %513 = vmatprep.subr.bf16.mxu0 0
      %514 = vmatpush1.bf16.msra.mxu0 %v495
      %515 = vmatprep.subr.bf16.mxu0 0
      %516 = vmatpush1.bf16.msra.mxu0 %v494
      %517 = vmatprep.subr.bf16.mxu0 0
      %518 = vmatpush1.bf16.msra.mxu0 %v493
      %519 = vmatprep.subr.bf16.mxu0 0
      %520 = vmatpush1.bf16.msra.mxu0 %v492
      %521 = vmatprep.subr.bf16.mxu0 0
      %522 = vmatpush1.bf16.msra.mxu0 %v491
      %523 = vmatprep.subr.bf16.mxu0 0
      %524 = vmatpush2.bf16.msra.mxu0 0
      %525 = vmatprep.subr.bf16.mxu0 0
      %526 = vmatpush2.bf16.msra.mxu0 0
      %527 = vmatprep.subr.bf16.mxu0 0
      %528 = vmatpush2.bf16.msra.mxu0 0
      %529 = vmatprep.subr.bf16.mxu0 0
      %530 = vmatpush2.bf16.msra.mxu0 0
      %531 = vmatprep.subr.bf16.mxu0 0
      %532 = vmatpush2.bf16.msra.mxu0 0
      %533 = vmatprep.subr.bf16.mxu0 0
      %534 = vmatpush2.bf16.msra.mxu0 0
      %535 = vmatprep.subr.bf16.mxu0 0
      %536 = vmatpush2.bf16.msra.mxu0 0
      %537 = vmatprep.subr.bf16.mxu0 0
      %538 = vmatpush2.bf16.msra.mxu0 0
      %539 = vmatprep.mubr.bf16.mxu0 0
      %540 = vmatmul.mubr.bf16.gmra.mxu0 %v427
      %v541 = vpop.f32.mrf.mxu0
      %v542 = vadd.f32 0.0, %v541
      %v543 = vpop.f32.mrf.mxu0
      %v544 = vpop.f32.mrf.mxu0
      %v545 = vadd.f32 0.0, %v544
      %v546 = vpop.f32.mrf.mxu0
      %547 = vmatprep.mubr.bf16.mxu0 0
      %548 = vmatmul.mubr.bf16.gmra.mxu0 %v428
      %v549 = vpop.f32.mrf.mxu0
      %v550 = vadd.f32 0.0, %v549
      %v551 = vpop.f32.mrf.mxu0
      %v552 = vpop.f32.mrf.mxu0
      %v553 = vadd.f32 0.0, %v552
      %v554 = vpop.f32.mrf.mxu0
      %555 = vmatprep.mubr.bf16.mxu0 0
      %556 = vmatmul.mubr.bf16.gmra.mxu0 %v429
      %v557 = vpop.f32.mrf.mxu0
      %v558 = vadd.f32 0.0, %v557
      %v559 = vpop.f32.mrf.mxu0
      %v560 = vpop.f32.mrf.mxu0
      %v561 = vadd.f32 0.0, %v560
      %v562 = vpop.f32.mrf.mxu0
      %563 = vmatprep.mubr.bf16.mxu0 0
      %564 = vmatmul.mubr.bf16.gmra.mxu0 %v430
      %v565 = vpop.f32.mrf.mxu0
      %v566 = vadd.f32 0.0, %v565
      %v567 = vpop.f32.mrf.mxu0
      %v568 = vpop.f32.mrf.mxu0
      %v569 = vadd.f32 0.0, %v568
      %v570 = vpop.f32.mrf.mxu0
      %571 = vmatprep.mubr.bf16.mxu0 0
      %572 = vmatmul.mubr.bf16.gmra.mxu0 %v431
      %v573 = vpop.f32.mrf.mxu0
      %v574 = vadd.f32 0.0, %v573
      %v575 = vpop.f32.mrf.mxu0
      %v576 = vpop.f32.mrf.mxu0
      %v577 = vadd.f32 0.0, %v576
      %v578 = vpop.f32.mrf.mxu0
      %579 = vmatprep.mubr.bf16.mxu0 0
      %580 = vmatmul.mubr.bf16.gmra.mxu0 %v432
      %v581 = vpop.f32.mrf.mxu0
      %v582 = vadd.f32 0.0, %v581
      %v583 = vpop.f32.mrf.mxu0
      %v584 = vpop.f32.mrf.mxu0
      %v585 = vadd.f32 0.0, %v584
      %v586 = vpop.f32.mrf.mxu0
      %587 = vmatprep.mubr.bf16.mxu0 0
      %588 = vmatmul.mubr.bf16.gmra.mxu0 %v433
      %v589 = vpop.f32.mrf.mxu0
      %v590 = vadd.f32 0.0, %v589
      %v591 = vpop.f32.mrf.mxu0
      %v592 = vpop.f32.mrf.mxu0
      %v593 = vadd.f32 0.0, %v592
      %v594 = vpop.f32.mrf.mxu0
      %595 = vmatprep.mubr.bf16.mxu0 0
      %596 = vmatmul.mubr.bf16.gmra.mxu0 %v434
      %v597 = vpop.f32.mrf.mxu0
      %v598 = vadd.f32 0.0, %v597
      %v599 = vpop.f32.mrf.mxu0
      %v600 = vpop.f32.mrf.mxu0
      %v601 = vadd.f32 0.0, %v600
      %v602 = vpop.f32.mrf.mxu0
      %603 = vmatprep.mubr.bf16.mxu0 0
      %604 = vmatmul.mubr.bf16.gmra.mxu0 %v435
      %v605 = vpop.f32.mrf.mxu0
      %v606 = vadd.f32 0.0, %v605
      %v607 = vpop.f32.mrf.mxu0
      %v608 = vpop.f32.mrf.mxu0
      %v609 = vadd.f32 0.0, %v608
      %v610 = vpop.f32.mrf.mxu0
      %611 = vmatprep.mubr.bf16.mxu0 0
      %612 = vmatmul.mubr.bf16.gmra.mxu0 %v436
      %v613 = vpop.f32.mrf.mxu0
      %v614 = vadd.f32 0.0, %v613
      %v615 = vpop.f32.mrf.mxu0
      %v616 = vpop.f32.mrf.mxu0
      %v617 = vadd.f32 0.0, %v616
      %v618 = vpop.f32.mrf.mxu0
      %619 = vmatprep.mubr.bf16.mxu0 0
      %620 = vmatmul.mubr.bf16.gmra.mxu0 %v437
      %v621 = vpop.f32.mrf.mxu0
      %v622 = vadd.f32 0.0, %v621
      %v623 = vpop.f32.mrf.mxu0
      %v624 = vpop.f32.mrf.mxu0
      %v625 = vadd.f32 0.0, %v624
      %v626 = vpop.f32.mrf.mxu0
      %627 = vmatprep.mubr.bf16.mxu0 0
      %628 = vmatmul.mubr.bf16.gmra.mxu0 %v438
      %v629 = vpop.f32.mrf.mxu0
      %v630 = vadd.f32 0.0, %v629
      %v631 = vpop.f32.mrf.mxu0
      %v632 = vpop.f32.mrf.mxu0
      %v633 = vadd.f32 0.0, %v632
      %v634 = vpop.f32.mrf.mxu0
      %635 = vmatprep.mubr.bf16.mxu0 0
      %636 = vmatmul.mubr.bf16.gmra.mxu0 %v439
      %v637 = vpop.f32.mrf.mxu0
      %v638 = vadd.f32 0.0, %v637
      %v639 = vpop.f32.mrf.mxu0
      %v640 = vpop.f32.mrf.mxu0
      %v641 = vadd.f32 0.0, %v640
      %v642 = vpop.f32.mrf.mxu0
      %643 = vmatprep.mubr.bf16.mxu0 0
      %644 = vmatmul.mubr.bf16.gmra.mxu0 %v440
      %v645 = vpop.f32.mrf.mxu0
      %v646 = vadd.f32 0.0, %v645
      %v647 = vpop.f32.mrf.mxu0
      %v648 = vpop.f32.mrf.mxu0
      %v649 = vadd.f32 0.0, %v648
      %v650 = vpop.f32.mrf.mxu0
      %651 = vmatprep.mubr.bf16.mxu0 0
      %652 = vmatmul.mubr.bf16.gmra.mxu0 %v441
      %v653 = vpop.f32.mrf.mxu0
      %v654 = vadd.f32 0.0, %v653
      %v655 = vpop.f32.mrf.mxu0
      %v656 = vpop.f32.mrf.mxu0
      %v657 = vadd.f32 0.0, %v656
      %v658 = vpop.f32.mrf.mxu0
      %659 = vmatprep.mubr.bf16.mxu0 0
      %660 = vmatmul.mubr.bf16.gmra.mxu0 %v442
      %v661 = vpop.f32.mrf.mxu0
      %v662 = vadd.f32 0.0, %v661
      %v663 = vpop.f32.mrf.mxu0
      %v664 = vpop.f32.mrf.mxu0
      %v665 = vadd.f32 0.0, %v664
      %v666 = vpop.f32.mrf.mxu0
      %667 = vdwg.mxu0
      %v668 = vadd.f32 %v283, %v542
      %v669 = vadd.f32 %v284, %v545
      %v670 = vadd.f32 %v285, %v550
      %v671 = vadd.f32 %v286, %v553
      %v672 = vadd.f32 %v287, %v558
      %v673 = vadd.f32 %v288, %v561
      %v674 = vadd.f32 %v289, %v566
      %v675 = vadd.f32 %v290, %v569
      %v676 = vadd.f32 %v291, %v574
      %v677 = vadd.f32 %v292, %v577
      %v678 = vadd.f32 %v293, %v582
      %v679 = vadd.f32 %v294, %v585
      %v680 = vadd.f32 %v295, %v590
      %v681 = vadd.f32 %v296, %v593
      %v682 = vadd.f32 %v297, %v598
      %v683 = vadd.f32 %v298, %v601
      %v684 = vadd.f32 %v299, %v606
      %v685 = vadd.f32 %v300, %v609
      %v686 = vadd.f32 %v301, %v614
      %v687 = vadd.f32 %v302, %v617
      %v688 = vadd.f32 %v303, %v622
      %v689 = vadd.f32 %v304, %v625
      %v690 = vadd.f32 %v305, %v630
      %v691 = vadd.f32 %v306, %v633
      %v692 = vadd.f32 %v307, %v638
      %v693 = vadd.f32 %v308, %v641
      %v694 = vadd.f32 %v309, %v646
      %v695 = vadd.f32 %v310, %v649
      %v696 = vadd.f32 %v311, %v654
      %v697 = vadd.f32 %v312, %v657
      %v698 = vadd.f32 %v313, %v662
      %v699 = vadd.f32 %v314, %v665
      %700 = vst [vmem:[#allocation2] sm:$0xff] %v668
      %701 = vst [vmem:[#allocation2 + $0x8] sm:$0xff] %v669
      %702 = vst [vmem:[#allocation2 + $0x10] sm:$0xff] %v670
      %703 = vst [vmem:[#allocation2 + $0x18] sm:$0xff] %v671
      %704 = vst [vmem:[#allocation2 + $0x20] sm:$0xff] %v672
      %705 = vst [vmem:[#allocation2 + $0x28] sm:$0xff] %v673
      %706 = vst [vmem:[#allocation2 + $0x30] sm:$0xff] %v674
      %707 = vst [vmem:[#allocation2 + $0x38] sm:$0xff] %v675
      %708 = vst [vmem:[#allocation2 + $0x40] sm:$0xff] %v676
      %709 = vst [vmem:[#allocation2 + $0x48] sm:$0xff] %v677
      %710 = vst [vmem:[#allocation2 + $0x50] sm:$0xff] %v678
      %711 = vst [vmem:[#allocation2 + $0x58] sm:$0xff] %v679
      %712 = vst [vmem:[#allocation2 + $0x60] sm:$0xff] %v680
      %713 = vst [vmem:[#allocation2 + $0x68] sm:$0xff] %v681
      %714 = vst [vmem:[#allocation2 + $0x70] sm:$0xff] %v682
      %715 = vst [vmem:[#allocation2 + $0x78] sm:$0xff] %v683
      %716 = vst [vmem:[#allocation2 + $0x80] sm:$0xff] %v684
      %717 = vst [vmem:[#allocation2 + $0x88] sm:$0xff] %v685
      %718 = vst [vmem:[#allocation2 + $0x90] sm:$0xff] %v686
      %719 = vst [vmem:[#allocation2 + $0x98] sm:$0xff] %v687
      %720 = vst [vmem:[#allocation2 + $0xa0] sm:$0xff] %v688
      %721 = vst [vmem:[#allocation2 + $0xa8] sm:$0xff] %v689
      %722 = vst [vmem:[#allocation2 + $0xb0] sm:$0xff] %v690
      %723 = vst [vmem:[#allocation2 + $0xb8] sm:$0xff] %v691
      %724 = vst [vmem:[#allocation2 + $0xc0] sm:$0xff] %v692
      %725 = vst [vmem:[#allocation2 + $0xc8] sm:$0xff] %v693
      %726 = vst [vmem:[#allocation2 + $0xd0] sm:$0xff] %v694
      %727 = vst [vmem:[#allocation2 + $0xd8] sm:$0xff] %v695
      %728 = vst [vmem:[#allocation2 + $0xe0] sm:$0xff] %v696
      %729 = vst [vmem:[#allocation2 + $0xe8] sm:$0xff] %v697
      %730 = vst [vmem:[#allocation2 + $0xf0] sm:$0xff] %v698
      %731 = vst [vmem:[#allocation2 + $0xf8] sm:$0xff] %v699
      // Predicated region
      $region41: #{_lambda_.13} parent=35 // pred_check
        %p732 = pneg %p247
      $region42: #{_lambda_.13} parent=35 // pred_check_branch
        %734 = sbr.rel (%p732) target = $region44
      $region43: #{_lambda_.13} parent=35 // pred_region
        %v735 = vld [vmem:[#allocation2] sm:$0xff]
        %v736 = vld [vmem:[#allocation2 + $0x8] sm:$0xff]
        %v737 = vld [vmem:[#allocation2 + $0x10] sm:$0xff]
        %v738 = vld [vmem:[#allocation2 + $0x18] sm:$0xff]
        %v739 = vld [vmem:[#allocation2 + $0x20] sm:$0xff]
        %v740 = vld [vmem:[#allocation2 + $0x28] sm:$0xff]
        %v741 = vld [vmem:[#allocation2 + $0x30] sm:$0xff]
        %v742 = vld [vmem:[#allocation2 + $0x38] sm:$0xff]
        %v743 = vld [vmem:[#allocation2 + $0x40] sm:$0xff]
        %v744 = vld [vmem:[#allocation2 + $0x48] sm:$0xff]
        %v745 = vld [vmem:[#allocation2 + $0x50] sm:$0xff]
        %v746 = vld [vmem:[#allocation2 + $0x58] sm:$0xff]
        %v747 = vld [vmem:[#allocation2 + $0x60] sm:$0xff]
        %v748 = vld [vmem:[#allocation2 + $0x68] sm:$0xff]
        %v749 = vld [vmem:[#allocation2 + $0x70] sm:$0xff]
        %v750 = vld [vmem:[#allocation2 + $0x78] sm:$0xff]
        %v751 = vld [vmem:[#allocation2 + $0x80] sm:$0xff]
        %v752 = vld [vmem:[#allocation2 + $0x88] sm:$0xff]
        %v753 = vld [vmem:[#allocation2 + $0x90] sm:$0xff]
        %v754 = vld [vmem:[#allocation2 + $0x98] sm:$0xff]
        %v755 = vld [vmem:[#allocation2 + $0xa0] sm:$0xff]
        %v756 = vld [vmem:[#allocation2 + $0xa8] sm:$0xff]
        %v757 = vld [vmem:[#allocation2 + $0xb0] sm:$0xff]
        %v758 = vld [vmem:[#allocation2 + $0xb8] sm:$0xff]
        %v759 = vld [vmem:[#allocation2 + $0xc0] sm:$0xff]
        %v760 = vld [vmem:[#allocation2 + $0xc8] sm:$0xff]
        %v761 = vld [vmem:[#allocation2 + $0xd0] sm:$0xff]
        %v762 = vld [vmem:[#allocation2 + $0xd8] sm:$0xff]
        %v763 = vld [vmem:[#allocation2 + $0xe0] sm:$0xff]
        %v764 = vld [vmem:[#allocation2 + $0xe8] sm:$0xff]
        %v765 = vld [vmem:[#allocation2 + $0xf0] sm:$0xff]
        %v766 = vld [vmem:[#allocation2 + $0xf8] sm:$0xff]
        %v767 = vld [vmem:[%s2] sm:$0x1]
        %v769 = vlaneseq
        %v770 = vshrl.u32 %v769, 7
        %v771 = vsub.s32 0, %v770
        %v772 = vrot.slane %v767, %v771
        %v774 = vmul.f32 %v735, %v772
        %v775 = vmul.f32 %v736, %v772
        %v776 = vmul.f32 %v737, %v772
        %v777 = vmul.f32 %v738, %v772
        %v778 = vmul.f32 %v739, %v772
        %v779 = vmul.f32 %v740, %v772
        %v780 = vmul.f32 %v741, %v772
        %v781 = vmul.f32 %v742, %v772
        %v782 = vmul.f32 %v743, %v772
        %v783 = vmul.f32 %v744, %v772
        %v784 = vmul.f32 %v745, %v772
        %v785 = vmul.f32 %v746, %v772
        %v786 = vmul.f32 %v747, %v772
        %v787 = vmul.f32 %v748, %v772
        %v788 = vmul.f32 %v749, %v772
        %v789 = vmul.f32 %v750, %v772
        %v790 = vmul.f32 %v751, %v772
        %v791 = vmul.f32 %v752, %v772
        %v792 = vmul.f32 %v753, %v772
        %v793 = vmul.f32 %v754, %v772
        %v794 = vmul.f32 %v755, %v772
        %v795 = vmul.f32 %v756, %v772
        %v796 = vmul.f32 %v757, %v772
        %v797 = vmul.f32 %v758, %v772
        %v798 = vmul.f32 %v759, %v772
        %v799 = vmul.f32 %v760, %v772
        %v800 = vmul.f32 %v761, %v772
        %v801 = vmul.f32 %v762, %v772
        %v802 = vmul.f32 %v763, %v772
        %v803 = vmul.f32 %v764, %v772
        %v804 = vmul.f32 %v765, %v772
        %v805 = vmul.f32 %v766, %v772
        %v806 = vld [vmem:[%s3] sm:$0x1]
        %v808 = vlaneseq
        %v809 = vshrl.u32 %v808, 7
        %v810 = vsub.s32 0, %v809
        %v811 = vrot.slane %v806, %v810
        %v813 = vadd.f32 %v774, %v811
        %v814 = vadd.f32 %v775, %v811
        %v815 = vadd.f32 %v776, %v811
        %v816 = vadd.f32 %v777, %v811
        %v817 = vadd.f32 %v778, %v811
        %v818 = vadd.f32 %v779, %v811
        %v819 = vadd.f32 %v780, %v811
        %v820 = vadd.f32 %v781, %v811
        %v821 = vadd.f32 %v782, %v811
        %v822 = vadd.f32 %v783, %v811
        %v823 = vadd.f32 %v784, %v811
        %v824 = vadd.f32 %v785, %v811
        %v825 = vadd.f32 %v786, %v811
        %v826 = vadd.f32 %v787, %v811
        %v827 = vadd.f32 %v788, %v811
        %v828 = vadd.f32 %v789, %v811
        %v829 = vadd.f32 %v790, %v811
        %v830 = vadd.f32 %v791, %v811
        %v831 = vadd.f32 %v792, %v811
        %v832 = vadd.f32 %v793, %v811
        %v833 = vadd.f32 %v794, %v811
        %v834 = vadd.f32 %v795, %v811
        %v835 = vadd.f32 %v796, %v811
        %v836 = vadd.f32 %v797, %v811
        %v837 = vadd.f32 %v798, %v811
        %v838 = vadd.f32 %v799, %v811
        %v839 = vadd.f32 %v800, %v811
        %v840 = vadd.f32 %v801, %v811
        %v841 = vadd.f32 %v802, %v811
        %v842 = vadd.f32 %v803, %v811
        %v843 = vadd.f32 %v804, %v811
        %v844 = vadd.f32 %v805, %v811
        %vm845 = vcmp.gt.f32.partialorder %v813, 0.0
        %vm846 = vcmp.gt.f32.partialorder %v814, 0.0
        %vm847 = vcmp.gt.f32.partialorder %v815, 0.0
        %vm848 = vcmp.gt.f32.partialorder %v816, 0.0
        %vm849 = vcmp.gt.f32.partialorder %v817, 0.0
        %vm850 = vcmp.gt.f32.partialorder %v818, 0.0
        %vm851 = vcmp.gt.f32.partialorder %v819, 0.0
        %vm852 = vcmp.gt.f32.partialorder %v820, 0.0
        %vm853 = vcmp.gt.f32.partialorder %v821, 0.0
        %vm854 = vcmp.gt.f32.partialorder %v822, 0.0
        %vm855 = vcmp.gt.f32.partialorder %v823, 0.0
        %vm856 = vcmp.gt.f32.partialorder %v824, 0.0
        %vm857 = vcmp.gt.f32.partialorder %v825, 0.0
        %vm858 = vcmp.gt.f32.partialorder %v826, 0.0
        %vm859 = vcmp.gt.f32.partialorder %v827, 0.0
        %vm860 = vcmp.gt.f32.partialorder %v828, 0.0
        %vm861 = vcmp.gt.f32.partialorder %v829, 0.0
        %vm862 = vcmp.gt.f32.partialorder %v830, 0.0
        %vm863 = vcmp.gt.f32.partialorder %v831, 0.0
        %vm864 = vcmp.gt.f32.partialorder %v832, 0.0
        %vm865 = vcmp.gt.f32.partialorder %v833, 0.0
        %vm866 = vcmp.gt.f32.partialorder %v834, 0.0
        %vm867 = vcmp.gt.f32.partialorder %v835, 0.0
        %vm868 = vcmp.gt.f32.partialorder %v836, 0.0
        %vm869 = vcmp.gt.f32.partialorder %v837, 0.0
        %vm870 = vcmp.gt.f32.partialorder %v838, 0.0
        %vm871 = vcmp.gt.f32.partialorder %v839, 0.0
        %vm872 = vcmp.gt.f32.partialorder %v840, 0.0
        %vm873 = vcmp.gt.f32.partialorder %v841, 0.0
        %vm874 = vcmp.gt.f32.partialorder %v842, 0.0
        %vm875 = vcmp.gt.f32.partialorder %v843, 0.0
        %vm876 = vcmp.gt.f32.partialorder %v844, 0.0
        %v877 = vmul.f32 %v813, 0.2
        %v878 = vmul.f32 %v814, 0.2
        %v879 = vmul.f32 %v815, 0.2
        %v880 = vmul.f32 %v816, 0.2
        %v881 = vmul.f32 %v817, 0.2
        %v882 = vmul.f32 %v818, 0.2
        %v883 = vmul.f32 %v819, 0.2
        %v884 = vmul.f32 %v820, 0.2
        %v885 = vmul.f32 %v821, 0.2
        %v886 = vmul.f32 %v822, 0.2
        %v887 = vmul.f32 %v823, 0.2
        %v888 = vmul.f32 %v824, 0.2
        %v889 = vmul.f32 %v825, 0.2
        %v890 = vmul.f32 %v826, 0.2
        %v891 = vmul.f32 %v827, 0.2
        %v892 = vmul.f32 %v828, 0.2
        %v893 = vmul.f32 %v829, 0.2
        %v894 = vmul.f32 %v830, 0.2
        %v895 = vmul.f32 %v831, 0.2
        %v896 = vmul.f32 %v832, 0.2
        %v897 = vmul.f32 %v833, 0.2
        %v898 = vmul.f32 %v834, 0.2
        %v899 = vmul.f32 %v835, 0.2
        %v900 = vmul.f32 %v836, 0.2
        %v901 = vmul.f32 %v837, 0.2
        %v902 = vmul.f32 %v838, 0.2
        %v903 = vmul.f32 %v839, 0.2
        %v904 = vmul.f32 %v840, 0.2
        %v905 = vmul.f32 %v841, 0.2
        %v906 = vmul.f32 %v842, 0.2
        %v907 = vmul.f32 %v843, 0.2
        %v908 = vmul.f32 %v844, 0.2
        %v909 = vsel %vm845, %v813, %v877
        %v910 = vsel %vm846, %v814, %v878
        %v911 = vsel %vm847, %v815, %v879
        %v912 = vsel %vm848, %v816, %v880
        %v913 = vsel %vm849, %v817, %v881
        %v914 = vsel %vm850, %v818, %v882
        %v915 = vsel %vm851, %v819, %v883
        %v916 = vsel %vm852, %v820, %v884
        %v917 = vsel %vm853, %v821, %v885
        %v918 = vsel %vm854, %v822, %v886
        %v919 = vsel %vm855, %v823, %v887
        %v920 = vsel %vm856, %v824, %v888
        %v921 = vsel %vm857, %v825, %v889
        %v922 = vsel %vm858, %v826, %v890
        %v923 = vsel %vm859, %v827, %v891
        %v924 = vsel %vm860, %v828, %v892
        %v925 = vsel %vm861, %v829, %v893
        %v926 = vsel %vm862, %v830, %v894
        %v927 = vsel %vm863, %v831, %v895
        %v928 = vsel %vm864, %v832, %v896
        %v929 = vsel %vm865, %v833, %v897
        %v930 = vsel %vm866, %v834, %v898
        %v931 = vsel %vm867, %v835, %v899
        %v932 = vsel %vm868, %v836, %v900
        %v933 = vsel %vm869, %v837, %v901
        %v934 = vsel %vm870, %v838, %v902
        %v935 = vsel %vm871, %v839, %v903
        %v936 = vsel %vm872, %v840, %v904
        %v937 = vsel %vm873, %v841, %v905
        %v938 = vsel %vm874, %v842, %v906
        %v939 = vsel %vm875, %v843, %v907
        %v940 = vsel %vm876, %v844, %v908
        %941 = vst [vmem:[%s244] sm:$0xff] %v909
        %942 = vst [vmem:[%s244 + $0x8] sm:$0xff] %v910
        %943 = vst [vmem:[%s244 + $0x10] sm:$0xff] %v911
        %944 = vst [vmem:[%s244 + $0x18] sm:$0xff] %v912
        %945 = vst [vmem:[%s244 + $0x20] sm:$0xff] %v913
        %946 = vst [vmem:[%s244 + $0x28] sm:$0xff] %v914
        %947 = vst [vmem:[%s244 + $0x30] sm:$0xff] %v915
        %948 = vst [vmem:[%s244 + $0x38] sm:$0xff] %v916
        %949 = vst [vmem:[%s244 + $0x40] sm:$0xff] %v917
        %950 = vst [vmem:[%s244 + $0x48] sm:$0xff] %v918
        %951 = vst [vmem:[%s244 + $0x50] sm:$0xff] %v919
        %952 = vst [vmem:[%s244 + $0x58] sm:$0xff] %v920
        %953 = vst [vmem:[%s244 + $0x60] sm:$0xff] %v921
        %954 = vst [vmem:[%s244 + $0x68] sm:$0xff] %v922
        %955 = vst [vmem:[%s244 + $0x70] sm:$0xff] %v923
        %956 = vst [vmem:[%s244 + $0x78] sm:$0xff] %v924
        %957 = vst [vmem:[%s244 + $0x80] sm:$0xff] %v925
        %958 = vst [vmem:[%s244 + $0x88] sm:$0xff] %v926
        %959 = vst [vmem:[%s244 + $0x90] sm:$0xff] %v927
        %960 = vst [vmem:[%s244 + $0x98] sm:$0xff] %v928
        %961 = vst [vmem:[%s244 + $0xa0] sm:$0xff] %v929
        %962 = vst [vmem:[%s244 + $0xa8] sm:$0xff] %v930
        %963 = vst [vmem:[%s244 + $0xb0] sm:$0xff] %v931
        %964 = vst [vmem:[%s244 + $0xb8] sm:$0xff] %v932
        %965 = vst [vmem:[%s244 + $0xc0] sm:$0xff] %v933
        %966 = vst [vmem:[%s244 + $0xc8] sm:$0xff] %v934
        %967 = vst [vmem:[%s244 + $0xd0] sm:$0xff] %v935
        %968 = vst [vmem:[%s244 + $0xd8] sm:$0xff] %v936
        %969 = vst [vmem:[%s244 + $0xe0] sm:$0xff] %v937
        %970 = vst [vmem:[%s244 + $0xe8] sm:$0xff] %v938
        %971 = vst [vmem:[%s244 + $0xf0] sm:$0xff] %v939
        %972 = vst [vmem:[%s244 + $0xf8] sm:$0xff] %v940
      $region44: #{_lambda_.13} parent=35 // pred_fallthru
        _
      %s973 = smul.u32 32, %s19
      %p974 = scmp.lt.s32.totalorder %s973, 63
      %s975 = scalar_select %p974, %s973, 63
      %s976 = smul.addr %s975, 8
      %s977 = scalar_lea.vmem %s4, %s976
      // Predicated region
      $region45: #{_lambda_.13} parent=35 // pred_check
        %p978 = pneg %p141
      $region46: #{_lambda_.13} parent=35 // pred_check_branch
        %980 = sbr.rel (%p978) target = $region48
      $region47: #{_lambda_.13} parent=35 // pred_region
        %s981 = smul.u32 32, %s19
      $region48: #{_lambda_.13} parent=35 // pred_fallthru
        _
    $region36: #{_lambda_.13} parent=5 // pred_fallthru
      _
    %p982 = scmp.le.s32.totalorder 2, %s10
    // Predicated region
    $region49: #{_lambda_.13} parent=5 // pred_check
      %p983 = pneg %p982
    $region50: #{_lambda_.13} parent=5 // pred_check_branch
      %985 = sbr.rel (%p983) target = $region52
    $region51: #{_lambda_.13} parent=5 // pred_region
      %s986 = ssub.s32 %s10, 2
      // Predicated region
      $region53: #{_lambda_.13} parent=51 // pred_check
        %p987 = pneg %p147
      $region54: #{_lambda_.13} parent=51 // pred_check_branch
        %989 = sbr.rel (%p987) target = $region56
      $region55: #{_lambda_.13} parent=51 // pred_region
        %s990 = smul.u32 32, %s21
        %p991 = scmp.lt.s32.totalorder %s990, 63
        %s992 = scalar_select %p991, %s990, 63
        %s993 = smul.addr %s992, 8
        %s994 = scalar_lea.vmem %s4, %s993
      $region56: #{_lambda_.13} parent=51 // pred_fallthru
        _
    $region52: #{_lambda_.13} parent=5 // pred_fallthru
      _
  $region6: #{_lambda_.13} parent=0 // loop_footer
    %s14 = sadd.s32 1, %s10
  $region7: #{_lambda_.13} parent=0 // loop_footer_branch
    %9 = sbr.rel target = $region3
  $region8: #{_lambda_.13} parent=0 // loop_exit
    _

// kernel: _lambda_.14
$region0: #{_lambda_.14}
  #allocation0 [shape = 'u32[]', space=smem, size = 0x4, offset = 0x4, fixed_abs, tag = 'smem constant byte address 0x4 - core index']
  #allocation1 [shape = 'u32[144,128]{1,0:T(1,128)}', space=vmem, size = 0x12000, scoped, tag = 'internal scratch']
  #allocation2 [shape = 'f32[64,128]{1,0:T(8,128)}', space=vmem, size = 0x8000, scoped, tag = 'scratch operand']
  %s0 = inlined_call_operand.vmem [shape: bf16[128,256], index: 0, kind: input, shape index: {}]
  %s1 = inlined_call_operand.vmem [shape: bf16[256,128], index: 1, kind: input, shape index: {}]
  %s2 = inlined_call_operand.vmem [shape: f32[1,128], index: 2, kind: input, shape index: {}]
  %s3 = inlined_call_operand.vmem [shape: f32[1,128], index: 3, kind: input, shape index: {}]
  %s4 = inlined_call_operand.vmem [shape: f32[128,128], index: 4, kind: output, shape index: {}]
  %s5 = sld [smem:[#allocation0]]
  $region57: #{_lambda_.14} parent=0
    _
  %s7 = ssub.s32 1, %s5
  %s8 = scalar_select 0, %s7, %s5
  loop: start=0, step=1, limit=4
  $region2: #{_lambda_.14} parent=0 // loop_pre_header
    _
  $region3: #{_lambda_.14} parent=0 // loop_header
    %s10 = sphi 0, %s14
    %p11 = scmp.ge.s32.totalorder %s10, 4
    %s17 = sphi 0, %s29
    %s18 = sphi 0, %s25
    %s19 = sphi 0, %s17
    %s20 = sphi 0, %s18
    %s21 = sphi 0, %s19
    %s22 = sphi 0, %s20
    %s34 = sphi 0, %s36
    %s37 = sphi 0, %s34
    %s38 = sphi 0, %s37
    %s54 = sphi 0, %s38
    %s60 = sphi 0, %s62
    %s63 = sphi 0, %s60
    %s64 = sphi 0, %s63
    %s80 = sphi 0, %s64
    %s84 = sphi 0, %s84
    %s86 = sphi 0, %s84
    %s87 = sphi 0, %s86
    %s101 = sphi 0, %s87
    %s105 = sphi 0, %s105
    %s107 = sphi 0, %s105
    %s108 = sphi 0, %s107
    %s122 = sphi 0, %s108
    %s128 = sphi 0, %s130
    %s131 = sphi 0, %s128
    %s132 = sphi 0, %s131
    %s148 = sphi 0, %s132
  $region4: #{_lambda_.14} parent=0 // loop_header_branch
    %13 = sbr.rel (%p11) target = $region8
  $region5: #{_lambda_.14} parent=0 // loop_body
    %s15 = ssub.s32 %s10, 1
    %s16 = ssub.s32 %s10, 2
    %s23 = sadd.s32 1, %s18
    %p24 = scmp.ge.s32.totalorder %s23, 1
    %s25 = scalar_select %p24, 0, %s23
    %s26 = sadd.s32 1, %s17
    %s27 = scalar_select %p24, %s26, %s17
    %p28 = scmp.ge.s32.totalorder %s27, 2
    %s29 = scalar_select %p28, 0, %s27
    %s30 = ssub.s32 %s17, %s29
    %s31 = ssub.s32 %s18, %s25
    %s32 = sor.u32 %s30, %s31
    %p33 = scmp.eq.s32.totalorder %s32, 0
    %s35 = sadd.s32 %s34, 1
    %s36 = scalar_select %p33, %s34, %s35
    %p39 = pneg %p33
    %p40 = scmp.eq.s32.totalorder %s10, 1
    %p41 = por %p39, %p40
    %p42 = scmp.ne.s32.totalorder %s34, %s37
    %p43 = scmp.eq.s32.totalorder %s10, 0
    %p44 = por %p42, %p43
    %p45 = scmp.ne.s32.totalorder %s34, %s37
    %p46 = scmp.eq.s32.totalorder %s15, 1
    %p47 = por %p45, %p46
    %p48 = scmp.ne.s32.totalorder %s37, %s38
    %p49 = scmp.eq.s32.totalorder %s15, 0
    %p50 = por %p48, %p49
    %p51 = scmp.ne.s32.totalorder %s37, %s38
    %p52 = scmp.eq.s32.totalorder %s16, 1
    %p53 = por %p51, %p52
    %p55 = scmp.ne.s32.totalorder %s38, %s54
    %p56 = scmp.eq.s32.totalorder %s16, 0
    %p57 = por %p55, %p56
    %s58 = ssub.s32 %s18, %s25
    %p59 = scmp.eq.s32.totalorder %s58, 0
    %s61 = sadd.s32 %s60, 1
    %s62 = scalar_select %p59, %s60, %s61
    %p65 = pneg %p59
    %p66 = scmp.eq.s32.totalorder %s10, 1
    %p67 = por %p65, %p66
    %p68 = scmp.ne.s32.totalorder %s60, %s63
    %p69 = scmp.eq.s32.totalorder %s10, 0
    %p70 = por %p68, %p69
    %p71 = scmp.ne.s32.totalorder %s60, %s63
    %p72 = scmp.eq.s32.totalorder %s15, 1
    %p73 = por %p71, %p72
    %p74 = scmp.ne.s32.totalorder %s63, %s64
    %p75 = scmp.eq.s32.totalorder %s15, 0
    %p76 = por %p74, %p75
    %p77 = scmp.ne.s32.totalorder %s63, %s64
    %p78 = scmp.eq.s32.totalorder %s16, 1
    %p79 = por %p77, %p78
    %p81 = scmp.ne.s32.totalorder %s64, %s80
    %p82 = scmp.eq.s32.totalorder %s16, 0
    %p83 = por %p81, %p82
    %s85 = sadd.s32 %s84, 1
    %p88 = scmp.eq.s32.totalorder %s10, 1
    %p89 = scmp.ne.s32.totalorder %s84, %s86
    %p90 = scmp.eq.s32.totalorder %s10, 0
    %p91 = por %p89, %p90
    %p92 = scmp.ne.s32.totalorder %s84, %s86
    %p93 = scmp.eq.s32.totalorder %s15, 1
    %p94 = por %p92, %p93
    %p95 = scmp.ne.s32.totalorder %s86, %s87
    %p96 = scmp.eq.s32.totalorder %s15, 0
    %p97 = por %p95, %p96
    %p98 = scmp.ne.s32.totalorder %s86, %s87
    %p99 = scmp.eq.s32.totalorder %s16, 1
    %p100 = por %p98, %p99
    %p102 = scmp.ne.s32.totalorder %s87, %s101
    %p103 = scmp.eq.s32.totalorder %s16, 0
    %p104 = por %p102, %p103
    %s106 = sadd.s32 %s105, 1
    %p109 = scmp.eq.s32.totalorder %s10, 1
    %p110 = scmp.ne.s32.totalorder %s105, %s107
    %p111 = scmp.eq.s32.totalorder %s10, 0
    %p112 = por %p110, %p111
    %p113 = scmp.ne.s32.totalorder %s105, %s107
    %p114 = scmp.eq.s32.totalorder %s15, 1
    %p115 = por %p113, %p114
    %p116 = scmp.ne.s32.totalorder %s107, %s108
    %p117 = scmp.eq.s32.totalorder %s15, 0
    %p118 = por %p116, %p117
    %p119 = scmp.ne.s32.totalorder %s107, %s108
    %p120 = scmp.eq.s32.totalorder %s16, 1
    %p121 = por %p119, %p120
    %p123 = scmp.ne.s32.totalorder %s108, %s122
    %p124 = scmp.eq.s32.totalorder %s16, 0
    %p125 = por %p123, %p124
    %s126 = ssub.s32 %s17, %s29
    %p127 = scmp.eq.s32.totalorder %s126, 0
    %s129 = sadd.s32 %s128, 1
    %s130 = scalar_select %p127, %s128, %s129
    %p133 = pneg %p127
    %p134 = scmp.eq.s32.totalorder %s10, 1
    %p135 = por %p133, %p134
    %p136 = scmp.ne.s32.totalorder %s128, %s131
    %p137 = scmp.eq.s32.totalorder %s10, 0
    %p138 = por %p136, %p137
    %p139 = scmp.ne.s32.totalorder %s128, %s131
    %p140 = scmp.eq.s32.totalorder %s15, 1
    %p141 = por %p139, %p140
    %p142 = scmp.ne.s32.totalorder %s131, %s132
    %p143 = scmp.eq.s32.totalorder %s15, 0
    %p144 = por %p142, %p143
    %p145 = scmp.ne.s32.totalorder %s131, %s132
    %p146 = scmp.eq.s32.totalorder %s16, 1
    %p147 = por %p145, %p146
    %p149 = scmp.ne.s32.totalorder %s132, %s148
    %p150 = scmp.eq.s32.totalorder %s16, 0
    %p151 = por %p149, %p150
    %p152 = scmp.le.s32.totalorder 1, %s10
    %p153 = scmp.lt.s32.totalorder %s10, 3
    %p154 = pnand %p152, %p153
    %p155 = pneg %p154
    // Predicated region
    $region9: #{_lambda_.14} parent=5 // pred_check
      _
    $region10: #{_lambda_.14} parent=5 // pred_check_branch
      %157 = sbr.rel (%p154) target = $region12
    $region11: #{_lambda_.14} parent=5 // pred_region
      %s158 = ssub.s32 %s10, 1
      // Predicated region
      $region13: #{_lambda_.14} parent=11 // pred_check
        %p159 = pneg %p76
      $region14: #{_lambda_.14} parent=11 // pred_check_branch
        %161 = sbr.rel (%p159) target = $region16
      $region15: #{_lambda_.14} parent=11 // pred_region
        %s162 = smul.u32 32, %s20
        %p163 = scmp.lt.s32.totalorder %s162, 31
        %s164 = scalar_select %p163, %s162, 31
        %s165 = smul.addr %s164, 4
        %s166 = scalar_lea.vmem %s1, %s165
        %s167 = smul.u32 32, %s20
      $region16: #{_lambda_.14} parent=11 // pred_fallthru
        _
      // Predicated region
      $region17: #{_lambda_.14} parent=11 // pred_check
        %p168 = pneg %p97
      $region18: #{_lambda_.14} parent=11 // pred_check_branch
        %170 = sbr.rel (%p168) target = $region20
      $region19: #{_lambda_.14} parent=11 // pred_region
        _
      $region20: #{_lambda_.14} parent=11 // pred_fallthru
        _
      // Predicated region
      $region21: #{_lambda_.14} parent=11 // pred_check
        %p171 = pneg %p118
      $region22: #{_lambda_.14} parent=11 // pred_check_branch
        %173 = sbr.rel (%p171) target = $region24
      $region23: #{_lambda_.14} parent=11 // pred_region
        _
      $region24: #{_lambda_.14} parent=11 // pred_fallthru
        _
    $region12: #{_lambda_.14} parent=5 // pred_fallthru
      _
    %p174 = scmp.lt.s32.totalorder %s10, 2
    // Predicated region
    $region25: #{_lambda_.14} parent=5 // pred_check
      %p175 = pneg %p174
    $region26: #{_lambda_.14} parent=5 // pred_check_branch
      %177 = sbr.rel (%p175) target = $region28
    $region27: #{_lambda_.14} parent=5 // pred_region
      // Predicated region
      $region29: #{_lambda_.14} parent=27 // pred_check
        %p178 = pneg %p44
      $region30: #{_lambda_.14} parent=27 // pred_check_branch
        %180 = sbr.rel (%p178) target = $region32
      $region31: #{_lambda_.14} parent=27 // pred_region
        %s181 = smul.u32 8, %s17
        %s182 = smul.u32 2, %s18
        %p183 = scmp.lt.s32.totalorder %s181, 15
        %s184 = scalar_select %p183, %s181, 15
        %p185 = scmp.lt.s32.totalorder %s182, 1
        %s186 = scalar_select %p185, %s182, 1
        %s187 = smul.addr %s184, 2
        %s188 = sadd.s32 %s186, %s187
        %s189 = smul.addr %s188, 4
        %s190 = scalar_lea.vmem %s0, %s189
        %s191 = smul.u32 8, %s17
        %s192 = smul.u32 2, %s18
      $region32: #{_lambda_.14} parent=27 // pred_fallthru
        _
    $region28: #{_lambda_.14} parent=5 // pred_fallthru
      _
    %p193 = scmp.le.s32.totalorder 1, %s10
    %p194 = scmp.lt.s32.totalorder %s10, 3
    %p195 = pnand %p193, %p194
    %p196 = pneg %p195
    // Predicated region
    $region33: #{_lambda_.14} parent=5 // pred_check
      _
    $region34: #{_lambda_.14} parent=5 // pred_check_branch
      %198 = sbr.rel (%p195) target = $region36
    $region35: #{_lambda_.14} parent=5 // pred_region
      %s199 = ssub.s32 %s10, 1
      %s200 = smul.u32 8, %s19
      %s201 = smul.u32 2, %s20
      %p202 = scmp.lt.s32.totalorder %s200, 15
      %s203 = scalar_select %p202, %s200, 15
      %p204 = scmp.lt.s32.totalorder %s201, 1
      %s205 = scalar_select %p204, %s201, 1
      %s206 = smul.addr %s203, 2
      %s207 = sadd.s32 %s205, %s206
      %s208 = smul.addr %s207, 4
      %s209 = scalar_lea.vmem %s0, %s208
      %p210 = pneg %p50
      %p211 = pneg %p47
      %s212 = smul.u32 32, %s20
      %p213 = scmp.lt.s32.totalorder %s212, 31
      %s214 = scalar_select %p213, %s212, 31
      %s215 = smul.addr %s214, 4
      %s216 = scalar_lea.vmem %s1, %s215
      %p217 = pneg %p76
      %p218 = pneg %p73
      %p219 = pneg %p97
      %p220 = pneg %p94
      %p221 = pneg %p118
      %p222 = pneg %p115
      %p223 = pneg %p144
      %p224 = pneg %p141
      %s225 = smul.u32 8, %s19
      %p226 = scmp.lt.s32.totalorder %s225, 15
      %s227 = scalar_select %p226, %s225, 15
      %s228 = smul.addr %s227, 8
      %s229 = scalar_lea.vmem %s4, %s228
      %s230 = smul.u32 8, %s19
      %s231 = smul.u32 2, %s20
      %p232 = scmp.lt.s32.totalorder %s230, 15
      %s233 = scalar_select %p232, %s230, 15
      %p234 = scmp.lt.s32.totalorder %s231, 1
      %s235 = scalar_select %p234, %s231, 1
      %s236 = smul.addr %s233, 2
      %s237 = sadd.s32 %s235, %s236
      %s238 = smul.addr %s237, 4
      %s239 = scalar_lea.vmem %s0, %s238
      %s240 = smul.u32 8, %s19
      %s241 = smul.u32 2, %s20
      %s242 = smul.u32 32, %s20
      %p243 = scmp.lt.s32.totalorder %s242, 31
      %s244 = scalar_select %p243, %s242, 31
      %s245 = smul.addr %s244, 4
      %s246 = scalar_lea.vmem %s1, %s245
      %s247 = smul.u32 32, %s20
      %s248 = smul.u32 8, %s19
      %p249 = scmp.lt.s32.totalorder %s248, 15
      %s250 = scalar_select %p249, %s248, 15
      %s251 = smul.addr %s250, 8
      %s252 = scalar_lea.vmem %s4, %s251
      %s253 = smul.u32 8, %s19
      %p255 = scmp.eq.s32.totalorder %s20, 0
      // Predicated region
      $region37: #{_lambda_.14} parent=35 // pred_check
        %p256 = pneg %p255
      $region38: #{_lambda_.14} parent=35 // pred_check_branch
        %258 = sbr.rel (%p256) target = $region40
      $region39: #{_lambda_.14} parent=35 // pred_region
        %259 = vst [vmem:[#allocation2] sm:$0xff] 0.0
        %260 = vst [vmem:[#allocation2 + $0x8] sm:$0xff] 0.0
        %261 = vst [vmem:[#allocation2 + $0x10] sm:$0xff] 0.0
        %262 = vst [vmem:[#allocation2 + $0x18] sm:$0xff] 0.0
        %263 = vst [vmem:[#allocation2 + $0x20] sm:$0xff] 0.0
        %264 = vst [vmem:[#allocation2 + $0x28] sm:$0xff] 0.0
        %265 = vst [vmem:[#allocation2 + $0x30] sm:$0xff] 0.0
        %266 = vst [vmem:[#allocation2 + $0x38] sm:$0xff] 0.0
      $region40: #{_lambda_.14} parent=35 // pred_fallthru
        _
      %v267 = vld [vmem:[#allocation2] sm:$0xff]
      %v268 = vld [vmem:[#allocation2 + $0x8] sm:$0xff]
      %v269 = vld [vmem:[#allocation2 + $0x10] sm:$0xff]
      %v270 = vld [vmem:[#allocation2 + $0x18] sm:$0xff]
      %v271 = vld [vmem:[#allocation2 + $0x20] sm:$0xff]
      %v272 = vld [vmem:[#allocation2 + $0x28] sm:$0xff]
      %v273 = vld [vmem:[#allocation2 + $0x30] sm:$0xff]
      %v274 = vld [vmem:[#allocation2 + $0x38] sm:$0xff]
      %v275 = vld [vmem:[%s239] sm:$0xff]
      %v276 = vld [vmem:[%s239 + $0x8] sm:$0xff]
      %v277 = vld [vmem:[%s239 + $0x10] sm:$0xff]
      %v278 = vld [vmem:[%s239 + $0x18] sm:$0xff]
      %v279 = vld [vmem:[%s239 + $0x20] sm:$0xff]
      %v280 = vld [vmem:[%s239 + $0x28] sm:$0xff]
      %v281 = vld [vmem:[%s239 + $0x30] sm:$0xff]
      %v282 = vld [vmem:[%s239 + $0x38] sm:$0xff]
      %v283 = vld [vmem:[%s246] sm:$0xf]
      %v284 = vld [vmem:[%s246 + $0x4] sm:$0xf]
      %v285 = vld [vmem:[%s246 + $0x8] sm:$0xf]
      %v286 = vld [vmem:[%s246 + $0xc] sm:$0xf]
      %v287 = vld [vmem:[%s246 + $0x10] sm:$0xf]
      %v288 = vld [vmem:[%s246 + $0x14] sm:$0xf]
      %v289 = vld [vmem:[%s246 + $0x18] sm:$0xf]
      %v290 = vld [vmem:[%s246 + $0x1c] sm:$0xf]
      %v291 = vld [vmem:[%s246 + $0x20] sm:$0xf]
      %v292 = vld [vmem:[%s246 + $0x24] sm:$0xf]
      %v293 = vld [vmem:[%s246 + $0x28] sm:$0xf]
      %v294 = vld [vmem:[%s246 + $0x2c] sm:$0xf]
      %v295 = vld [vmem:[%s246 + $0x30] sm:$0xf]
      %v296 = vld [vmem:[%s246 + $0x34] sm:$0xf]
      %v297 = vld [vmem:[%s246 + $0x38] sm:$0xf]
      %v298 = vld [vmem:[%s246 + $0x3c] sm:$0xf]
      %v299 = vld [vmem:[%s246 + $0x40] sm:$0xf]
      %v300 = vld [vmem:[%s246 + $0x44] sm:$0xf]
      %v301 = vld [vmem:[%s246 + $0x48] sm:$0xf]
      %v302 = vld [vmem:[%s246 + $0x4c] sm:$0xf]
      %v303 = vld [vmem:[%s246 + $0x50] sm:$0xf]
      %v304 = vld [vmem:[%s246 + $0x54] sm:$0xf]
      %v305 = vld [vmem:[%s246 + $0x58] sm:$0xf]
      %v306 = vld [vmem:[%s246 + $0x5c] sm:$0xf]
      %v307 = vld [vmem:[%s246 + $0x60] sm:$0xf]
      %v308 = vld [vmem:[%s246 + $0x64] sm:$0xf]
      %v309 = vld [vmem:[%s246 + $0x68] sm:$0xf]
      %v310 = vld [vmem:[%s246 + $0x6c] sm:$0xf]
      %v311 = vld [vmem:[%s246 + $0x70] sm:$0xf]
      %v312 = vld [vmem:[%s246 + $0x74] sm:$0xf]
      %v313 = vld [vmem:[%s246 + $0x78] sm:$0xf]
      %v314 = vld [vmem:[%s246 + $0x7c] sm:$0xf]
      %v323 = vunpack.c.l.b16 %v275
      %v324 = vunpack.c.h.b16 %v275
      %v325 = vunpack.c.l.b16 %v276
      %v326 = vunpack.c.h.b16 %v276
      %v327 = vunpack.c.l.b16 %v277
      %v328 = vunpack.c.h.b16 %v277
      %v329 = vunpack.c.l.b16 %v278
      %v330 = vunpack.c.h.b16 %v278
      %v331 = vunpack.c.l.b16 %v279
      %v332 = vunpack.c.h.b16 %v279
      %v333 = vunpack.c.l.b16 %v280
      %v334 = vunpack.c.h.b16 %v280
      %v335 = vunpack.c.l.b16 %v281
      %v336 = vunpack.c.h.b16 %v281
      %v337 = vunpack.c.l.b16 %v282
      %v338 = vunpack.c.h.b16 %v282
      %v339 = vpack.c.b16 %v325, %v323
      %v340 = vpack.c.b16 %v326, %v324
      %v341 = vpack.c.b16 %v329, %v327
      %v342 = vpack.c.b16 %v330, %v328
      %v343 = vpack.c.b16 %v333, %v331
      %v344 = vpack.c.b16 %v334, %v332
      %v345 = vpack.c.b16 %v337, %v335
      %v346 = vpack.c.b16 %v338, %v336
      %v387 = vunpack.c.l.b16 %v283
      %v388 = vunpack.c.l.b16 %v284
      %v389 = vunpack.c.l.b16 %v285
      %v390 = vunpack.c.l.b16 %v286
      %v391 = vunpack.c.l.b16 %v287
      %v392 = vunpack.c.l.b16 %v288
      %v393 = vunpack.c.l.b16 %v289
      %v394 = vunpack.c.l.b16 %v290
      %v395 = vunpack.c.l.b16 %v291
      %v396 = vunpack.c.l.b16 %v292
      %v397 = vunpack.c.l.b16 %v293
      %v398 = vunpack.c.l.b16 %v294
      %v399 = vunpack.c.l.b16 %v295
      %v400 = vunpack.c.l.b16 %v296
      %v401 = vunpack.c.l.b16 %v297
      %v402 = vunpack.c.l.b16 %v298
      %v403 = vunpack.c.l.b16 %v299
      %v404 = vunpack.c.l.b16 %v300
      %v405 = vunpack.c.l.b16 %v301
      %v406 = vunpack.c.l.b16 %v302
      %v407 = vunpack.c.l.b16 %v303
      %v408 = vunpack.c.l.b16 %v304
      %v409 = vunpack.c.l.b16 %v305
      %v410 = vunpack.c.l.b16 %v306
      %v411 = vunpack.c.l.b16 %v307
      %v412 = vunpack.c.l.b16 %v308
      %v413 = vunpack.c.l.b16 %v309
      %v414 = vunpack.c.l.b16 %v310
      %v415 = vunpack.c.l.b16 %v311
      %v416 = vunpack.c.l.b16 %v312
      %v417 = vunpack.c.l.b16 %v313
      %v418 = vunpack.c.l.b16 %v314
      %v419 = vpack.c.b16 %v388, %v387
      %v420 = vpack.c.b16 %v390, %v389
      %v421 = vpack.c.b16 %v392, %v391
      %v422 = vpack.c.b16 %v394, %v393
      %v423 = vpack.c.b16 %v396, %v395
      %v424 = vpack.c.b16 %v398, %v397
      %v425 = vpack.c.b16 %v400, %v399
      %v426 = vpack.c.b16 %v402, %v401
      %v427 = vpack.c.b16 %v404, %v403
      %v428 = vpack.c.b16 %v406, %v405
      %v429 = vpack.c.b16 %v408, %v407
      %v430 = vpack.c.b16 %v410, %v409
      %v431 = vpack.c.b16 %v412, %v411
      %v432 = vpack.c.b16 %v414, %v413
      %v433 = vpack.c.b16 %v416, %v415
      %v434 = vpack.c.b16 %v418, %v417
      %451 = vmatprep.subr.bf16.mxu0 0
      %452 = vmatpush1.bf16.msra.mxu0 %v426
      %453 = vmatprep.subr.bf16.mxu0 0
      %454 = vmatpush1.bf16.msra.mxu0 %v425
      %455 = vmatprep.subr.bf16.mxu0 0
      %456 = vmatpush1.bf16.msra.mxu0 %v424
      %457 = vmatprep.subr.bf16.mxu0 0
      %458 = vmatpush1.bf16.msra.mxu0 %v423
      %459 = vmatprep.subr.bf16.mxu0 0
      %460 = vmatpush1.bf16.msra.mxu0 %v422
      %461 = vmatprep.subr.bf16.mxu0 0
      %462 = vmatpush1.bf16.msra.mxu0 %v421
      %463 = vmatprep.subr.bf16.mxu0 0
      %464 = vmatpush1.bf16.msra.mxu0 %v420
      %465 = vmatprep.subr.bf16.mxu0 0
      %466 = vmatpush1.bf16.msra.mxu0 %v419
      %467 = vmatprep.subr.bf16.mxu0 0
      %468 = vmatpush2.bf16.msra.mxu0 %v434
      %469 = vmatprep.subr.bf16.mxu0 0
      %470 = vmatpush2.bf16.msra.mxu0 %v433
      %471 = vmatprep.subr.bf16.mxu0 0
      %472 = vmatpush2.bf16.msra.mxu0 %v432
      %473 = vmatprep.subr.bf16.mxu0 0
      %474 = vmatpush2.bf16.msra.mxu0 %v431
      %475 = vmatprep.subr.bf16.mxu0 0
      %476 = vmatpush2.bf16.msra.mxu0 %v430
      %477 = vmatprep.subr.bf16.mxu0 0
      %478 = vmatpush2.bf16.msra.mxu0 %v429
      %479 = vmatprep.subr.bf16.mxu0 0
      %480 = vmatpush2.bf16.msra.mxu0 %v428
      %481 = vmatprep.subr.bf16.mxu0 0
      %482 = vmatpush2.bf16.msra.mxu0 %v427
      %483 = vmatprep.mubr.bf16.mxu0 %v340
      %484 = vmatmul.mubr.bf16.gmra.mxu0 %v339
      %v485 = vpop.f32.mrf.mxu0
      %v486 = vadd.f32 0.0, %v485
      %v487 = vpop.f32.mrf.mxu0
      %v488 = vpop.f32.mrf.mxu0
      %v489 = vadd.f32 0.0, %v488
      %v490 = vpop.f32.mrf.mxu0
      %491 = vmatprep.mubr.bf16.mxu0 %v342
      %492 = vmatmul.mubr.bf16.gmra.mxu0 %v341
      %v493 = vpop.f32.mrf.mxu0
      %v494 = vadd.f32 0.0, %v493
      %v495 = vpop.f32.mrf.mxu0
      %v496 = vpop.f32.mrf.mxu0
      %v497 = vadd.f32 0.0, %v496
      %v498 = vpop.f32.mrf.mxu0
      %499 = vmatprep.mubr.bf16.mxu0 %v344
      %500 = vmatmul.mubr.bf16.gmra.mxu0 %v343
      %v501 = vpop.f32.mrf.mxu0
      %v502 = vadd.f32 0.0, %v501
      %v503 = vpop.f32.mrf.mxu0
      %v504 = vpop.f32.mrf.mxu0
      %v505 = vadd.f32 0.0, %v504
      %v506 = vpop.f32.mrf.mxu0
      %507 = vmatprep.mubr.bf16.mxu0 %v346
      %508 = vmatmul.mubr.bf16.gmra.mxu0 %v345
      %v509 = vpop.f32.mrf.mxu0
      %v510 = vadd.f32 0.0, %v509
      %v511 = vpop.f32.mrf.mxu0
      %v512 = vpop.f32.mrf.mxu0
      %v513 = vadd.f32 0.0, %v512
      %v514 = vpop.f32.mrf.mxu0
      %515 = vdwg.mxu0
      %v516 = vadd.f32 %v267, %v486
      %v517 = vadd.f32 %v268, %v489
      %v518 = vadd.f32 %v269, %v494
      %v519 = vadd.f32 %v270, %v497
      %v520 = vadd.f32 %v271, %v502
      %v521 = vadd.f32 %v272, %v505
      %v522 = vadd.f32 %v273, %v510
      %v523 = vadd.f32 %v274, %v513
      %524 = vst [vmem:[#allocation2] sm:$0xff] %v516
      %525 = vst [vmem:[#allocation2 + $0x8] sm:$0xff] %v517
      %526 = vst [vmem:[#allocation2 + $0x10] sm:$0xff] %v518
      %527 = vst [vmem:[#allocation2 + $0x18] sm:$0xff] %v519
      %528 = vst [vmem:[#allocation2 + $0x20] sm:$0xff] %v520
      %529 = vst [vmem:[#allocation2 + $0x28] sm:$0xff] %v521
      %530 = vst [vmem:[#allocation2 + $0x30] sm:$0xff] %v522
      %531 = vst [vmem:[#allocation2 + $0x38] sm:$0xff] %v523
      // Predicated region
      $region41: #{_lambda_.14} parent=35 // pred_check
        %p532 = pneg %p255
      $region42: #{_lambda_.14} parent=35 // pred_check_branch
        %534 = sbr.rel (%p532) target = $region44
      $region43: #{_lambda_.14} parent=35 // pred_region
        %v535 = vld [vmem:[#allocation2] sm:$0xff]
        %v536 = vld [vmem:[#allocation2 + $0x8] sm:$0xff]
        %v537 = vld [vmem:[#allocation2 + $0x10] sm:$0xff]
        %v538 = vld [vmem:[#allocation2 + $0x18] sm:$0xff]
        %v539 = vld [vmem:[#allocation2 + $0x20] sm:$0xff]
        %v540 = vld [vmem:[#allocation2 + $0x28] sm:$0xff]
        %v541 = vld [vmem:[#allocation2 + $0x30] sm:$0xff]
        %v542 = vld [vmem:[#allocation2 + $0x38] sm:$0xff]
        %v543 = vld [vmem:[%s2] sm:$0x1]
        %v545 = vlaneseq
        %v546 = vshrl.u32 %v545, 7
        %v547 = vsub.s32 0, %v546
        %v548 = vrot.slane %v543, %v547
        %v550 = vmul.f32 %v535, %v548
        %v551 = vmul.f32 %v536, %v548
        %v552 = vmul.f32 %v537, %v548
        %v553 = vmul.f32 %v538, %v548
        %v554 = vmul.f32 %v539, %v548
        %v555 = vmul.f32 %v540, %v548
        %v556 = vmul.f32 %v541, %v548
        %v557 = vmul.f32 %v542, %v548
        %v558 = vld [vmem:[%s3] sm:$0x1]
        %v560 = vlaneseq
        %v561 = vshrl.u32 %v560, 7
        %v562 = vsub.s32 0, %v561
        %v563 = vrot.slane %v558, %v562
        %v565 = vadd.f32 %v550, %v563
        %v566 = vadd.f32 %v551, %v563
        %v567 = vadd.f32 %v552, %v563
        %v568 = vadd.f32 %v553, %v563
        %v569 = vadd.f32 %v554, %v563
        %v570 = vadd.f32 %v555, %v563
        %v571 = vadd.f32 %v556, %v563
        %v572 = vadd.f32 %v557, %v563
        %vm573 = vcmp.gt.f32.partialorder %v565, 0.0
        %vm574 = vcmp.gt.f32.partialorder %v566, 0.0
        %vm575 = vcmp.gt.f32.partialorder %v567, 0.0
        %vm576 = vcmp.gt.f32.partialorder %v568, 0.0
        %vm577 = vcmp.gt.f32.partialorder %v569, 0.0
        %vm578 = vcmp.gt.f32.partialorder %v570, 0.0
        %vm579 = vcmp.gt.f32.partialorder %v571, 0.0
        %vm580 = vcmp.gt.f32.partialorder %v572, 0.0
        %v581 = vmul.f32 %v565, 0.2
        %v582 = vmul.f32 %v566, 0.2
        %v583 = vmul.f32 %v567, 0.2
        %v584 = vmul.f32 %v568, 0.2
        %v585 = vmul.f32 %v569, 0.2
        %v586 = vmul.f32 %v570, 0.2
        %v587 = vmul.f32 %v571, 0.2
        %v588 = vmul.f32 %v572, 0.2
        %v589 = vsel %vm573, %v565, %v581
        %v590 = vsel %vm574, %v566, %v582
        %v591 = vsel %vm575, %v567, %v583
        %v592 = vsel %vm576, %v568, %v584
        %v593 = vsel %vm577, %v569, %v585
        %v594 = vsel %vm578, %v570, %v586
        %v595 = vsel %vm579, %v571, %v587
        %v596 = vsel %vm580, %v572, %v588
        %597 = vst [vmem:[%s252] sm:$0xff] %v589
        %598 = vst [vmem:[%s252 + $0x8] sm:$0xff] %v590
        %599 = vst [vmem:[%s252 + $0x10] sm:$0xff] %v591
        %600 = vst [vmem:[%s252 + $0x18] sm:$0xff] %v592
        %601 = vst [vmem:[%s252 + $0x20] sm:$0xff] %v593
        %602 = vst [vmem:[%s252 + $0x28] sm:$0xff] %v594
        %603 = vst [vmem:[%s252 + $0x30] sm:$0xff] %v595
        %604 = vst [vmem:[%s252 + $0x38] sm:$0xff] %v596
      $region44: #{_lambda_.14} parent=35 // pred_fallthru
        _
      %s605 = smul.u32 8, %s19
      %p606 = scmp.lt.s32.totalorder %s605, 15
      %s607 = scalar_select %p606, %s605, 15
      %s608 = smul.addr %s607, 8
      %s609 = scalar_lea.vmem %s4, %s608
      // Predicated region
      $region45: #{_lambda_.14} parent=35 // pred_check
        %p610 = pneg %p141
      $region46: #{_lambda_.14} parent=35 // pred_check_branch
        %612 = sbr.rel (%p610) target = $region48
      $region47: #{_lambda_.14} parent=35 // pred_region
        %s613 = smul.u32 8, %s19
      $region48: #{_lambda_.14} parent=35 // pred_fallthru
        _
    $region36: #{_lambda_.14} parent=5 // pred_fallthru
      _
    %p614 = scmp.le.s32.totalorder 2, %s10
    // Predicated region
    $region49: #{_lambda_.14} parent=5 // pred_check
      %p615 = pneg %p614
    $region50: #{_lambda_.14} parent=5 // pred_check_branch
      %617 = sbr.rel (%p615) target = $region52
    $region51: #{_lambda_.14} parent=5 // pred_region
      %s618 = ssub.s32 %s10, 2
      // Predicated region
      $region53: #{_lambda_.14} parent=51 // pred_check
        %p619 = pneg %p147
      $region54: #{_lambda_.14} parent=51 // pred_check_branch
        %621 = sbr.rel (%p619) target = $region56
      $region55: #{_lambda_.14} parent=51 // pred_region
        %s622 = smul.u32 8, %s21
        %p623 = scmp.lt.s32.totalorder %s622, 15
        %s624 = scalar_select %p623, %s622, 15
        %s625 = smul.addr %s624, 8
        %s626 = scalar_lea.vmem %s4, %s625
      $region56: #{_lambda_.14} parent=51 // pred_fallthru
        _
    $region52: #{_lambda_.14} parent=5 // pred_fallthru
      _
  $region6: #{_lambda_.14} parent=0 // loop_footer
    %s14 = sadd.s32 1, %s10
  $region7: #{_lambda_.14} parent=0 // loop_footer_branch
    %9 = sbr.rel target = $region3
  $region8: #{_lambda_.14} parent=0 // loop_exit
    _

// kernel: _lambda_.15
$region0: #{_lambda_.15}
  #allocation0 [shape = 'u32[]', space=smem, size = 0x4, offset = 0x4, fixed_abs, tag = 'smem constant byte address 0x4 - core index']
  #allocation1 [shape = 'u32[144,128]{1,0:T(1,128)}', space=vmem, size = 0x12000, scoped, tag = 'internal scratch']
  #allocation2 [shape = 'f32[32,128]{1,0:T(8,128)}', space=vmem, size = 0x4000, scoped, tag = 'scratch operand']
  %s0 = inlined_call_operand.vmem [shape: bf16[32,512], index: 0, kind: input, shape index: {}]
  %s1 = inlined_call_operand.vmem [shape: bf16[512,128], index: 1, kind: input, shape index: {}]
  %s2 = inlined_call_operand.vmem [shape: f32[1,128], index: 2, kind: input, shape index: {}]
  %s3 = inlined_call_operand.vmem [shape: f32[1,128], index: 3, kind: input, shape index: {}]
  %s4 = inlined_call_operand.vmem [shape: f32[32,128], index: 4, kind: output, shape index: {}]
  %s5 = sld [smem:[#allocation0]]
  $region34: #{_lambda_.15} parent=0
    _
  %s7 = ssub.s32 1, %s5
  %s8 = scalar_select 0, %s7, %s5
  // Predicated region
  $region2: #{_lambda_.15} parent=0 // pred_check
    _
  $region3: #{_lambda_.15} parent=0 // pred_check_branch
    %10 = sbr.rel (0) target = $region5
  $region4: #{_lambda_.15} parent=0 // pred_region
    _
  $region5: #{_lambda_.15} parent=0 // pred_fallthru
    _
  // Predicated region
  $region6: #{_lambda_.15} parent=0 // pred_check
    _
  $region7: #{_lambda_.15} parent=0 // pred_check_branch
    %12 = sbr.rel (0) target = $region9
  $region8: #{_lambda_.15} parent=0 // pred_region
    _
  $region9: #{_lambda_.15} parent=0 // pred_fallthru
    _
  // Predicated region
  $region10: #{_lambda_.15} parent=0 // pred_check
    _
  $region11: #{_lambda_.15} parent=0 // pred_check_branch
    %14 = sbr.rel (0) target = $region13
  $region12: #{_lambda_.15} parent=0 // pred_region
    _
  $region13: #{_lambda_.15} parent=0 // pred_fallthru
    _
  // Predicated region
  $region14: #{_lambda_.15} parent=0 // pred_check
    _
  $region15: #{_lambda_.15} parent=0 // pred_check_branch
    %16 = sbr.rel (0) target = $region17
  $region16: #{_lambda_.15} parent=0 // pred_region
    _
  $region17: #{_lambda_.15} parent=0 // pred_fallthru
    _
  %p18 = scmp.eq.s32.totalorder 0, 0
  // Predicated region
  $region18: #{_lambda_.15} parent=0 // pred_check
    %p19 = pneg %p18
  $region19: #{_lambda_.15} parent=0 // pred_check_branch
    %21 = sbr.rel (%p19) target = $region21
  $region20: #{_lambda_.15} parent=0 // pred_region
    %22 = vst [vmem:[#allocation2] sm:$0xff] 0.0
    %23 = vst [vmem:[#allocation2 + $0x8] sm:$0xff] 0.0
    %24 = vst [vmem:[#allocation2 + $0x10] sm:$0xff] 0.0
    %25 = vst [vmem:[#allocation2 + $0x18] sm:$0xff] 0.0
  $region21: #{_lambda_.15} parent=0 // pred_fallthru
    _
  %v26 = vld [vmem:[#allocation2] sm:$0xff]
  %v27 = vld [vmem:[#allocation2 + $0x8] sm:$0xff]
  %v28 = vld [vmem:[#allocation2 + $0x10] sm:$0xff]
  %v29 = vld [vmem:[#allocation2 + $0x18] sm:$0xff]
  %v30 = vld [vmem:[%s0] sm:$0xff]
  %v31 = vld [vmem:[%s0 + $0x8] sm:$0xff]
  %v32 = vld [vmem:[%s0 + $0x10] sm:$0xff]
  %v33 = vld [vmem:[%s0 + $0x18] sm:$0xff]
  %v34 = vld [vmem:[%s0 + $0x20] sm:$0xff]
  %v35 = vld [vmem:[%s0 + $0x28] sm:$0xff]
  %v36 = vld [vmem:[%s0 + $0x30] sm:$0xff]
  %v37 = vld [vmem:[%s0 + $0x38] sm:$0xff]
  %v38 = vld [vmem:[%s1] sm:$0xf]
  %v39 = vld [vmem:[%s1 + $0x4] sm:$0xf]
  %v40 = vld [vmem:[%s1 + $0x8] sm:$0xf]
  %v41 = vld [vmem:[%s1 + $0xc] sm:$0xf]
  %v42 = vld [vmem:[%s1 + $0x10] sm:$0xf]
  %v43 = vld [vmem:[%s1 + $0x14] sm:$0xf]
  %v44 = vld [vmem:[%s1 + $0x18] sm:$0xf]
  %v45 = vld [vmem:[%s1 + $0x1c] sm:$0xf]
  %v46 = vld [vmem:[%s1 + $0x20] sm:$0xf]
  %v47 = vld [vmem:[%s1 + $0x24] sm:$0xf]
  %v48 = vld [vmem:[%s1 + $0x28] sm:$0xf]
  %v49 = vld [vmem:[%s1 + $0x2c] sm:$0xf]
  %v50 = vld [vmem:[%s1 + $0x30] sm:$0xf]
  %v51 = vld [vmem:[%s1 + $0x34] sm:$0xf]
  %v52 = vld [vmem:[%s1 + $0x38] sm:$0xf]
  %v53 = vld [vmem:[%s1 + $0x3c] sm:$0xf]
  %v54 = vld [vmem:[%s1 + $0x40] sm:$0xf]
  %v55 = vld [vmem:[%s1 + $0x44] sm:$0xf]
  %v56 = vld [vmem:[%s1 + $0x48] sm:$0xf]
  %v57 = vld [vmem:[%s1 + $0x4c] sm:$0xf]
  %v58 = vld [vmem:[%s1 + $0x50] sm:$0xf]
  %v59 = vld [vmem:[%s1 + $0x54] sm:$0xf]
  %v60 = vld [vmem:[%s1 + $0x58] sm:$0xf]
  %v61 = vld [vmem:[%s1 + $0x5c] sm:$0xf]
  %v62 = vld [vmem:[%s1 + $0x60] sm:$0xf]
  %v63 = vld [vmem:[%s1 + $0x64] sm:$0xf]
  %v64 = vld [vmem:[%s1 + $0x68] sm:$0xf]
  %v65 = vld [vmem:[%s1 + $0x6c] sm:$0xf]
  %v66 = vld [vmem:[%s1 + $0x70] sm:$0xf]
  %v67 = vld [vmem:[%s1 + $0x74] sm:$0xf]
  %v68 = vld [vmem:[%s1 + $0x78] sm:$0xf]
  %v69 = vld [vmem:[%s1 + $0x7c] sm:$0xf]
  %v70 = vld [vmem:[%s1 + $0x80] sm:$0xf]
  %v71 = vld [vmem:[%s1 + $0x84] sm:$0xf]
  %v72 = vld [vmem:[%s1 + $0x88] sm:$0xf]
  %v73 = vld [vmem:[%s1 + $0x8c] sm:$0xf]
  %v74 = vld [vmem:[%s1 + $0x90] sm:$0xf]
  %v75 = vld [vmem:[%s1 + $0x94] sm:$0xf]
  %v76 = vld [vmem:[%s1 + $0x98] sm:$0xf]
  %v77 = vld [vmem:[%s1 + $0x9c] sm:$0xf]
  %v78 = vld [vmem:[%s1 + $0xa0] sm:$0xf]
  %v79 = vld [vmem:[%s1 + $0xa4] sm:$0xf]
  %v80 = vld [vmem:[%s1 + $0xa8] sm:$0xf]
  %v81 = vld [vmem:[%s1 + $0xac] sm:$0xf]
  %v82 = vld [vmem:[%s1 + $0xb0] sm:$0xf]
  %v83 = vld [vmem:[%s1 + $0xb4] sm:$0xf]
  %v84 = vld [vmem:[%s1 + $0xb8] sm:$0xf]
  %v85 = vld [vmem:[%s1 + $0xbc] sm:$0xf]
  %v86 = vld [vmem:[%s1 + $0xc0] sm:$0xf]
  %v87 = vld [vmem:[%s1 + $0xc4] sm:$0xf]
  %v88 = vld [vmem:[%s1 + $0xc8] sm:$0xf]
  %v89 = vld [vmem:[%s1 + $0xcc] sm:$0xf]
  %v90 = vld [vmem:[%s1 + $0xd0] sm:$0xf]
  %v91 = vld [vmem:[%s1 + $0xd4] sm:$0xf]
  %v92 = vld [vmem:[%s1 + $0xd8] sm:$0xf]
  %v93 = vld [vmem:[%s1 + $0xdc] sm:$0xf]
  %v94 = vld [vmem:[%s1 + $0xe0] sm:$0xf]
  %v95 = vld [vmem:[%s1 + $0xe4] sm:$0xf]
  %v96 = vld [vmem:[%s1 + $0xe8] sm:$0xf]
  %v97 = vld [vmem:[%s1 + $0xec] sm:$0xf]
  %v98 = vld [vmem:[%s1 + $0xf0] sm:$0xf]
  %v99 = vld [vmem:[%s1 + $0xf4] sm:$0xf]
  %v100 = vld [vmem:[%s1 + $0xf8] sm:$0xf]
  %v101 = vld [vmem:[%s1 + $0xfc] sm:$0xf]
  %v110 = vunpack.c.l.b16 %v30
  %v111 = vunpack.c.h.b16 %v30
  %v112 = vunpack.c.l.b16 %v31
  %v113 = vunpack.c.h.b16 %v31
  %v114 = vunpack.c.l.b16 %v32
  %v115 = vunpack.c.h.b16 %v32
  %v116 = vunpack.c.l.b16 %v33
  %v117 = vunpack.c.h.b16 %v33
  %v118 = vunpack.c.l.b16 %v34
  %v119 = vunpack.c.h.b16 %v34
  %v120 = vunpack.c.l.b16 %v35
  %v121 = vunpack.c.h.b16 %v35
  %v122 = vunpack.c.l.b16 %v36
  %v123 = vunpack.c.h.b16 %v36
  %v124 = vunpack.c.l.b16 %v37
  %v125 = vunpack.c.h.b16 %v37
  %v126 = vpack.c.b16 %v114, %v110
  %v127 = vpack.c.b16 %v115, %v111
  %v128 = vpack.c.b16 %v116, %v112
  %v129 = vpack.c.b16 %v117, %v113
  %v130 = vpack.c.b16 %v122, %v118
  %v131 = vpack.c.b16 %v123, %v119
  %v132 = vpack.c.b16 %v124, %v120
  %v133 = vpack.c.b16 %v125, %v121
  %v206 = vunpack.c.l.b16 %v38
  %v207 = vunpack.c.l.b16 %v39
  %v208 = vunpack.c.l.b16 %v40
  %v209 = vunpack.c.l.b16 %v41
  %v210 = vunpack.c.l.b16 %v42
  %v211 = vunpack.c.l.b16 %v43
  %v212 = vunpack.c.l.b16 %v44
  %v213 = vunpack.c.l.b16 %v45
  %v214 = vunpack.c.l.b16 %v46
  %v215 = vunpack.c.l.b16 %v47
  %v216 = vunpack.c.l.b16 %v48
  %v217 = vunpack.c.l.b16 %v49
  %v218 = vunpack.c.l.b16 %v50
  %v219 = vunpack.c.l.b16 %v51
  %v220 = vunpack.c.l.b16 %v52
  %v221 = vunpack.c.l.b16 %v53
  %v222 = vunpack.c.l.b16 %v54
  %v223 = vunpack.c.l.b16 %v55
  %v224 = vunpack.c.l.b16 %v56
  %v225 = vunpack.c.l.b16 %v57
  %v226 = vunpack.c.l.b16 %v58
  %v227 = vunpack.c.l.b16 %v59
  %v228 = vunpack.c.l.b16 %v60
  %v229 = vunpack.c.l.b16 %v61
  %v230 = vunpack.c.l.b16 %v62
  %v231 = vunpack.c.l.b16 %v63
  %v232 = vunpack.c.l.b16 %v64
  %v233 = vunpack.c.l.b16 %v65
  %v234 = vunpack.c.l.b16 %v66
  %v235 = vunpack.c.l.b16 %v67
  %v236 = vunpack.c.l.b16 %v68
  %v237 = vunpack.c.l.b16 %v69
  %v238 = vunpack.c.l.b16 %v70
  %v239 = vunpack.c.l.b16 %v71
  %v240 = vunpack.c.l.b16 %v72
  %v241 = vunpack.c.l.b16 %v73
  %v242 = vunpack.c.l.b16 %v74
  %v243 = vunpack.c.l.b16 %v75
  %v244 = vunpack.c.l.b16 %v76
  %v245 = vunpack.c.l.b16 %v77
  %v246 = vunpack.c.l.b16 %v78
  %v247 = vunpack.c.l.b16 %v79
  %v248 = vunpack.c.l.b16 %v80
  %v249 = vunpack.c.l.b16 %v81
  %v250 = vunpack.c.l.b16 %v82
  %v251 = vunpack.c.l.b16 %v83
  %v252 = vunpack.c.l.b16 %v84
  %v253 = vunpack.c.l.b16 %v85
  %v254 = vunpack.c.l.b16 %v86
  %v255 = vunpack.c.l.b16 %v87
  %v256 = vunpack.c.l.b16 %v88
  %v257 = vunpack.c.l.b16 %v89
  %v258 = vunpack.c.l.b16 %v90
  %v259 = vunpack.c.l.b16 %v91
  %v260 = vunpack.c.l.b16 %v92
  %v261 = vunpack.c.l.b16 %v93
  %v262 = vunpack.c.l.b16 %v94
  %v263 = vunpack.c.l.b16 %v95
  %v264 = vunpack.c.l.b16 %v96
  %v265 = vunpack.c.l.b16 %v97
  %v266 = vunpack.c.l.b16 %v98
  %v267 = vunpack.c.l.b16 %v99
  %v268 = vunpack.c.l.b16 %v100
  %v269 = vunpack.c.l.b16 %v101
  %v270 = vpack.c.b16 %v207, %v206
  %v271 = vpack.c.b16 %v209, %v208
  %v272 = vpack.c.b16 %v211, %v210
  %v273 = vpack.c.b16 %v213, %v212
  %v274 = vpack.c.b16 %v215, %v214
  %v275 = vpack.c.b16 %v217, %v216
  %v276 = vpack.c.b16 %v219, %v218
  %v277 = vpack.c.b16 %v221, %v220
  %v278 = vpack.c.b16 %v223, %v222
  %v279 = vpack.c.b16 %v225, %v224
  %v280 = vpack.c.b16 %v227, %v226
  %v281 = vpack.c.b16 %v229, %v228
  %v282 = vpack.c.b16 %v231, %v230
  %v283 = vpack.c.b16 %v233, %v232
  %v284 = vpack.c.b16 %v235, %v234
  %v285 = vpack.c.b16 %v237, %v236
  %v286 = vpack.c.b16 %v239, %v238
  %v287 = vpack.c.b16 %v241, %v240
  %v288 = vpack.c.b16 %v243, %v242
  %v289 = vpack.c.b16 %v245, %v244
  %v290 = vpack.c.b16 %v247, %v246
  %v291 = vpack.c.b16 %v249, %v248
  %v292 = vpack.c.b16 %v251, %v250
  %v293 = vpack.c.b16 %v253, %v252
  %v294 = vpack.c.b16 %v255, %v254
  %v295 = vpack.c.b16 %v257, %v256
  %v296 = vpack.c.b16 %v259, %v258
  %v297 = vpack.c.b16 %v261, %v260
  %v298 = vpack.c.b16 %v263, %v262
  %v299 = vpack.c.b16 %v265, %v264
  %v300 = vpack.c.b16 %v267, %v266
  %v301 = vpack.c.b16 %v269, %v268
  %334 = vmatprep.subr.bf16.mxu0 0
  %335 = vmatpush1.bf16.msra.mxu0 %v277
  %336 = vmatprep.subr.bf16.mxu0 0
  %337 = vmatpush1.bf16.msra.mxu0 %v276
  %338 = vmatprep.subr.bf16.mxu0 0
  %339 = vmatpush1.bf16.msra.mxu0 %v275
  %340 = vmatprep.subr.bf16.mxu0 0
  %341 = vmatpush1.bf16.msra.mxu0 %v274
  %342 = vmatprep.subr.bf16.mxu0 0
  %343 = vmatpush1.bf16.msra.mxu0 %v273
  %344 = vmatprep.subr.bf16.mxu0 0
  %345 = vmatpush1.bf16.msra.mxu0 %v272
  %346 = vmatprep.subr.bf16.mxu0 0
  %347 = vmatpush1.bf16.msra.mxu0 %v271
  %348 = vmatprep.subr.bf16.mxu0 0
  %349 = vmatpush1.bf16.msra.mxu0 %v270
  %350 = vmatprep.subr.bf16.mxu0 0
  %351 = vmatpush2.bf16.msra.mxu0 %v285
  %352 = vmatprep.subr.bf16.mxu0 0
  %353 = vmatpush2.bf16.msra.mxu0 %v284
  %354 = vmatprep.subr.bf16.mxu0 0
  %355 = vmatpush2.bf16.msra.mxu0 %v283
  %356 = vmatprep.subr.bf16.mxu0 0
  %357 = vmatpush2.bf16.msra.mxu0 %v282
  %358 = vmatprep.subr.bf16.mxu0 0
  %359 = vmatpush2.bf16.msra.mxu0 %v281
  %360 = vmatprep.subr.bf16.mxu0 0
  %361 = vmatpush2.bf16.msra.mxu0 %v280
  %362 = vmatprep.subr.bf16.mxu0 0
  %363 = vmatpush2.bf16.msra.mxu0 %v279
  %364 = vmatprep.subr.bf16.mxu0 0
  %365 = vmatpush2.bf16.msra.mxu0 %v278
  %366 = vmatprep.mubr.bf16.mxu0 %v127
  %367 = vmatmul.mubr.bf16.gmra.mxu0 %v126
  %v368 = vpop.f32.mrf.mxu0
  %v369 = vadd.f32 0.0, %v368
  %v370 = vpop.f32.mrf.mxu0
  %v371 = vpop.f32.mrf.mxu0
  %v372 = vadd.f32 0.0, %v371
  %v373 = vpop.f32.mrf.mxu0
  %374 = vmatprep.mubr.bf16.mxu0 %v131
  %375 = vmatmul.mubr.bf16.gmra.mxu0 %v130
  %v376 = vpop.f32.mrf.mxu0
  %v377 = vadd.f32 0.0, %v376
  %v378 = vpop.f32.mrf.mxu0
  %v379 = vpop.f32.mrf.mxu0
  %v380 = vadd.f32 0.0, %v379
  %v381 = vpop.f32.mrf.mxu0
  %382 = vdwg.mxu0
  %383 = vmatprep.subr.bf16.mxu0 0
  %384 = vmatpush1.bf16.msra.mxu0 %v293
  %385 = vmatprep.subr.bf16.mxu0 0
  %386 = vmatpush1.bf16.msra.mxu0 %v292
  %387 = vmatprep.subr.bf16.mxu0 0
  %388 = vmatpush1.bf16.msra.mxu0 %v291
  %389 = vmatprep.subr.bf16.mxu0 0
  %390 = vmatpush1.bf16.msra.mxu0 %v290
  %391 = vmatprep.subr.bf16.mxu0 0
  %392 = vmatpush1.bf16.msra.mxu0 %v289
  %393 = vmatprep.subr.bf16.mxu0 0
  %394 = vmatpush1.bf16.msra.mxu0 %v288
  %395 = vmatprep.subr.bf16.mxu0 0
  %396 = vmatpush1.bf16.msra.mxu0 %v287
  %397 = vmatprep.subr.bf16.mxu0 0
  %398 = vmatpush1.bf16.msra.mxu0 %v286
  %399 = vmatprep.subr.bf16.mxu0 0
  %400 = vmatpush2.bf16.msra.mxu0 %v301
  %401 = vmatprep.subr.bf16.mxu0 0
  %402 = vmatpush2.bf16.msra.mxu0 %v300
  %403 = vmatprep.subr.bf16.mxu0 0
  %404 = vmatpush2.bf16.msra.mxu0 %v299
  %405 = vmatprep.subr.bf16.mxu0 0
  %406 = vmatpush2.bf16.msra.mxu0 %v298
  %407 = vmatprep.subr.bf16.mxu0 0
  %408 = vmatpush2.bf16.msra.mxu0 %v297
  %409 = vmatprep.subr.bf16.mxu0 0
  %410 = vmatpush2.bf16.msra.mxu0 %v296
  %411 = vmatprep.subr.bf16.mxu0 0
  %412 = vmatpush2.bf16.msra.mxu0 %v295
  %413 = vmatprep.subr.bf16.mxu0 0
  %414 = vmatpush2.bf16.msra.mxu0 %v294
  %415 = vmatprep.mubr.bf16.mxu0 %v129
  %416 = vmatmul.mubr.bf16.gmra.mxu0 %v128
  %v417 = vpop.f32.mrf.mxu0
  %v418 = vadd.f32 %v369, %v417
  %v419 = vpop.f32.mrf.mxu0
  %v420 = vpop.f32.mrf.mxu0
  %v421 = vadd.f32 %v372, %v420
  %v422 = vpop.f32.mrf.mxu0
  %423 = vmatprep.mubr.bf16.mxu0 %v133
  %424 = vmatmul.mubr.bf16.gmra.mxu0 %v132
  %v425 = vpop.f32.mrf.mxu0
  %v426 = vadd.f32 %v377, %v425
  %v427 = vpop.f32.mrf.mxu0
  %v428 = vpop.f32.mrf.mxu0
  %v429 = vadd.f32 %v380, %v428
  %v430 = vpop.f32.mrf.mxu0
  %431 = vdwg.mxu0
  %v432 = vadd.f32 %v26, %v418
  %v433 = vadd.f32 %v27, %v421
  %v434 = vadd.f32 %v28, %v426
  %v435 = vadd.f32 %v29, %v429
  %436 = vst [vmem:[#allocation2] sm:$0xff] %v432
  %437 = vst [vmem:[#allocation2 + $0x8] sm:$0xff] %v433
  %438 = vst [vmem:[#allocation2 + $0x10] sm:$0xff] %v434
  %439 = vst [vmem:[#allocation2 + $0x18] sm:$0xff] %v435
  // Predicated region
  $region22: #{_lambda_.15} parent=0 // pred_check
    %p440 = pneg %p18
  $region23: #{_lambda_.15} parent=0 // pred_check_branch
    %442 = sbr.rel (%p440) target = $region25
  $region24: #{_lambda_.15} parent=0 // pred_region
    %v443 = vld [vmem:[#allocation2] sm:$0xff]
    %v444 = vld [vmem:[#allocation2 + $0x8] sm:$0xff]
    %v445 = vld [vmem:[#allocation2 + $0x10] sm:$0xff]
    %v446 = vld [vmem:[#allocation2 + $0x18] sm:$0xff]
    %v447 = vld [vmem:[%s2] sm:$0x1]
    %v449 = vlaneseq
    %v450 = vshrl.u32 %v449, 7
    %v451 = vsub.s32 0, %v450
    %v452 = vrot.slane %v447, %v451
    %v454 = vmul.f32 %v443, %v452
    %v455 = vmul.f32 %v444, %v452
    %v456 = vmul.f32 %v445, %v452
    %v457 = vmul.f32 %v446, %v452
    %v458 = vld [vmem:[%s3] sm:$0x1]
    %v460 = vlaneseq
    %v461 = vshrl.u32 %v460, 7
    %v462 = vsub.s32 0, %v461
    %v463 = vrot.slane %v458, %v462
    %v465 = vadd.f32 %v454, %v463
    %v466 = vadd.f32 %v455, %v463
    %v467 = vadd.f32 %v456, %v463
    %v468 = vadd.f32 %v457, %v463
    %vm469 = vcmp.gt.f32.partialorder %v465, 0.0
    %vm470 = vcmp.gt.f32.partialorder %v466, 0.0
    %vm471 = vcmp.gt.f32.partialorder %v467, 0.0
    %vm472 = vcmp.gt.f32.partialorder %v468, 0.0
    %v473 = vmul.f32 %v465, 0.2
    %v474 = vmul.f32 %v466, 0.2
    %v475 = vmul.f32 %v467, 0.2
    %v476 = vmul.f32 %v468, 0.2
    %v477 = vsel %vm469, %v465, %v473
    %v478 = vsel %vm470, %v466, %v474
    %v479 = vsel %vm471, %v467, %v475
    %v480 = vsel %vm472, %v468, %v476
    %481 = vst [vmem:[%s4] sm:$0xff] %v477
    %482 = vst [vmem:[%s4 + $0x8] sm:$0xff] %v478
    %483 = vst [vmem:[%s4 + $0x10] sm:$0xff] %v479
    %484 = vst [vmem:[%s4 + $0x18] sm:$0xff] %v480
  $region25: #{_lambda_.15} parent=0 // pred_fallthru
    _
  // Predicated region
  $region26: #{_lambda_.15} parent=0 // pred_check
    _
  $region27: #{_lambda_.15} parent=0 // pred_check_branch
    %486 = sbr.rel (0) target = $region29
  $region28: #{_lambda_.15} parent=0 // pred_region
    _
  $region29: #{_lambda_.15} parent=0 // pred_fallthru
    _
  // Predicated region
  $region30: #{_lambda_.15} parent=0 // pred_check
    _
  $region31: #{_lambda_.15} parent=0 // pred_check_branch
    %488 = sbr.rel (0) target = $region33
  $region32: #{_lambda_.15} parent=0 // pred_region
    _
  $region33: #{_lambda_.15} parent=0 // pred_fallthru
    _

// kernel: _lambda_.16
$region0: #{_lambda_.16}
  #allocation0 [shape = 'u32[]', space=smem, size = 0x4, offset = 0x4, fixed_abs, tag = 'smem constant byte address 0x4 - core index']
  #allocation1 [shape = 'u32[144,128]{1,0:T(1,128)}', space=vmem, size = 0x12000, scoped, tag = 'internal scratch']
  #allocation2 [shape = 'f32[16,128]{1,0:T(8,128)}', space=vmem, size = 0x2000, scoped, tag = 'scratch operand']
  %s0 = inlined_call_operand.vmem [shape: bf16[16,1024], index: 0, kind: input, shape index: {}]
  %s1 = inlined_call_operand.vmem [shape: bf16[1024,128], index: 1, kind: input, shape index: {}]
  %s2 = inlined_call_operand.vmem [shape: f32[1,128], index: 2, kind: input, shape index: {}]
  %s3 = inlined_call_operand.vmem [shape: f32[1,128], index: 3, kind: input, shape index: {}]
  %s4 = inlined_call_operand.vmem [shape: f32[16,128], index: 4, kind: output, shape index: {}]
  %s5 = sld [smem:[#allocation0]]
  $region34: #{_lambda_.16} parent=0
    _
  %s7 = ssub.s32 1, %s5
  %s8 = scalar_select 0, %s7, %s5
  // Predicated region
  $region2: #{_lambda_.16} parent=0 // pred_check
    _
  $region3: #{_lambda_.16} parent=0 // pred_check_branch
    %10 = sbr.rel (0) target = $region5
  $region4: #{_lambda_.16} parent=0 // pred_region
    _
  $region5: #{_lambda_.16} parent=0 // pred_fallthru
    _
  // Predicated region
  $region6: #{_lambda_.16} parent=0 // pred_check
    _
  $region7: #{_lambda_.16} parent=0 // pred_check_branch
    %12 = sbr.rel (0) target = $region9
  $region8: #{_lambda_.16} parent=0 // pred_region
    _
  $region9: #{_lambda_.16} parent=0 // pred_fallthru
    _
  // Predicated region
  $region10: #{_lambda_.16} parent=0 // pred_check
    _
  $region11: #{_lambda_.16} parent=0 // pred_check_branch
    %14 = sbr.rel (0) target = $region13
  $region12: #{_lambda_.16} parent=0 // pred_region
    _
  $region13: #{_lambda_.16} parent=0 // pred_fallthru
    _
  // Predicated region
  $region14: #{_lambda_.16} parent=0 // pred_check
    _
  $region15: #{_lambda_.16} parent=0 // pred_check_branch
    %16 = sbr.rel (0) target = $region17
  $region16: #{_lambda_.16} parent=0 // pred_region
    _
  $region17: #{_lambda_.16} parent=0 // pred_fallthru
    _
  %p18 = scmp.eq.s32.totalorder 0, 0
  // Predicated region
  $region18: #{_lambda_.16} parent=0 // pred_check
    %p19 = pneg %p18
  $region19: #{_lambda_.16} parent=0 // pred_check_branch
    %21 = sbr.rel (%p19) target = $region21
  $region20: #{_lambda_.16} parent=0 // pred_region
    %22 = vst [vmem:[#allocation2] sm:$0xff] 0.0
    %23 = vst [vmem:[#allocation2 + $0x8] sm:$0xff] 0.0
  $region21: #{_lambda_.16} parent=0 // pred_fallthru
    _
  %v24 = vld [vmem:[#allocation2] sm:$0xff]
  %v25 = vld [vmem:[#allocation2 + $0x8] sm:$0xff]
  %v26 = vld [vmem:[%s0] sm:$0xff]
  %v27 = vld [vmem:[%s0 + $0x8] sm:$0xff]
  %v28 = vld [vmem:[%s0 + $0x10] sm:$0xff]
  %v29 = vld [vmem:[%s0 + $0x18] sm:$0xff]
  %v30 = vld [vmem:[%s0 + $0x20] sm:$0xff]
  %v31 = vld [vmem:[%s0 + $0x28] sm:$0xff]
  %v32 = vld [vmem:[%s0 + $0x30] sm:$0xff]
  %v33 = vld [vmem:[%s0 + $0x38] sm:$0xff]
  %v34 = vld [vmem:[%s1] sm:$0xf]
  %v35 = vld [vmem:[%s1 + $0x4] sm:$0xf]
  %v36 = vld [vmem:[%s1 + $0x8] sm:$0xf]
  %v37 = vld [vmem:[%s1 + $0xc] sm:$0xf]
  %v38 = vld [vmem:[%s1 + $0x10] sm:$0xf]
  %v39 = vld [vmem:[%s1 + $0x14] sm:$0xf]
  %v40 = vld [vmem:[%s1 + $0x18] sm:$0xf]
  %v41 = vld [vmem:[%s1 + $0x1c] sm:$0xf]
  %v42 = vld [vmem:[%s1 + $0x20] sm:$0xf]
  %v43 = vld [vmem:[%s1 + $0x24] sm:$0xf]
  %v44 = vld [vmem:[%s1 + $0x28] sm:$0xf]
  %v45 = vld [vmem:[%s1 + $0x2c] sm:$0xf]
  %v46 = vld [vmem:[%s1 + $0x30] sm:$0xf]
  %v47 = vld [vmem:[%s1 + $0x34] sm:$0xf]
  %v48 = vld [vmem:[%s1 + $0x38] sm:$0xf]
  %v49 = vld [vmem:[%s1 + $0x3c] sm:$0xf]
  %v50 = vld [vmem:[%s1 + $0x40] sm:$0xf]
  %v51 = vld [vmem:[%s1 + $0x44] sm:$0xf]
  %v52 = vld [vmem:[%s1 + $0x48] sm:$0xf]
  %v53 = vld [vmem:[%s1 + $0x4c] sm:$0xf]
  %v54 = vld [vmem:[%s1 + $0x50] sm:$0xf]
  %v55 = vld [vmem:[%s1 + $0x54] sm:$0xf]
  %v56 = vld [vmem:[%s1 + $0x58] sm:$0xf]
  %v57 = vld [vmem:[%s1 + $0x5c] sm:$0xf]
  %v58 = vld [vmem:[%s1 + $0x60] sm:$0xf]
  %v59 = vld [vmem:[%s1 + $0x64] sm:$0xf]
  %v60 = vld [vmem:[%s1 + $0x68] sm:$0xf]
  %v61 = vld [vmem:[%s1 + $0x6c] sm:$0xf]
  %v62 = vld [vmem:[%s1 + $0x70] sm:$0xf]
  %v63 = vld [vmem:[%s1 + $0x74] sm:$0xf]
  %v64 = vld [vmem:[%s1 + $0x78] sm:$0xf]
  %v65 = vld [vmem:[%s1 + $0x7c] sm:$0xf]
  %v66 = vld [vmem:[%s1 + $0x80] sm:$0xf]
  %v67 = vld [vmem:[%s1 + $0x84] sm:$0xf]
  %v68 = vld [vmem:[%s1 + $0x88] sm:$0xf]
  %v69 = vld [vmem:[%s1 + $0x8c] sm:$0xf]
  %v70 = vld [vmem:[%s1 + $0x90] sm:$0xf]
  %v71 = vld [vmem:[%s1 + $0x94] sm:$0xf]
  %v72 = vld [vmem:[%s1 + $0x98] sm:$0xf]
  %v73 = vld [vmem:[%s1 + $0x9c] sm:$0xf]
  %v74 = vld [vmem:[%s1 + $0xa0] sm:$0xf]
  %v75 = vld [vmem:[%s1 + $0xa4] sm:$0xf]
  %v76 = vld [vmem:[%s1 + $0xa8] sm:$0xf]
  %v77 = vld [vmem:[%s1 + $0xac] sm:$0xf]
  %v78 = vld [vmem:[%s1 + $0xb0] sm:$0xf]
  %v79 = vld [vmem:[%s1 + $0xb4] sm:$0xf]
  %v80 = vld [vmem:[%s1 + $0xb8] sm:$0xf]
  %v81 = vld [vmem:[%s1 + $0xbc] sm:$0xf]
  %v82 = vld [vmem:[%s1 + $0xc0] sm:$0xf]
  %v83 = vld [vmem:[%s1 + $0xc4] sm:$0xf]
  %v84 = vld [vmem:[%s1 + $0xc8] sm:$0xf]
  %v85 = vld [vmem:[%s1 + $0xcc] sm:$0xf]
  %v86 = vld [vmem:[%s1 + $0xd0] sm:$0xf]
  %v87 = vld [vmem:[%s1 + $0xd4] sm:$0xf]
  %v88 = vld [vmem:[%s1 + $0xd8] sm:$0xf]
  %v89 = vld [vmem:[%s1 + $0xdc] sm:$0xf]
  %v90 = vld [vmem:[%s1 + $0xe0] sm:$0xf]
  %v91 = vld [vmem:[%s1 + $0xe4] sm:$0xf]
  %v92 = vld [vmem:[%s1 + $0xe8] sm:$0xf]
  %v93 = vld [vmem:[%s1 + $0xec] sm:$0xf]
  %v94 = vld [vmem:[%s1 + $0xf0] sm:$0xf]
  %v95 = vld [vmem:[%s1 + $0xf4] sm:$0xf]
  %v96 = vld [vmem:[%s1 + $0xf8] sm:$0xf]
  %v97 = vld [vmem:[%s1 + $0xfc] sm:$0xf]
  %v98 = vld [vmem:[%s1 + $0x100] sm:$0xf]
  %v99 = vld [vmem:[%s1 + $0x104] sm:$0xf]
  %v100 = vld [vmem:[%s1 + $0x108] sm:$0xf]
  %v101 = vld [vmem:[%s1 + $0x10c] sm:$0xf]
  %v102 = vld [vmem:[%s1 + $0x110] sm:$0xf]
  %v103 = vld [vmem:[%s1 + $0x114] sm:$0xf]
  %v104 = vld [vmem:[%s1 + $0x118] sm:$0xf]
  %v105 = vld [vmem:[%s1 + $0x11c] sm:$0xf]
  %v106 = vld [vmem:[%s1 + $0x120] sm:$0xf]
  %v107 = vld [vmem:[%s1 + $0x124] sm:$0xf]
  %v108 = vld [vmem:[%s1 + $0x128] sm:$0xf]
  %v109 = vld [vmem:[%s1 + $0x12c] sm:$0xf]
  %v110 = vld [vmem:[%s1 + $0x130] sm:$0xf]
  %v111 = vld [vmem:[%s1 + $0x134] sm:$0xf]
  %v112 = vld [vmem:[%s1 + $0x138] sm:$0xf]
  %v113 = vld [vmem:[%s1 + $0x13c] sm:$0xf]
  %v114 = vld [vmem:[%s1 + $0x140] sm:$0xf]
  %v115 = vld [vmem:[%s1 + $0x144] sm:$0xf]
  %v116 = vld [vmem:[%s1 + $0x148] sm:$0xf]
  %v117 = vld [vmem:[%s1 + $0x14c] sm:$0xf]
  %v118 = vld [vmem:[%s1 + $0x150] sm:$0xf]
  %v119 = vld [vmem:[%s1 + $0x154] sm:$0xf]
  %v120 = vld [vmem:[%s1 + $0x158] sm:$0xf]
  %v121 = vld [vmem:[%s1 + $0x15c] sm:$0xf]
  %v122 = vld [vmem:[%s1 + $0x160] sm:$0xf]
  %v123 = vld [vmem:[%s1 + $0x164] sm:$0xf]
  %v124 = vld [vmem:[%s1 + $0x168] sm:$0xf]
  %v125 = vld [vmem:[%s1 + $0x16c] sm:$0xf]
  %v126 = vld [vmem:[%s1 + $0x170] sm:$0xf]
  %v127 = vld [vmem:[%s1 + $0x174] sm:$0xf]
  %v128 = vld [vmem:[%s1 + $0x178] sm:$0xf]
  %v129 = vld [vmem:[%s1 + $0x17c] sm:$0xf]
  %v130 = vld [vmem:[%s1 + $0x180] sm:$0xf]
  %v131 = vld [vmem:[%s1 + $0x184] sm:$0xf]
  %v132 = vld [vmem:[%s1 + $0x188] sm:$0xf]
  %v133 = vld [vmem:[%s1 + $0x18c] sm:$0xf]
  %v134 = vld [vmem:[%s1 + $0x190] sm:$0xf]
  %v135 = vld [vmem:[%s1 + $0x194] sm:$0xf]
  %v136 = vld [vmem:[%s1 + $0x198] sm:$0xf]
  %v137 = vld [vmem:[%s1 + $0x19c] sm:$0xf]
  %v138 = vld [vmem:[%s1 + $0x1a0] sm:$0xf]
  %v139 = vld [vmem:[%s1 + $0x1a4] sm:$0xf]
  %v140 = vld [vmem:[%s1 + $0x1a8] sm:$0xf]
  %v141 = vld [vmem:[%s1 + $0x1ac] sm:$0xf]
  %v142 = vld [vmem:[%s1 + $0x1b0] sm:$0xf]
  %v143 = vld [vmem:[%s1 + $0x1b4] sm:$0xf]
  %v144 = vld [vmem:[%s1 + $0x1b8] sm:$0xf]
  %v145 = vld [vmem:[%s1 + $0x1bc] sm:$0xf]
  %v146 = vld [vmem:[%s1 + $0x1c0] sm:$0xf]
  %v147 = vld [vmem:[%s1 + $0x1c4] sm:$0xf]
  %v148 = vld [vmem:[%s1 + $0x1c8] sm:$0xf]
  %v149 = vld [vmem:[%s1 + $0x1cc] sm:$0xf]
  %v150 = vld [vmem:[%s1 + $0x1d0] sm:$0xf]
  %v151 = vld [vmem:[%s1 + $0x1d4] sm:$0xf]
  %v152 = vld [vmem:[%s1 + $0x1d8] sm:$0xf]
  %v153 = vld [vmem:[%s1 + $0x1dc] sm:$0xf]
  %v154 = vld [vmem:[%s1 + $0x1e0] sm:$0xf]
  %v155 = vld [vmem:[%s1 + $0x1e4] sm:$0xf]
  %v156 = vld [vmem:[%s1 + $0x1e8] sm:$0xf]
  %v157 = vld [vmem:[%s1 + $0x1ec] sm:$0xf]
  %v158 = vld [vmem:[%s1 + $0x1f0] sm:$0xf]
  %v159 = vld [vmem:[%s1 + $0x1f4] sm:$0xf]
  %v160 = vld [vmem:[%s1 + $0x1f8] sm:$0xf]
  %v161 = vld [vmem:[%s1 + $0x1fc] sm:$0xf]
  %v170 = vunpack.c.l.b16 %v26
  %v171 = vunpack.c.h.b16 %v26
  %v172 = vunpack.c.l.b16 %v27
  %v173 = vunpack.c.h.b16 %v27
  %v174 = vunpack.c.l.b16 %v28
  %v175 = vunpack.c.h.b16 %v28
  %v176 = vunpack.c.l.b16 %v29
  %v177 = vunpack.c.h.b16 %v29
  %v178 = vunpack.c.l.b16 %v30
  %v179 = vunpack.c.h.b16 %v30
  %v180 = vunpack.c.l.b16 %v31
  %v181 = vunpack.c.h.b16 %v31
  %v182 = vunpack.c.l.b16 %v32
  %v183 = vunpack.c.h.b16 %v32
  %v184 = vunpack.c.l.b16 %v33
  %v185 = vunpack.c.h.b16 %v33
  %v186 = vpack.c.b16 %v178, %v170
  %v187 = vpack.c.b16 %v179, %v171
  %v188 = vpack.c.b16 %v180, %v172
  %v189 = vpack.c.b16 %v181, %v173
  %v190 = vpack.c.b16 %v182, %v174
  %v191 = vpack.c.b16 %v183, %v175
  %v192 = vpack.c.b16 %v184, %v176
  %v193 = vpack.c.b16 %v185, %v177
  %v330 = vunpack.c.l.b16 %v34
  %v331 = vunpack.c.l.b16 %v35
  %v332 = vunpack.c.l.b16 %v36
  %v333 = vunpack.c.l.b16 %v37
  %v334 = vunpack.c.l.b16 %v38
  %v335 = vunpack.c.l.b16 %v39
  %v336 = vunpack.c.l.b16 %v40
  %v337 = vunpack.c.l.b16 %v41
  %v338 = vunpack.c.l.b16 %v42
  %v339 = vunpack.c.l.b16 %v43
  %v340 = vunpack.c.l.b16 %v44
  %v341 = vunpack.c.l.b16 %v45
  %v342 = vunpack.c.l.b16 %v46
  %v343 = vunpack.c.l.b16 %v47
  %v344 = vunpack.c.l.b16 %v48
  %v345 = vunpack.c.l.b16 %v49
  %v346 = vunpack.c.l.b16 %v50
  %v347 = vunpack.c.l.b16 %v51
  %v348 = vunpack.c.l.b16 %v52
  %v349 = vunpack.c.l.b16 %v53
  %v350 = vunpack.c.l.b16 %v54
  %v351 = vunpack.c.l.b16 %v55
  %v352 = vunpack.c.l.b16 %v56
  %v353 = vunpack.c.l.b16 %v57
  %v354 = vunpack.c.l.b16 %v58
  %v355 = vunpack.c.l.b16 %v59
  %v356 = vunpack.c.l.b16 %v60
  %v357 = vunpack.c.l.b16 %v61
  %v358 = vunpack.c.l.b16 %v62
  %v359 = vunpack.c.l.b16 %v63
  %v360 = vunpack.c.l.b16 %v64
  %v361 = vunpack.c.l.b16 %v65
  %v362 = vunpack.c.l.b16 %v66
  %v363 = vunpack.c.l.b16 %v67
  %v364 = vunpack.c.l.b16 %v68
  %v365 = vunpack.c.l.b16 %v69
  %v366 = vunpack.c.l.b16 %v70
  %v367 = vunpack.c.l.b16 %v71
  %v368 = vunpack.c.l.b16 %v72
  %v369 = vunpack.c.l.b16 %v73
  %v370 = vunpack.c.l.b16 %v74
  %v371 = vunpack.c.l.b16 %v75
  %v372 = vunpack.c.l.b16 %v76
  %v373 = vunpack.c.l.b16 %v77
  %v374 = vunpack.c.l.b16 %v78
  %v375 = vunpack.c.l.b16 %v79
  %v376 = vunpack.c.l.b16 %v80
  %v377 = vunpack.c.l.b16 %v81
  %v378 = vunpack.c.l.b16 %v82
  %v379 = vunpack.c.l.b16 %v83
  %v380 = vunpack.c.l.b16 %v84
  %v381 = vunpack.c.l.b16 %v85
  %v382 = vunpack.c.l.b16 %v86
  %v383 = vunpack.c.l.b16 %v87
  %v384 = vunpack.c.l.b16 %v88
  %v385 = vunpack.c.l.b16 %v89
  %v386 = vunpack.c.l.b16 %v90
  %v387 = vunpack.c.l.b16 %v91
  %v388 = vunpack.c.l.b16 %v92
  %v389 = vunpack.c.l.b16 %v93
  %v390 = vunpack.c.l.b16 %v94
  %v391 = vunpack.c.l.b16 %v95
  %v392 = vunpack.c.l.b16 %v96
  %v393 = vunpack.c.l.b16 %v97
  %v394 = vunpack.c.l.b16 %v98
  %v395 = vunpack.c.l.b16 %v99
  %v396 = vunpack.c.l.b16 %v100
  %v397 = vunpack.c.l.b16 %v101
  %v398 = vunpack.c.l.b16 %v102
  %v399 = vunpack.c.l.b16 %v103
  %v400 = vunpack.c.l.b16 %v104
  %v401 = vunpack.c.l.b16 %v105
  %v402 = vunpack.c.l.b16 %v106
  %v403 = vunpack.c.l.b16 %v107
  %v404 = vunpack.c.l.b16 %v108
  %v405 = vunpack.c.l.b16 %v109
  %v406 = vunpack.c.l.b16 %v110
  %v407 = vunpack.c.l.b16 %v111
  %v408 = vunpack.c.l.b16 %v112
  %v409 = vunpack.c.l.b16 %v113
  %v410 = vunpack.c.l.b16 %v114
  %v411 = vunpack.c.l.b16 %v115
  %v412 = vunpack.c.l.b16 %v116
  %v413 = vunpack.c.l.b16 %v117
  %v414 = vunpack.c.l.b16 %v118
  %v415 = vunpack.c.l.b16 %v119
  %v416 = vunpack.c.l.b16 %v120
  %v417 = vunpack.c.l.b16 %v121
  %v418 = vunpack.c.l.b16 %v122
  %v419 = vunpack.c.l.b16 %v123
  %v420 = vunpack.c.l.b16 %v124
  %v421 = vunpack.c.l.b16 %v125
  %v422 = vunpack.c.l.b16 %v126
  %v423 = vunpack.c.l.b16 %v127
  %v424 = vunpack.c.l.b16 %v128
  %v425 = vunpack.c.l.b16 %v129
  %v426 = vunpack.c.l.b16 %v130
  %v427 = vunpack.c.l.b16 %v131
  %v428 = vunpack.c.l.b16 %v132
  %v429 = vunpack.c.l.b16 %v133
  %v430 = vunpack.c.l.b16 %v134
  %v431 = vunpack.c.l.b16 %v135
  %v432 = vunpack.c.l.b16 %v136
  %v433 = vunpack.c.l.b16 %v137
  %v434 = vunpack.c.l.b16 %v138
  %v435 = vunpack.c.l.b16 %v139
  %v436 = vunpack.c.l.b16 %v140
  %v437 = vunpack.c.l.b16 %v141
  %v438 = vunpack.c.l.b16 %v142
  %v439 = vunpack.c.l.b16 %v143
  %v440 = vunpack.c.l.b16 %v144
  %v441 = vunpack.c.l.b16 %v145
  %v442 = vunpack.c.l.b16 %v146
  %v443 = vunpack.c.l.b16 %v147
  %v444 = vunpack.c.l.b16 %v148
  %v445 = vunpack.c.l.b16 %v149
  %v446 = vunpack.c.l.b16 %v150
  %v447 = vunpack.c.l.b16 %v151
  %v448 = vunpack.c.l.b16 %v152
  %v449 = vunpack.c.l.b16 %v153
  %v450 = vunpack.c.l.b16 %v154
  %v451 = vunpack.c.l.b16 %v155
  %v452 = vunpack.c.l.b16 %v156
  %v453 = vunpack.c.l.b16 %v157
  %v454 = vunpack.c.l.b16 %v158
  %v455 = vunpack.c.l.b16 %v159
  %v456 = vunpack.c.l.b16 %v160
  %v457 = vunpack.c.l.b16 %v161
  %v458 = vpack.c.b16 %v331, %v330
  %v459 = vpack.c.b16 %v333, %v332
  %v460 = vpack.c.b16 %v335, %v334
  %v461 = vpack.c.b16 %v337, %v336
  %v462 = vpack.c.b16 %v339, %v338
  %v463 = vpack.c.b16 %v341, %v340
  %v464 = vpack.c.b16 %v343, %v342
  %v465 = vpack.c.b16 %v345, %v344
  %v466 = vpack.c.b16 %v347, %v346
  %v467 = vpack.c.b16 %v349, %v348
  %v468 = vpack.c.b16 %v351, %v350
  %v469 = vpack.c.b16 %v353, %v352
  %v470 = vpack.c.b16 %v355, %v354
  %v471 = vpack.c.b16 %v357, %v356
  %v472 = vpack.c.b16 %v359, %v358
  %v473 = vpack.c.b16 %v361, %v360
  %v474 = vpack.c.b16 %v363, %v362
  %v475 = vpack.c.b16 %v365, %v364
  %v476 = vpack.c.b16 %v367, %v366
  %v477 = vpack.c.b16 %v369, %v368
  %v478 = vpack.c.b16 %v371, %v370
  %v479 = vpack.c.b16 %v373, %v372
  %v480 = vpack.c.b16 %v375, %v374
  %v481 = vpack.c.b16 %v377, %v376
  %v482 = vpack.c.b16 %v379, %v378
  %v483 = vpack.c.b16 %v381, %v380
  %v484 = vpack.c.b16 %v383, %v382
  %v485 = vpack.c.b16 %v385, %v384
  %v486 = vpack.c.b16 %v387, %v386
  %v487 = vpack.c.b16 %v389, %v388
  %v488 = vpack.c.b16 %v391, %v390
  %v489 = vpack.c.b16 %v393, %v392
  %v490 = vpack.c.b16 %v395, %v394
  %v491 = vpack.c.b16 %v397, %v396
  %v492 = vpack.c.b16 %v399, %v398
  %v493 = vpack.c.b16 %v401, %v400
  %v494 = vpack.c.b16 %v403, %v402
  %v495 = vpack.c.b16 %v405, %v404
  %v496 = vpack.c.b16 %v407, %v406
  %v497 = vpack.c.b16 %v409, %v408
  %v498 = vpack.c.b16 %v411, %v410
  %v499 = vpack.c.b16 %v413, %v412
  %v500 = vpack.c.b16 %v415, %v414
  %v501 = vpack.c.b16 %v417, %v416
  %v502 = vpack.c.b16 %v419, %v418
  %v503 = vpack.c.b16 %v421, %v420
  %v504 = vpack.c.b16 %v423, %v422
  %v505 = vpack.c.b16 %v425, %v424
  %v506 = vpack.c.b16 %v427, %v426
  %v507 = vpack.c.b16 %v429, %v428
  %v508 = vpack.c.b16 %v431, %v430
  %v509 = vpack.c.b16 %v433, %v432
  %v510 = vpack.c.b16 %v435, %v434
  %v511 = vpack.c.b16 %v437, %v436
  %v512 = vpack.c.b16 %v439, %v438
  %v513 = vpack.c.b16 %v441, %v440
  %v514 = vpack.c.b16 %v443, %v442
  %v515 = vpack.c.b16 %v445, %v444
  %v516 = vpack.c.b16 %v447, %v446
  %v517 = vpack.c.b16 %v449, %v448
  %v518 = vpack.c.b16 %v451, %v450
  %v519 = vpack.c.b16 %v453, %v452
  %v520 = vpack.c.b16 %v455, %v454
  %v521 = vpack.c.b16 %v457, %v456
  %586 = vmatprep.subr.bf16.mxu0 0
  %587 = vmatpush1.bf16.msra.mxu0 %v465
  %588 = vmatprep.subr.bf16.mxu0 0
  %589 = vmatpush1.bf16.msra.mxu0 %v464
  %590 = vmatprep.subr.bf16.mxu0 0
  %591 = vmatpush1.bf16.msra.mxu0 %v463
  %592 = vmatprep.subr.bf16.mxu0 0
  %593 = vmatpush1.bf16.msra.mxu0 %v462
  %594 = vmatprep.subr.bf16.mxu0 0
  %595 = vmatpush1.bf16.msra.mxu0 %v461
  %596 = vmatprep.subr.bf16.mxu0 0
  %597 = vmatpush1.bf16.msra.mxu0 %v460
  %598 = vmatprep.subr.bf16.mxu0 0
  %599 = vmatpush1.bf16.msra.mxu0 %v459
  %600 = vmatprep.subr.bf16.mxu0 0
  %601 = vmatpush1.bf16.msra.mxu0 %v458
  %602 = vmatprep.subr.bf16.mxu0 0
  %603 = vmatpush2.bf16.msra.mxu0 %v473
  %604 = vmatprep.subr.bf16.mxu0 0
  %605 = vmatpush2.bf16.msra.mxu0 %v472
  %606 = vmatprep.subr.bf16.mxu0 0
  %607 = vmatpush2.bf16.msra.mxu0 %v471
  %608 = vmatprep.subr.bf16.mxu0 0
  %609 = vmatpush2.bf16.msra.mxu0 %v470
  %610 = vmatprep.subr.bf16.mxu0 0
  %611 = vmatpush2.bf16.msra.mxu0 %v469
  %612 = vmatprep.subr.bf16.mxu0 0
  %613 = vmatpush2.bf16.msra.mxu0 %v468
  %614 = vmatprep.subr.bf16.mxu0 0
  %615 = vmatpush2.bf16.msra.mxu0 %v467
  %616 = vmatprep.subr.bf16.mxu0 0
  %617 = vmatpush2.bf16.msra.mxu0 %v466
  %618 = vmatprep.mubr.bf16.mxu0 %v187
  %619 = vmatmul.mubr.bf16.gmra.mxu0 %v186
  %v620 = vpop.f32.mrf.mxu0
  %v621 = vadd.f32 0.0, %v620
  %v622 = vpop.f32.mrf.mxu0
  %v623 = vpop.f32.mrf.mxu0
  %v624 = vadd.f32 0.0, %v623
  %v625 = vpop.f32.mrf.mxu0
  %626 = vdwg.mxu0
  %627 = vmatprep.subr.bf16.mxu0 0
  %628 = vmatpush1.bf16.msra.mxu0 %v481
  %629 = vmatprep.subr.bf16.mxu0 0
  %630 = vmatpush1.bf16.msra.mxu0 %v480
  %631 = vmatprep.subr.bf16.mxu0 0
  %632 = vmatpush1.bf16.msra.mxu0 %v479
  %633 = vmatprep.subr.bf16.mxu0 0
  %634 = vmatpush1.bf16.msra.mxu0 %v478
  %635 = vmatprep.subr.bf16.mxu0 0
  %636 = vmatpush1.bf16.msra.mxu0 %v477
  %637 = vmatprep.subr.bf16.mxu0 0
  %638 = vmatpush1.bf16.msra.mxu0 %v476
  %639 = vmatprep.subr.bf16.mxu0 0
  %640 = vmatpush1.bf16.msra.mxu0 %v475
  %641 = vmatprep.subr.bf16.mxu0 0
  %642 = vmatpush1.bf16.msra.mxu0 %v474
  %643 = vmatprep.subr.bf16.mxu0 0
  %644 = vmatpush2.bf16.msra.mxu0 %v489
  %645 = vmatprep.subr.bf16.mxu0 0
  %646 = vmatpush2.bf16.msra.mxu0 %v488
  %647 = vmatprep.subr.bf16.mxu0 0
  %648 = vmatpush2.bf16.msra.mxu0 %v487
  %649 = vmatprep.subr.bf16.mxu0 0
  %650 = vmatpush2.bf16.msra.mxu0 %v486
  %651 = vmatprep.subr.bf16.mxu0 0
  %652 = vmatpush2.bf16.msra.mxu0 %v485
  %653 = vmatprep.subr.bf16.mxu0 0
  %654 = vmatpush2.bf16.msra.mxu0 %v484
  %655 = vmatprep.subr.bf16.mxu0 0
  %656 = vmatpush2.bf16.msra.mxu0 %v483
  %657 = vmatprep.subr.bf16.mxu0 0
  %658 = vmatpush2.bf16.msra.mxu0 %v482
  %659 = vmatprep.mubr.bf16.mxu0 %v189
  %660 = vmatmul.mubr.bf16.gmra.mxu0 %v188
  %v661 = vpop.f32.mrf.mxu0
  %v662 = vadd.f32 %v621, %v661
  %v663 = vpop.f32.mrf.mxu0
  %v664 = vpop.f32.mrf.mxu0
  %v665 = vadd.f32 %v624, %v664
  %v666 = vpop.f32.mrf.mxu0
  %667 = vdwg.mxu0
  %668 = vmatprep.subr.bf16.mxu0 0
  %669 = vmatpush1.bf16.msra.mxu0 %v497
  %670 = vmatprep.subr.bf16.mxu0 0
  %671 = vmatpush1.bf16.msra.mxu0 %v496
  %672 = vmatprep.subr.bf16.mxu0 0
  %673 = vmatpush1.bf16.msra.mxu0 %v495
  %674 = vmatprep.subr.bf16.mxu0 0
  %675 = vmatpush1.bf16.msra.mxu0 %v494
  %676 = vmatprep.subr.bf16.mxu0 0
  %677 = vmatpush1.bf16.msra.mxu0 %v493
  %678 = vmatprep.subr.bf16.mxu0 0
  %679 = vmatpush1.bf16.msra.mxu0 %v492
  %680 = vmatprep.subr.bf16.mxu0 0
  %681 = vmatpush1.bf16.msra.mxu0 %v491
  %682 = vmatprep.subr.bf16.mxu0 0
  %683 = vmatpush1.bf16.msra.mxu0 %v490
  %684 = vmatprep.subr.bf16.mxu0 0
  %685 = vmatpush2.bf16.msra.mxu0 %v505
  %686 = vmatprep.subr.bf16.mxu0 0
  %687 = vmatpush2.bf16.msra.mxu0 %v504
  %688 = vmatprep.subr.bf16.mxu0 0
  %689 = vmatpush2.bf16.msra.mxu0 %v503
  %690 = vmatprep.subr.bf16.mxu0 0
  %691 = vmatpush2.bf16.msra.mxu0 %v502
  %692 = vmatprep.subr.bf16.mxu0 0
  %693 = vmatpush2.bf16.msra.mxu0 %v501
  %694 = vmatprep.subr.bf16.mxu0 0
  %695 = vmatpush2.bf16.msra.mxu0 %v500
  %696 = vmatprep.subr.bf16.mxu0 0
  %697 = vmatpush2.bf16.msra.mxu0 %v499
  %698 = vmatprep.subr.bf16.mxu0 0
  %699 = vmatpush2.bf16.msra.mxu0 %v498
  %700 = vmatprep.mubr.bf16.mxu0 %v191
  %701 = vmatmul.mubr.bf16.gmra.mxu0 %v190
  %v702 = vpop.f32.mrf.mxu0
  %v703 = vadd.f32 %v662, %v702
  %v704 = vpop.f32.mrf.mxu0
  %v705 = vpop.f32.mrf.mxu0
  %v706 = vadd.f32 %v665, %v705
  %v707 = vpop.f32.mrf.mxu0
  %708 = vdwg.mxu0
  %709 = vmatprep.subr.bf16.mxu0 0
  %710 = vmatpush1.bf16.msra.mxu0 %v513
  %711 = vmatprep.subr.bf16.mxu0 0
  %712 = vmatpush1.bf16.msra.mxu0 %v512
  %713 = vmatprep.subr.bf16.mxu0 0
  %714 = vmatpush1.bf16.msra.mxu0 %v511
  %715 = vmatprep.subr.bf16.mxu0 0
  %716 = vmatpush1.bf16.msra.mxu0 %v510
  %717 = vmatprep.subr.bf16.mxu0 0
  %718 = vmatpush1.bf16.msra.mxu0 %v509
  %719 = vmatprep.subr.bf16.mxu0 0
  %720 = vmatpush1.bf16.msra.mxu0 %v508
  %721 = vmatprep.subr.bf16.mxu0 0
  %722 = vmatpush1.bf16.msra.mxu0 %v507
  %723 = vmatprep.subr.bf16.mxu0 0
  %724 = vmatpush1.bf16.msra.mxu0 %v506
  %725 = vmatprep.subr.bf16.mxu0 0
  %726 = vmatpush2.bf16.msra.mxu0 %v521
  %727 = vmatprep.subr.bf16.mxu0 0
  %728 = vmatpush2.bf16.msra.mxu0 %v520
  %729 = vmatprep.subr.bf16.mxu0 0
  %730 = vmatpush2.bf16.msra.mxu0 %v519
  %731 = vmatprep.subr.bf16.mxu0 0
  %732 = vmatpush2.bf16.msra.mxu0 %v518
  %733 = vmatprep.subr.bf16.mxu0 0
  %734 = vmatpush2.bf16.msra.mxu0 %v517
  %735 = vmatprep.subr.bf16.mxu0 0
  %736 = vmatpush2.bf16.msra.mxu0 %v516
  %737 = vmatprep.subr.bf16.mxu0 0
  %738 = vmatpush2.bf16.msra.mxu0 %v515
  %739 = vmatprep.subr.bf16.mxu0 0
  %740 = vmatpush2.bf16.msra.mxu0 %v514
  %741 = vmatprep.mubr.bf16.mxu0 %v193
  %742 = vmatmul.mubr.bf16.gmra.mxu0 %v192
  %v743 = vpop.f32.mrf.mxu0
  %v744 = vadd.f32 %v703, %v743
  %v745 = vpop.f32.mrf.mxu0
  %v746 = vpop.f32.mrf.mxu0
  %v747 = vadd.f32 %v706, %v746
  %v748 = vpop.f32.mrf.mxu0
  %749 = vdwg.mxu0
  %v750 = vadd.f32 %v24, %v744
  %v751 = vadd.f32 %v25, %v747
  %752 = vst [vmem:[#allocation2] sm:$0xff] %v750
  %753 = vst [vmem:[#allocation2 + $0x8] sm:$0xff] %v751
  // Predicated region
  $region22: #{_lambda_.16} parent=0 // pred_check
    %p754 = pneg %p18
  $region23: #{_lambda_.16} parent=0 // pred_check_branch
    %756 = sbr.rel (%p754) target = $region25
  $region24: #{_lambda_.16} parent=0 // pred_region
    %v757 = vld [vmem:[#allocation2] sm:$0xff]
    %v758 = vld [vmem:[#allocation2 + $0x8] sm:$0xff]
    %v759 = vld [vmem:[%s2] sm:$0x1]
    %v761 = vlaneseq
    %v762 = vshrl.u32 %v761, 7
    %v763 = vsub.s32 0, %v762
    %v764 = vrot.slane %v759, %v763
    %v766 = vmul.f32 %v757, %v764
    %v767 = vmul.f32 %v758, %v764
    %v768 = vld [vmem:[%s3] sm:$0x1]
    %v770 = vlaneseq
    %v771 = vshrl.u32 %v770, 7
    %v772 = vsub.s32 0, %v771
    %v773 = vrot.slane %v768, %v772
    %v775 = vadd.f32 %v766, %v773
    %v776 = vadd.f32 %v767, %v773
    %vm777 = vcmp.gt.f32.partialorder %v775, 0.0
    %vm778 = vcmp.gt.f32.partialorder %v776, 0.0
    %v779 = vmul.f32 %v775, 0.2
    %v780 = vmul.f32 %v776, 0.2
    %v781 = vsel %vm777, %v775, %v779
    %v782 = vsel %vm778, %v776, %v780
    %783 = vst [vmem:[%s4] sm:$0xff] %v781
    %784 = vst [vmem:[%s4 + $0x8] sm:$0xff] %v782
  $region25: #{_lambda_.16} parent=0 // pred_fallthru
    _
  // Predicated region
  $region26: #{_lambda_.16} parent=0 // pred_check
    _
  $region27: #{_lambda_.16} parent=0 // pred_check_branch
    %786 = sbr.rel (0) target = $region29
  $region28: #{_lambda_.16} parent=0 // pred_region
    _
  $region29: #{_lambda_.16} parent=0 // pred_fallthru
    _
  // Predicated region
  $region30: #{_lambda_.16} parent=0 // pred_check
    _
  $region31: #{_lambda_.16} parent=0 // pred_check_branch
    %788 = sbr.rel (0) target = $region33
  $region32: #{_lambda_.16} parent=0 // pred_region
    _
  $region33: #{_lambda_.16} parent=0 // pred_fallthru
    _

// kernel: _lambda_.18
$region0: #{_lambda_.18}
  #allocation0 [shape = 'u32[]', space=smem, size = 0x4, offset = 0x4, fixed_abs, tag = 'smem constant byte address 0x4 - core index']
  #allocation1 [shape = 'u32[144,128]{1,0:T(1,128)}', space=vmem, size = 0x12000, scoped, tag = 'internal scratch']
  #allocation2 [shape = 'f32[16,256]{1,0:T(8,128)}', space=vmem, size = 0x4000, scoped, tag = 'scratch operand']
  %s0 = inlined_call_operand.vmem [shape: bf16[16,256], index: 0, kind: input, shape index: {}]
  %s1 = inlined_call_operand.vmem [shape: bf16[256,256], index: 1, kind: input, shape index: {}]
  %s2 = inlined_call_operand.vmem [shape: f32[1,256], index: 2, kind: input, shape index: {}]
  %s3 = inlined_call_operand.vmem [shape: f32[1,256], index: 3, kind: input, shape index: {}]
  %s4 = inlined_call_operand.vmem [shape: f32[16,256], index: 4, kind: output, shape index: {}]
  %s5 = sld [smem:[#allocation0]]
  $region34: #{_lambda_.18} parent=0
    _
  %s7 = ssub.s32 1, %s5
  %s8 = scalar_select 0, %s7, %s5
  // Predicated region
  $region2: #{_lambda_.18} parent=0 // pred_check
    _
  $region3: #{_lambda_.18} parent=0 // pred_check_branch
    %10 = sbr.rel (0) target = $region5
  $region4: #{_lambda_.18} parent=0 // pred_region
    _
  $region5: #{_lambda_.18} parent=0 // pred_fallthru
    _
  // Predicated region
  $region6: #{_lambda_.18} parent=0 // pred_check
    _
  $region7: #{_lambda_.18} parent=0 // pred_check_branch
    %12 = sbr.rel (0) target = $region9
  $region8: #{_lambda_.18} parent=0 // pred_region
    _
  $region9: #{_lambda_.18} parent=0 // pred_fallthru
    _
  // Predicated region
  $region10: #{_lambda_.18} parent=0 // pred_check
    _
  $region11: #{_lambda_.18} parent=0 // pred_check_branch
    %14 = sbr.rel (0) target = $region13
  $region12: #{_lambda_.18} parent=0 // pred_region
    _
  $region13: #{_lambda_.18} parent=0 // pred_fallthru
    _
  // Predicated region
  $region14: #{_lambda_.18} parent=0 // pred_check
    _
  $region15: #{_lambda_.18} parent=0 // pred_check_branch
    %16 = sbr.rel (0) target = $region17
  $region16: #{_lambda_.18} parent=0 // pred_region
    _
  $region17: #{_lambda_.18} parent=0 // pred_fallthru
    _
  %p17 = scmp.eq.s32.totalorder 0, 0
  // Predicated region
  $region18: #{_lambda_.18} parent=0 // pred_check
    %p18 = pneg %p17
  $region19: #{_lambda_.18} parent=0 // pred_check_branch
    %20 = sbr.rel (%p18) target = $region21
  $region20: #{_lambda_.18} parent=0 // pred_region
    %21 = vst [vmem:[#allocation2] sm:$0xff] 0.0
    %22 = vst [vmem:[#allocation2 + $0x8] sm:$0xff] 0.0
    %23 = vst [vmem:[#allocation2 + $0x10] sm:$0xff] 0.0
    %24 = vst [vmem:[#allocation2 + $0x18] sm:$0xff] 0.0
  $region21: #{_lambda_.18} parent=0 // pred_fallthru
    _
  %v25 = vld [vmem:[#allocation2] sm:$0xff]
  %v26 = vld [vmem:[#allocation2 + $0x8] sm:$0xff]
  %v27 = vld [vmem:[#allocation2 + $0x10] sm:$0xff]
  %v28 = vld [vmem:[#allocation2 + $0x18] sm:$0xff]
  %v29 = vld [vmem:[%s0] sm:$0xff]
  %v30 = vld [vmem:[%s0 + $0x8] sm:$0xff]
  %v31 = vld [vmem:[%s1] sm:$0xff]
  %v32 = vld [vmem:[%s1 + $0x8] sm:$0xff]
  %v33 = vld [vmem:[%s1 + $0x10] sm:$0xff]
  %v34 = vld [vmem:[%s1 + $0x18] sm:$0xff]
  %v35 = vld [vmem:[%s1 + $0x20] sm:$0xff]
  %v36 = vld [vmem:[%s1 + $0x28] sm:$0xff]
  %v37 = vld [vmem:[%s1 + $0x30] sm:$0xff]
  %v38 = vld [vmem:[%s1 + $0x38] sm:$0xff]
  %v39 = vld [vmem:[%s1 + $0x40] sm:$0xff]
  %v40 = vld [vmem:[%s1 + $0x48] sm:$0xff]
  %v41 = vld [vmem:[%s1 + $0x50] sm:$0xff]
  %v42 = vld [vmem:[%s1 + $0x58] sm:$0xff]
  %v43 = vld [vmem:[%s1 + $0x60] sm:$0xff]
  %v44 = vld [vmem:[%s1 + $0x68] sm:$0xff]
  %v45 = vld [vmem:[%s1 + $0x70] sm:$0xff]
  %v46 = vld [vmem:[%s1 + $0x78] sm:$0xff]
  %v47 = vld [vmem:[%s1 + $0x80] sm:$0xff]
  %v48 = vld [vmem:[%s1 + $0x88] sm:$0xff]
  %v49 = vld [vmem:[%s1 + $0x90] sm:$0xff]
  %v50 = vld [vmem:[%s1 + $0x98] sm:$0xff]
  %v51 = vld [vmem:[%s1 + $0xa0] sm:$0xff]
  %v52 = vld [vmem:[%s1 + $0xa8] sm:$0xff]
  %v53 = vld [vmem:[%s1 + $0xb0] sm:$0xff]
  %v54 = vld [vmem:[%s1 + $0xb8] sm:$0xff]
  %v55 = vld [vmem:[%s1 + $0xc0] sm:$0xff]
  %v56 = vld [vmem:[%s1 + $0xc8] sm:$0xff]
  %v57 = vld [vmem:[%s1 + $0xd0] sm:$0xff]
  %v58 = vld [vmem:[%s1 + $0xd8] sm:$0xff]
  %v59 = vld [vmem:[%s1 + $0xe0] sm:$0xff]
  %v60 = vld [vmem:[%s1 + $0xe8] sm:$0xff]
  %v61 = vld [vmem:[%s1 + $0xf0] sm:$0xff]
  %v62 = vld [vmem:[%s1 + $0xf8] sm:$0xff]
  %v65 = vunpack.c.l.b16 %v29
  %v66 = vunpack.c.h.b16 %v29
  %v67 = vunpack.c.l.b16 %v30
  %v68 = vunpack.c.h.b16 %v30
  %v69 = vpack.c.b16 %v67, %v65
  %v70 = vpack.c.b16 %v68, %v66
  %v105 = vunpack.c.l.b16 %v31
  %v106 = vunpack.c.h.b16 %v31
  %v107 = vunpack.c.l.b16 %v32
  %v108 = vunpack.c.h.b16 %v32
  %v109 = vunpack.c.l.b16 %v33
  %v110 = vunpack.c.h.b16 %v33
  %v111 = vunpack.c.l.b16 %v34
  %v112 = vunpack.c.h.b16 %v34
  %v113 = vunpack.c.l.b16 %v35
  %v114 = vunpack.c.h.b16 %v35
  %v115 = vunpack.c.l.b16 %v36
  %v116 = vunpack.c.h.b16 %v36
  %v117 = vunpack.c.l.b16 %v37
  %v118 = vunpack.c.h.b16 %v37
  %v119 = vunpack.c.l.b16 %v38
  %v120 = vunpack.c.h.b16 %v38
  %v121 = vunpack.c.l.b16 %v39
  %v122 = vunpack.c.h.b16 %v39
  %v123 = vunpack.c.l.b16 %v40
  %v124 = vunpack.c.h.b16 %v40
  %v125 = vunpack.c.l.b16 %v41
  %v126 = vunpack.c.h.b16 %v41
  %v127 = vunpack.c.l.b16 %v42
  %v128 = vunpack.c.h.b16 %v42
  %v129 = vunpack.c.l.b16 %v43
  %v130 = vunpack.c.h.b16 %v43
  %v131 = vunpack.c.l.b16 %v44
  %v132 = vunpack.c.h.b16 %v44
  %v133 = vunpack.c.l.b16 %v45
  %v134 = vunpack.c.h.b16 %v45
  %v135 = vunpack.c.l.b16 %v46
  %v136 = vunpack.c.h.b16 %v46
  %v137 = vunpack.c.l.b16 %v47
  %v138 = vunpack.c.h.b16 %v47
  %v139 = vunpack.c.l.b16 %v48
  %v140 = vunpack.c.h.b16 %v48
  %v141 = vunpack.c.l.b16 %v49
  %v142 = vunpack.c.h.b16 %v49
  %v143 = vunpack.c.l.b16 %v50
  %v144 = vunpack.c.h.b16 %v50
  %v145 = vunpack.c.l.b16 %v51
  %v146 = vunpack.c.h.b16 %v51
  %v147 = vunpack.c.l.b16 %v52
  %v148 = vunpack.c.h.b16 %v52
  %v149 = vunpack.c.l.b16 %v53
  %v150 = vunpack.c.h.b16 %v53
  %v151 = vunpack.c.l.b16 %v54
  %v152 = vunpack.c.h.b16 %v54
  %v153 = vunpack.c.l.b16 %v55
  %v154 = vunpack.c.h.b16 %v55
  %v155 = vunpack.c.l.b16 %v56
  %v156 = vunpack.c.h.b16 %v56
  %v157 = vunpack.c.l.b16 %v57
  %v158 = vunpack.c.h.b16 %v57
  %v159 = vunpack.c.l.b16 %v58
  %v160 = vunpack.c.h.b16 %v58
  %v161 = vunpack.c.l.b16 %v59
  %v162 = vunpack.c.h.b16 %v59
  %v163 = vunpack.c.l.b16 %v60
  %v164 = vunpack.c.h.b16 %v60
  %v165 = vunpack.c.l.b16 %v61
  %v166 = vunpack.c.h.b16 %v61
  %v167 = vunpack.c.l.b16 %v62
  %v168 = vunpack.c.h.b16 %v62
  %v169 = vpack.c.b16 %v107, %v105
  %v170 = vpack.c.b16 %v108, %v106
  %v171 = vpack.c.b16 %v111, %v109
  %v172 = vpack.c.b16 %v112, %v110
  %v173 = vpack.c.b16 %v115, %v113
  %v174 = vpack.c.b16 %v116, %v114
  %v175 = vpack.c.b16 %v119, %v117
  %v176 = vpack.c.b16 %v120, %v118
  %v177 = vpack.c.b16 %v123, %v121
  %v178 = vpack.c.b16 %v124, %v122
  %v179 = vpack.c.b16 %v127, %v125
  %v180 = vpack.c.b16 %v128, %v126
  %v181 = vpack.c.b16 %v131, %v129
  %v182 = vpack.c.b16 %v132, %v130
  %v183 = vpack.c.b16 %v135, %v133
  %v184 = vpack.c.b16 %v136, %v134
  %v185 = vpack.c.b16 %v139, %v137
  %v186 = vpack.c.b16 %v140, %v138
  %v187 = vpack.c.b16 %v143, %v141
  %v188 = vpack.c.b16 %v144, %v142
  %v189 = vpack.c.b16 %v147, %v145
  %v190 = vpack.c.b16 %v148, %v146
  %v191 = vpack.c.b16 %v151, %v149
  %v192 = vpack.c.b16 %v152, %v150
  %v193 = vpack.c.b16 %v155, %v153
  %v194 = vpack.c.b16 %v156, %v154
  %v195 = vpack.c.b16 %v159, %v157
  %v196 = vpack.c.b16 %v160, %v158
  %v197 = vpack.c.b16 %v163, %v161
  %v198 = vpack.c.b16 %v164, %v162
  %v199 = vpack.c.b16 %v167, %v165
  %v200 = vpack.c.b16 %v168, %v166
  %233 = vmatprep.subr.bf16.mxu0 %v184
  %234 = vmatpush1.bf16.msra.mxu0 %v183
  %235 = vmatprep.subr.bf16.mxu0 %v182
  %236 = vmatpush1.bf16.msra.mxu0 %v181
  %237 = vmatprep.subr.bf16.mxu0 %v180
  %238 = vmatpush1.bf16.msra.mxu0 %v179
  %239 = vmatprep.subr.bf16.mxu0 %v178
  %240 = vmatpush1.bf16.msra.mxu0 %v177
  %241 = vmatprep.subr.bf16.mxu0 %v176
  %242 = vmatpush1.bf16.msra.mxu0 %v175
  %243 = vmatprep.subr.bf16.mxu0 %v174
  %244 = vmatpush1.bf16.msra.mxu0 %v173
  %245 = vmatprep.subr.bf16.mxu0 %v172
  %246 = vmatpush1.bf16.msra.mxu0 %v171
  %247 = vmatprep.subr.bf16.mxu0 %v170
  %248 = vmatpush1.bf16.msra.mxu0 %v169
  %249 = vmatprep.subr.bf16.mxu0 %v200
  %250 = vmatpush2.bf16.msra.mxu0 %v199
  %251 = vmatprep.subr.bf16.mxu0 %v198
  %252 = vmatpush2.bf16.msra.mxu0 %v197
  %253 = vmatprep.subr.bf16.mxu0 %v196
  %254 = vmatpush2.bf16.msra.mxu0 %v195
  %255 = vmatprep.subr.bf16.mxu0 %v194
  %256 = vmatpush2.bf16.msra.mxu0 %v193
  %257 = vmatprep.subr.bf16.mxu0 %v192
  %258 = vmatpush2.bf16.msra.mxu0 %v191
  %259 = vmatprep.subr.bf16.mxu0 %v190
  %260 = vmatpush2.bf16.msra.mxu0 %v189
  %261 = vmatprep.subr.bf16.mxu0 %v188
  %262 = vmatpush2.bf16.msra.mxu0 %v187
  %263 = vmatprep.subr.bf16.mxu0 %v186
  %264 = vmatpush2.bf16.msra.mxu0 %v185
  %265 = vmatprep.mubr.bf16.mxu0 %v70
  %266 = vmatmul.mubr.bf16.gmra.mxu0 %v69
  %v267 = vpop.f32.mrf.mxu0
  %v268 = vadd.f32 0.0, %v267
  %v269 = vpop.f32.mrf.mxu0
  %v270 = vadd.f32 0.0, %v269
  %v271 = vpop.f32.mrf.mxu0
  %v272 = vadd.f32 0.0, %v271
  %v273 = vpop.f32.mrf.mxu0
  %v274 = vadd.f32 0.0, %v273
  %275 = vdwg.mxu0
  %v276 = vadd.f32 %v25, %v268
  %v277 = vadd.f32 %v26, %v270
  %v278 = vadd.f32 %v27, %v272
  %v279 = vadd.f32 %v28, %v274
  %280 = vst [vmem:[#allocation2] sm:$0xff] %v276
  %281 = vst [vmem:[#allocation2 + $0x8] sm:$0xff] %v277
  %282 = vst [vmem:[#allocation2 + $0x10] sm:$0xff] %v278
  %283 = vst [vmem:[#allocation2 + $0x18] sm:$0xff] %v279
  // Predicated region
  $region22: #{_lambda_.18} parent=0 // pred_check
    %p284 = pneg %p17
  $region23: #{_lambda_.18} parent=0 // pred_check_branch
    %286 = sbr.rel (%p284) target = $region25
  $region24: #{_lambda_.18} parent=0 // pred_region
    %v287 = vld [vmem:[#allocation2] sm:$0xff]
    %v288 = vld [vmem:[#allocation2 + $0x8] sm:$0xff]
    %v289 = vld [vmem:[#allocation2 + $0x10] sm:$0xff]
    %v290 = vld [vmem:[#allocation2 + $0x18] sm:$0xff]
    %v291 = vld [vmem:[%s2] sm:$0x3]
    %v293 = vlaneseq
    %v294 = vshrl.u32 %v293, 7
    %v295 = vsub.s32 0, %v294
    %v296 = vrot.slane %v291, %v295
    %v297 = vlaneseq
    %v298 = vshrl.u32 %v297, 7
    %v299 = vsub.s32 1, %v298
    %v300 = vrot.slane %v291, %v299
    %v303 = vmul.f32 %v287, %v296
    %v304 = vmul.f32 %v288, %v300
    %v305 = vmul.f32 %v289, %v296
    %v306 = vmul.f32 %v290, %v300
    %v307 = vld [vmem:[%s3] sm:$0x3]
    %v309 = vlaneseq
    %v310 = vshrl.u32 %v309, 7
    %v311 = vsub.s32 0, %v310
    %v312 = vrot.slane %v307, %v311
    %v313 = vlaneseq
    %v314 = vshrl.u32 %v313, 7
    %v315 = vsub.s32 1, %v314
    %v316 = vrot.slane %v307, %v315
    %v319 = vadd.f32 %v303, %v312
    %v320 = vadd.f32 %v304, %v316
    %v321 = vadd.f32 %v305, %v312
    %v322 = vadd.f32 %v306, %v316
    %323 = vst [vmem:[%s4] sm:$0xff] %v319
    %324 = vst [vmem:[%s4 + $0x8] sm:$0xff] %v320
    %325 = vst [vmem:[%s4 + $0x10] sm:$0xff] %v321
    %326 = vst [vmem:[%s4 + $0x18] sm:$0xff] %v322
  $region25: #{_lambda_.18} parent=0 // pred_fallthru
    _
  // Predicated region
  $region26: #{_lambda_.18} parent=0 // pred_check
    _
  $region27: #{_lambda_.18} parent=0 // pred_check_branch
    %328 = sbr.rel (0) target = $region29
  $region28: #{_lambda_.18} parent=0 // pred_region
    _
  $region29: #{_lambda_.18} parent=0 // pred_fallthru
    _
  // Predicated region
  $region30: #{_lambda_.18} parent=0 // pred_check
    _
  $region31: #{_lambda_.18} parent=0 // pred_check_branch
    %330 = sbr.rel (0) target = $region33
  $region32: #{_lambda_.18} parent=0 // pred_region
    _
  $region33: #{_lambda_.18} parent=0 // pred_fallthru
    _

// kernel: _lambda_.19
$region0: #{_lambda_.19}
  #allocation0 [shape = 'u32[]', space=smem, size = 0x4, offset = 0x4, fixed_abs, tag = 'smem constant byte address 0x4 - core index']
  #allocation1 [shape = 'u32[144,128]{1,0:T(1,128)}', space=vmem, size = 0x12000, scoped, tag = 'internal scratch']
  #allocation2 [shape = 'f32[32,256]{1,0:T(8,128)}', space=vmem, size = 0x8000, scoped, tag = 'scratch operand']
  %s0 = inlined_call_operand.vmem [shape: bf16[32,512], index: 0, kind: input, shape index: {}]
  %s1 = inlined_call_operand.vmem [shape: bf16[512,256], index: 1, kind: input, shape index: {}]
  %s2 = inlined_call_operand.vmem [shape: f32[1,256], index: 2, kind: input, shape index: {}]
  %s3 = inlined_call_operand.vmem [shape: f32[1,256], index: 3, kind: input, shape index: {}]
  %s4 = inlined_call_operand.vmem [shape: f32[32,256], index: 4, kind: output, shape index: {}]
  %s5 = sld [smem:[#allocation0]]
  $region34: #{_lambda_.19} parent=0
    _
  %s7 = ssub.s32 1, %s5
  %s8 = scalar_select 0, %s7, %s5
  // Predicated region
  $region2: #{_lambda_.19} parent=0 // pred_check
    _
  $region3: #{_lambda_.19} parent=0 // pred_check_branch
    %10 = sbr.rel (0) target = $region5
  $region4: #{_lambda_.19} parent=0 // pred_region
    _
  $region5: #{_lambda_.19} parent=0 // pred_fallthru
    _
  // Predicated region
  $region6: #{_lambda_.19} parent=0 // pred_check
    _
  $region7: #{_lambda_.19} parent=0 // pred_check_branch
    %12 = sbr.rel (0) target = $region9
  $region8: #{_lambda_.19} parent=0 // pred_region
    _
  $region9: #{_lambda_.19} parent=0 // pred_fallthru
    _
  // Predicated region
  $region10: #{_lambda_.19} parent=0 // pred_check
    _
  $region11: #{_lambda_.19} parent=0 // pred_check_branch
    %14 = sbr.rel (0) target = $region13
  $region12: #{_lambda_.19} parent=0 // pred_region
    _
  $region13: #{_lambda_.19} parent=0 // pred_fallthru
    _
  // Predicated region
  $region14: #{_lambda_.19} parent=0 // pred_check
    _
  $region15: #{_lambda_.19} parent=0 // pred_check_branch
    %16 = sbr.rel (0) target = $region17
  $region16: #{_lambda_.19} parent=0 // pred_region
    _
  $region17: #{_lambda_.19} parent=0 // pred_fallthru
    _
  %p17 = scmp.eq.s32.totalorder 0, 0
  // Predicated region
  $region18: #{_lambda_.19} parent=0 // pred_check
    %p18 = pneg %p17
  $region19: #{_lambda_.19} parent=0 // pred_check_branch
    %20 = sbr.rel (%p18) target = $region21
  $region20: #{_lambda_.19} parent=0 // pred_region
    %21 = vst [vmem:[#allocation2] sm:$0xff] 0.0
    %22 = vst [vmem:[#allocation2 + $0x8] sm:$0xff] 0.0
    %23 = vst [vmem:[#allocation2 + $0x10] sm:$0xff] 0.0
    %24 = vst [vmem:[#allocation2 + $0x18] sm:$0xff] 0.0
    %25 = vst [vmem:[#allocation2 + $0x20] sm:$0xff] 0.0
    %26 = vst [vmem:[#allocation2 + $0x28] sm:$0xff] 0.0
    %27 = vst [vmem:[#allocation2 + $0x30] sm:$0xff] 0.0
    %28 = vst [vmem:[#allocation2 + $0x38] sm:$0xff] 0.0
  $region21: #{_lambda_.19} parent=0 // pred_fallthru
    _
  %v29 = vld [vmem:[#allocation2] sm:$0xff]
  %v30 = vld [vmem:[#allocation2 + $0x8] sm:$0xff]
  %v31 = vld [vmem:[#allocation2 + $0x10] sm:$0xff]
  %v32 = vld [vmem:[#allocation2 + $0x18] sm:$0xff]
  %v33 = vld [vmem:[#allocation2 + $0x20] sm:$0xff]
  %v34 = vld [vmem:[#allocation2 + $0x28] sm:$0xff]
  %v35 = vld [vmem:[#allocation2 + $0x30] sm:$0xff]
  %v36 = vld [vmem:[#allocation2 + $0x38] sm:$0xff]
  %v37 = vld [vmem:[%s0] sm:$0xff]
  %v38 = vld [vmem:[%s0 + $0x8] sm:$0xff]
  %v39 = vld [vmem:[%s0 + $0x10] sm:$0xff]
  %v40 = vld [vmem:[%s0 + $0x18] sm:$0xff]
  %v41 = vld [vmem:[%s0 + $0x20] sm:$0xff]
  %v42 = vld [vmem:[%s0 + $0x28] sm:$0xff]
  %v43 = vld [vmem:[%s0 + $0x30] sm:$0xff]
  %v44 = vld [vmem:[%s0 + $0x38] sm:$0xff]
  %v45 = vld [vmem:[%s1] sm:$0xff]
  %v46 = vld [vmem:[%s1 + $0x8] sm:$0xff]
  %v47 = vld [vmem:[%s1 + $0x10] sm:$0xff]
  %v48 = vld [vmem:[%s1 + $0x18] sm:$0xff]
  %v49 = vld [vmem:[%s1 + $0x20] sm:$0xff]
  %v50 = vld [vmem:[%s1 + $0x28] sm:$0xff]
  %v51 = vld [vmem:[%s1 + $0x30] sm:$0xff]
  %v52 = vld [vmem:[%s1 + $0x38] sm:$0xff]
  %v53 = vld [vmem:[%s1 + $0x40] sm:$0xff]
  %v54 = vld [vmem:[%s1 + $0x48] sm:$0xff]
  %v55 = vld [vmem:[%s1 + $0x50] sm:$0xff]
  %v56 = vld [vmem:[%s1 + $0x58] sm:$0xff]
  %v57 = vld [vmem:[%s1 + $0x60] sm:$0xff]
  %v58 = vld [vmem:[%s1 + $0x68] sm:$0xff]
  %v59 = vld [vmem:[%s1 + $0x70] sm:$0xff]
  %v60 = vld [vmem:[%s1 + $0x78] sm:$0xff]
  %v61 = vld [vmem:[%s1 + $0x80] sm:$0xff]
  %v62 = vld [vmem:[%s1 + $0x88] sm:$0xff]
  %v63 = vld [vmem:[%s1 + $0x90] sm:$0xff]
  %v64 = vld [vmem:[%s1 + $0x98] sm:$0xff]
  %v65 = vld [vmem:[%s1 + $0xa0] sm:$0xff]
  %v66 = vld [vmem:[%s1 + $0xa8] sm:$0xff]
  %v67 = vld [vmem:[%s1 + $0xb0] sm:$0xff]
  %v68 = vld [vmem:[%s1 + $0xb8] sm:$0xff]
  %v69 = vld [vmem:[%s1 + $0xc0] sm:$0xff]
  %v70 = vld [vmem:[%s1 + $0xc8] sm:$0xff]
  %v71 = vld [vmem:[%s1 + $0xd0] sm:$0xff]
  %v72 = vld [vmem:[%s1 + $0xd8] sm:$0xff]
  %v73 = vld [vmem:[%s1 + $0xe0] sm:$0xff]
  %v74 = vld [vmem:[%s1 + $0xe8] sm:$0xff]
  %v75 = vld [vmem:[%s1 + $0xf0] sm:$0xff]
  %v76 = vld [vmem:[%s1 + $0xf8] sm:$0xff]
  %v77 = vld [vmem:[%s1 + $0x100] sm:$0xff]
  %v78 = vld [vmem:[%s1 + $0x108] sm:$0xff]
  %v79 = vld [vmem:[%s1 + $0x110] sm:$0xff]
  %v80 = vld [vmem:[%s1 + $0x118] sm:$0xff]
  %v81 = vld [vmem:[%s1 + $0x120] sm:$0xff]
  %v82 = vld [vmem:[%s1 + $0x128] sm:$0xff]
  %v83 = vld [vmem:[%s1 + $0x130] sm:$0xff]
  %v84 = vld [vmem:[%s1 + $0x138] sm:$0xff]
  %v85 = vld [vmem:[%s1 + $0x140] sm:$0xff]
  %v86 = vld [vmem:[%s1 + $0x148] sm:$0xff]
  %v87 = vld [vmem:[%s1 + $0x150] sm:$0xff]
  %v88 = vld [vmem:[%s1 + $0x158] sm:$0xff]
  %v89 = vld [vmem:[%s1 + $0x160] sm:$0xff]
  %v90 = vld [vmem:[%s1 + $0x168] sm:$0xff]
  %v91 = vld [vmem:[%s1 + $0x170] sm:$0xff]
  %v92 = vld [vmem:[%s1 + $0x178] sm:$0xff]
  %v93 = vld [vmem:[%s1 + $0x180] sm:$0xff]
  %v94 = vld [vmem:[%s1 + $0x188] sm:$0xff]
  %v95 = vld [vmem:[%s1 + $0x190] sm:$0xff]
  %v96 = vld [vmem:[%s1 + $0x198] sm:$0xff]
  %v97 = vld [vmem:[%s1 + $0x1a0] sm:$0xff]
  %v98 = vld [vmem:[%s1 + $0x1a8] sm:$0xff]
  %v99 = vld [vmem:[%s1 + $0x1b0] sm:$0xff]
  %v100 = vld [vmem:[%s1 + $0x1b8] sm:$0xff]
  %v101 = vld [vmem:[%s1 + $0x1c0] sm:$0xff]
  %v102 = vld [vmem:[%s1 + $0x1c8] sm:$0xff]
  %v103 = vld [vmem:[%s1 + $0x1d0] sm:$0xff]
  %v104 = vld [vmem:[%s1 + $0x1d8] sm:$0xff]
  %v105 = vld [vmem:[%s1 + $0x1e0] sm:$0xff]
  %v106 = vld [vmem:[%s1 + $0x1e8] sm:$0xff]
  %v107 = vld [vmem:[%s1 + $0x1f0] sm:$0xff]
  %v108 = vld [vmem:[%s1 + $0x1f8] sm:$0xff]
  %v117 = vunpack.c.l.b16 %v37
  %v118 = vunpack.c.h.b16 %v37
  %v119 = vunpack.c.l.b16 %v38
  %v120 = vunpack.c.h.b16 %v38
  %v121 = vunpack.c.l.b16 %v39
  %v122 = vunpack.c.h.b16 %v39
  %v123 = vunpack.c.l.b16 %v40
  %v124 = vunpack.c.h.b16 %v40
  %v125 = vunpack.c.l.b16 %v41
  %v126 = vunpack.c.h.b16 %v41
  %v127 = vunpack.c.l.b16 %v42
  %v128 = vunpack.c.h.b16 %v42
  %v129 = vunpack.c.l.b16 %v43
  %v130 = vunpack.c.h.b16 %v43
  %v131 = vunpack.c.l.b16 %v44
  %v132 = vunpack.c.h.b16 %v44
  %v133 = vpack.c.b16 %v121, %v117
  %v134 = vpack.c.b16 %v122, %v118
  %v135 = vpack.c.b16 %v123, %v119
  %v136 = vpack.c.b16 %v124, %v120
  %v137 = vpack.c.b16 %v129, %v125
  %v138 = vpack.c.b16 %v130, %v126
  %v139 = vpack.c.b16 %v131, %v127
  %v140 = vpack.c.b16 %v132, %v128
  %v213 = vunpack.c.l.b16 %v45
  %v214 = vunpack.c.h.b16 %v45
  %v215 = vunpack.c.l.b16 %v46
  %v216 = vunpack.c.h.b16 %v46
  %v217 = vunpack.c.l.b16 %v47
  %v218 = vunpack.c.h.b16 %v47
  %v219 = vunpack.c.l.b16 %v48
  %v220 = vunpack.c.h.b16 %v48
  %v221 = vunpack.c.l.b16 %v49
  %v222 = vunpack.c.h.b16 %v49
  %v223 = vunpack.c.l.b16 %v50
  %v224 = vunpack.c.h.b16 %v50
  %v225 = vunpack.c.l.b16 %v51
  %v226 = vunpack.c.h.b16 %v51
  %v227 = vunpack.c.l.b16 %v52
  %v228 = vunpack.c.h.b16 %v52
  %v229 = vunpack.c.l.b16 %v53
  %v230 = vunpack.c.h.b16 %v53
  %v231 = vunpack.c.l.b16 %v54
  %v232 = vunpack.c.h.b16 %v54
  %v233 = vunpack.c.l.b16 %v55
  %v234 = vunpack.c.h.b16 %v55
  %v235 = vunpack.c.l.b16 %v56
  %v236 = vunpack.c.h.b16 %v56
  %v237 = vunpack.c.l.b16 %v57
  %v238 = vunpack.c.h.b16 %v57
  %v239 = vunpack.c.l.b16 %v58
  %v240 = vunpack.c.h.b16 %v58
  %v241 = vunpack.c.l.b16 %v59
  %v242 = vunpack.c.h.b16 %v59
  %v243 = vunpack.c.l.b16 %v60
  %v244 = vunpack.c.h.b16 %v60
  %v245 = vunpack.c.l.b16 %v61
  %v246 = vunpack.c.h.b16 %v61
  %v247 = vunpack.c.l.b16 %v62
  %v248 = vunpack.c.h.b16 %v62
  %v249 = vunpack.c.l.b16 %v63
  %v250 = vunpack.c.h.b16 %v63
  %v251 = vunpack.c.l.b16 %v64
  %v252 = vunpack.c.h.b16 %v64
  %v253 = vunpack.c.l.b16 %v65
  %v254 = vunpack.c.h.b16 %v65
  %v255 = vunpack.c.l.b16 %v66
  %v256 = vunpack.c.h.b16 %v66
  %v257 = vunpack.c.l.b16 %v67
  %v258 = vunpack.c.h.b16 %v67
  %v259 = vunpack.c.l.b16 %v68
  %v260 = vunpack.c.h.b16 %v68
  %v261 = vunpack.c.l.b16 %v69
  %v262 = vunpack.c.h.b16 %v69
  %v263 = vunpack.c.l.b16 %v70
  %v264 = vunpack.c.h.b16 %v70
  %v265 = vunpack.c.l.b16 %v71
  %v266 = vunpack.c.h.b16 %v71
  %v267 = vunpack.c.l.b16 %v72
  %v268 = vunpack.c.h.b16 %v72
  %v269 = vunpack.c.l.b16 %v73
  %v270 = vunpack.c.h.b16 %v73
  %v271 = vunpack.c.l.b16 %v74
  %v272 = vunpack.c.h.b16 %v74
  %v273 = vunpack.c.l.b16 %v75
  %v274 = vunpack.c.h.b16 %v75
  %v275 = vunpack.c.l.b16 %v76
  %v276 = vunpack.c.h.b16 %v76
  %v277 = vunpack.c.l.b16 %v77
  %v278 = vunpack.c.h.b16 %v77
  %v279 = vunpack.c.l.b16 %v78
  %v280 = vunpack.c.h.b16 %v78
  %v281 = vunpack.c.l.b16 %v79
  %v282 = vunpack.c.h.b16 %v79
  %v283 = vunpack.c.l.b16 %v80
  %v284 = vunpack.c.h.b16 %v80
  %v285 = vunpack.c.l.b16 %v81
  %v286 = vunpack.c.h.b16 %v81
  %v287 = vunpack.c.l.b16 %v82
  %v288 = vunpack.c.h.b16 %v82
  %v289 = vunpack.c.l.b16 %v83
  %v290 = vunpack.c.h.b16 %v83
  %v291 = vunpack.c.l.b16 %v84
  %v292 = vunpack.c.h.b16 %v84
  %v293 = vunpack.c.l.b16 %v85
  %v294 = vunpack.c.h.b16 %v85
  %v295 = vunpack.c.l.b16 %v86
  %v296 = vunpack.c.h.b16 %v86
  %v297 = vunpack.c.l.b16 %v87
  %v298 = vunpack.c.h.b16 %v87
  %v299 = vunpack.c.l.b16 %v88
  %v300 = vunpack.c.h.b16 %v88
  %v301 = vunpack.c.l.b16 %v89
  %v302 = vunpack.c.h.b16 %v89
  %v303 = vunpack.c.l.b16 %v90
  %v304 = vunpack.c.h.b16 %v90
  %v305 = vunpack.c.l.b16 %v91
  %v306 = vunpack.c.h.b16 %v91
  %v307 = vunpack.c.l.b16 %v92
  %v308 = vunpack.c.h.b16 %v92
  %v309 = vunpack.c.l.b16 %v93
  %v310 = vunpack.c.h.b16 %v93
  %v311 = vunpack.c.l.b16 %v94
  %v312 = vunpack.c.h.b16 %v94
  %v313 = vunpack.c.l.b16 %v95
  %v314 = vunpack.c.h.b16 %v95
  %v315 = vunpack.c.l.b16 %v96
  %v316 = vunpack.c.h.b16 %v96
  %v317 = vunpack.c.l.b16 %v97
  %v318 = vunpack.c.h.b16 %v97
  %v319 = vunpack.c.l.b16 %v98
  %v320 = vunpack.c.h.b16 %v98
  %v321 = vunpack.c.l.b16 %v99
  %v322 = vunpack.c.h.b16 %v99
  %v323 = vunpack.c.l.b16 %v100
  %v324 = vunpack.c.h.b16 %v100
  %v325 = vunpack.c.l.b16 %v101
  %v326 = vunpack.c.h.b16 %v101
  %v327 = vunpack.c.l.b16 %v102
  %v328 = vunpack.c.h.b16 %v102
  %v329 = vunpack.c.l.b16 %v103
  %v330 = vunpack.c.h.b16 %v103
  %v331 = vunpack.c.l.b16 %v104
  %v332 = vunpack.c.h.b16 %v104
  %v333 = vunpack.c.l.b16 %v105
  %v334 = vunpack.c.h.b16 %v105
  %v335 = vunpack.c.l.b16 %v106
  %v336 = vunpack.c.h.b16 %v106
  %v337 = vunpack.c.l.b16 %v107
  %v338 = vunpack.c.h.b16 %v107
  %v339 = vunpack.c.l.b16 %v108
  %v340 = vunpack.c.h.b16 %v108
  %v341 = vpack.c.b16 %v215, %v213
  %v342 = vpack.c.b16 %v216, %v214
  %v343 = vpack.c.b16 %v219, %v217
  %v344 = vpack.c.b16 %v220, %v218
  %v345 = vpack.c.b16 %v223, %v221
  %v346 = vpack.c.b16 %v224, %v222
  %v347 = vpack.c.b16 %v227, %v225
  %v348 = vpack.c.b16 %v228, %v226
  %v349 = vpack.c.b16 %v231, %v229
  %v350 = vpack.c.b16 %v232, %v230
  %v351 = vpack.c.b16 %v235, %v233
  %v352 = vpack.c.b16 %v236, %v234
  %v353 = vpack.c.b16 %v239, %v237
  %v354 = vpack.c.b16 %v240, %v238
  %v355 = vpack.c.b16 %v243, %v241
  %v356 = vpack.c.b16 %v244, %v242
  %v357 = vpack.c.b16 %v247, %v245
  %v358 = vpack.c.b16 %v248, %v246
  %v359 = vpack.c.b16 %v251, %v249
  %v360 = vpack.c.b16 %v252, %v250
  %v361 = vpack.c.b16 %v255, %v253
  %v362 = vpack.c.b16 %v256, %v254
  %v363 = vpack.c.b16 %v259, %v257
  %v364 = vpack.c.b16 %v260, %v258
  %v365 = vpack.c.b16 %v263, %v261
  %v366 = vpack.c.b16 %v264, %v262
  %v367 = vpack.c.b16 %v267, %v265
  %v368 = vpack.c.b16 %v268, %v266
  %v369 = vpack.c.b16 %v271, %v269
  %v370 = vpack.c.b16 %v272, %v270
  %v371 = vpack.c.b16 %v275, %v273
  %v372 = vpack.c.b16 %v276, %v274
  %v373 = vpack.c.b16 %v279, %v277
  %v374 = vpack.c.b16 %v280, %v278
  %v375 = vpack.c.b16 %v283, %v281
  %v376 = vpack.c.b16 %v284, %v282
  %v377 = vpack.c.b16 %v287, %v285
  %v378 = vpack.c.b16 %v288, %v286
  %v379 = vpack.c.b16 %v291, %v289
  %v380 = vpack.c.b16 %v292, %v290
  %v381 = vpack.c.b16 %v295, %v293
  %v382 = vpack.c.b16 %v296, %v294
  %v383 = vpack.c.b16 %v299, %v297
  %v384 = vpack.c.b16 %v300, %v298
  %v385 = vpack.c.b16 %v303, %v301
  %v386 = vpack.c.b16 %v304, %v302
  %v387 = vpack.c.b16 %v307, %v305
  %v388 = vpack.c.b16 %v308, %v306
  %v389 = vpack.c.b16 %v311, %v309
  %v390 = vpack.c.b16 %v312, %v310
  %v391 = vpack.c.b16 %v315, %v313
  %v392 = vpack.c.b16 %v316, %v314
  %v393 = vpack.c.b16 %v319, %v317
  %v394 = vpack.c.b16 %v320, %v318
  %v395 = vpack.c.b16 %v323, %v321
  %v396 = vpack.c.b16 %v324, %v322
  %v397 = vpack.c.b16 %v327, %v325
  %v398 = vpack.c.b16 %v328, %v326
  %v399 = vpack.c.b16 %v331, %v329
  %v400 = vpack.c.b16 %v332, %v330
  %v401 = vpack.c.b16 %v335, %v333
  %v402 = vpack.c.b16 %v336, %v334
  %v403 = vpack.c.b16 %v339, %v337
  %v404 = vpack.c.b16 %v340, %v338
  %469 = vmatprep.subr.bf16.mxu0 %v356
  %470 = vmatpush1.bf16.msra.mxu0 %v355
  %471 = vmatprep.subr.bf16.mxu0 %v354
  %472 = vmatpush1.bf16.msra.mxu0 %v353
  %473 = vmatprep.subr.bf16.mxu0 %v352
  %474 = vmatpush1.bf16.msra.mxu0 %v351
  %475 = vmatprep.subr.bf16.mxu0 %v350
  %476 = vmatpush1.bf16.msra.mxu0 %v349
  %477 = vmatprep.subr.bf16.mxu0 %v348
  %478 = vmatpush1.bf16.msra.mxu0 %v347
  %479 = vmatprep.subr.bf16.mxu0 %v346
  %480 = vmatpush1.bf16.msra.mxu0 %v345
  %481 = vmatprep.subr.bf16.mxu0 %v344
  %482 = vmatpush1.bf16.msra.mxu0 %v343
  %483 = vmatprep.subr.bf16.mxu0 %v342
  %484 = vmatpush1.bf16.msra.mxu0 %v341
  %485 = vmatprep.subr.bf16.mxu0 %v372
  %486 = vmatpush2.bf16.msra.mxu0 %v371
  %487 = vmatprep.subr.bf16.mxu0 %v370
  %488 = vmatpush2.bf16.msra.mxu0 %v369
  %489 = vmatprep.subr.bf16.mxu0 %v368
  %490 = vmatpush2.bf16.msra.mxu0 %v367
  %491 = vmatprep.subr.bf16.mxu0 %v366
  %492 = vmatpush2.bf16.msra.mxu0 %v365
  %493 = vmatprep.subr.bf16.mxu0 %v364
  %494 = vmatpush2.bf16.msra.mxu0 %v363
  %495 = vmatprep.subr.bf16.mxu0 %v362
  %496 = vmatpush2.bf16.msra.mxu0 %v361
  %497 = vmatprep.subr.bf16.mxu0 %v360
  %498 = vmatpush2.bf16.msra.mxu0 %v359
  %499 = vmatprep.subr.bf16.mxu0 %v358
  %500 = vmatpush2.bf16.msra.mxu0 %v357
  %501 = vmatprep.mubr.bf16.mxu0 %v134
  %502 = vmatmul.mubr.bf16.gmra.mxu0 %v133
  %v503 = vpop.f32.mrf.mxu0
  %v504 = vadd.f32 0.0, %v503
  %v505 = vpop.f32.mrf.mxu0
  %v506 = vadd.f32 0.0, %v505
  %v507 = vpop.f32.mrf.mxu0
  %v508 = vadd.f32 0.0, %v507
  %v509 = vpop.f32.mrf.mxu0
  %v510 = vadd.f32 0.0, %v509
  %511 = vmatprep.mubr.bf16.mxu0 %v138
  %512 = vmatmul.mubr.bf16.gmra.mxu0 %v137
  %v513 = vpop.f32.mrf.mxu0
  %v514 = vadd.f32 0.0, %v513
  %v515 = vpop.f32.mrf.mxu0
  %v516 = vadd.f32 0.0, %v515
  %v517 = vpop.f32.mrf.mxu0
  %v518 = vadd.f32 0.0, %v517
  %v519 = vpop.f32.mrf.mxu0
  %v520 = vadd.f32 0.0, %v519
  %521 = vdwg.mxu0
  %522 = vmatprep.subr.bf16.mxu0 %v388
  %523 = vmatpush1.bf16.msra.mxu0 %v387
  %524 = vmatprep.subr.bf16.mxu0 %v386
  %525 = vmatpush1.bf16.msra.mxu0 %v385
  %526 = vmatprep.subr.bf16.mxu0 %v384
  %527 = vmatpush1.bf16.msra.mxu0 %v383
  %528 = vmatprep.subr.bf16.mxu0 %v382
  %529 = vmatpush1.bf16.msra.mxu0 %v381
  %530 = vmatprep.subr.bf16.mxu0 %v380
  %531 = vmatpush1.bf16.msra.mxu0 %v379
  %532 = vmatprep.subr.bf16.mxu0 %v378
  %533 = vmatpush1.bf16.msra.mxu0 %v377
  %534 = vmatprep.subr.bf16.mxu0 %v376
  %535 = vmatpush1.bf16.msra.mxu0 %v375
  %536 = vmatprep.subr.bf16.mxu0 %v374
  %537 = vmatpush1.bf16.msra.mxu0 %v373
  %538 = vmatprep.subr.bf16.mxu0 %v404
  %539 = vmatpush2.bf16.msra.mxu0 %v403
  %540 = vmatprep.subr.bf16.mxu0 %v402
  %541 = vmatpush2.bf16.msra.mxu0 %v401
  %542 = vmatprep.subr.bf16.mxu0 %v400
  %543 = vmatpush2.bf16.msra.mxu0 %v399
  %544 = vmatprep.subr.bf16.mxu0 %v398
  %545 = vmatpush2.bf16.msra.mxu0 %v397
  %546 = vmatprep.subr.bf16.mxu0 %v396
  %547 = vmatpush2.bf16.msra.mxu0 %v395
  %548 = vmatprep.subr.bf16.mxu0 %v394
  %549 = vmatpush2.bf16.msra.mxu0 %v393
  %550 = vmatprep.subr.bf16.mxu0 %v392
  %551 = vmatpush2.bf16.msra.mxu0 %v391
  %552 = vmatprep.subr.bf16.mxu0 %v390
  %553 = vmatpush2.bf16.msra.mxu0 %v389
  %554 = vmatprep.mubr.bf16.mxu0 %v136
  %555 = vmatmul.mubr.bf16.gmra.mxu0 %v135
  %v556 = vpop.f32.mrf.mxu0
  %v557 = vadd.f32 %v504, %v556
  %v558 = vpop.f32.mrf.mxu0
  %v559 = vadd.f32 %v506, %v558
  %v560 = vpop.f32.mrf.mxu0
  %v561 = vadd.f32 %v508, %v560
  %v562 = vpop.f32.mrf.mxu0
  %v563 = vadd.f32 %v510, %v562
  %564 = vmatprep.mubr.bf16.mxu0 %v140
  %565 = vmatmul.mubr.bf16.gmra.mxu0 %v139
  %v566 = vpop.f32.mrf.mxu0
  %v567 = vadd.f32 %v514, %v566
  %v568 = vpop.f32.mrf.mxu0
  %v569 = vadd.f32 %v516, %v568
  %v570 = vpop.f32.mrf.mxu0
  %v571 = vadd.f32 %v518, %v570
  %v572 = vpop.f32.mrf.mxu0
  %v573 = vadd.f32 %v520, %v572
  %574 = vdwg.mxu0
  %v575 = vadd.f32 %v29, %v557
  %v576 = vadd.f32 %v30, %v559
  %v577 = vadd.f32 %v31, %v561
  %v578 = vadd.f32 %v32, %v563
  %v579 = vadd.f32 %v33, %v567
  %v580 = vadd.f32 %v34, %v569
  %v581 = vadd.f32 %v35, %v571
  %v582 = vadd.f32 %v36, %v573
  %583 = vst [vmem:[#allocation2] sm:$0xff] %v575
  %584 = vst [vmem:[#allocation2 + $0x8] sm:$0xff] %v576
  %585 = vst [vmem:[#allocation2 + $0x10] sm:$0xff] %v577
  %586 = vst [vmem:[#allocation2 + $0x18] sm:$0xff] %v578
  %587 = vst [vmem:[#allocation2 + $0x20] sm:$0xff] %v579
  %588 = vst [vmem:[#allocation2 + $0x28] sm:$0xff] %v580
  %589 = vst [vmem:[#allocation2 + $0x30] sm:$0xff] %v581
  %590 = vst [vmem:[#allocation2 + $0x38] sm:$0xff] %v582
  // Predicated region
  $region22: #{_lambda_.19} parent=0 // pred_check
    %p591 = pneg %p17
  $region23: #{_lambda_.19} parent=0 // pred_check_branch
    %593 = sbr.rel (%p591) target = $region25
  $region24: #{_lambda_.19} parent=0 // pred_region
    %v594 = vld [vmem:[#allocation2] sm:$0xff]
    %v595 = vld [vmem:[#allocation2 + $0x8] sm:$0xff]
    %v596 = vld [vmem:[#allocation2 + $0x10] sm:$0xff]
    %v597 = vld [vmem:[#allocation2 + $0x18] sm:$0xff]
    %v598 = vld [vmem:[#allocation2 + $0x20] sm:$0xff]
    %v599 = vld [vmem:[#allocation2 + $0x28] sm:$0xff]
    %v600 = vld [vmem:[#allocation2 + $0x30] sm:$0xff]
    %v601 = vld [vmem:[#allocation2 + $0x38] sm:$0xff]
    %v602 = vld [vmem:[%s2] sm:$0x3]
    %v604 = vlaneseq
    %v605 = vshrl.u32 %v604, 7
    %v606 = vsub.s32 0, %v605
    %v607 = vrot.slane %v602, %v606
    %v608 = vlaneseq
    %v609 = vshrl.u32 %v608, 7
    %v610 = vsub.s32 1, %v609
    %v611 = vrot.slane %v602, %v610
    %v614 = vmul.f32 %v594, %v607
    %v615 = vmul.f32 %v595, %v611
    %v616 = vmul.f32 %v596, %v607
    %v617 = vmul.f32 %v597, %v611
    %v618 = vmul.f32 %v598, %v607
    %v619 = vmul.f32 %v599, %v611
    %v620 = vmul.f32 %v600, %v607
    %v621 = vmul.f32 %v601, %v611
    %v622 = vld [vmem:[%s3] sm:$0x3]
    %v624 = vlaneseq
    %v625 = vshrl.u32 %v624, 7
    %v626 = vsub.s32 0, %v625
    %v627 = vrot.slane %v622, %v626
    %v628 = vlaneseq
    %v629 = vshrl.u32 %v628, 7
    %v630 = vsub.s32 1, %v629
    %v631 = vrot.slane %v622, %v630
    %v634 = vadd.f32 %v614, %v627
    %v635 = vadd.f32 %v615, %v631
    %v636 = vadd.f32 %v616, %v627
    %v637 = vadd.f32 %v617, %v631
    %v638 = vadd.f32 %v618, %v627
    %v639 = vadd.f32 %v619, %v631
    %v640 = vadd.f32 %v620, %v627
    %v641 = vadd.f32 %v621, %v631
    %642 = vst [vmem:[%s4] sm:$0xff] %v634
    %643 = vst [vmem:[%s4 + $0x8] sm:$0xff] %v635
    %644 = vst [vmem:[%s4 + $0x10] sm:$0xff] %v636
    %645 = vst [vmem:[%s4 + $0x18] sm:$0xff] %v637
    %646 = vst [vmem:[%s4 + $0x20] sm:$0xff] %v638
    %647 = vst [vmem:[%s4 + $0x28] sm:$0xff] %v639
    %648 = vst [vmem:[%s4 + $0x30] sm:$0xff] %v640
    %649 = vst [vmem:[%s4 + $0x38] sm:$0xff] %v641
  $region25: #{_lambda_.19} parent=0 // pred_fallthru
    _
  // Predicated region
  $region26: #{_lambda_.19} parent=0 // pred_check
    _
  $region27: #{_lambda_.19} parent=0 // pred_check_branch
    %651 = sbr.rel (0) target = $region29
  $region28: #{_lambda_.19} parent=0 // pred_region
    _
  $region29: #{_lambda_.19} parent=0 // pred_fallthru
    _
  // Predicated region
  $region30: #{_lambda_.19} parent=0 // pred_check
    _
  $region31: #{_lambda_.19} parent=0 // pred_check_branch
    %653 = sbr.rel (0) target = $region33
  $region32: #{_lambda_.19} parent=0 // pred_region
    _
  $region33: #{_lambda_.19} parent=0 // pred_fallthru
    _

// kernel: _lambda_.20
$region0: #{_lambda_.20}
  #allocation0 [shape = 'u32[]', space=smem, size = 0x4, offset = 0x4, fixed_abs, tag = 'smem constant byte address 0x4 - core index']
  #allocation1 [shape = 'u32[144,128]{1,0:T(1,128)}', space=vmem, size = 0x12000, scoped, tag = 'internal scratch']
  #allocation2 [shape = 'f32[64,128]{1,0:T(8,128)}', space=vmem, size = 0x8000, scoped, tag = 'scratch operand']
  %s0 = inlined_call_operand.vmem [shape: bf16[64,512], index: 0, kind: input, shape index: {}]
  %s1 = inlined_call_operand.vmem [shape: bf16[512,128], index: 1, kind: input, shape index: {}]
  %s2 = inlined_call_operand.vmem [shape: f32[1,128], index: 2, kind: input, shape index: {}]
  %s3 = inlined_call_operand.vmem [shape: f32[1,128], index: 3, kind: input, shape index: {}]
  %s4 = inlined_call_operand.vmem [shape: f32[64,128], index: 4, kind: output, shape index: {}]
  %s5 = sld [smem:[#allocation0]]
  $region34: #{_lambda_.20} parent=0
    _
  %s7 = ssub.s32 1, %s5
  %s8 = scalar_select 0, %s7, %s5
  // Predicated region
  $region2: #{_lambda_.20} parent=0 // pred_check
    _
  $region3: #{_lambda_.20} parent=0 // pred_check_branch
    %10 = sbr.rel (0) target = $region5
  $region4: #{_lambda_.20} parent=0 // pred_region
    _
  $region5: #{_lambda_.20} parent=0 // pred_fallthru
    _
  // Predicated region
  $region6: #{_lambda_.20} parent=0 // pred_check
    _
  $region7: #{_lambda_.20} parent=0 // pred_check_branch
    %12 = sbr.rel (0) target = $region9
  $region8: #{_lambda_.20} parent=0 // pred_region
    _
  $region9: #{_lambda_.20} parent=0 // pred_fallthru
    _
  // Predicated region
  $region10: #{_lambda_.20} parent=0 // pred_check
    _
  $region11: #{_lambda_.20} parent=0 // pred_check_branch
    %14 = sbr.rel (0) target = $region13
  $region12: #{_lambda_.20} parent=0 // pred_region
    _
  $region13: #{_lambda_.20} parent=0 // pred_fallthru
    _
  // Predicated region
  $region14: #{_lambda_.20} parent=0 // pred_check
    _
  $region15: #{_lambda_.20} parent=0 // pred_check_branch
    %16 = sbr.rel (0) target = $region17
  $region16: #{_lambda_.20} parent=0 // pred_region
    _
  $region17: #{_lambda_.20} parent=0 // pred_fallthru
    _
  %p18 = scmp.eq.s32.totalorder 0, 0
  // Predicated region
  $region18: #{_lambda_.20} parent=0 // pred_check
    %p19 = pneg %p18
  $region19: #{_lambda_.20} parent=0 // pred_check_branch
    %21 = sbr.rel (%p19) target = $region21
  $region20: #{_lambda_.20} parent=0 // pred_region
    %22 = vst [vmem:[#allocation2] sm:$0xff] 0.0
    %23 = vst [vmem:[#allocation2 + $0x8] sm:$0xff] 0.0
    %24 = vst [vmem:[#allocation2 + $0x10] sm:$0xff] 0.0
    %25 = vst [vmem:[#allocation2 + $0x18] sm:$0xff] 0.0
    %26 = vst [vmem:[#allocation2 + $0x20] sm:$0xff] 0.0
    %27 = vst [vmem:[#allocation2 + $0x28] sm:$0xff] 0.0
    %28 = vst [vmem:[#allocation2 + $0x30] sm:$0xff] 0.0
    %29 = vst [vmem:[#allocation2 + $0x38] sm:$0xff] 0.0
  $region21: #{_lambda_.20} parent=0 // pred_fallthru
    _
  %v30 = vld [vmem:[#allocation2] sm:$0xff]
  %v31 = vld [vmem:[#allocation2 + $0x8] sm:$0xff]
  %v32 = vld [vmem:[#allocation2 + $0x10] sm:$0xff]
  %v33 = vld [vmem:[#allocation2 + $0x18] sm:$0xff]
  %v34 = vld [vmem:[#allocation2 + $0x20] sm:$0xff]
  %v35 = vld [vmem:[#allocation2 + $0x28] sm:$0xff]
  %v36 = vld [vmem:[#allocation2 + $0x30] sm:$0xff]
  %v37 = vld [vmem:[#allocation2 + $0x38] sm:$0xff]
  %v38 = vld [vmem:[%s0] sm:$0xff]
  %v39 = vld [vmem:[%s0 + $0x8] sm:$0xff]
  %v40 = vld [vmem:[%s0 + $0x10] sm:$0xff]
  %v41 = vld [vmem:[%s0 + $0x18] sm:$0xff]
  %v42 = vld [vmem:[%s0 + $0x20] sm:$0xff]
  %v43 = vld [vmem:[%s0 + $0x28] sm:$0xff]
  %v44 = vld [vmem:[%s0 + $0x30] sm:$0xff]
  %v45 = vld [vmem:[%s0 + $0x38] sm:$0xff]
  %v46 = vld [vmem:[%s0 + $0x40] sm:$0xff]
  %v47 = vld [vmem:[%s0 + $0x48] sm:$0xff]
  %v48 = vld [vmem:[%s0 + $0x50] sm:$0xff]
  %v49 = vld [vmem:[%s0 + $0x58] sm:$0xff]
  %v50 = vld [vmem:[%s0 + $0x60] sm:$0xff]
  %v51 = vld [vmem:[%s0 + $0x68] sm:$0xff]
  %v52 = vld [vmem:[%s0 + $0x70] sm:$0xff]
  %v53 = vld [vmem:[%s0 + $0x78] sm:$0xff]
  %v54 = vld [vmem:[%s1] sm:$0xf]
  %v55 = vld [vmem:[%s1 + $0x4] sm:$0xf]
  %v56 = vld [vmem:[%s1 + $0x8] sm:$0xf]
  %v57 = vld [vmem:[%s1 + $0xc] sm:$0xf]
  %v58 = vld [vmem:[%s1 + $0x10] sm:$0xf]
  %v59 = vld [vmem:[%s1 + $0x14] sm:$0xf]
  %v60 = vld [vmem:[%s1 + $0x18] sm:$0xf]
  %v61 = vld [vmem:[%s1 + $0x1c] sm:$0xf]
  %v62 = vld [vmem:[%s1 + $0x20] sm:$0xf]
  %v63 = vld [vmem:[%s1 + $0x24] sm:$0xf]
  %v64 = vld [vmem:[%s1 + $0x28] sm:$0xf]
  %v65 = vld [vmem:[%s1 + $0x2c] sm:$0xf]
  %v66 = vld [vmem:[%s1 + $0x30] sm:$0xf]
  %v67 = vld [vmem:[%s1 + $0x34] sm:$0xf]
  %v68 = vld [vmem:[%s1 + $0x38] sm:$0xf]
  %v69 = vld [vmem:[%s1 + $0x3c] sm:$0xf]
  %v70 = vld [vmem:[%s1 + $0x40] sm:$0xf]
  %v71 = vld [vmem:[%s1 + $0x44] sm:$0xf]
  %v72 = vld [vmem:[%s1 + $0x48] sm:$0xf]
  %v73 = vld [vmem:[%s1 + $0x4c] sm:$0xf]
  %v74 = vld [vmem:[%s1 + $0x50] sm:$0xf]
  %v75 = vld [vmem:[%s1 + $0x54] sm:$0xf]
  %v76 = vld [vmem:[%s1 + $0x58] sm:$0xf]
  %v77 = vld [vmem:[%s1 + $0x5c] sm:$0xf]
  %v78 = vld [vmem:[%s1 + $0x60] sm:$0xf]
  %v79 = vld [vmem:[%s1 + $0x64] sm:$0xf]
  %v80 = vld [vmem:[%s1 + $0x68] sm:$0xf]
  %v81 = vld [vmem:[%s1 + $0x6c] sm:$0xf]
  %v82 = vld [vmem:[%s1 + $0x70] sm:$0xf]
  %v83 = vld [vmem:[%s1 + $0x74] sm:$0xf]
  %v84 = vld [vmem:[%s1 + $0x78] sm:$0xf]
  %v85 = vld [vmem:[%s1 + $0x7c] sm:$0xf]
  %v86 = vld [vmem:[%s1 + $0x80] sm:$0xf]
  %v87 = vld [vmem:[%s1 + $0x84] sm:$0xf]
  %v88 = vld [vmem:[%s1 + $0x88] sm:$0xf]
  %v89 = vld [vmem:[%s1 + $0x8c] sm:$0xf]
  %v90 = vld [vmem:[%s1 + $0x90] sm:$0xf]
  %v91 = vld [vmem:[%s1 + $0x94] sm:$0xf]
  %v92 = vld [vmem:[%s1 + $0x98] sm:$0xf]
  %v93 = vld [vmem:[%s1 + $0x9c] sm:$0xf]
  %v94 = vld [vmem:[%s1 + $0xa0] sm:$0xf]
  %v95 = vld [vmem:[%s1 + $0xa4] sm:$0xf]
  %v96 = vld [vmem:[%s1 + $0xa8] sm:$0xf]
  %v97 = vld [vmem:[%s1 + $0xac] sm:$0xf]
  %v98 = vld [vmem:[%s1 + $0xb0] sm:$0xf]
  %v99 = vld [vmem:[%s1 + $0xb4] sm:$0xf]
  %v100 = vld [vmem:[%s1 + $0xb8] sm:$0xf]
  %v101 = vld [vmem:[%s1 + $0xbc] sm:$0xf]
  %v102 = vld [vmem:[%s1 + $0xc0] sm:$0xf]
  %v103 = vld [vmem:[%s1 + $0xc4] sm:$0xf]
  %v104 = vld [vmem:[%s1 + $0xc8] sm:$0xf]
  %v105 = vld [vmem:[%s1 + $0xcc] sm:$0xf]
  %v106 = vld [vmem:[%s1 + $0xd0] sm:$0xf]
  %v107 = vld [vmem:[%s1 + $0xd4] sm:$0xf]
  %v108 = vld [vmem:[%s1 + $0xd8] sm:$0xf]
  %v109 = vld [vmem:[%s1 + $0xdc] sm:$0xf]
  %v110 = vld [vmem:[%s1 + $0xe0] sm:$0xf]
  %v111 = vld [vmem:[%s1 + $0xe4] sm:$0xf]
  %v112 = vld [vmem:[%s1 + $0xe8] sm:$0xf]
  %v113 = vld [vmem:[%s1 + $0xec] sm:$0xf]
  %v114 = vld [vmem:[%s1 + $0xf0] sm:$0xf]
  %v115 = vld [vmem:[%s1 + $0xf4] sm:$0xf]
  %v116 = vld [vmem:[%s1 + $0xf8] sm:$0xf]
  %v117 = vld [vmem:[%s1 + $0xfc] sm:$0xf]
  %v134 = vunpack.c.l.b16 %v38
  %v135 = vunpack.c.h.b16 %v38
  %v136 = vunpack.c.l.b16 %v39
  %v137 = vunpack.c.h.b16 %v39
  %v138 = vunpack.c.l.b16 %v40
  %v139 = vunpack.c.h.b16 %v40
  %v140 = vunpack.c.l.b16 %v41
  %v141 = vunpack.c.h.b16 %v41
  %v142 = vunpack.c.l.b16 %v42
  %v143 = vunpack.c.h.b16 %v42
  %v144 = vunpack.c.l.b16 %v43
  %v145 = vunpack.c.h.b16 %v43
  %v146 = vunpack.c.l.b16 %v44
  %v147 = vunpack.c.h.b16 %v44
  %v148 = vunpack.c.l.b16 %v45
  %v149 = vunpack.c.h.b16 %v45
  %v150 = vunpack.c.l.b16 %v46
  %v151 = vunpack.c.h.b16 %v46
  %v152 = vunpack.c.l.b16 %v47
  %v153 = vunpack.c.h.b16 %v47
  %v154 = vunpack.c.l.b16 %v48
  %v155 = vunpack.c.h.b16 %v48
  %v156 = vunpack.c.l.b16 %v49
  %v157 = vunpack.c.h.b16 %v49
  %v158 = vunpack.c.l.b16 %v50
  %v159 = vunpack.c.h.b16 %v50
  %v160 = vunpack.c.l.b16 %v51
  %v161 = vunpack.c.h.b16 %v51
  %v162 = vunpack.c.l.b16 %v52
  %v163 = vunpack.c.h.b16 %v52
  %v164 = vunpack.c.l.b16 %v53
  %v165 = vunpack.c.h.b16 %v53
  %v166 = vpack.c.b16 %v138, %v134
  %v167 = vpack.c.b16 %v139, %v135
  %v168 = vpack.c.b16 %v140, %v136
  %v169 = vpack.c.b16 %v141, %v137
  %v170 = vpack.c.b16 %v146, %v142
  %v171 = vpack.c.b16 %v147, %v143
  %v172 = vpack.c.b16 %v148, %v144
  %v173 = vpack.c.b16 %v149, %v145
  %v174 = vpack.c.b16 %v154, %v150
  %v175 = vpack.c.b16 %v155, %v151
  %v176 = vpack.c.b16 %v156, %v152
  %v177 = vpack.c.b16 %v157, %v153
  %v178 = vpack.c.b16 %v162, %v158
  %v179 = vpack.c.b16 %v163, %v159
  %v180 = vpack.c.b16 %v164, %v160
  %v181 = vpack.c.b16 %v165, %v161
  %v262 = vunpack.c.l.b16 %v54
  %v263 = vunpack.c.l.b16 %v55
  %v264 = vunpack.c.l.b16 %v56
  %v265 = vunpack.c.l.b16 %v57
  %v266 = vunpack.c.l.b16 %v58
  %v267 = vunpack.c.l.b16 %v59
  %v268 = vunpack.c.l.b16 %v60
  %v269 = vunpack.c.l.b16 %v61
  %v270 = vunpack.c.l.b16 %v62
  %v271 = vunpack.c.l.b16 %v63
  %v272 = vunpack.c.l.b16 %v64
  %v273 = vunpack.c.l.b16 %v65
  %v274 = vunpack.c.l.b16 %v66
  %v275 = vunpack.c.l.b16 %v67
  %v276 = vunpack.c.l.b16 %v68
  %v277 = vunpack.c.l.b16 %v69
  %v278 = vunpack.c.l.b16 %v70
  %v279 = vunpack.c.l.b16 %v71
  %v280 = vunpack.c.l.b16 %v72
  %v281 = vunpack.c.l.b16 %v73
  %v282 = vunpack.c.l.b16 %v74
  %v283 = vunpack.c.l.b16 %v75
  %v284 = vunpack.c.l.b16 %v76
  %v285 = vunpack.c.l.b16 %v77
  %v286 = vunpack.c.l.b16 %v78
  %v287 = vunpack.c.l.b16 %v79
  %v288 = vunpack.c.l.b16 %v80
  %v289 = vunpack.c.l.b16 %v81
  %v290 = vunpack.c.l.b16 %v82
  %v291 = vunpack.c.l.b16 %v83
  %v292 = vunpack.c.l.b16 %v84
  %v293 = vunpack.c.l.b16 %v85
  %v294 = vunpack.c.l.b16 %v86
  %v295 = vunpack.c.l.b16 %v87
  %v296 = vunpack.c.l.b16 %v88
  %v297 = vunpack.c.l.b16 %v89
  %v298 = vunpack.c.l.b16 %v90
  %v299 = vunpack.c.l.b16 %v91
  %v300 = vunpack.c.l.b16 %v92
  %v301 = vunpack.c.l.b16 %v93
  %v302 = vunpack.c.l.b16 %v94
  %v303 = vunpack.c.l.b16 %v95
  %v304 = vunpack.c.l.b16 %v96
  %v305 = vunpack.c.l.b16 %v97
  %v306 = vunpack.c.l.b16 %v98
  %v307 = vunpack.c.l.b16 %v99
  %v308 = vunpack.c.l.b16 %v100
  %v309 = vunpack.c.l.b16 %v101
  %v310 = vunpack.c.l.b16 %v102
  %v311 = vunpack.c.l.b16 %v103
  %v312 = vunpack.c.l.b16 %v104
  %v313 = vunpack.c.l.b16 %v105
  %v314 = vunpack.c.l.b16 %v106
  %v315 = vunpack.c.l.b16 %v107
  %v316 = vunpack.c.l.b16 %v108
  %v317 = vunpack.c.l.b16 %v109
  %v318 = vunpack.c.l.b16 %v110
  %v319 = vunpack.c.l.b16 %v111
  %v320 = vunpack.c.l.b16 %v112
  %v321 = vunpack.c.l.b16 %v113
  %v322 = vunpack.c.l.b16 %v114
  %v323 = vunpack.c.l.b16 %v115
  %v324 = vunpack.c.l.b16 %v116
  %v325 = vunpack.c.l.b16 %v117
  %v326 = vpack.c.b16 %v263, %v262
  %v327 = vpack.c.b16 %v265, %v264
  %v328 = vpack.c.b16 %v267, %v266
  %v329 = vpack.c.b16 %v269, %v268
  %v330 = vpack.c.b16 %v271, %v270
  %v331 = vpack.c.b16 %v273, %v272
  %v332 = vpack.c.b16 %v275, %v274
  %v333 = vpack.c.b16 %v277, %v276
  %v334 = vpack.c.b16 %v279, %v278
  %v335 = vpack.c.b16 %v281, %v280
  %v336 = vpack.c.b16 %v283, %v282
  %v337 = vpack.c.b16 %v285, %v284
  %v338 = vpack.c.b16 %v287, %v286
  %v339 = vpack.c.b16 %v289, %v288
  %v340 = vpack.c.b16 %v291, %v290
  %v341 = vpack.c.b16 %v293, %v292
  %v342 = vpack.c.b16 %v295, %v294
  %v343 = vpack.c.b16 %v297, %v296
  %v344 = vpack.c.b16 %v299, %v298
  %v345 = vpack.c.b16 %v301, %v300
  %v346 = vpack.c.b16 %v303, %v302
  %v347 = vpack.c.b16 %v305, %v304
  %v348 = vpack.c.b16 %v307, %v306
  %v349 = vpack.c.b16 %v309, %v308
  %v350 = vpack.c.b16 %v311, %v310
  %v351 = vpack.c.b16 %v313, %v312
  %v352 = vpack.c.b16 %v315, %v314
  %v353 = vpack.c.b16 %v317, %v316
  %v354 = vpack.c.b16 %v319, %v318
  %v355 = vpack.c.b16 %v321, %v320
  %v356 = vpack.c.b16 %v323, %v322
  %v357 = vpack.c.b16 %v325, %v324
  %390 = vmatprep.subr.bf16.mxu0 0
  %391 = vmatpush1.bf16.msra.mxu0 %v333
  %392 = vmatprep.subr.bf16.mxu0 0
  %393 = vmatpush1.bf16.msra.mxu0 %v332
  %394 = vmatprep.subr.bf16.mxu0 0
  %395 = vmatpush1.bf16.msra.mxu0 %v331
  %396 = vmatprep.subr.bf16.mxu0 0
  %397 = vmatpush1.bf16.msra.mxu0 %v330
  %398 = vmatprep.subr.bf16.mxu0 0
  %399 = vmatpush1.bf16.msra.mxu0 %v329
  %400 = vmatprep.subr.bf16.mxu0 0
  %401 = vmatpush1.bf16.msra.mxu0 %v328
  %402 = vmatprep.subr.bf16.mxu0 0
  %403 = vmatpush1.bf16.msra.mxu0 %v327
  %404 = vmatprep.subr.bf16.mxu0 0
  %405 = vmatpush1.bf16.msra.mxu0 %v326
  %406 = vmatprep.subr.bf16.mxu0 0
  %407 = vmatpush2.bf16.msra.mxu0 %v341
  %408 = vmatprep.subr.bf16.mxu0 0
  %409 = vmatpush2.bf16.msra.mxu0 %v340
  %410 = vmatprep.subr.bf16.mxu0 0
  %411 = vmatpush2.bf16.msra.mxu0 %v339
  %412 = vmatprep.subr.bf16.mxu0 0
  %413 = vmatpush2.bf16.msra.mxu0 %v338
  %414 = vmatprep.subr.bf16.mxu0 0
  %415 = vmatpush2.bf16.msra.mxu0 %v337
  %416 = vmatprep.subr.bf16.mxu0 0
  %417 = vmatpush2.bf16.msra.mxu0 %v336
  %418 = vmatprep.subr.bf16.mxu0 0
  %419 = vmatpush2.bf16.msra.mxu0 %v335
  %420 = vmatprep.subr.bf16.mxu0 0
  %421 = vmatpush2.bf16.msra.mxu0 %v334
  %422 = vmatprep.mubr.bf16.mxu0 %v167
  %423 = vmatmul.mubr.bf16.gmra.mxu0 %v166
  %v424 = vpop.f32.mrf.mxu0
  %v425 = vadd.f32 0.0, %v424
  %v426 = vpop.f32.mrf.mxu0
  %v427 = vpop.f32.mrf.mxu0
  %v428 = vadd.f32 0.0, %v427
  %v429 = vpop.f32.mrf.mxu0
  %430 = vmatprep.mubr.bf16.mxu0 %v171
  %431 = vmatmul.mubr.bf16.gmra.mxu0 %v170
  %v432 = vpop.f32.mrf.mxu0
  %v433 = vadd.f32 0.0, %v432
  %v434 = vpop.f32.mrf.mxu0
  %v435 = vpop.f32.mrf.mxu0
  %v436 = vadd.f32 0.0, %v435
  %v437 = vpop.f32.mrf.mxu0
  %438 = vmatprep.mubr.bf16.mxu0 %v175
  %439 = vmatmul.mubr.bf16.gmra.mxu0 %v174
  %v440 = vpop.f32.mrf.mxu0
  %v441 = vadd.f32 0.0, %v440
  %v442 = vpop.f32.mrf.mxu0
  %v443 = vpop.f32.mrf.mxu0
  %v444 = vadd.f32 0.0, %v443
  %v445 = vpop.f32.mrf.mxu0
  %446 = vmatprep.mubr.bf16.mxu0 %v179
  %447 = vmatmul.mubr.bf16.gmra.mxu0 %v178
  %v448 = vpop.f32.mrf.mxu0
  %v449 = vadd.f32 0.0, %v448
  %v450 = vpop.f32.mrf.mxu0
  %v451 = vpop.f32.mrf.mxu0
  %v452 = vadd.f32 0.0, %v451
  %v453 = vpop.f32.mrf.mxu0
  %454 = vdwg.mxu0
  %455 = vmatprep.subr.bf16.mxu0 0
  %456 = vmatpush1.bf16.msra.mxu0 %v349
  %457 = vmatprep.subr.bf16.mxu0 0
  %458 = vmatpush1.bf16.msra.mxu0 %v348
  %459 = vmatprep.subr.bf16.mxu0 0
  %460 = vmatpush1.bf16.msra.mxu0 %v347
  %461 = vmatprep.subr.bf16.mxu0 0
  %462 = vmatpush1.bf16.msra.mxu0 %v346
  %463 = vmatprep.subr.bf16.mxu0 0
  %464 = vmatpush1.bf16.msra.mxu0 %v345
  %465 = vmatprep.subr.bf16.mxu0 0
  %466 = vmatpush1.bf16.msra.mxu0 %v344
  %467 = vmatprep.subr.bf16.mxu0 0
  %468 = vmatpush1.bf16.msra.mxu0 %v343
  %469 = vmatprep.subr.bf16.mxu0 0
  %470 = vmatpush1.bf16.msra.mxu0 %v342
  %471 = vmatprep.subr.bf16.mxu0 0
  %472 = vmatpush2.bf16.msra.mxu0 %v357
  %473 = vmatprep.subr.bf16.mxu0 0
  %474 = vmatpush2.bf16.msra.mxu0 %v356
  %475 = vmatprep.subr.bf16.mxu0 0
  %476 = vmatpush2.bf16.msra.mxu0 %v355
  %477 = vmatprep.subr.bf16.mxu0 0
  %478 = vmatpush2.bf16.msra.mxu0 %v354
  %479 = vmatprep.subr.bf16.mxu0 0
  %480 = vmatpush2.bf16.msra.mxu0 %v353
  %481 = vmatprep.subr.bf16.mxu0 0
  %482 = vmatpush2.bf16.msra.mxu0 %v352
  %483 = vmatprep.subr.bf16.mxu0 0
  %484 = vmatpush2.bf16.msra.mxu0 %v351
  %485 = vmatprep.subr.bf16.mxu0 0
  %486 = vmatpush2.bf16.msra.mxu0 %v350
  %487 = vmatprep.mubr.bf16.mxu0 %v169
  %488 = vmatmul.mubr.bf16.gmra.mxu0 %v168
  %v489 = vpop.f32.mrf.mxu0
  %v490 = vadd.f32 %v425, %v489
  %v491 = vpop.f32.mrf.mxu0
  %v492 = vpop.f32.mrf.mxu0
  %v493 = vadd.f32 %v428, %v492
  %v494 = vpop.f32.mrf.mxu0
  %495 = vmatprep.mubr.bf16.mxu0 %v173
  %496 = vmatmul.mubr.bf16.gmra.mxu0 %v172
  %v497 = vpop.f32.mrf.mxu0
  %v498 = vadd.f32 %v433, %v497
  %v499 = vpop.f32.mrf.mxu0
  %v500 = vpop.f32.mrf.mxu0
  %v501 = vadd.f32 %v436, %v500
  %v502 = vpop.f32.mrf.mxu0
  %503 = vmatprep.mubr.bf16.mxu0 %v177
  %504 = vmatmul.mubr.bf16.gmra.mxu0 %v176
  %v505 = vpop.f32.mrf.mxu0
  %v506 = vadd.f32 %v441, %v505
  %v507 = vpop.f32.mrf.mxu0
  %v508 = vpop.f32.mrf.mxu0
  %v509 = vadd.f32 %v444, %v508
  %v510 = vpop.f32.mrf.mxu0
  %511 = vmatprep.mubr.bf16.mxu0 %v181
  %512 = vmatmul.mubr.bf16.gmra.mxu0 %v180
  %v513 = vpop.f32.mrf.mxu0
  %v514 = vadd.f32 %v449, %v513
  %v515 = vpop.f32.mrf.mxu0
  %v516 = vpop.f32.mrf.mxu0
  %v517 = vadd.f32 %v452, %v516
  %v518 = vpop.f32.mrf.mxu0
  %519 = vdwg.mxu0
  %v520 = vadd.f32 %v30, %v490
  %v521 = vadd.f32 %v31, %v493
  %v522 = vadd.f32 %v32, %v498
  %v523 = vadd.f32 %v33, %v501
  %v524 = vadd.f32 %v34, %v506
  %v525 = vadd.f32 %v35, %v509
  %v526 = vadd.f32 %v36, %v514
  %v527 = vadd.f32 %v37, %v517
  %528 = vst [vmem:[#allocation2] sm:$0xff] %v520
  %529 = vst [vmem:[#allocation2 + $0x8] sm:$0xff] %v521
  %530 = vst [vmem:[#allocation2 + $0x10] sm:$0xff] %v522
  %531 = vst [vmem:[#allocation2 + $0x18] sm:$0xff] %v523
  %532 = vst [vmem:[#allocation2 + $0x20] sm:$0xff] %v524
  %533 = vst [vmem:[#allocation2 + $0x28] sm:$0xff] %v525
  %534 = vst [vmem:[#allocation2 + $0x30] sm:$0xff] %v526
  %535 = vst [vmem:[#allocation2 + $0x38] sm:$0xff] %v527
  // Predicated region
  $region22: #{_lambda_.20} parent=0 // pred_check
    %p536 = pneg %p18
  $region23: #{_lambda_.20} parent=0 // pred_check_branch
    %538 = sbr.rel (%p536) target = $region25
  $region24: #{_lambda_.20} parent=0 // pred_region
    %v539 = vld [vmem:[#allocation2] sm:$0xff]
    %v540 = vld [vmem:[#allocation2 + $0x8] sm:$0xff]
    %v541 = vld [vmem:[#allocation2 + $0x10] sm:$0xff]
    %v542 = vld [vmem:[#allocation2 + $0x18] sm:$0xff]
    %v543 = vld [vmem:[#allocation2 + $0x20] sm:$0xff]
    %v544 = vld [vmem:[#allocation2 + $0x28] sm:$0xff]
    %v545 = vld [vmem:[#allocation2 + $0x30] sm:$0xff]
    %v546 = vld [vmem:[#allocation2 + $0x38] sm:$0xff]
    %v547 = vld [vmem:[%s2] sm:$0x1]
    %v549 = vlaneseq
    %v550 = vshrl.u32 %v549, 7
    %v551 = vsub.s32 0, %v550
    %v552 = vrot.slane %v547, %v551
    %v554 = vmul.f32 %v539, %v552
    %v555 = vmul.f32 %v540, %v552
    %v556 = vmul.f32 %v541, %v552
    %v557 = vmul.f32 %v542, %v552
    %v558 = vmul.f32 %v543, %v552
    %v559 = vmul.f32 %v544, %v552
    %v560 = vmul.f32 %v545, %v552
    %v561 = vmul.f32 %v546, %v552
    %v562 = vld [vmem:[%s3] sm:$0x1]
    %v564 = vlaneseq
    %v565 = vshrl.u32 %v564, 7
    %v566 = vsub.s32 0, %v565
    %v567 = vrot.slane %v562, %v566
    %v569 = vadd.f32 %v554, %v567
    %v570 = vadd.f32 %v555, %v567
    %v571 = vadd.f32 %v556, %v567
    %v572 = vadd.f32 %v557, %v567
    %v573 = vadd.f32 %v558, %v567
    %v574 = vadd.f32 %v559, %v567
    %v575 = vadd.f32 %v560, %v567
    %v576 = vadd.f32 %v561, %v567
    %577 = vst [vmem:[%s4] sm:$0xff] %v569
    %578 = vst [vmem:[%s4 + $0x8] sm:$0xff] %v570
    %579 = vst [vmem:[%s4 + $0x10] sm:$0xff] %v571
    %580 = vst [vmem:[%s4 + $0x18] sm:$0xff] %v572
    %581 = vst [vmem:[%s4 + $0x20] sm:$0xff] %v573
    %582 = vst [vmem:[%s4 + $0x28] sm:$0xff] %v574
    %583 = vst [vmem:[%s4 + $0x30] sm:$0xff] %v575
    %584 = vst [vmem:[%s4 + $0x38] sm:$0xff] %v576
  $region25: #{_lambda_.20} parent=0 // pred_fallthru
    _
  // Predicated region
  $region26: #{_lambda_.20} parent=0 // pred_check
    _
  $region27: #{_lambda_.20} parent=0 // pred_check_branch
    %586 = sbr.rel (0) target = $region29
  $region28: #{_lambda_.20} parent=0 // pred_region
    _
  $region29: #{_lambda_.20} parent=0 // pred_fallthru
    _
  // Predicated region
  $region30: #{_lambda_.20} parent=0 // pred_check
    _
  $region31: #{_lambda_.20} parent=0 // pred_check_branch
    %588 = sbr.rel (0) target = $region33
  $region32: #{_lambda_.20} parent=0 // pred_region
    _
  $region33: #{_lambda_.20} parent=0 // pred_fallthru
    _

// kernel: _lambda_.21
$region0: #{_lambda_.21}
  #allocation0 [shape = 'u32[]', space=smem, size = 0x4, offset = 0x4, fixed_abs, tag = 'smem constant byte address 0x4 - core index']
  #allocation1 [shape = 'u32[144,128]{1,0:T(1,128)}', space=vmem, size = 0x12000, scoped, tag = 'internal scratch']
  #allocation2 [shape = 'f32[64,128]{1,0:T(8,128)}', space=vmem, size = 0x8000, scoped, tag = 'scratch operand']
  %s0 = inlined_call_operand.vmem [shape: bf16[162,256], index: 0, kind: input, shape index: {}]
  %s1 = inlined_call_operand.vmem [shape: bf16[256,128], index: 1, kind: input, shape index: {}]
  %s2 = inlined_call_operand.vmem [shape: f32[1,128], index: 2, kind: input, shape index: {}]
  %s3 = inlined_call_operand.vmem [shape: f32[1,128], index: 3, kind: input, shape index: {}]
  %s4 = inlined_call_operand.vmem [shape: f32[162,128], index: 4, kind: output, shape index: {}]
  %s5 = sld [smem:[#allocation0]]
  $region105: #{_lambda_.21} parent=0
    _
  %s7 = ssub.s32 1, %s5
  %s8 = scalar_select 0, %s7, %s5
  $region1: #{_lambda_.21} parent=0
    #allocation3 [shape = 'u8[65536]{0}', space=vmem, size = 0x10000, scoped, tag = 'output window, operand 0']
    loop: start=0, step=1, limit=5
    $region2: #{_lambda_.21} parent=1 // loop_pre_header
      _
    $region3: #{_lambda_.21} parent=1 // loop_header
      %s10 = sphi 0, %s14
      %p11 = scmp.ge.s32.totalorder %s10, 5
      %s17 = sphi 0, %s29
      %s18 = sphi 0, %s25
      %s19 = sphi 0, %s17
      %s20 = sphi 0, %s18
      %s21 = sphi 0, %s19
      %s22 = sphi 0, %s20
      %s34 = sphi 0, %s36
      %s37 = sphi 0, %s34
      %s38 = sphi 0, %s37
      %s54 = sphi 0, %s38
      %s60 = sphi 0, %s62
      %s63 = sphi 0, %s60
      %s64 = sphi 0, %s63
      %s80 = sphi 0, %s64
      %s84 = sphi 0, %s84
      %s86 = sphi 0, %s84
      %s87 = sphi 0, %s86
      %s101 = sphi 0, %s87
      %s105 = sphi 0, %s105
      %s107 = sphi 0, %s105
      %s108 = sphi 0, %s107
      %s122 = sphi 0, %s108
      %s128 = sphi 0, %s130
      %s131 = sphi 0, %s128
      %s132 = sphi 0, %s131
      %s148 = sphi 0, %s132
    $region4: #{_lambda_.21} parent=1 // loop_header_branch
      %13 = sbr.rel (%p11) target = $region8
    $region5: #{_lambda_.21} parent=1 // loop_body
      %s15 = ssub.s32 %s10, 1
      %s16 = ssub.s32 %s10, 2
      %s23 = sadd.s32 1, %s18
      %p24 = scmp.ge.s32.totalorder %s23, 1
      %s25 = scalar_select %p24, 0, %s23
      %s26 = sadd.s32 1, %s17
      %s27 = scalar_select %p24, %s26, %s17
      %p28 = scmp.ge.s32.totalorder %s27, 3
      %s29 = scalar_select %p28, 0, %s27
      %s30 = ssub.s32 %s17, %s29
      %s31 = ssub.s32 %s18, %s25
      %s32 = sor.u32 %s30, %s31
      %p33 = scmp.eq.s32.totalorder %s32, 0
      %s35 = sadd.s32 %s34, 1
      %s36 = scalar_select %p33, %s34, %s35
      %p39 = pneg %p33
      %p40 = scmp.eq.s32.totalorder %s10, 2
      %p41 = por %p39, %p40
      %p42 = scmp.ne.s32.totalorder %s34, %s37
      %p43 = scmp.eq.s32.totalorder %s10, 0
      %p44 = por %p42, %p43
      %p45 = scmp.ne.s32.totalorder %s34, %s37
      %p46 = scmp.eq.s32.totalorder %s15, 2
      %p47 = por %p45, %p46
      %p48 = scmp.ne.s32.totalorder %s37, %s38
      %p49 = scmp.eq.s32.totalorder %s15, 0
      %p50 = por %p48, %p49
      %p51 = scmp.ne.s32.totalorder %s37, %s38
      %p52 = scmp.eq.s32.totalorder %s16, 2
      %p53 = por %p51, %p52
      %p55 = scmp.ne.s32.totalorder %s38, %s54
      %p56 = scmp.eq.s32.totalorder %s16, 0
      %p57 = por %p55, %p56
      %s58 = ssub.s32 %s18, %s25
      %p59 = scmp.eq.s32.totalorder %s58, 0
      %s61 = sadd.s32 %s60, 1
      %s62 = scalar_select %p59, %s60, %s61
      %p65 = pneg %p59
      %p66 = scmp.eq.s32.totalorder %s10, 2
      %p67 = por %p65, %p66
      %p68 = scmp.ne.s32.totalorder %s60, %s63
      %p69 = scmp.eq.s32.totalorder %s10, 0
      %p70 = por %p68, %p69
      %p71 = scmp.ne.s32.totalorder %s60, %s63
      %p72 = scmp.eq.s32.totalorder %s15, 2
      %p73 = por %p71, %p72
      %p74 = scmp.ne.s32.totalorder %s63, %s64
      %p75 = scmp.eq.s32.totalorder %s15, 0
      %p76 = por %p74, %p75
      %p77 = scmp.ne.s32.totalorder %s63, %s64
      %p78 = scmp.eq.s32.totalorder %s16, 2
      %p79 = por %p77, %p78
      %p81 = scmp.ne.s32.totalorder %s64, %s80
      %p82 = scmp.eq.s32.totalorder %s16, 0
      %p83 = por %p81, %p82
      %s85 = sadd.s32 %s84, 1
      %p88 = scmp.eq.s32.totalorder %s10, 2
      %p89 = scmp.ne.s32.totalorder %s84, %s86
      %p90 = scmp.eq.s32.totalorder %s10, 0
      %p91 = por %p89, %p90
      %p92 = scmp.ne.s32.totalorder %s84, %s86
      %p93 = scmp.eq.s32.totalorder %s15, 2
      %p94 = por %p92, %p93
      %p95 = scmp.ne.s32.totalorder %s86, %s87
      %p96 = scmp.eq.s32.totalorder %s15, 0
      %p97 = por %p95, %p96
      %p98 = scmp.ne.s32.totalorder %s86, %s87
      %p99 = scmp.eq.s32.totalorder %s16, 2
      %p100 = por %p98, %p99
      %p102 = scmp.ne.s32.totalorder %s87, %s101
      %p103 = scmp.eq.s32.totalorder %s16, 0
      %p104 = por %p102, %p103
      %s106 = sadd.s32 %s105, 1
      %p109 = scmp.eq.s32.totalorder %s10, 2
      %p110 = scmp.ne.s32.totalorder %s105, %s107
      %p111 = scmp.eq.s32.totalorder %s10, 0
      %p112 = por %p110, %p111
      %p113 = scmp.ne.s32.totalorder %s105, %s107
      %p114 = scmp.eq.s32.totalorder %s15, 2
      %p115 = por %p113, %p114
      %p116 = scmp.ne.s32.totalorder %s107, %s108
      %p117 = scmp.eq.s32.totalorder %s15, 0
      %p118 = por %p116, %p117
      %p119 = scmp.ne.s32.totalorder %s107, %s108
      %p120 = scmp.eq.s32.totalorder %s16, 2
      %p121 = por %p119, %p120
      %p123 = scmp.ne.s32.totalorder %s108, %s122
      %p124 = scmp.eq.s32.totalorder %s16, 0
      %p125 = por %p123, %p124
      %s126 = ssub.s32 %s17, %s29
      %p127 = scmp.eq.s32.totalorder %s126, 0
      %s129 = sadd.s32 %s128, 1
      %s130 = scalar_select %p127, %s128, %s129
      %p133 = pneg %p127
      %p134 = scmp.eq.s32.totalorder %s10, 2
      %p135 = por %p133, %p134
      %p136 = scmp.ne.s32.totalorder %s128, %s131
      %p137 = scmp.eq.s32.totalorder %s10, 0
      %p138 = por %p136, %p137
      %p139 = scmp.ne.s32.totalorder %s128, %s131
      %p140 = scmp.eq.s32.totalorder %s15, 2
      %p141 = por %p139, %p140
      %p142 = scmp.ne.s32.totalorder %s131, %s132
      %p143 = scmp.eq.s32.totalorder %s15, 0
      %p144 = por %p142, %p143
      %p145 = scmp.ne.s32.totalorder %s131, %s132
      %p146 = scmp.eq.s32.totalorder %s16, 2
      %p147 = por %p145, %p146
      %p149 = scmp.ne.s32.totalorder %s132, %s148
      %p150 = scmp.eq.s32.totalorder %s16, 0
      %p151 = por %p149, %p150
      %p152 = scmp.le.s32.totalorder 1, %s10
      %p153 = scmp.lt.s32.totalorder %s10, 4
      %p154 = pnand %p152, %p153
      %p155 = pneg %p154
      // Predicated region
      $region9: #{_lambda_.21} parent=5 // pred_check
        _
      $region10: #{_lambda_.21} parent=5 // pred_check_branch
        %157 = sbr.rel (%p154) target = $region12
      $region11: #{_lambda_.21} parent=5 // pred_region
        %s158 = ssub.s32 %s10, 1
        // Predicated region
        $region13: #{_lambda_.21} parent=11 // pred_check
          %p159 = pneg %p76
        $region14: #{_lambda_.21} parent=11 // pred_check_branch
          %161 = sbr.rel (%p159) target = $region16
        $region15: #{_lambda_.21} parent=11 // pred_region
          %s162 = smul.u32 32, %s20
          %p163 = scmp.lt.s32.totalorder %s162, 31
          %s164 = scalar_select %p163, %s162, 31
          %s165 = smul.addr %s164, 4
          %s166 = scalar_lea.vmem %s1, %s165
          %s167 = smul.u32 32, %s20
        $region16: #{_lambda_.21} parent=11 // pred_fallthru
          _
        // Predicated region
        $region17: #{_lambda_.21} parent=11 // pred_check
          %p168 = pneg %p97
        $region18: #{_lambda_.21} parent=11 // pred_check_branch
          %170 = sbr.rel (%p168) target = $region20
        $region19: #{_lambda_.21} parent=11 // pred_region
          _
        $region20: #{_lambda_.21} parent=11 // pred_fallthru
          _
        // Predicated region
        $region21: #{_lambda_.21} parent=11 // pred_check
          %p171 = pneg %p118
        $region22: #{_lambda_.21} parent=11 // pred_check_branch
          %173 = sbr.rel (%p171) target = $region24
        $region23: #{_lambda_.21} parent=11 // pred_region
          _
        $region24: #{_lambda_.21} parent=11 // pred_fallthru
          _
      $region12: #{_lambda_.21} parent=5 // pred_fallthru
        _
      %p174 = scmp.lt.s32.totalorder %s10, 3
      // Predicated region
      $region25: #{_lambda_.21} parent=5 // pred_check
        %p175 = pneg %p174
      $region26: #{_lambda_.21} parent=5 // pred_check_branch
        %177 = sbr.rel (%p175) target = $region28
      $region27: #{_lambda_.21} parent=5 // pred_region
        // Predicated region
        $region29: #{_lambda_.21} parent=27 // pred_check
          %p178 = pneg %p44
        $region30: #{_lambda_.21} parent=27 // pred_check_branch
          %180 = sbr.rel (%p178) target = $region32
        $region31: #{_lambda_.21} parent=27 // pred_region
          %s181 = smul.u32 8, %s17
          %s182 = smul.u32 2, %s18
          %s183 = ssub.s32 21, %s181
          %p184 = scmp.lt.s32.totalorder %s183, 8
          %s185 = scalar_select %p184, %s183, 8
          %s186 = smul.u32 64, %s185
          %s187 = smul.u32 %s186, 2
          %p188 = scmp.lt.s32.totalorder %s181, 20
          %s189 = scalar_select %p188, %s181, 20
          %p190 = scmp.lt.s32.totalorder %s182, 1
          %s191 = scalar_select %p190, %s182, 1
          %s192 = smul.addr %s189, 2
          %s193 = sadd.s32 %s191, %s192
          %s194 = smul.addr %s193, 4
          %s195 = scalar_lea.vmem %s0, %s194
          %s196 = smul.u32 8, %s17
          %s197 = smul.u32 2, %s18
          %s198 = ssub.s32 21, %s196
          %p199 = scmp.lt.s32.totalorder %s198, 8
          %s200 = scalar_select %p199, %s198, 8
          %s201 = smul.u32 64, %s200
          %s202 = smul.u32 %s201, 2
        $region32: #{_lambda_.21} parent=27 // pred_fallthru
          _
      $region28: #{_lambda_.21} parent=5 // pred_fallthru
        _
      %p203 = scmp.le.s32.totalorder 1, %s10
      %p204 = scmp.lt.s32.totalorder %s10, 4
      %p205 = pnand %p203, %p204
      %p206 = pneg %p205
      // Predicated region
      $region33: #{_lambda_.21} parent=5 // pred_check
        _
      $region34: #{_lambda_.21} parent=5 // pred_check_branch
        %208 = sbr.rel (%p205) target = $region36
      $region35: #{_lambda_.21} parent=5 // pred_region
        %s209 = ssub.s32 %s10, 1
        %s210 = smul.u32 8, %s19
        %s211 = smul.u32 2, %s20
        %s212 = ssub.s32 21, %s210
        %p213 = scmp.lt.s32.totalorder %s212, 8
        %s214 = scalar_select %p213, %s212, 8
        %s215 = smul.u32 64, %s214
        %s216 = smul.u32 %s215, 2
        %p217 = scmp.lt.s32.totalorder %s210, 20
        %s218 = scalar_select %p217, %s210, 20
        %p219 = scmp.lt.s32.totalorder %s211, 1
        %s220 = scalar_select %p219, %s211, 1
        %s221 = smul.addr %s218, 2
        %s222 = sadd.s32 %s220, %s221
        %s223 = smul.addr %s222, 4
        %s224 = scalar_lea.vmem %s0, %s223
        %p225 = pneg %p50
        %p226 = pneg %p47
        %s227 = smul.u32 32, %s20
        %p228 = scmp.lt.s32.totalorder %s227, 31
        %s229 = scalar_select %p228, %s227, 31
        %s230 = smul.addr %s229, 4
        %s231 = scalar_lea.vmem %s1, %s230
        %p232 = pneg %p76
        %p233 = pneg %p73
        %p234 = pneg %p97
        %p235 = pneg %p94
        %p236 = pneg %p118
        %p237 = pneg %p115
        %p238 = pneg %p144
        %p239 = pneg %p141
        %s240 = sand.u32 %s131, 1
        %s241 = sand.u32 %s131, 1
        %s242 = smul.addr %s241, 64
        %s243 = scalar_lea.vmem [#allocation3], %s242
        %s244 = smul.u32 8, %s19
        %s245 = smul.u32 2, %s20
        %s246 = ssub.s32 21, %s244
        %p247 = scmp.lt.s32.totalorder %s246, 8
        %s248 = scalar_select %p247, %s246, 8
        %s249 = smul.u32 64, %s248
        %s250 = smul.u32 %s249, 2
        %p251 = scmp.lt.s32.totalorder %s244, 20
        %s252 = scalar_select %p251, %s244, 20
        %p253 = scmp.lt.s32.totalorder %s245, 1
        %s254 = scalar_select %p253, %s245, 1
        %s255 = smul.addr %s252, 2
        %s256 = sadd.s32 %s254, %s255
        %s257 = smul.addr %s256, 4
        %s258 = scalar_lea.vmem %s0, %s257
        %s259 = smul.u32 8, %s19
        %s260 = smul.u32 2, %s20
        %s261 = ssub.s32 21, %s259
        %p262 = scmp.lt.s32.totalorder %s261, 8
        %s263 = scalar_select %p262, %s261, 8
        %s264 = smul.u32 64, %s263
        %s265 = smul.u32 %s264, 2
        %s266 = smul.u32 32, %s20
        %p267 = scmp.lt.s32.totalorder %s266, 31
        %s268 = scalar_select %p267, %s266, 31
        %s269 = smul.addr %s268, 4
        %s270 = scalar_lea.vmem %s1, %s269
        %s271 = smul.u32 32, %s20
        %s272 = smul.u32 8, %s19
        %s273 = ssub.s32 21, %s272
        %p274 = scmp.lt.s32.totalorder %s273, 8
        %s275 = scalar_select %p274, %s273, 8
        %s276 = smul.u32 128, %s275
        %p278 = scmp.eq.s32.totalorder %s20, 0
        // Predicated region
        $region37: #{_lambda_.21} parent=35 // pred_check
          %p279 = pneg %p278
        $region38: #{_lambda_.21} parent=35 // pred_check_branch
          %281 = sbr.rel (%p279) target = $region40
        $region39: #{_lambda_.21} parent=35 // pred_region
          %282 = vst [vmem:[#allocation2] sm:$0xff] 0.0
          %283 = vst [vmem:[#allocation2 + $0x8] sm:$0xff] 0.0
          %284 = vst [vmem:[#allocation2 + $0x10] sm:$0xff] 0.0
          %285 = vst [vmem:[#allocation2 + $0x18] sm:$0xff] 0.0
          %286 = vst [vmem:[#allocation2 + $0x20] sm:$0xff] 0.0
          %287 = vst [vmem:[#allocation2 + $0x28] sm:$0xff] 0.0
          %288 = vst [vmem:[#allocation2 + $0x30] sm:$0xff] 0.0
          %289 = vst [vmem:[#allocation2 + $0x38] sm:$0xff] 0.0
        $region40: #{_lambda_.21} parent=35 // pred_fallthru
          _
        %v290 = vld [vmem:[#allocation2] sm:$0xff]
        %v291 = vld [vmem:[#allocation2 + $0x8] sm:$0xff]
        %v292 = vld [vmem:[#allocation2 + $0x10] sm:$0xff]
        %v293 = vld [vmem:[#allocation2 + $0x18] sm:$0xff]
        %v294 = vld [vmem:[#allocation2 + $0x20] sm:$0xff]
        %v295 = vld [vmem:[#allocation2 + $0x28] sm:$0xff]
        %v296 = vld [vmem:[#allocation2 + $0x30] sm:$0xff]
        %v297 = vld [vmem:[#allocation2 + $0x38] sm:$0xff]
        %v298 = vld [vmem:[%s258] sm:$0xff]
        %v299 = vld [vmem:[%s258 + $0x8] sm:$0xff]
        %v300 = vld [vmem:[%s258 + $0x10] sm:$0xff]
        %v301 = vld [vmem:[%s258 + $0x18] sm:$0xff]
        %v302 = vld [vmem:[%s258 + $0x20] sm:$0xff]
        %v303 = vld [vmem:[%s258 + $0x28] sm:$0xff]
        %v304 = vld [vmem:[%s258 + $0x30] sm:$0xff]
        %v305 = vld [vmem:[%s258 + $0x38] sm:$0xff]
        %v306 = vld [vmem:[%s270] sm:$0xf]
        %v307 = vld [vmem:[%s270 + $0x4] sm:$0xf]
        %v308 = vld [vmem:[%s270 + $0x8] sm:$0xf]
        %v309 = vld [vmem:[%s270 + $0xc] sm:$0xf]
        %v310 = vld [vmem:[%s270 + $0x10] sm:$0xf]
        %v311 = vld [vmem:[%s270 + $0x14] sm:$0xf]
        %v312 = vld [vmem:[%s270 + $0x18] sm:$0xf]
        %v313 = vld [vmem:[%s270 + $0x1c] sm:$0xf]
        %v314 = vld [vmem:[%s270 + $0x20] sm:$0xf]
        %v315 = vld [vmem:[%s270 + $0x24] sm:$0xf]
        %v316 = vld [vmem:[%s270 + $0x28] sm:$0xf]
        %v317 = vld [vmem:[%s270 + $0x2c] sm:$0xf]
        %v318 = vld [vmem:[%s270 + $0x30] sm:$0xf]
        %v319 = vld [vmem:[%s270 + $0x34] sm:$0xf]
        %v320 = vld [vmem:[%s270 + $0x38] sm:$0xf]
        %v321 = vld [vmem:[%s270 + $0x3c] sm:$0xf]
        %v322 = vld [vmem:[%s270 + $0x40] sm:$0xf]
        %v323 = vld [vmem:[%s270 + $0x44] sm:$0xf]
        %v324 = vld [vmem:[%s270 + $0x48] sm:$0xf]
        %v325 = vld [vmem:[%s270 + $0x4c] sm:$0xf]
        %v326 = vld [vmem:[%s270 + $0x50] sm:$0xf]
        %v327 = vld [vmem:[%s270 + $0x54] sm:$0xf]
        %v328 = vld [vmem:[%s270 + $0x58] sm:$0xf]
        %v329 = vld [vmem:[%s270 + $0x5c] sm:$0xf]
        %v330 = vld [vmem:[%s270 + $0x60] sm:$0xf]
        %v331 = vld [vmem:[%s270 + $0x64] sm:$0xf]
        %v332 = vld [vmem:[%s270 + $0x68] sm:$0xf]
        %v333 = vld [vmem:[%s270 + $0x6c] sm:$0xf]
        %v334 = vld [vmem:[%s270 + $0x70] sm:$0xf]
        %v335 = vld [vmem:[%s270 + $0x74] sm:$0xf]
        %v336 = vld [vmem:[%s270 + $0x78] sm:$0xf]
        %v337 = vld [vmem:[%s270 + $0x7c] sm:$0xf]
        %v346 = vunpack.c.l.b16 %v298
        %v347 = vunpack.c.h.b16 %v298
        %v348 = vunpack.c.l.b16 %v299
        %v349 = vunpack.c.h.b16 %v299
        %v350 = vunpack.c.l.b16 %v300
        %v351 = vunpack.c.h.b16 %v300
        %v352 = vunpack.c.l.b16 %v301
        %v353 = vunpack.c.h.b16 %v301
        %v354 = vunpack.c.l.b16 %v302
        %v355 = vunpack.c.h.b16 %v302
        %v356 = vunpack.c.l.b16 %v303
        %v357 = vunpack.c.h.b16 %v303
        %v358 = vunpack.c.l.b16 %v304
        %v359 = vunpack.c.h.b16 %v304
        %v360 = vunpack.c.l.b16 %v305
        %v361 = vunpack.c.h.b16 %v305
        %v362 = vpack.c.b16 %v348, %v346
        %v363 = vpack.c.b16 %v349, %v347
        %v364 = vpack.c.b16 %v352, %v350
        %v365 = vpack.c.b16 %v353, %v351
        %v366 = vpack.c.b16 %v356, %v354
        %v367 = vpack.c.b16 %v357, %v355
        %v368 = vpack.c.b16 %v360, %v358
        %v369 = vpack.c.b16 %v361, %v359
        %v410 = vunpack.c.l.b16 %v306
        %v411 = vunpack.c.l.b16 %v307
        %v412 = vunpack.c.l.b16 %v308
        %v413 = vunpack.c.l.b16 %v309
        %v414 = vunpack.c.l.b16 %v310
        %v415 = vunpack.c.l.b16 %v311
        %v416 = vunpack.c.l.b16 %v312
        %v417 = vunpack.c.l.b16 %v313
        %v418 = vunpack.c.l.b16 %v314
        %v419 = vunpack.c.l.b16 %v315
        %v420 = vunpack.c.l.b16 %v316
        %v421 = vunpack.c.l.b16 %v317
        %v422 = vunpack.c.l.b16 %v318
        %v423 = vunpack.c.l.b16 %v319
        %v424 = vunpack.c.l.b16 %v320
        %v425 = vunpack.c.l.b16 %v321
        %v426 = vunpack.c.l.b16 %v322
        %v427 = vunpack.c.l.b16 %v323
        %v428 = vunpack.c.l.b16 %v324
        %v429 = vunpack.c.l.b16 %v325
        %v430 = vunpack.c.l.b16 %v326
        %v431 = vunpack.c.l.b16 %v327
        %v432 = vunpack.c.l.b16 %v328
        %v433 = vunpack.c.l.b16 %v329
        %v434 = vunpack.c.l.b16 %v330
        %v435 = vunpack.c.l.b16 %v331
        %v436 = vunpack.c.l.b16 %v332
        %v437 = vunpack.c.l.b16 %v333
        %v438 = vunpack.c.l.b16 %v334
        %v439 = vunpack.c.l.b16 %v335
        %v440 = vunpack.c.l.b16 %v336
        %v441 = vunpack.c.l.b16 %v337
        %v442 = vpack.c.b16 %v411, %v410
        %v443 = vpack.c.b16 %v413, %v412
        %v444 = vpack.c.b16 %v415, %v414
        %v445 = vpack.c.b16 %v417, %v416
        %v446 = vpack.c.b16 %v419, %v418
        %v447 = vpack.c.b16 %v421, %v420
        %v448 = vpack.c.b16 %v423, %v422
        %v449 = vpack.c.b16 %v425, %v424
        %v450 = vpack.c.b16 %v427, %v426
        %v451 = vpack.c.b16 %v429, %v428
        %v452 = vpack.c.b16 %v431, %v430
        %v453 = vpack.c.b16 %v433, %v432
        %v454 = vpack.c.b16 %v435, %v434
        %v455 = vpack.c.b16 %v437, %v436
        %v456 = vpack.c.b16 %v439, %v438
        %v457 = vpack.c.b16 %v441, %v440
        %474 = vmatprep.subr.bf16.mxu0 0
        %475 = vmatpush1.bf16.msra.mxu0 %v449
        %476 = vmatprep.subr.bf16.mxu0 0
        %477 = vmatpush1.bf16.msra.mxu0 %v448
        %478 = vmatprep.subr.bf16.mxu0 0
        %479 = vmatpush1.bf16.msra.mxu0 %v447
        %480 = vmatprep.subr.bf16.mxu0 0
        %481 = vmatpush1.bf16.msra.mxu0 %v446
        %482 = vmatprep.subr.bf16.mxu0 0
        %483 = vmatpush1.bf16.msra.mxu0 %v445
        %484 = vmatprep.subr.bf16.mxu0 0
        %485 = vmatpush1.bf16.msra.mxu0 %v444
        %486 = vmatprep.subr.bf16.mxu0 0
        %487 = vmatpush1.bf16.msra.mxu0 %v443
        %488 = vmatprep.subr.bf16.mxu0 0
        %489 = vmatpush1.bf16.msra.mxu0 %v442
        %490 = vmatprep.subr.bf16.mxu0 0
        %491 = vmatpush2.bf16.msra.mxu0 %v457
        %492 = vmatprep.subr.bf16.mxu0 0
        %493 = vmatpush2.bf16.msra.mxu0 %v456
        %494 = vmatprep.subr.bf16.mxu0 0
        %495 = vmatpush2.bf16.msra.mxu0 %v455
        %496 = vmatprep.subr.bf16.mxu0 0
        %497 = vmatpush2.bf16.msra.mxu0 %v454
        %498 = vmatprep.subr.bf16.mxu0 0
        %499 = vmatpush2.bf16.msra.mxu0 %v453
        %500 = vmatprep.subr.bf16.mxu0 0
        %501 = vmatpush2.bf16.msra.mxu0 %v452
        %502 = vmatprep.subr.bf16.mxu0 0
        %503 = vmatpush2.bf16.msra.mxu0 %v451
        %504 = vmatprep.subr.bf16.mxu0 0
        %505 = vmatpush2.bf16.msra.mxu0 %v450
        %506 = vmatprep.mubr.bf16.mxu0 %v363
        %507 = vmatmul.mubr.bf16.gmra.mxu0 %v362
        %v508 = vpop.f32.mrf.mxu0
        %v509 = vadd.f32 0.0, %v508
        %v510 = vpop.f32.mrf.mxu0
        %v511 = vpop.f32.mrf.mxu0
        %v512 = vadd.f32 0.0, %v511
        %v513 = vpop.f32.mrf.mxu0
        %514 = vmatprep.mubr.bf16.mxu0 %v365
        %515 = vmatmul.mubr.bf16.gmra.mxu0 %v364
        %v516 = vpop.f32.mrf.mxu0
        %v517 = vadd.f32 0.0, %v516
        %v518 = vpop.f32.mrf.mxu0
        %v519 = vpop.f32.mrf.mxu0
        %v520 = vadd.f32 0.0, %v519
        %v521 = vpop.f32.mrf.mxu0
        %522 = vmatprep.mubr.bf16.mxu0 %v367
        %523 = vmatmul.mubr.bf16.gmra.mxu0 %v366
        %v524 = vpop.f32.mrf.mxu0
        %v525 = vadd.f32 0.0, %v524
        %v526 = vpop.f32.mrf.mxu0
        %v527 = vpop.f32.mrf.mxu0
        %v528 = vadd.f32 0.0, %v527
        %v529 = vpop.f32.mrf.mxu0
        %530 = vmatprep.mubr.bf16.mxu0 %v369
        %531 = vmatmul.mubr.bf16.gmra.mxu0 %v368
        %v532 = vpop.f32.mrf.mxu0
        %v533 = vadd.f32 0.0, %v532
        %v534 = vpop.f32.mrf.mxu0
        %v535 = vpop.f32.mrf.mxu0
        %v536 = vadd.f32 0.0, %v535
        %v537 = vpop.f32.mrf.mxu0
        %538 = vdwg.mxu0
        %v539 = vadd.f32 %v290, %v509
        %v540 = vadd.f32 %v291, %v512
        %v541 = vadd.f32 %v292, %v517
        %v542 = vadd.f32 %v293, %v520
        %v543 = vadd.f32 %v294, %v525
        %v544 = vadd.f32 %v295, %v528
        %v545 = vadd.f32 %v296, %v533
        %v546 = vadd.f32 %v297, %v536
        %547 = vst [vmem:[#allocation2] sm:$0xff] %v539
        %548 = vst [vmem:[#allocation2 + $0x8] sm:$0xff] %v540
        %549 = vst [vmem:[#allocation2 + $0x10] sm:$0xff] %v541
        %550 = vst [vmem:[#allocation2 + $0x18] sm:$0xff] %v542
        %551 = vst [vmem:[#allocation2 + $0x20] sm:$0xff] %v543
        %552 = vst [vmem:[#allocation2 + $0x28] sm:$0xff] %v544
        %553 = vst [vmem:[#allocation2 + $0x30] sm:$0xff] %v545
        %554 = vst [vmem:[#allocation2 + $0x38] sm:$0xff] %v546
        // Predicated region
        $region41: #{_lambda_.21} parent=35 // pred_check
          %p555 = pneg %p278
        $region42: #{_lambda_.21} parent=35 // pred_check_branch
          %557 = sbr.rel (%p555) target = $region44
        $region43: #{_lambda_.21} parent=35 // pred_region
          %v558 = vld [vmem:[#allocation2] sm:$0xff]
          %v559 = vld [vmem:[#allocation2 + $0x8] sm:$0xff]
          %v560 = vld [vmem:[#allocation2 + $0x10] sm:$0xff]
          %v561 = vld [vmem:[#allocation2 + $0x18] sm:$0xff]
          %v562 = vld [vmem:[#allocation2 + $0x20] sm:$0xff]
          %v563 = vld [vmem:[#allocation2 + $0x28] sm:$0xff]
          %v564 = vld [vmem:[#allocation2 + $0x30] sm:$0xff]
          %v565 = vld [vmem:[#allocation2 + $0x38] sm:$0xff]
          %v566 = vld [vmem:[%s2] sm:$0x1]
          %v568 = vlaneseq
          %v569 = vshrl.u32 %v568, 7
          %v570 = vsub.s32 0, %v569
          %v571 = vrot.slane %v566, %v570
          %v573 = vmul.f32 %v558, %v571
          %v574 = vmul.f32 %v559, %v571
          %v575 = vmul.f32 %v560, %v571
          %v576 = vmul.f32 %v561, %v571
          %v577 = vmul.f32 %v562, %v571
          %v578 = vmul.f32 %v563, %v571
          %v579 = vmul.f32 %v564, %v571
          %v580 = vmul.f32 %v565, %v571
          %v581 = vld [vmem:[%s3] sm:$0x1]
          %v583 = vlaneseq
          %v584 = vshrl.u32 %v583, 7
          %v585 = vsub.s32 0, %v584
          %v586 = vrot.slane %v581, %v585
          %v588 = vadd.f32 %v573, %v586
          %v589 = vadd.f32 %v574, %v586
          %v590 = vadd.f32 %v575, %v586
          %v591 = vadd.f32 %v576, %v586
          %v592 = vadd.f32 %v577, %v586
          %v593 = vadd.f32 %v578, %v586
          %v594 = vadd.f32 %v579, %v586
          %v595 = vadd.f32 %v580, %v586
          %596 = vst [vmem:[%s243] sm:$0xff] %v588
          %597 = vst [vmem:[%s243 + $0x8] sm:$0xff] %v589
          %598 = vst [vmem:[%s243 + $0x10] sm:$0xff] %v590
          %599 = vst [vmem:[%s243 + $0x18] sm:$0xff] %v591
          %600 = vst [vmem:[%s243 + $0x20] sm:$0xff] %v592
          %601 = vst [vmem:[%s243 + $0x28] sm:$0xff] %v593
          %602 = vst [vmem:[%s243 + $0x30] sm:$0xff] %v594
          %603 = vst [vmem:[%s243 + $0x38] sm:$0xff] %v595
        $region44: #{_lambda_.21} parent=35 // pred_fallthru
          _
        %s604 = sand.u32 %s131, 1
        %s605 = sand.u32 %s131, 1
        %s606 = smul.addr %s605, 64
        %s607 = scalar_lea.vmem [#allocation3], %s606
        // Predicated region
        $region45: #{_lambda_.21} parent=35 // pred_check
          %p608 = pneg %p141
        $region46: #{_lambda_.21} parent=35 // pred_check_branch
          %610 = sbr.rel (%p608) target = $region48
        $region47: #{_lambda_.21} parent=35 // pred_region
          %s611 = smul.u32 8, %s19
          %s612 = ssub.s32 21, %s611
          %p613 = scmp.lt.s32.totalorder %s612, 8
          %s614 = scalar_select %p613, %s612, 8
          %s615 = smul.u32 128, %s614
          %p616 = scmp.ne.s32.totalorder 0, %s615
          %s617 = smul.addr %s611, 8
          %s618 = scalar_lea.vmem %s4, %s617
          // Predicated region
          $region49: #{_lambda_.21} parent=47 // pred_check
            %p619 = pneg %p616
          $region50: #{_lambda_.21} parent=47 // pred_check_branch
            %621 = sbr.rel (%p619) target = $region52
          $region51: #{_lambda_.21} parent=47 // pred_region
            // Predicated region
            $region53: #{_lambda_.21} parent=51 // pred_check
              _
            $region54: #{_lambda_.21} parent=51 // pred_check_branch
              %623 = sbr.rel (0) target = $region56
            $region55: #{_lambda_.21} parent=51 // pred_region
              // Predicated region
              $region75: #{_lambda_.21} parent=55 // pred_check
                _
              $region76: #{_lambda_.21} parent=55 // pred_check_branch
                %687 = sbr.rel (0) target = $region78
              $region77: #{_lambda_.21} parent=55 // pred_region
                %s688 = sshrl.u32 %s614, 3
                // While loop
                $region79: #{_lambda_.21} parent=77 // loop_pre_header
                  _
                $region80: #{_lambda_.21} parent=77 // loop_header
                  %s690 = sphi 0, %s692
                  %p691 = scmp.ge.s32.totalorder %s690, %s688
                  %s695 = sphi 0, %s716
                  %s696 = sphi %s607, %s719
                  %s697 = sphi %s618, %s720
                $region81: #{_lambda_.21} parent=77 // loop_header_branch
                  %694 = sbr.rel (%p691) target = $region85
                $region82: #{_lambda_.21} parent=77 // loop_body
                  %v698 = vld [vmem:[%s696] sm:$0xff]
                  %699 = vst [vmem:[%s697] sm:$0xff] %v698
                  %v700 = vld [vmem:[%s696 + $0x8] sm:$0xff]
                  %701 = vst [vmem:[%s697 + $0x8] sm:$0xff] %v700
                  %v702 = vld [vmem:[%s696 + $0x10] sm:$0xff]
                  %703 = vst [vmem:[%s697 + $0x10] sm:$0xff] %v702
                  %v704 = vld [vmem:[%s696 + $0x18] sm:$0xff]
                  %705 = vst [vmem:[%s697 + $0x18] sm:$0xff] %v704
                  %v706 = vld [vmem:[%s696 + $0x20] sm:$0xff]
                  %707 = vst [vmem:[%s697 + $0x20] sm:$0xff] %v706
                  %v708 = vld [vmem:[%s696 + $0x28] sm:$0xff]
                  %709 = vst [vmem:[%s697 + $0x28] sm:$0xff] %v708
                  %v710 = vld [vmem:[%s696 + $0x30] sm:$0xff]
                  %711 = vst [vmem:[%s697 + $0x30] sm:$0xff] %v710
                  %v712 = vld [vmem:[%s696 + $0x38] sm:$0xff]
                  %713 = vst [vmem:[%s697 + $0x38] sm:$0xff] %v712
                  %s714 = sadd.s32 1, %s695
                  %p715 = scmp.ge.s32.totalorder %s714, %s688
                  %s716 = scalar_select %p715, 0, %s714
                  %s717 = smul.u32 %s716, 64
                  %s718 = smul.u32 %s716, 64
                  %s719 = scalar_lea.vmem %s607, %s717 [#allocation3]
                  %s720 = scalar_lea.vmem %s618, %s718
                $region83: #{_lambda_.21} parent=77 // loop_footer
                  %s692 = sadd.s32 %s690, 1
                $region84: #{_lambda_.21} parent=77 // loop_footer_branch
                  %689 = sbr.rel target = $region80
                $region85: #{_lambda_.21} parent=77 // loop_exit
                  _
                %s721 = sshrl.u32 %s614, 3
                %s722 = sand.u32 %s614, 7
                %s723 = smul.u32 %s721, 8
                %s724 = smul.u32 8, %s723
                %s725 = scalar_lea.vmem %s607, %s724 [#allocation3]
                %s726 = smul.u32 8, %s723
                %s727 = scalar_lea.vmem %s618, %s726
                // While loop
                $region86: #{_lambda_.21} parent=77 // loop_pre_header
                  _
                $region87: #{_lambda_.21} parent=77 // loop_header
                  %s729 = sphi 0, %s731
                  %p730 = scmp.ge.s32.totalorder %s729, %s722
                  %s734 = sphi 0, %s741
                  %s735 = sphi %s725, %s744
                  %s736 = sphi %s727, %s745
                $region88: #{_lambda_.21} parent=77 // loop_header_branch
                  %733 = sbr.rel (%p730) target = $region92
                $region89: #{_lambda_.21} parent=77 // loop_body
                  %v737 = vld [vmem:[%s735] sm:$0xff]
                  %738 = vst [vmem:[%s736] sm:$0xff] %v737
                  %s739 = sadd.s32 1, %s734
                  %p740 = scmp.ge.s32.totalorder %s739, %s722
                  %s741 = scalar_select %p740, 0, %s739
                  %s742 = smul.u32 %s741, 8
                  %s743 = smul.u32 %s741, 8
                  %s744 = scalar_lea.vmem %s725, %s742 [#allocation3]
                  %s745 = scalar_lea.vmem %s727, %s743
                $region90: #{_lambda_.21} parent=77 // loop_footer
                  %s731 = sadd.s32 %s729, 1
                $region91: #{_lambda_.21} parent=77 // loop_footer_branch
                  %728 = sbr.rel target = $region87
                $region92: #{_lambda_.21} parent=77 // loop_exit
                  _
              $region78: #{_lambda_.21} parent=55 // pred_fallthru
                _
              // Predicated region
              $region93: #{_lambda_.21} parent=55 // pred_check
                _
              $region94: #{_lambda_.21} parent=55 // pred_check_branch
                %747 = sbr.rel target = $region96
              $region95: #{_lambda_.21} parent=55 // pred_region
                _
              $region96: #{_lambda_.21} parent=55 // pred_fallthru
                _
            $region56: #{_lambda_.21} parent=51 // pred_fallthru
              _
            // Predicated region
            $region57: #{_lambda_.21} parent=51 // pred_check
              _
            $region58: #{_lambda_.21} parent=51 // pred_check_branch
              %625 = sbr.rel target = $region60
            $region59: #{_lambda_.21} parent=51 // pred_region
              %s627 = ssub.s32 256, 1
              %s628 = sshrl.u32 %s614, 3
              // While loop
              $region61: #{_lambda_.21} parent=59 // loop_pre_header
                _
              $region62: #{_lambda_.21} parent=59 // loop_header
                %s630 = sphi 0, %s632
                %p631 = scmp.ge.s32.totalorder %s630, %s628
                %s635 = sphi 0, %s656
                %s636 = sphi %s607, %s659
                %s637 = sphi %s618, %s660
              $region63: #{_lambda_.21} parent=59 // loop_header_branch
                %634 = sbr.rel (%p631) target = $region67
              $region64: #{_lambda_.21} parent=59 // loop_body
                %v638 = vld [vmem:[%s636] sm:%s627]
                %639 = vst [vmem:[%s637] sm:%s627] %v638
                %v640 = vld [vmem:[%s636 + $0x8] sm:%s627]
                %641 = vst [vmem:[%s637 + $0x8] sm:%s627] %v640
                %v642 = vld [vmem:[%s636 + $0x10] sm:%s627]
                %643 = vst [vmem:[%s637 + $0x10] sm:%s627] %v642
                %v644 = vld [vmem:[%s636 + $0x18] sm:%s627]
                %645 = vst [vmem:[%s637 + $0x18] sm:%s627] %v644
                %v646 = vld [vmem:[%s636 + $0x20] sm:%s627]
                %647 = vst [vmem:[%s637 + $0x20] sm:%s627] %v646
                %v648 = vld [vmem:[%s636 + $0x28] sm:%s627]
                %649 = vst [vmem:[%s637 + $0x28] sm:%s627] %v648
                %v650 = vld [vmem:[%s636 + $0x30] sm:%s627]
                %651 = vst [vmem:[%s637 + $0x30] sm:%s627] %v650
                %v652 = vld [vmem:[%s636 + $0x38] sm:%s627]
                %653 = vst [vmem:[%s637 + $0x38] sm:%s627] %v652
                %s654 = sadd.s32 1, %s635
                %p655 = scmp.ge.s32.totalorder %s654, %s628
                %s656 = scalar_select %p655, 0, %s654
                %s657 = smul.u32 %s656, 64
                %s658 = smul.u32 %s656, 64
                %s659 = scalar_lea.vmem %s607, %s657 [#allocation3]
                %s660 = scalar_lea.vmem %s618, %s658
              $region65: #{_lambda_.21} parent=59 // loop_footer
                %s632 = sadd.s32 %s630, 1
              $region66: #{_lambda_.21} parent=59 // loop_footer_branch
                %629 = sbr.rel target = $region62
              $region67: #{_lambda_.21} parent=59 // loop_exit
                _
              %s661 = sshrl.u32 %s614, 3
              %s662 = sand.u32 %s614, 7
              %s663 = smul.u32 %s661, 8
              %s664 = smul.u32 8, %s663
              %s665 = scalar_lea.vmem %s607, %s664 [#allocation3]
              %s666 = smul.u32 8, %s663
              %s667 = scalar_lea.vmem %s618, %s666
              // While loop
              $region68: #{_lambda_.21} parent=59 // loop_pre_header
                _
              $region69: #{_lambda_.21} parent=59 // loop_header
                %s669 = sphi 0, %s671
                %p670 = scmp.ge.s32.totalorder %s669, %s662
                %s674 = sphi 0, %s681
                %s675 = sphi %s665, %s684
                %s676 = sphi %s667, %s685
              $region70: #{_lambda_.21} parent=59 // loop_header_branch
                %673 = sbr.rel (%p670) target = $region74
              $region71: #{_lambda_.21} parent=59 // loop_body
                %v677 = vld [vmem:[%s675] sm:%s627]
                %678 = vst [vmem:[%s676] sm:%s627] %v677
                %s679 = sadd.s32 1, %s674
                %p680 = scmp.ge.s32.totalorder %s679, %s662
                %s681 = scalar_select %p680, 0, %s679
                %s682 = smul.u32 %s681, 8
                %s683 = smul.u32 %s681, 8
                %s684 = scalar_lea.vmem %s665, %s682 [#allocation3]
                %s685 = scalar_lea.vmem %s667, %s683
              $region72: #{_lambda_.21} parent=59 // loop_footer
                %s671 = sadd.s32 %s669, 1
              $region73: #{_lambda_.21} parent=59 // loop_footer_branch
                %668 = sbr.rel target = $region69
              $region74: #{_lambda_.21} parent=59 // loop_exit
                _
            $region60: #{_lambda_.21} parent=51 // pred_fallthru
              _
          $region52: #{_lambda_.21} parent=47 // pred_fallthru
            _
          %748 = vnop
        $region48: #{_lambda_.21} parent=35 // pred_fallthru
          _
      $region36: #{_lambda_.21} parent=5 // pred_fallthru
        _
      %p749 = scmp.le.s32.totalorder 2, %s10
      // Predicated region
      $region97: #{_lambda_.21} parent=5 // pred_check
        %p750 = pneg %p749
      $region98: #{_lambda_.21} parent=5 // pred_check_branch
        %752 = sbr.rel (%p750) target = $region100
      $region99: #{_lambda_.21} parent=5 // pred_region
        %s753 = ssub.s32 %s10, 2
        // Predicated region
        $region101: #{_lambda_.21} parent=99 // pred_check
          %p754 = pneg %p147
        $region102: #{_lambda_.21} parent=99 // pred_check_branch
          %756 = sbr.rel (%p754) target = $region104
        $region103: #{_lambda_.21} parent=99 // pred_region
          %s757 = sand.u32 %s132, 1
          %s758 = sand.u32 %s132, 1
          %s759 = smul.addr %s758, 64
          %s760 = scalar_lea.vmem [#allocation3], %s759
        $region104: #{_lambda_.21} parent=99 // pred_fallthru
          _
      $region100: #{_lambda_.21} parent=5 // pred_fallthru
        _
    $region6: #{_lambda_.21} parent=1 // loop_footer
      %s14 = sadd.s32 1, %s10
    $region7: #{_lambda_.21} parent=1 // loop_footer_branch
      %9 = sbr.rel target = $region3
    $region8: #{_lambda_.21} parent=1 // loop_exit
      _

// kernel: _lambda_.22
$region0: #{_lambda_.22}
  #allocation0 [shape = 'u32[]', space=smem, size = 0x4, offset = 0x4, fixed_abs, tag = 'smem constant byte address 0x4 - core index']
  #allocation1 [shape = 'u32[144,128]{1,0:T(1,128)}', space=vmem, size = 0x12000, scoped, tag = 'internal scratch']
  #allocation2 [shape = 'f32[256,128]{1,0:T(8,128)}', space=vmem, size = 0x20000, scoped, tag = 'scratch operand']
  %s0 = inlined_call_operand.vmem [shape: bf16[578,128], index: 0, kind: input, shape index: {}]
  %s1 = inlined_call_operand.vmem [shape: bf16[128,128], index: 1, kind: input, shape index: {}]
  %s2 = inlined_call_operand.vmem [shape: f32[1,128], index: 2, kind: input, shape index: {}]
  %s3 = inlined_call_operand.vmem [shape: f32[1,128], index: 3, kind: input, shape index: {}]
  %s4 = inlined_call_operand.vmem [shape: f32[578,128], index: 4, kind: output, shape index: {}]
  %s5 = sld [smem:[#allocation0]]
  $region105: #{_lambda_.22} parent=0
    _
  %s7 = ssub.s32 1, %s5
  %s8 = scalar_select 0, %s7, %s5
  $region1: #{_lambda_.22} parent=0
    #allocation3 [shape = 'u8[262144]{0}', space=vmem, size = 0x40000, scoped, tag = 'output window, operand 0']
    loop: start=0, step=1, limit=5
    $region2: #{_lambda_.22} parent=1 // loop_pre_header
      _
    $region3: #{_lambda_.22} parent=1 // loop_header
      %s10 = sphi 0, %s14
      %p11 = scmp.ge.s32.totalorder %s10, 5
      %s17 = sphi 0, %s29
      %s18 = sphi 0, %s25
      %s19 = sphi 0, %s17
      %s20 = sphi 0, %s18
      %s21 = sphi 0, %s19
      %s22 = sphi 0, %s20
      %s34 = sphi 0, %s36
      %s37 = sphi 0, %s34
      %s38 = sphi 0, %s37
      %s54 = sphi 0, %s38
      %s60 = sphi 0, %s62
      %s63 = sphi 0, %s60
      %s64 = sphi 0, %s63
      %s80 = sphi 0, %s64
      %s84 = sphi 0, %s84
      %s86 = sphi 0, %s84
      %s87 = sphi 0, %s86
      %s101 = sphi 0, %s87
      %s105 = sphi 0, %s105
      %s107 = sphi 0, %s105
      %s108 = sphi 0, %s107
      %s122 = sphi 0, %s108
      %s128 = sphi 0, %s130
      %s131 = sphi 0, %s128
      %s132 = sphi 0, %s131
      %s148 = sphi 0, %s132
    $region4: #{_lambda_.22} parent=1 // loop_header_branch
      %13 = sbr.rel (%p11) target = $region8
    $region5: #{_lambda_.22} parent=1 // loop_body
      %s15 = ssub.s32 %s10, 1
      %s16 = ssub.s32 %s10, 2
      %s23 = sadd.s32 1, %s18
      %p24 = scmp.ge.s32.totalorder %s23, 1
      %s25 = scalar_select %p24, 0, %s23
      %s26 = sadd.s32 1, %s17
      %s27 = scalar_select %p24, %s26, %s17
      %p28 = scmp.ge.s32.totalorder %s27, 3
      %s29 = scalar_select %p28, 0, %s27
      %s30 = ssub.s32 %s17, %s29
      %s31 = ssub.s32 %s18, %s25
      %s32 = sor.u32 %s30, %s31
      %p33 = scmp.eq.s32.totalorder %s32, 0
      %s35 = sadd.s32 %s34, 1
      %s36 = scalar_select %p33, %s34, %s35
      %p39 = pneg %p33
      %p40 = scmp.eq.s32.totalorder %s10, 2
      %p41 = por %p39, %p40
      %p42 = scmp.ne.s32.totalorder %s34, %s37
      %p43 = scmp.eq.s32.totalorder %s10, 0
      %p44 = por %p42, %p43
      %p45 = scmp.ne.s32.totalorder %s34, %s37
      %p46 = scmp.eq.s32.totalorder %s15, 2
      %p47 = por %p45, %p46
      %p48 = scmp.ne.s32.totalorder %s37, %s38
      %p49 = scmp.eq.s32.totalorder %s15, 0
      %p50 = por %p48, %p49
      %p51 = scmp.ne.s32.totalorder %s37, %s38
      %p52 = scmp.eq.s32.totalorder %s16, 2
      %p53 = por %p51, %p52
      %p55 = scmp.ne.s32.totalorder %s38, %s54
      %p56 = scmp.eq.s32.totalorder %s16, 0
      %p57 = por %p55, %p56
      %s58 = ssub.s32 %s18, %s25
      %p59 = scmp.eq.s32.totalorder %s58, 0
      %s61 = sadd.s32 %s60, 1
      %s62 = scalar_select %p59, %s60, %s61
      %p65 = pneg %p59
      %p66 = scmp.eq.s32.totalorder %s10, 2
      %p67 = por %p65, %p66
      %p68 = scmp.ne.s32.totalorder %s60, %s63
      %p69 = scmp.eq.s32.totalorder %s10, 0
      %p70 = por %p68, %p69
      %p71 = scmp.ne.s32.totalorder %s60, %s63
      %p72 = scmp.eq.s32.totalorder %s15, 2
      %p73 = por %p71, %p72
      %p74 = scmp.ne.s32.totalorder %s63, %s64
      %p75 = scmp.eq.s32.totalorder %s15, 0
      %p76 = por %p74, %p75
      %p77 = scmp.ne.s32.totalorder %s63, %s64
      %p78 = scmp.eq.s32.totalorder %s16, 2
      %p79 = por %p77, %p78
      %p81 = scmp.ne.s32.totalorder %s64, %s80
      %p82 = scmp.eq.s32.totalorder %s16, 0
      %p83 = por %p81, %p82
      %s85 = sadd.s32 %s84, 1
      %p88 = scmp.eq.s32.totalorder %s10, 2
      %p89 = scmp.ne.s32.totalorder %s84, %s86
      %p90 = scmp.eq.s32.totalorder %s10, 0
      %p91 = por %p89, %p90
      %p92 = scmp.ne.s32.totalorder %s84, %s86
      %p93 = scmp.eq.s32.totalorder %s15, 2
      %p94 = por %p92, %p93
      %p95 = scmp.ne.s32.totalorder %s86, %s87
      %p96 = scmp.eq.s32.totalorder %s15, 0
      %p97 = por %p95, %p96
      %p98 = scmp.ne.s32.totalorder %s86, %s87
      %p99 = scmp.eq.s32.totalorder %s16, 2
      %p100 = por %p98, %p99
      %p102 = scmp.ne.s32.totalorder %s87, %s101
      %p103 = scmp.eq.s32.totalorder %s16, 0
      %p104 = por %p102, %p103
      %s106 = sadd.s32 %s105, 1
      %p109 = scmp.eq.s32.totalorder %s10, 2
      %p110 = scmp.ne.s32.totalorder %s105, %s107
      %p111 = scmp.eq.s32.totalorder %s10, 0
      %p112 = por %p110, %p111
      %p113 = scmp.ne.s32.totalorder %s105, %s107
      %p114 = scmp.eq.s32.totalorder %s15, 2
      %p115 = por %p113, %p114
      %p116 = scmp.ne.s32.totalorder %s107, %s108
      %p117 = scmp.eq.s32.totalorder %s15, 0
      %p118 = por %p116, %p117
      %p119 = scmp.ne.s32.totalorder %s107, %s108
      %p120 = scmp.eq.s32.totalorder %s16, 2
      %p121 = por %p119, %p120
      %p123 = scmp.ne.s32.totalorder %s108, %s122
      %p124 = scmp.eq.s32.totalorder %s16, 0
      %p125 = por %p123, %p124
      %s126 = ssub.s32 %s17, %s29
      %p127 = scmp.eq.s32.totalorder %s126, 0
      %s129 = sadd.s32 %s128, 1
      %s130 = scalar_select %p127, %s128, %s129
      %p133 = pneg %p127
      %p134 = scmp.eq.s32.totalorder %s10, 2
      %p135 = por %p133, %p134
      %p136 = scmp.ne.s32.totalorder %s128, %s131
      %p137 = scmp.eq.s32.totalorder %s10, 0
      %p138 = por %p136, %p137
      %p139 = scmp.ne.s32.totalorder %s128, %s131
      %p140 = scmp.eq.s32.totalorder %s15, 2
      %p141 = por %p139, %p140
      %p142 = scmp.ne.s32.totalorder %s131, %s132
      %p143 = scmp.eq.s32.totalorder %s15, 0
      %p144 = por %p142, %p143
      %p145 = scmp.ne.s32.totalorder %s131, %s132
      %p146 = scmp.eq.s32.totalorder %s16, 2
      %p147 = por %p145, %p146
      %p149 = scmp.ne.s32.totalorder %s132, %s148
      %p150 = scmp.eq.s32.totalorder %s16, 0
      %p151 = por %p149, %p150
      %p152 = scmp.le.s32.totalorder 1, %s10
      %p153 = scmp.lt.s32.totalorder %s10, 4
      %p154 = pnand %p152, %p153
      %p155 = pneg %p154
      // Predicated region
      $region9: #{_lambda_.22} parent=5 // pred_check
        _
      $region10: #{_lambda_.22} parent=5 // pred_check_branch
        %157 = sbr.rel (%p154) target = $region12
      $region11: #{_lambda_.22} parent=5 // pred_region
        %s158 = ssub.s32 %s10, 1
        // Predicated region
        $region13: #{_lambda_.22} parent=11 // pred_check
          %p159 = pneg %p76
        $region14: #{_lambda_.22} parent=11 // pred_check_branch
          %161 = sbr.rel (%p159) target = $region16
        $region15: #{_lambda_.22} parent=11 // pred_region
          %s162 = smul.u32 16, %s20
          %p163 = scmp.lt.s32.totalorder %s162, 15
          %s164 = scalar_select %p163, %s162, 15
          %s165 = smul.addr %s164, 4
          %s166 = scalar_lea.vmem %s1, %s165
          %s167 = smul.u32 16, %s20
        $region16: #{_lambda_.22} parent=11 // pred_fallthru
          _
        // Predicated region
        $region17: #{_lambda_.22} parent=11 // pred_check
          %p168 = pneg %p97
        $region18: #{_lambda_.22} parent=11 // pred_check_branch
          %170 = sbr.rel (%p168) target = $region20
        $region19: #{_lambda_.22} parent=11 // pred_region
          _
        $region20: #{_lambda_.22} parent=11 // pred_fallthru
          _
        // Predicated region
        $region21: #{_lambda_.22} parent=11 // pred_check
          %p171 = pneg %p118
        $region22: #{_lambda_.22} parent=11 // pred_check_branch
          %173 = sbr.rel (%p171) target = $region24
        $region23: #{_lambda_.22} parent=11 // pred_region
          _
        $region24: #{_lambda_.22} parent=11 // pred_fallthru
          _
      $region12: #{_lambda_.22} parent=5 // pred_fallthru
        _
      %p174 = scmp.lt.s32.totalorder %s10, 3
      // Predicated region
      $region25: #{_lambda_.22} parent=5 // pred_check
        %p175 = pneg %p174
      $region26: #{_lambda_.22} parent=5 // pred_check_branch
        %177 = sbr.rel (%p175) target = $region28
      $region27: #{_lambda_.22} parent=5 // pred_region
        // Predicated region
        $region29: #{_lambda_.22} parent=27 // pred_check
          %p178 = pneg %p44
        $region30: #{_lambda_.22} parent=27 // pred_check_branch
          %180 = sbr.rel (%p178) target = $region32
        $region31: #{_lambda_.22} parent=27 // pred_region
          %s181 = smul.u32 32, %s17
          %s182 = ssub.s32 73, %s181
          %p183 = scmp.lt.s32.totalorder %s182, 32
          %s184 = scalar_select %p183, %s182, 32
          %s185 = smul.u32 64, %s184
          %p186 = scmp.lt.s32.totalorder %s181, 72
          %s187 = scalar_select %p186, %s181, 72
          %p188 = scmp.lt.s32.totalorder %s18, 0
          %s189 = scalar_select %p188, %s18, 0
          %s190 = sadd.s32 %s189, %s187
          %s191 = smul.addr %s190, 4
          %s192 = scalar_lea.vmem %s0, %s191
          %s193 = smul.u32 32, %s17
          %s194 = ssub.s32 73, %s193
          %p195 = scmp.lt.s32.totalorder %s194, 32
          %s196 = scalar_select %p195, %s194, 32
          %s197 = smul.u32 64, %s196
        $region32: #{_lambda_.22} parent=27 // pred_fallthru
          _
      $region28: #{_lambda_.22} parent=5 // pred_fallthru
        _
      %p198 = scmp.le.s32.totalorder 1, %s10
      %p199 = scmp.lt.s32.totalorder %s10, 4
      %p200 = pnand %p198, %p199
      %p201 = pneg %p200
      // Predicated region
      $region33: #{_lambda_.22} parent=5 // pred_check
        _
      $region34: #{_lambda_.22} parent=5 // pred_check_branch
        %203 = sbr.rel (%p200) target = $region36
      $region35: #{_lambda_.22} parent=5 // pred_region
        %s204 = ssub.s32 %s10, 1
        %s205 = smul.u32 32, %s19
        %s206 = ssub.s32 73, %s205
        %p207 = scmp.lt.s32.totalorder %s206, 32
        %s208 = scalar_select %p207, %s206, 32
        %s209 = smul.u32 64, %s208
        %p210 = scmp.lt.s32.totalorder %s205, 72
        %s211 = scalar_select %p210, %s205, 72
        %p212 = scmp.lt.s32.totalorder %s20, 0
        %s213 = scalar_select %p212, %s20, 0
        %s214 = sadd.s32 %s213, %s211
        %s215 = smul.addr %s214, 4
        %s216 = scalar_lea.vmem %s0, %s215
        %p217 = pneg %p50
        %p218 = pneg %p47
        %s219 = smul.u32 16, %s20
        %p220 = scmp.lt.s32.totalorder %s219, 15
        %s221 = scalar_select %p220, %s219, 15
        %s222 = smul.addr %s221, 4
        %s223 = scalar_lea.vmem %s1, %s222
        %p224 = pneg %p76
        %p225 = pneg %p73
        %p226 = pneg %p97
        %p227 = pneg %p94
        %p228 = pneg %p118
        %p229 = pneg %p115
        %p230 = pneg %p144
        %p231 = pneg %p141
        %s232 = sand.u32 %s131, 1
        %s233 = sand.u32 %s131, 1
        %s234 = smul.addr %s233, 256
        %s235 = scalar_lea.vmem [#allocation3], %s234
        %s236 = smul.u32 32, %s19
        %s237 = ssub.s32 73, %s236
        %p238 = scmp.lt.s32.totalorder %s237, 32
        %s239 = scalar_select %p238, %s237, 32
        %s240 = smul.u32 64, %s239
        %p241 = scmp.lt.s32.totalorder %s236, 72
        %s242 = scalar_select %p241, %s236, 72
        %p243 = scmp.lt.s32.totalorder %s20, 0
        %s244 = scalar_select %p243, %s20, 0
        %s245 = sadd.s32 %s244, %s242
        %s246 = smul.addr %s245, 4
        %s247 = scalar_lea.vmem %s0, %s246
        %s248 = smul.u32 32, %s19
        %s249 = ssub.s32 73, %s248
        %p250 = scmp.lt.s32.totalorder %s249, 32
        %s251 = scalar_select %p250, %s249, 32
        %s252 = smul.u32 64, %s251
        %s253 = smul.u32 16, %s20
        %p254 = scmp.lt.s32.totalorder %s253, 15
        %s255 = scalar_select %p254, %s253, 15
        %s256 = smul.addr %s255, 4
        %s257 = scalar_lea.vmem %s1, %s256
        %s258 = smul.u32 16, %s20
        %s259 = smul.u32 32, %s19
        %s260 = ssub.s32 73, %s259
        %p261 = scmp.lt.s32.totalorder %s260, 32
        %s262 = scalar_select %p261, %s260, 32
        %s263 = smul.u32 128, %s262
        %p265 = scmp.eq.s32.totalorder %s20, 0
        // Predicated region
        $region37: #{_lambda_.22} parent=35 // pred_check
          %p266 = pneg %p265
        $region38: #{_lambda_.22} parent=35 // pred_check_branch
          %268 = sbr.rel (%p266) target = $region40
        $region39: #{_lambda_.22} parent=35 // pred_region
          %269 = vst [vmem:[#allocation2] sm:$0xff] 0.0
          %270 = vst [vmem:[#allocation2 + $0x8] sm:$0xff] 0.0
          %271 = vst [vmem:[#allocation2 + $0x10] sm:$0xff] 0.0
          %272 = vst [vmem:[#allocation2 + $0x18] sm:$0xff] 0.0
          %273 = vst [vmem:[#allocation2 + $0x20] sm:$0xff] 0.0
          %274 = vst [vmem:[#allocation2 + $0x28] sm:$0xff] 0.0
          %275 = vst [vmem:[#allocation2 + $0x30] sm:$0xff] 0.0
          %276 = vst [vmem:[#allocation2 + $0x38] sm:$0xff] 0.0
          %277 = vst [vmem:[#allocation2 + $0x40] sm:$0xff] 0.0
          %278 = vst [vmem:[#allocation2 + $0x48] sm:$0xff] 0.0
          %279 = vst [vmem:[#allocation2 + $0x50] sm:$0xff] 0.0
          %280 = vst [vmem:[#allocation2 + $0x58] sm:$0xff] 0.0
          %281 = vst [vmem:[#allocation2 + $0x60] sm:$0xff] 0.0
          %282 = vst [vmem:[#allocation2 + $0x68] sm:$0xff] 0.0
          %283 = vst [vmem:[#allocation2 + $0x70] sm:$0xff] 0.0
          %284 = vst [vmem:[#allocation2 + $0x78] sm:$0xff] 0.0
          %285 = vst [vmem:[#allocation2 + $0x80] sm:$0xff] 0.0
          %286 = vst [vmem:[#allocation2 + $0x88] sm:$0xff] 0.0
          %287 = vst [vmem:[#allocation2 + $0x90] sm:$0xff] 0.0
          %288 = vst [vmem:[#allocation2 + $0x98] sm:$0xff] 0.0
          %289 = vst [vmem:[#allocation2 + $0xa0] sm:$0xff] 0.0
          %290 = vst [vmem:[#allocation2 + $0xa8] sm:$0xff] 0.0
          %291 = vst [vmem:[#allocation2 + $0xb0] sm:$0xff] 0.0
          %292 = vst [vmem:[#allocation2 + $0xb8] sm:$0xff] 0.0
          %293 = vst [vmem:[#allocation2 + $0xc0] sm:$0xff] 0.0
          %294 = vst [vmem:[#allocation2 + $0xc8] sm:$0xff] 0.0
          %295 = vst [vmem:[#allocation2 + $0xd0] sm:$0xff] 0.0
          %296 = vst [vmem:[#allocation2 + $0xd8] sm:$0xff] 0.0
          %297 = vst [vmem:[#allocation2 + $0xe0] sm:$0xff] 0.0
          %298 = vst [vmem:[#allocation2 + $0xe8] sm:$0xff] 0.0
          %299 = vst [vmem:[#allocation2 + $0xf0] sm:$0xff] 0.0
          %300 = vst [vmem:[#allocation2 + $0xf8] sm:$0xff] 0.0
        $region40: #{_lambda_.22} parent=35 // pred_fallthru
          _
        %v301 = vld [vmem:[#allocation2] sm:$0xff]
        %v302 = vld [vmem:[#allocation2 + $0x8] sm:$0xff]
        %v303 = vld [vmem:[#allocation2 + $0x10] sm:$0xff]
        %v304 = vld [vmem:[#allocation2 + $0x18] sm:$0xff]
        %v305 = vld [vmem:[#allocation2 + $0x20] sm:$0xff]
        %v306 = vld [vmem:[#allocation2 + $0x28] sm:$0xff]
        %v307 = vld [vmem:[#allocation2 + $0x30] sm:$0xff]
        %v308 = vld [vmem:[#allocation2 + $0x38] sm:$0xff]
        %v309 = vld [vmem:[#allocation2 + $0x40] sm:$0xff]
        %v310 = vld [vmem:[#allocation2 + $0x48] sm:$0xff]
        %v311 = vld [vmem:[#allocation2 + $0x50] sm:$0xff]
        %v312 = vld [vmem:[#allocation2 + $0x58] sm:$0xff]
        %v313 = vld [vmem:[#allocation2 + $0x60] sm:$0xff]
        %v314 = vld [vmem:[#allocation2 + $0x68] sm:$0xff]
        %v315 = vld [vmem:[#allocation2 + $0x70] sm:$0xff]
        %v316 = vld [vmem:[#allocation2 + $0x78] sm:$0xff]
        %v317 = vld [vmem:[#allocation2 + $0x80] sm:$0xff]
        %v318 = vld [vmem:[#allocation2 + $0x88] sm:$0xff]
        %v319 = vld [vmem:[#allocation2 + $0x90] sm:$0xff]
        %v320 = vld [vmem:[#allocation2 + $0x98] sm:$0xff]
        %v321 = vld [vmem:[#allocation2 + $0xa0] sm:$0xff]
        %v322 = vld [vmem:[#allocation2 + $0xa8] sm:$0xff]
        %v323 = vld [vmem:[#allocation2 + $0xb0] sm:$0xff]
        %v324 = vld [vmem:[#allocation2 + $0xb8] sm:$0xff]
        %v325 = vld [vmem:[#allocation2 + $0xc0] sm:$0xff]
        %v326 = vld [vmem:[#allocation2 + $0xc8] sm:$0xff]
        %v327 = vld [vmem:[#allocation2 + $0xd0] sm:$0xff]
        %v328 = vld [vmem:[#allocation2 + $0xd8] sm:$0xff]
        %v329 = vld [vmem:[#allocation2 + $0xe0] sm:$0xff]
        %v330 = vld [vmem:[#allocation2 + $0xe8] sm:$0xff]
        %v331 = vld [vmem:[#allocation2 + $0xf0] sm:$0xff]
        %v332 = vld [vmem:[#allocation2 + $0xf8] sm:$0xff]
        %v333 = vld [vmem:[%s247] sm:$0xf]
        %v334 = vld [vmem:[%s247 + $0x4] sm:$0xf]
        %v335 = vld [vmem:[%s247 + $0x8] sm:$0xf]
        %v336 = vld [vmem:[%s247 + $0xc] sm:$0xf]
        %v337 = vld [vmem:[%s247 + $0x10] sm:$0xf]
        %v338 = vld [vmem:[%s247 + $0x14] sm:$0xf]
        %v339 = vld [vmem:[%s247 + $0x18] sm:$0xf]
        %v340 = vld [vmem:[%s247 + $0x1c] sm:$0xf]
        %v341 = vld [vmem:[%s247 + $0x20] sm:$0xf]
        %v342 = vld [vmem:[%s247 + $0x24] sm:$0xf]
        %v343 = vld [vmem:[%s247 + $0x28] sm:$0xf]
        %v344 = vld [vmem:[%s247 + $0x2c] sm:$0xf]
        %v345 = vld [vmem:[%s247 + $0x30] sm:$0xf]
        %v346 = vld [vmem:[%s247 + $0x34] sm:$0xf]
        %v347 = vld [vmem:[%s247 + $0x38] sm:$0xf]
        %v348 = vld [vmem:[%s247 + $0x3c] sm:$0xf]
        %v349 = vld [vmem:[%s247 + $0x40] sm:$0xf]
        %v350 = vld [vmem:[%s247 + $0x44] sm:$0xf]
        %v351 = vld [vmem:[%s247 + $0x48] sm:$0xf]
        %v352 = vld [vmem:[%s247 + $0x4c] sm:$0xf]
        %v353 = vld [vmem:[%s247 + $0x50] sm:$0xf]
        %v354 = vld [vmem:[%s247 + $0x54] sm:$0xf]
        %v355 = vld [vmem:[%s247 + $0x58] sm:$0xf]
        %v356 = vld [vmem:[%s247 + $0x5c] sm:$0xf]
        %v357 = vld [vmem:[%s247 + $0x60] sm:$0xf]
        %v358 = vld [vmem:[%s247 + $0x64] sm:$0xf]
        %v359 = vld [vmem:[%s247 + $0x68] sm:$0xf]
        %v360 = vld [vmem:[%s247 + $0x6c] sm:$0xf]
        %v361 = vld [vmem:[%s247 + $0x70] sm:$0xf]
        %v362 = vld [vmem:[%s247 + $0x74] sm:$0xf]
        %v363 = vld [vmem:[%s247 + $0x78] sm:$0xf]
        %v364 = vld [vmem:[%s247 + $0x7c] sm:$0xf]
        %v365 = vld [vmem:[%s257] sm:$0xf]
        %v366 = vld [vmem:[%s257 + $0x4] sm:$0xf]
        %v367 = vld [vmem:[%s257 + $0x8] sm:$0xf]
        %v368 = vld [vmem:[%s257 + $0xc] sm:$0xf]
        %v369 = vld [vmem:[%s257 + $0x10] sm:$0xf]
        %v370 = vld [vmem:[%s257 + $0x14] sm:$0xf]
        %v371 = vld [vmem:[%s257 + $0x18] sm:$0xf]
        %v372 = vld [vmem:[%s257 + $0x1c] sm:$0xf]
        %v373 = vld [vmem:[%s257 + $0x20] sm:$0xf]
        %v374 = vld [vmem:[%s257 + $0x24] sm:$0xf]
        %v375 = vld [vmem:[%s257 + $0x28] sm:$0xf]
        %v376 = vld [vmem:[%s257 + $0x2c] sm:$0xf]
        %v377 = vld [vmem:[%s257 + $0x30] sm:$0xf]
        %v378 = vld [vmem:[%s257 + $0x34] sm:$0xf]
        %v379 = vld [vmem:[%s257 + $0x38] sm:$0xf]
        %v380 = vld [vmem:[%s257 + $0x3c] sm:$0xf]
        %v413 = vunpack.c.l.b16 %v333
        %v414 = vunpack.c.l.b16 %v334
        %v415 = vunpack.c.l.b16 %v335
        %v416 = vunpack.c.l.b16 %v336
        %v417 = vunpack.c.l.b16 %v337
        %v418 = vunpack.c.l.b16 %v338
        %v419 = vunpack.c.l.b16 %v339
        %v420 = vunpack.c.l.b16 %v340
        %v421 = vunpack.c.l.b16 %v341
        %v422 = vunpack.c.l.b16 %v342
        %v423 = vunpack.c.l.b16 %v343
        %v424 = vunpack.c.l.b16 %v344
        %v425 = vunpack.c.l.b16 %v345
        %v426 = vunpack.c.l.b16 %v346
        %v427 = vunpack.c.l.b16 %v347
        %v428 = vunpack.c.l.b16 %v348
        %v429 = vunpack.c.l.b16 %v349
        %v430 = vunpack.c.l.b16 %v350
        %v431 = vunpack.c.l.b16 %v351
        %v432 = vunpack.c.l.b16 %v352
        %v433 = vunpack.c.l.b16 %v353
        %v434 = vunpack.c.l.b16 %v354
        %v435 = vunpack.c.l.b16 %v355
        %v436 = vunpack.c.l.b16 %v356
        %v437 = vunpack.c.l.b16 %v357
        %v438 = vunpack.c.l.b16 %v358
        %v439 = vunpack.c.l.b16 %v359
        %v440 = vunpack.c.l.b16 %v360
        %v441 = vunpack.c.l.b16 %v361
        %v442 = vunpack.c.l.b16 %v362
        %v443 = vunpack.c.l.b16 %v363
        %v444 = vunpack.c.l.b16 %v364
        %v445 = vpack.c.b16 %v414, %v413
        %v446 = vpack.c.b16 %v416, %v415
        %v447 = vpack.c.b16 %v418, %v417
        %v448 = vpack.c.b16 %v420, %v419
        %v449 = vpack.c.b16 %v422, %v421
        %v450 = vpack.c.b16 %v424, %v423
        %v451 = vpack.c.b16 %v426, %v425
        %v452 = vpack.c.b16 %v428, %v427
        %v453 = vpack.c.b16 %v430, %v429
        %v454 = vpack.c.b16 %v432, %v431
        %v455 = vpack.c.b16 %v434, %v433
        %v456 = vpack.c.b16 %v436, %v435
        %v457 = vpack.c.b16 %v438, %v437
        %v458 = vpack.c.b16 %v440, %v439
        %v459 = vpack.c.b16 %v442, %v441
        %v460 = vpack.c.b16 %v444, %v443
        %v493 = vunpack.c.l.b16 %v365
        %v494 = vunpack.c.l.b16 %v366
        %v495 = vunpack.c.l.b16 %v367
        %v496 = vunpack.c.l.b16 %v368
        %v497 = vunpack.c.l.b16 %v369
        %v498 = vunpack.c.l.b16 %v370
        %v499 = vunpack.c.l.b16 %v371
        %v500 = vunpack.c.l.b16 %v372
        %v501 = vunpack.c.l.b16 %v373
        %v502 = vunpack.c.l.b16 %v374
        %v503 = vunpack.c.l.b16 %v375
        %v504 = vunpack.c.l.b16 %v376
        %v505 = vunpack.c.l.b16 %v377
        %v506 = vunpack.c.l.b16 %v378
        %v507 = vunpack.c.l.b16 %v379
        %v508 = vunpack.c.l.b16 %v380
        %v509 = vpack.c.b16 %v494, %v493
        %v510 = vpack.c.b16 %v496, %v495
        %v511 = vpack.c.b16 %v498, %v497
        %v512 = vpack.c.b16 %v500, %v499
        %v513 = vpack.c.b16 %v502, %v501
        %v514 = vpack.c.b16 %v504, %v503
        %v515 = vpack.c.b16 %v506, %v505
        %v516 = vpack.c.b16 %v508, %v507
        %525 = vmatprep.subr.bf16.mxu0 0
        %526 = vmatpush1.bf16.msra.mxu0 %v516
        %527 = vmatprep.subr.bf16.mxu0 0
        %528 = vmatpush1.bf16.msra.mxu0 %v515
        %529 = vmatprep.subr.bf16.mxu0 0
        %530 = vmatpush1.bf16.msra.mxu0 %v514
        %531 = vmatprep.subr.bf16.mxu0 0
        %532 = vmatpush1.bf16.msra.mxu0 %v513
        %533 = vmatprep.subr.bf16.mxu0 0
        %534 = vmatpush1.bf16.msra.mxu0 %v512
        %535 = vmatprep.subr.bf16.mxu0 0
        %536 = vmatpush1.bf16.msra.mxu0 %v511
        %537 = vmatprep.subr.bf16.mxu0 0
        %538 = vmatpush1.bf16.msra.mxu0 %v510
        %539 = vmatprep.subr.bf16.mxu0 0
        %540 = vmatpush1.bf16.msra.mxu0 %v509
        %541 = vmatprep.subr.bf16.mxu0 0
        %542 = vmatpush2.bf16.msra.mxu0 0
        %543 = vmatprep.subr.bf16.mxu0 0
        %544 = vmatpush2.bf16.msra.mxu0 0
        %545 = vmatprep.subr.bf16.mxu0 0
        %546 = vmatpush2.bf16.msra.mxu0 0
        %547 = vmatprep.subr.bf16.mxu0 0
        %548 = vmatpush2.bf16.msra.mxu0 0
        %549 = vmatprep.subr.bf16.mxu0 0
        %550 = vmatpush2.bf16.msra.mxu0 0
        %551 = vmatprep.subr.bf16.mxu0 0
        %552 = vmatpush2.bf16.msra.mxu0 0
        %553 = vmatprep.subr.bf16.mxu0 0
        %554 = vmatpush2.bf16.msra.mxu0 0
        %555 = vmatprep.subr.bf16.mxu0 0
        %556 = vmatpush2.bf16.msra.mxu0 0
        %557 = vmatprep.mubr.bf16.mxu0 0
        %558 = vmatmul.mubr.bf16.gmra.mxu0 %v445
        %v559 = vpop.f32.mrf.mxu0
        %v560 = vadd.f32 0.0, %v559
        %v561 = vpop.f32.mrf.mxu0
        %v562 = vpop.f32.mrf.mxu0
        %v563 = vadd.f32 0.0, %v562
        %v564 = vpop.f32.mrf.mxu0
        %565 = vmatprep.mubr.bf16.mxu0 0
        %566 = vmatmul.mubr.bf16.gmra.mxu0 %v446
        %v567 = vpop.f32.mrf.mxu0
        %v568 = vadd.f32 0.0, %v567
        %v569 = vpop.f32.mrf.mxu0
        %v570 = vpop.f32.mrf.mxu0
        %v571 = vadd.f32 0.0, %v570
        %v572 = vpop.f32.mrf.mxu0
        %573 = vmatprep.mubr.bf16.mxu0 0
        %574 = vmatmul.mubr.bf16.gmra.mxu0 %v447
        %v575 = vpop.f32.mrf.mxu0
        %v576 = vadd.f32 0.0, %v575
        %v577 = vpop.f32.mrf.mxu0
        %v578 = vpop.f32.mrf.mxu0
        %v579 = vadd.f32 0.0, %v578
        %v580 = vpop.f32.mrf.mxu0
        %581 = vmatprep.mubr.bf16.mxu0 0
        %582 = vmatmul.mubr.bf16.gmra.mxu0 %v448
        %v583 = vpop.f32.mrf.mxu0
        %v584 = vadd.f32 0.0, %v583
        %v585 = vpop.f32.mrf.mxu0
        %v586 = vpop.f32.mrf.mxu0
        %v587 = vadd.f32 0.0, %v586
        %v588 = vpop.f32.mrf.mxu0
        %589 = vmatprep.mubr.bf16.mxu0 0
        %590 = vmatmul.mubr.bf16.gmra.mxu0 %v449
        %v591 = vpop.f32.mrf.mxu0
        %v592 = vadd.f32 0.0, %v591
        %v593 = vpop.f32.mrf.mxu0
        %v594 = vpop.f32.mrf.mxu0
        %v595 = vadd.f32 0.0, %v594
        %v596 = vpop.f32.mrf.mxu0
        %597 = vmatprep.mubr.bf16.mxu0 0
        %598 = vmatmul.mubr.bf16.gmra.mxu0 %v450
        %v599 = vpop.f32.mrf.mxu0
        %v600 = vadd.f32 0.0, %v599
        %v601 = vpop.f32.mrf.mxu0
        %v602 = vpop.f32.mrf.mxu0
        %v603 = vadd.f32 0.0, %v602
        %v604 = vpop.f32.mrf.mxu0
        %605 = vmatprep.mubr.bf16.mxu0 0
        %606 = vmatmul.mubr.bf16.gmra.mxu0 %v451
        %v607 = vpop.f32.mrf.mxu0
        %v608 = vadd.f32 0.0, %v607
        %v609 = vpop.f32.mrf.mxu0
        %v610 = vpop.f32.mrf.mxu0
        %v611 = vadd.f32 0.0, %v610
        %v612 = vpop.f32.mrf.mxu0
        %613 = vmatprep.mubr.bf16.mxu0 0
        %614 = vmatmul.mubr.bf16.gmra.mxu0 %v452
        %v615 = vpop.f32.mrf.mxu0
        %v616 = vadd.f32 0.0, %v615
        %v617 = vpop.f32.mrf.mxu0
        %v618 = vpop.f32.mrf.mxu0
        %v619 = vadd.f32 0.0, %v618
        %v620 = vpop.f32.mrf.mxu0
        %621 = vmatprep.mubr.bf16.mxu0 0
        %622 = vmatmul.mubr.bf16.gmra.mxu0 %v453
        %v623 = vpop.f32.mrf.mxu0
        %v624 = vadd.f32 0.0, %v623
        %v625 = vpop.f32.mrf.mxu0
        %v626 = vpop.f32.mrf.mxu0
        %v627 = vadd.f32 0.0, %v626
        %v628 = vpop.f32.mrf.mxu0
        %629 = vmatprep.mubr.bf16.mxu0 0
        %630 = vmatmul.mubr.bf16.gmra.mxu0 %v454
        %v631 = vpop.f32.mrf.mxu0
        %v632 = vadd.f32 0.0, %v631
        %v633 = vpop.f32.mrf.mxu0
        %v634 = vpop.f32.mrf.mxu0
        %v635 = vadd.f32 0.0, %v634
        %v636 = vpop.f32.mrf.mxu0
        %637 = vmatprep.mubr.bf16.mxu0 0
        %638 = vmatmul.mubr.bf16.gmra.mxu0 %v455
        %v639 = vpop.f32.mrf.mxu0
        %v640 = vadd.f32 0.0, %v639
        %v641 = vpop.f32.mrf.mxu0
        %v642 = vpop.f32.mrf.mxu0
        %v643 = vadd.f32 0.0, %v642
        %v644 = vpop.f32.mrf.mxu0
        %645 = vmatprep.mubr.bf16.mxu0 0
        %646 = vmatmul.mubr.bf16.gmra.mxu0 %v456
        %v647 = vpop.f32.mrf.mxu0
        %v648 = vadd.f32 0.0, %v647
        %v649 = vpop.f32.mrf.mxu0
        %v650 = vpop.f32.mrf.mxu0
        %v651 = vadd.f32 0.0, %v650
        %v652 = vpop.f32.mrf.mxu0
        %653 = vmatprep.mubr.bf16.mxu0 0
        %654 = vmatmul.mubr.bf16.gmra.mxu0 %v457
        %v655 = vpop.f32.mrf.mxu0
        %v656 = vadd.f32 0.0, %v655
        %v657 = vpop.f32.mrf.mxu0
        %v658 = vpop.f32.mrf.mxu0
        %v659 = vadd.f32 0.0, %v658
        %v660 = vpop.f32.mrf.mxu0
        %661 = vmatprep.mubr.bf16.mxu0 0
        %662 = vmatmul.mubr.bf16.gmra.mxu0 %v458
        %v663 = vpop.f32.mrf.mxu0
        %v664 = vadd.f32 0.0, %v663
        %v665 = vpop.f32.mrf.mxu0
        %v666 = vpop.f32.mrf.mxu0
        %v667 = vadd.f32 0.0, %v666
        %v668 = vpop.f32.mrf.mxu0
        %669 = vmatprep.mubr.bf16.mxu0 0
        %670 = vmatmul.mubr.bf16.gmra.mxu0 %v459
        %v671 = vpop.f32.mrf.mxu0
        %v672 = vadd.f32 0.0, %v671
        %v673 = vpop.f32.mrf.mxu0
        %v674 = vpop.f32.mrf.mxu0
        %v675 = vadd.f32 0.0, %v674
        %v676 = vpop.f32.mrf.mxu0
        %677 = vmatprep.mubr.bf16.mxu0 0
        %678 = vmatmul.mubr.bf16.gmra.mxu0 %v460
        %v679 = vpop.f32.mrf.mxu0
        %v680 = vadd.f32 0.0, %v679
        %v681 = vpop.f32.mrf.mxu0
        %v682 = vpop.f32.mrf.mxu0
        %v683 = vadd.f32 0.0, %v682
        %v684 = vpop.f32.mrf.mxu0
        %685 = vdwg.mxu0
        %v686 = vadd.f32 %v301, %v560
        %v687 = vadd.f32 %v302, %v563
        %v688 = vadd.f32 %v303, %v568
        %v689 = vadd.f32 %v304, %v571
        %v690 = vadd.f32 %v305, %v576
        %v691 = vadd.f32 %v306, %v579
        %v692 = vadd.f32 %v307, %v584
        %v693 = vadd.f32 %v308, %v587
        %v694 = vadd.f32 %v309, %v592
        %v695 = vadd.f32 %v310, %v595
        %v696 = vadd.f32 %v311, %v600
        %v697 = vadd.f32 %v312, %v603
        %v698 = vadd.f32 %v313, %v608
        %v699 = vadd.f32 %v314, %v611
        %v700 = vadd.f32 %v315, %v616
        %v701 = vadd.f32 %v316, %v619
        %v702 = vadd.f32 %v317, %v624
        %v703 = vadd.f32 %v318, %v627
        %v704 = vadd.f32 %v319, %v632
        %v705 = vadd.f32 %v320, %v635
        %v706 = vadd.f32 %v321, %v640
        %v707 = vadd.f32 %v322, %v643
        %v708 = vadd.f32 %v323, %v648
        %v709 = vadd.f32 %v324, %v651
        %v710 = vadd.f32 %v325, %v656
        %v711 = vadd.f32 %v326, %v659
        %v712 = vadd.f32 %v327, %v664
        %v713 = vadd.f32 %v328, %v667
        %v714 = vadd.f32 %v329, %v672
        %v715 = vadd.f32 %v330, %v675
        %v716 = vadd.f32 %v331, %v680
        %v717 = vadd.f32 %v332, %v683
        %718 = vst [vmem:[#allocation2] sm:$0xff] %v686
        %719 = vst [vmem:[#allocation2 + $0x8] sm:$0xff] %v687
        %720 = vst [vmem:[#allocation2 + $0x10] sm:$0xff] %v688
        %721 = vst [vmem:[#allocation2 + $0x18] sm:$0xff] %v689
        %722 = vst [vmem:[#allocation2 + $0x20] sm:$0xff] %v690
        %723 = vst [vmem:[#allocation2 + $0x28] sm:$0xff] %v691
        %724 = vst [vmem:[#allocation2 + $0x30] sm:$0xff] %v692
        %725 = vst [vmem:[#allocation2 + $0x38] sm:$0xff] %v693
        %726 = vst [vmem:[#allocation2 + $0x40] sm:$0xff] %v694
        %727 = vst [vmem:[#allocation2 + $0x48] sm:$0xff] %v695
        %728 = vst [vmem:[#allocation2 + $0x50] sm:$0xff] %v696
        %729 = vst [vmem:[#allocation2 + $0x58] sm:$0xff] %v697
        %730 = vst [vmem:[#allocation2 + $0x60] sm:$0xff] %v698
        %731 = vst [vmem:[#allocation2 + $0x68] sm:$0xff] %v699
        %732 = vst [vmem:[#allocation2 + $0x70] sm:$0xff] %v700
        %733 = vst [vmem:[#allocation2 + $0x78] sm:$0xff] %v701
        %734 = vst [vmem:[#allocation2 + $0x80] sm:$0xff] %v702
        %735 = vst [vmem:[#allocation2 + $0x88] sm:$0xff] %v703
        %736 = vst [vmem:[#allocation2 + $0x90] sm:$0xff] %v704
        %737 = vst [vmem:[#allocation2 + $0x98] sm:$0xff] %v705
        %738 = vst [vmem:[#allocation2 + $0xa0] sm:$0xff] %v706
        %739 = vst [vmem:[#allocation2 + $0xa8] sm:$0xff] %v707
        %740 = vst [vmem:[#allocation2 + $0xb0] sm:$0xff] %v708
        %741 = vst [vmem:[#allocation2 + $0xb8] sm:$0xff] %v709
        %742 = vst [vmem:[#allocation2 + $0xc0] sm:$0xff] %v710
        %743 = vst [vmem:[#allocation2 + $0xc8] sm:$0xff] %v711
        %744 = vst [vmem:[#allocation2 + $0xd0] sm:$0xff] %v712
        %745 = vst [vmem:[#allocation2 + $0xd8] sm:$0xff] %v713
        %746 = vst [vmem:[#allocation2 + $0xe0] sm:$0xff] %v714
        %747 = vst [vmem:[#allocation2 + $0xe8] sm:$0xff] %v715
        %748 = vst [vmem:[#allocation2 + $0xf0] sm:$0xff] %v716
        %749 = vst [vmem:[#allocation2 + $0xf8] sm:$0xff] %v717
        // Predicated region
        $region41: #{_lambda_.22} parent=35 // pred_check
          %p750 = pneg %p265
        $region42: #{_lambda_.22} parent=35 // pred_check_branch
          %752 = sbr.rel (%p750) target = $region44
        $region43: #{_lambda_.22} parent=35 // pred_region
          %v753 = vld [vmem:[#allocation2] sm:$0xff]
          %v754 = vld [vmem:[#allocation2 + $0x8] sm:$0xff]
          %v755 = vld [vmem:[#allocation2 + $0x10] sm:$0xff]
          %v756 = vld [vmem:[#allocation2 + $0x18] sm:$0xff]
          %v757 = vld [vmem:[#allocation2 + $0x20] sm:$0xff]
          %v758 = vld [vmem:[#allocation2 + $0x28] sm:$0xff]
          %v759 = vld [vmem:[#allocation2 + $0x30] sm:$0xff]
          %v760 = vld [vmem:[#allocation2 + $0x38] sm:$0xff]
          %v761 = vld [vmem:[#allocation2 + $0x40] sm:$0xff]
          %v762 = vld [vmem:[#allocation2 + $0x48] sm:$0xff]
          %v763 = vld [vmem:[#allocation2 + $0x50] sm:$0xff]
          %v764 = vld [vmem:[#allocation2 + $0x58] sm:$0xff]
          %v765 = vld [vmem:[#allocation2 + $0x60] sm:$0xff]
          %v766 = vld [vmem:[#allocation2 + $0x68] sm:$0xff]
          %v767 = vld [vmem:[#allocation2 + $0x70] sm:$0xff]
          %v768 = vld [vmem:[#allocation2 + $0x78] sm:$0xff]
          %v769 = vld [vmem:[#allocation2 + $0x80] sm:$0xff]
          %v770 = vld [vmem:[#allocation2 + $0x88] sm:$0xff]
          %v771 = vld [vmem:[#allocation2 + $0x90] sm:$0xff]
          %v772 = vld [vmem:[#allocation2 + $0x98] sm:$0xff]
          %v773 = vld [vmem:[#allocation2 + $0xa0] sm:$0xff]
          %v774 = vld [vmem:[#allocation2 + $0xa8] sm:$0xff]
          %v775 = vld [vmem:[#allocation2 + $0xb0] sm:$0xff]
          %v776 = vld [vmem:[#allocation2 + $0xb8] sm:$0xff]
          %v777 = vld [vmem:[#allocation2 + $0xc0] sm:$0xff]
          %v778 = vld [vmem:[#allocation2 + $0xc8] sm:$0xff]
          %v779 = vld [vmem:[#allocation2 + $0xd0] sm:$0xff]
          %v780 = vld [vmem:[#allocation2 + $0xd8] sm:$0xff]
          %v781 = vld [vmem:[#allocation2 + $0xe0] sm:$0xff]
          %v782 = vld [vmem:[#allocation2 + $0xe8] sm:$0xff]
          %v783 = vld [vmem:[#allocation2 + $0xf0] sm:$0xff]
          %v784 = vld [vmem:[#allocation2 + $0xf8] sm:$0xff]
          %v785 = vld [vmem:[%s2] sm:$0x1]
          %v787 = vlaneseq
          %v788 = vshrl.u32 %v787, 7
          %v789 = vsub.s32 0, %v788
          %v790 = vrot.slane %v785, %v789
          %v792 = vmul.f32 %v753, %v790
          %v793 = vmul.f32 %v754, %v790
          %v794 = vmul.f32 %v755, %v790
          %v795 = vmul.f32 %v756, %v790
          %v796 = vmul.f32 %v757, %v790
          %v797 = vmul.f32 %v758, %v790
          %v798 = vmul.f32 %v759, %v790
          %v799 = vmul.f32 %v760, %v790
          %v800 = vmul.f32 %v761, %v790
          %v801 = vmul.f32 %v762, %v790
          %v802 = vmul.f32 %v763, %v790
          %v803 = vmul.f32 %v764, %v790
          %v804 = vmul.f32 %v765, %v790
          %v805 = vmul.f32 %v766, %v790
          %v806 = vmul.f32 %v767, %v790
          %v807 = vmul.f32 %v768, %v790
          %v808 = vmul.f32 %v769, %v790
          %v809 = vmul.f32 %v770, %v790
          %v810 = vmul.f32 %v771, %v790
          %v811 = vmul.f32 %v772, %v790
          %v812 = vmul.f32 %v773, %v790
          %v813 = vmul.f32 %v774, %v790
          %v814 = vmul.f32 %v775, %v790
          %v815 = vmul.f32 %v776, %v790
          %v816 = vmul.f32 %v777, %v790
          %v817 = vmul.f32 %v778, %v790
          %v818 = vmul.f32 %v779, %v790
          %v819 = vmul.f32 %v780, %v790
          %v820 = vmul.f32 %v781, %v790
          %v821 = vmul.f32 %v782, %v790
          %v822 = vmul.f32 %v783, %v790
          %v823 = vmul.f32 %v784, %v790
          %v824 = vld [vmem:[%s3] sm:$0x1]
          %v826 = vlaneseq
          %v827 = vshrl.u32 %v826, 7
          %v828 = vsub.s32 0, %v827
          %v829 = vrot.slane %v824, %v828
          %v831 = vadd.f32 %v792, %v829
          %v832 = vadd.f32 %v793, %v829
          %v833 = vadd.f32 %v794, %v829
          %v834 = vadd.f32 %v795, %v829
          %v835 = vadd.f32 %v796, %v829
          %v836 = vadd.f32 %v797, %v829
          %v837 = vadd.f32 %v798, %v829
          %v838 = vadd.f32 %v799, %v829
          %v839 = vadd.f32 %v800, %v829
          %v840 = vadd.f32 %v801, %v829
          %v841 = vadd.f32 %v802, %v829
          %v842 = vadd.f32 %v803, %v829
          %v843 = vadd.f32 %v804, %v829
          %v844 = vadd.f32 %v805, %v829
          %v845 = vadd.f32 %v806, %v829
          %v846 = vadd.f32 %v807, %v829
          %v847 = vadd.f32 %v808, %v829
          %v848 = vadd.f32 %v809, %v829
          %v849 = vadd.f32 %v810, %v829
          %v850 = vadd.f32 %v811, %v829
          %v851 = vadd.f32 %v812, %v829
          %v852 = vadd.f32 %v813, %v829
          %v853 = vadd.f32 %v814, %v829
          %v854 = vadd.f32 %v815, %v829
          %v855 = vadd.f32 %v816, %v829
          %v856 = vadd.f32 %v817, %v829
          %v857 = vadd.f32 %v818, %v829
          %v858 = vadd.f32 %v819, %v829
          %v859 = vadd.f32 %v820, %v829
          %v860 = vadd.f32 %v821, %v829
          %v861 = vadd.f32 %v822, %v829
          %v862 = vadd.f32 %v823, %v829
          %863 = vst [vmem:[%s235] sm:$0xff] %v831
          %864 = vst [vmem:[%s235 + $0x8] sm:$0xff] %v832
          %865 = vst [vmem:[%s235 + $0x10] sm:$0xff] %v833
          %866 = vst [vmem:[%s235 + $0x18] sm:$0xff] %v834
          %867 = vst [vmem:[%s235 + $0x20] sm:$0xff] %v835
          %868 = vst [vmem:[%s235 + $0x28] sm:$0xff] %v836
          %869 = vst [vmem:[%s235 + $0x30] sm:$0xff] %v837
          %870 = vst [vmem:[%s235 + $0x38] sm:$0xff] %v838
          %871 = vst [vmem:[%s235 + $0x40] sm:$0xff] %v839
          %872 = vst [vmem:[%s235 + $0x48] sm:$0xff] %v840
          %873 = vst [vmem:[%s235 + $0x50] sm:$0xff] %v841
          %874 = vst [vmem:[%s235 + $0x58] sm:$0xff] %v842
          %875 = vst [vmem:[%s235 + $0x60] sm:$0xff] %v843
          %876 = vst [vmem:[%s235 + $0x68] sm:$0xff] %v844
          %877 = vst [vmem:[%s235 + $0x70] sm:$0xff] %v845
          %878 = vst [vmem:[%s235 + $0x78] sm:$0xff] %v846
          %879 = vst [vmem:[%s235 + $0x80] sm:$0xff] %v847
          %880 = vst [vmem:[%s235 + $0x88] sm:$0xff] %v848
          %881 = vst [vmem:[%s235 + $0x90] sm:$0xff] %v849
          %882 = vst [vmem:[%s235 + $0x98] sm:$0xff] %v850
          %883 = vst [vmem:[%s235 + $0xa0] sm:$0xff] %v851
          %884 = vst [vmem:[%s235 + $0xa8] sm:$0xff] %v852
          %885 = vst [vmem:[%s235 + $0xb0] sm:$0xff] %v853
          %886 = vst [vmem:[%s235 + $0xb8] sm:$0xff] %v854
          %887 = vst [vmem:[%s235 + $0xc0] sm:$0xff] %v855
          %888 = vst [vmem:[%s235 + $0xc8] sm:$0xff] %v856
          %889 = vst [vmem:[%s235 + $0xd0] sm:$0xff] %v857
          %890 = vst [vmem:[%s235 + $0xd8] sm:$0xff] %v858
          %891 = vst [vmem:[%s235 + $0xe0] sm:$0xff] %v859
          %892 = vst [vmem:[%s235 + $0xe8] sm:$0xff] %v860
          %893 = vst [vmem:[%s235 + $0xf0] sm:$0xff] %v861
          %894 = vst [vmem:[%s235 + $0xf8] sm:$0xff] %v862
        $region44: #{_lambda_.22} parent=35 // pred_fallthru
          _
        %s895 = sand.u32 %s131, 1
        %s896 = sand.u32 %s131, 1
        %s897 = smul.addr %s896, 256
        %s898 = scalar_lea.vmem [#allocation3], %s897
        // Predicated region
        $region45: #{_lambda_.22} parent=35 // pred_check
          %p899 = pneg %p141
        $region46: #{_lambda_.22} parent=35 // pred_check_branch
          %901 = sbr.rel (%p899) target = $region48
        $region47: #{_lambda_.22} parent=35 // pred_region
          %s902 = smul.u32 32, %s19
          %s903 = ssub.s32 73, %s902
          %p904 = scmp.lt.s32.totalorder %s903, 32
          %s905 = scalar_select %p904, %s903, 32
          %s906 = smul.u32 128, %s905
          %p907 = scmp.ne.s32.totalorder 0, %s906
          %s908 = smul.addr %s902, 8
          %s909 = scalar_lea.vmem %s4, %s908
          // Predicated region
          $region49: #{_lambda_.22} parent=47 // pred_check
            %p910 = pneg %p907
          $region50: #{_lambda_.22} parent=47 // pred_check_branch
            %912 = sbr.rel (%p910) target = $region52
          $region51: #{_lambda_.22} parent=47 // pred_region
            // Predicated region
            $region53: #{_lambda_.22} parent=51 // pred_check
              _
            $region54: #{_lambda_.22} parent=51 // pred_check_branch
              %914 = sbr.rel (0) target = $region56
            $region55: #{_lambda_.22} parent=51 // pred_region
              // Predicated region
              $region75: #{_lambda_.22} parent=55 // pred_check
                _
              $region76: #{_lambda_.22} parent=55 // pred_check_branch
                %1026 = sbr.rel (0) target = $region78
              $region77: #{_lambda_.22} parent=55 // pred_region
                %s1027 = sshrl.u32 %s905, 5
                // While loop
                $region79: #{_lambda_.22} parent=77 // loop_pre_header
                  _
                $region80: #{_lambda_.22} parent=77 // loop_header
                  %s1029 = sphi 0, %s1031
                  %p1030 = scmp.ge.s32.totalorder %s1029, %s1027
                  %s1034 = sphi 0, %s1103
                  %s1035 = sphi %s898, %s1106
                  %s1036 = sphi %s909, %s1107
                $region81: #{_lambda_.22} parent=77 // loop_header_branch
                  %1033 = sbr.rel (%p1030) target = $region85
                $region82: #{_lambda_.22} parent=77 // loop_body
                  %v1037 = vld [vmem:[%s1035] sm:$0xff]
                  %1038 = vst [vmem:[%s1036] sm:$0xff] %v1037
                  %v1039 = vld [vmem:[%s1035 + $0x8] sm:$0xff]
                  %1040 = vst [vmem:[%s1036 + $0x8] sm:$0xff] %v1039
                  %v1041 = vld [vmem:[%s1035 + $0x10] sm:$0xff]
                  %1042 = vst [vmem:[%s1036 + $0x10] sm:$0xff] %v1041
                  %v1043 = vld [vmem:[%s1035 + $0x18] sm:$0xff]
                  %1044 = vst [vmem:[%s1036 + $0x18] sm:$0xff] %v1043
                  %v1045 = vld [vmem:[%s1035 + $0x20] sm:$0xff]
                  %1046 = vst [vmem:[%s1036 + $0x20] sm:$0xff] %v1045
                  %v1047 = vld [vmem:[%s1035 + $0x28] sm:$0xff]
                  %1048 = vst [vmem:[%s1036 + $0x28] sm:$0xff] %v1047
                  %v1049 = vld [vmem:[%s1035 + $0x30] sm:$0xff]
                  %1050 = vst [vmem:[%s1036 + $0x30] sm:$0xff] %v1049
                  %v1051 = vld [vmem:[%s1035 + $0x38] sm:$0xff]
                  %1052 = vst [vmem:[%s1036 + $0x38] sm:$0xff] %v1051
                  %v1053 = vld [vmem:[%s1035 + $0x40] sm:$0xff]
                  %1054 = vst [vmem:[%s1036 + $0x40] sm:$0xff] %v1053
                  %v1055 = vld [vmem:[%s1035 + $0x48] sm:$0xff]
                  %1056 = vst [vmem:[%s1036 + $0x48] sm:$0xff] %v1055
                  %v1057 = vld [vmem:[%s1035 + $0x50] sm:$0xff]
                  %1058 = vst [vmem:[%s1036 + $0x50] sm:$0xff] %v1057
                  %v1059 = vld [vmem:[%s1035 + $0x58] sm:$0xff]
                  %1060 = vst [vmem:[%s1036 + $0x58] sm:$0xff] %v1059
                  %v1061 = vld [vmem:[%s1035 + $0x60] sm:$0xff]
                  %1062 = vst [vmem:[%s1036 + $0x60] sm:$0xff] %v1061
                  %v1063 = vld [vmem:[%s1035 + $0x68] sm:$0xff]
                  %1064 = vst [vmem:[%s1036 + $0x68] sm:$0xff] %v1063
                  %v1065 = vld [vmem:[%s1035 + $0x70] sm:$0xff]
                  %1066 = vst [vmem:[%s1036 + $0x70] sm:$0xff] %v1065
                  %v1067 = vld [vmem:[%s1035 + $0x78] sm:$0xff]
                  %1068 = vst [vmem:[%s1036 + $0x78] sm:$0xff] %v1067
                  %v1069 = vld [vmem:[%s1035 + $0x80] sm:$0xff]
                  %1070 = vst [vmem:[%s1036 + $0x80] sm:$0xff] %v1069
                  %v1071 = vld [vmem:[%s1035 + $0x88] sm:$0xff]
                  %1072 = vst [vmem:[%s1036 + $0x88] sm:$0xff] %v1071
                  %v1073 = vld [vmem:[%s1035 + $0x90] sm:$0xff]
                  %1074 = vst [vmem:[%s1036 + $0x90] sm:$0xff] %v1073
                  %v1075 = vld [vmem:[%s1035 + $0x98] sm:$0xff]
                  %1076 = vst [vmem:[%s1036 + $0x98] sm:$0xff] %v1075
                  %v1077 = vld [vmem:[%s1035 + $0xa0] sm:$0xff]
                  %1078 = vst [vmem:[%s1036 + $0xa0] sm:$0xff] %v1077
                  %v1079 = vld [vmem:[%s1035 + $0xa8] sm:$0xff]
                  %1080 = vst [vmem:[%s1036 + $0xa8] sm:$0xff] %v1079
                  %v1081 = vld [vmem:[%s1035 + $0xb0] sm:$0xff]
                  %1082 = vst [vmem:[%s1036 + $0xb0] sm:$0xff] %v1081
                  %v1083 = vld [vmem:[%s1035 + $0xb8] sm:$0xff]
                  %1084 = vst [vmem:[%s1036 + $0xb8] sm:$0xff] %v1083
                  %v1085 = vld [vmem:[%s1035 + $0xc0] sm:$0xff]
                  %1086 = vst [vmem:[%s1036 + $0xc0] sm:$0xff] %v1085
                  %v1087 = vld [vmem:[%s1035 + $0xc8] sm:$0xff]
                  %1088 = vst [vmem:[%s1036 + $0xc8] sm:$0xff] %v1087
                  %v1089 = vld [vmem:[%s1035 + $0xd0] sm:$0xff]
                  %1090 = vst [vmem:[%s1036 + $0xd0] sm:$0xff] %v1089
                  %v1091 = vld [vmem:[%s1035 + $0xd8] sm:$0xff]
                  %1092 = vst [vmem:[%s1036 + $0xd8] sm:$0xff] %v1091
                  %v1093 = vld [vmem:[%s1035 + $0xe0] sm:$0xff]
                  %1094 = vst [vmem:[%s1036 + $0xe0] sm:$0xff] %v1093
                  %v1095 = vld [vmem:[%s1035 + $0xe8] sm:$0xff]
                  %1096 = vst [vmem:[%s1036 + $0xe8] sm:$0xff] %v1095
                  %v1097 = vld [vmem:[%s1035 + $0xf0] sm:$0xff]
                  %1098 = vst [vmem:[%s1036 + $0xf0] sm:$0xff] %v1097
                  %v1099 = vld [vmem:[%s1035 + $0xf8] sm:$0xff]
                  %1100 = vst [vmem:[%s1036 + $0xf8] sm:$0xff] %v1099
                  %s1101 = sadd.s32 1, %s1034
                  %p1102 = scmp.ge.s32.totalorder %s1101, %s1027
                  %s1103 = scalar_select %p1102, 0, %s1101
                  %s1104 = smul.u32 %s1103, 256
                  %s1105 = smul.u32 %s1103, 256
                  %s1106 = scalar_lea.vmem %s898, %s1104 [#allocation3]
                  %s1107 = scalar_lea.vmem %s909, %s1105
                $region83: #{_lambda_.22} parent=77 // loop_footer
                  %s1031 = sadd.s32 %s1029, 1
                $region84: #{_lambda_.22} parent=77 // loop_footer_branch
                  %1028 = sbr.rel target = $region80
                $region85: #{_lambda_.22} parent=77 // loop_exit
                  _
                %s1108 = sshrl.u32 %s905, 5
                %s1109 = sand.u32 %s905, 31
                %s1110 = smul.u32 %s1108, 32
                %s1111 = smul.u32 8, %s1110
                %s1112 = scalar_lea.vmem %s898, %s1111 [#allocation3]
                %s1113 = smul.u32 8, %s1110
                %s1114 = scalar_lea.vmem %s909, %s1113
                // While loop
                $region86: #{_lambda_.22} parent=77 // loop_pre_header
                  _
                $region87: #{_lambda_.22} parent=77 // loop_header
                  %s1116 = sphi 0, %s1118
                  %p1117 = scmp.ge.s32.totalorder %s1116, %s1109
                  %s1121 = sphi 0, %s1128
                  %s1122 = sphi %s1112, %s1131
                  %s1123 = sphi %s1114, %s1132
                $region88: #{_lambda_.22} parent=77 // loop_header_branch
                  %1120 = sbr.rel (%p1117) target = $region92
                $region89: #{_lambda_.22} parent=77 // loop_body
                  %v1124 = vld [vmem:[%s1122] sm:$0xff]
                  %1125 = vst [vmem:[%s1123] sm:$0xff] %v1124
                  %s1126 = sadd.s32 1, %s1121
                  %p1127 = scmp.ge.s32.totalorder %s1126, %s1109
                  %s1128 = scalar_select %p1127, 0, %s1126
                  %s1129 = smul.u32 %s1128, 8
                  %s1130 = smul.u32 %s1128, 8
                  %s1131 = scalar_lea.vmem %s1112, %s1129 [#allocation3]
                  %s1132 = scalar_lea.vmem %s1114, %s1130
                $region90: #{_lambda_.22} parent=77 // loop_footer
                  %s1118 = sadd.s32 %s1116, 1
                $region91: #{_lambda_.22} parent=77 // loop_footer_branch
                  %1115 = sbr.rel target = $region87
                $region92: #{_lambda_.22} parent=77 // loop_exit
                  _
              $region78: #{_lambda_.22} parent=55 // pred_fallthru
                _
              // Predicated region
              $region93: #{_lambda_.22} parent=55 // pred_check
                _
              $region94: #{_lambda_.22} parent=55 // pred_check_branch
                %1134 = sbr.rel target = $region96
              $region95: #{_lambda_.22} parent=55 // pred_region
                _
              $region96: #{_lambda_.22} parent=55 // pred_fallthru
                _
            $region56: #{_lambda_.22} parent=51 // pred_fallthru
              _
            // Predicated region
            $region57: #{_lambda_.22} parent=51 // pred_check
              _
            $region58: #{_lambda_.22} parent=51 // pred_check_branch
              %916 = sbr.rel target = $region60
            $region59: #{_lambda_.22} parent=51 // pred_region
              %s918 = ssub.s32 256, 1
              %s919 = sshrl.u32 %s905, 5
              // While loop
              $region61: #{_lambda_.22} parent=59 // loop_pre_header
                _
              $region62: #{_lambda_.22} parent=59 // loop_header
                %s921 = sphi 0, %s923
                %p922 = scmp.ge.s32.totalorder %s921, %s919
                %s926 = sphi 0, %s995
                %s927 = sphi %s898, %s998
                %s928 = sphi %s909, %s999
              $region63: #{_lambda_.22} parent=59 // loop_header_branch
                %925 = sbr.rel (%p922) target = $region67
              $region64: #{_lambda_.22} parent=59 // loop_body
                %v929 = vld [vmem:[%s927] sm:%s918]
                %930 = vst [vmem:[%s928] sm:%s918] %v929
                %v931 = vld [vmem:[%s927 + $0x8] sm:%s918]
                %932 = vst [vmem:[%s928 + $0x8] sm:%s918] %v931
                %v933 = vld [vmem:[%s927 + $0x10] sm:%s918]
                %934 = vst [vmem:[%s928 + $0x10] sm:%s918] %v933
                %v935 = vld [vmem:[%s927 + $0x18] sm:%s918]
                %936 = vst [vmem:[%s928 + $0x18] sm:%s918] %v935
                %v937 = vld [vmem:[%s927 + $0x20] sm:%s918]
                %938 = vst [vmem:[%s928 + $0x20] sm:%s918] %v937
                %v939 = vld [vmem:[%s927 + $0x28] sm:%s918]
                %940 = vst [vmem:[%s928 + $0x28] sm:%s918] %v939
                %v941 = vld [vmem:[%s927 + $0x30] sm:%s918]
                %942 = vst [vmem:[%s928 + $0x30] sm:%s918] %v941
                %v943 = vld [vmem:[%s927 + $0x38] sm:%s918]
                %944 = vst [vmem:[%s928 + $0x38] sm:%s918] %v943
                %v945 = vld [vmem:[%s927 + $0x40] sm:%s918]
                %946 = vst [vmem:[%s928 + $0x40] sm:%s918] %v945
                %v947 = vld [vmem:[%s927 + $0x48] sm:%s918]
                %948 = vst [vmem:[%s928 + $0x48] sm:%s918] %v947
                %v949 = vld [vmem:[%s927 + $0x50] sm:%s918]
                %950 = vst [vmem:[%s928 + $0x50] sm:%s918] %v949
                %v951 = vld [vmem:[%s927 + $0x58] sm:%s918]
                %952 = vst [vmem:[%s928 + $0x58] sm:%s918] %v951
                %v953 = vld [vmem:[%s927 + $0x60] sm:%s918]
                %954 = vst [vmem:[%s928 + $0x60] sm:%s918] %v953
                %v955 = vld [vmem:[%s927 + $0x68] sm:%s918]
                %956 = vst [vmem:[%s928 + $0x68] sm:%s918] %v955
                %v957 = vld [vmem:[%s927 + $0x70] sm:%s918]
                %958 = vst [vmem:[%s928 + $0x70] sm:%s918] %v957
                %v959 = vld [vmem:[%s927 + $0x78] sm:%s918]
                %960 = vst [vmem:[%s928 + $0x78] sm:%s918] %v959
                %v961 = vld [vmem:[%s927 + $0x80] sm:%s918]
                %962 = vst [vmem:[%s928 + $0x80] sm:%s918] %v961
                %v963 = vld [vmem:[%s927 + $0x88] sm:%s918]
                %964 = vst [vmem:[%s928 + $0x88] sm:%s918] %v963
                %v965 = vld [vmem:[%s927 + $0x90] sm:%s918]
                %966 = vst [vmem:[%s928 + $0x90] sm:%s918] %v965
                %v967 = vld [vmem:[%s927 + $0x98] sm:%s918]
                %968 = vst [vmem:[%s928 + $0x98] sm:%s918] %v967
                %v969 = vld [vmem:[%s927 + $0xa0] sm:%s918]
                %970 = vst [vmem:[%s928 + $0xa0] sm:%s918] %v969
                %v971 = vld [vmem:[%s927 + $0xa8] sm:%s918]
                %972 = vst [vmem:[%s928 + $0xa8] sm:%s918] %v971
                %v973 = vld [vmem:[%s927 + $0xb0] sm:%s918]
                %974 = vst [vmem:[%s928 + $0xb0] sm:%s918] %v973
                %v975 = vld [vmem:[%s927 + $0xb8] sm:%s918]
                %976 = vst [vmem:[%s928 + $0xb8] sm:%s918] %v975
                %v977 = vld [vmem:[%s927 + $0xc0] sm:%s918]
                %978 = vst [vmem:[%s928 + $0xc0] sm:%s918] %v977
                %v979 = vld [vmem:[%s927 + $0xc8] sm:%s918]
                %980 = vst [vmem:[%s928 + $0xc8] sm:%s918] %v979
                %v981 = vld [vmem:[%s927 + $0xd0] sm:%s918]
                %982 = vst [vmem:[%s928 + $0xd0] sm:%s918] %v981
                %v983 = vld [vmem:[%s927 + $0xd8] sm:%s918]
                %984 = vst [vmem:[%s928 + $0xd8] sm:%s918] %v983
                %v985 = vld [vmem:[%s927 + $0xe0] sm:%s918]
                %986 = vst [vmem:[%s928 + $0xe0] sm:%s918] %v985
                %v987 = vld [vmem:[%s927 + $0xe8] sm:%s918]
                %988 = vst [vmem:[%s928 + $0xe8] sm:%s918] %v987
                %v989 = vld [vmem:[%s927 + $0xf0] sm:%s918]
                %990 = vst [vmem:[%s928 + $0xf0] sm:%s918] %v989
                %v991 = vld [vmem:[%s927 + $0xf8] sm:%s918]
                %992 = vst [vmem:[%s928 + $0xf8] sm:%s918] %v991
                %s993 = sadd.s32 1, %s926
                %p994 = scmp.ge.s32.totalorder %s993, %s919
                %s995 = scalar_select %p994, 0, %s993
                %s996 = smul.u32 %s995, 256
                %s997 = smul.u32 %s995, 256
                %s998 = scalar_lea.vmem %s898, %s996 [#allocation3]
                %s999 = scalar_lea.vmem %s909, %s997
              $region65: #{_lambda_.22} parent=59 // loop_footer
                %s923 = sadd.s32 %s921, 1
              $region66: #{_lambda_.22} parent=59 // loop_footer_branch
                %920 = sbr.rel target = $region62
              $region67: #{_lambda_.22} parent=59 // loop_exit
                _
              %s1000 = sshrl.u32 %s905, 5
              %s1001 = sand.u32 %s905, 31
              %s1002 = smul.u32 %s1000, 32
              %s1003 = smul.u32 8, %s1002
              %s1004 = scalar_lea.vmem %s898, %s1003 [#allocation3]
              %s1005 = smul.u32 8, %s1002
              %s1006 = scalar_lea.vmem %s909, %s1005
              // While loop
              $region68: #{_lambda_.22} parent=59 // loop_pre_header
                _
              $region69: #{_lambda_.22} parent=59 // loop_header
                %s1008 = sphi 0, %s1010
                %p1009 = scmp.ge.s32.totalorder %s1008, %s1001
                %s1013 = sphi 0, %s1020
                %s1014 = sphi %s1004, %s1023
                %s1015 = sphi %s1006, %s1024
              $region70: #{_lambda_.22} parent=59 // loop_header_branch
                %1012 = sbr.rel (%p1009) target = $region74
              $region71: #{_lambda_.22} parent=59 // loop_body
                %v1016 = vld [vmem:[%s1014] sm:%s918]
                %1017 = vst [vmem:[%s1015] sm:%s918] %v1016
                %s1018 = sadd.s32 1, %s1013
                %p1019 = scmp.ge.s32.totalorder %s1018, %s1001
                %s1020 = scalar_select %p1019, 0, %s1018
                %s1021 = smul.u32 %s1020, 8
                %s1022 = smul.u32 %s1020, 8
                %s1023 = scalar_lea.vmem %s1004, %s1021 [#allocation3]
                %s1024 = scalar_lea.vmem %s1006, %s1022
              $region72: #{_lambda_.22} parent=59 // loop_footer
                %s1010 = sadd.s32 %s1008, 1
              $region73: #{_lambda_.22} parent=59 // loop_footer_branch
                %1007 = sbr.rel target = $region69
              $region74: #{_lambda_.22} parent=59 // loop_exit
                _
            $region60: #{_lambda_.22} parent=51 // pred_fallthru
              _
          $region52: #{_lambda_.22} parent=47 // pred_fallthru
            _
          %1135 = vnop
        $region48: #{_lambda_.22} parent=35 // pred_fallthru
          _
      $region36: #{_lambda_.22} parent=5 // pred_fallthru
        _
      %p1136 = scmp.le.s32.totalorder 2, %s10
      // Predicated region
      $region97: #{_lambda_.22} parent=5 // pred_check
        %p1137 = pneg %p1136
      $region98: #{_lambda_.22} parent=5 // pred_check_branch
        %1139 = sbr.rel (%p1137) target = $region100
      $region99: #{_lambda_.22} parent=5 // pred_region
        %s1140 = ssub.s32 %s10, 2
        // Predicated region
        $region101: #{_lambda_.22} parent=99 // pred_check
          %p1141 = pneg %p147
        $region102: #{_lambda_.22} parent=99 // pred_check_branch
          %1143 = sbr.rel (%p1141) target = $region104
        $region103: #{_lambda_.22} parent=99 // pred_region
          %s1144 = sand.u32 %s132, 1
          %s1145 = sand.u32 %s132, 1
          %s1146 = smul.addr %s1145, 256
          %s1147 = scalar_lea.vmem [#allocation3], %s1146
        $region104: #{_lambda_.22} parent=99 // pred_fallthru
          _
      $region100: #{_lambda_.22} parent=5 // pred_fallthru
        _
    $region6: #{_lambda_.22} parent=1 // loop_footer
      %s14 = sadd.s32 1, %s10
    $region7: #{_lambda_.22} parent=1 // loop_footer_branch
      %9 = sbr.rel target = $region3
    $region8: #{_lambda_.22} parent=1 // loop_exit
      _

// kernel: _lambda_.23
$region0: #{_lambda_.23}
  #allocation0 [shape = 'u32[]', space=smem, size = 0x4, offset = 0x4, fixed_abs, tag = 'smem constant byte address 0x4 - core index']
  #allocation1 [shape = 'u32[144,128]{1,0:T(1,128)}', space=vmem, size = 0x12000, scoped, tag = 'internal scratch']
  #allocation2 [shape = 'f32[512,128]{1,0:T(8,128)}', space=vmem, size = 0x40000, scoped, tag = 'scratch operand']
  %s0 = inlined_call_operand.vmem [shape: bf16[2178,32], index: 0, kind: input, shape index: {}]
  %s1 = inlined_call_operand.vmem [shape: bf16[32,128], index: 1, kind: input, shape index: {}]
  %s2 = inlined_call_operand.vmem [shape: f32[1,128], index: 2, kind: input, shape index: {}]
  %s3 = inlined_call_operand.vmem [shape: f32[1,128], index: 3, kind: input, shape index: {}]
  %s4 = inlined_call_operand.vmem [shape: f32[2178,128], index: 4, kind: output, shape index: {}]
  %s5 = sld [smem:[#allocation0]]
  $region105: #{_lambda_.23} parent=0
    _
  %s7 = ssub.s32 1, %s5
  %s8 = scalar_select 0, %s7, %s5
  $region1: #{_lambda_.23} parent=0
    #allocation3 [shape = 'u8[524288]{0}', space=vmem, size = 0x80000, scoped, tag = 'output window, operand 0']
    loop: start=0, step=1, limit=7
    $region2: #{_lambda_.23} parent=1 // loop_pre_header
      _
    $region3: #{_lambda_.23} parent=1 // loop_header
      %s10 = sphi 0, %s14
      %p11 = scmp.ge.s32.totalorder %s10, 7
      %s17 = sphi 0, %s29
      %s18 = sphi 0, %s25
      %s19 = sphi 0, %s17
      %s20 = sphi 0, %s18
      %s21 = sphi 0, %s19
      %s22 = sphi 0, %s20
      %s34 = sphi 0, %s36
      %s37 = sphi 0, %s34
      %s38 = sphi 0, %s37
      %s54 = sphi 0, %s38
      %s60 = sphi 0, %s62
      %s63 = sphi 0, %s60
      %s64 = sphi 0, %s63
      %s80 = sphi 0, %s64
      %s84 = sphi 0, %s84
      %s86 = sphi 0, %s84
      %s87 = sphi 0, %s86
      %s101 = sphi 0, %s87
      %s105 = sphi 0, %s105
      %s107 = sphi 0, %s105
      %s108 = sphi 0, %s107
      %s122 = sphi 0, %s108
      %s128 = sphi 0, %s130
      %s131 = sphi 0, %s128
      %s132 = sphi 0, %s131
      %s148 = sphi 0, %s132
    $region4: #{_lambda_.23} parent=1 // loop_header_branch
      %13 = sbr.rel (%p11) target = $region8
    $region5: #{_lambda_.23} parent=1 // loop_body
      %s15 = ssub.s32 %s10, 1
      %s16 = ssub.s32 %s10, 2
      %s23 = sadd.s32 1, %s18
      %p24 = scmp.ge.s32.totalorder %s23, 1
      %s25 = scalar_select %p24, 0, %s23
      %s26 = sadd.s32 1, %s17
      %s27 = scalar_select %p24, %s26, %s17
      %p28 = scmp.ge.s32.totalorder %s27, 5
      %s29 = scalar_select %p28, 0, %s27
      %s30 = ssub.s32 %s17, %s29
      %s31 = ssub.s32 %s18, %s25
      %s32 = sor.u32 %s30, %s31
      %p33 = scmp.eq.s32.totalorder %s32, 0
      %s35 = sadd.s32 %s34, 1
      %s36 = scalar_select %p33, %s34, %s35
      %p39 = pneg %p33
      %p40 = scmp.eq.s32.totalorder %s10, 4
      %p41 = por %p39, %p40
      %p42 = scmp.ne.s32.totalorder %s34, %s37
      %p43 = scmp.eq.s32.totalorder %s10, 0
      %p44 = por %p42, %p43
      %p45 = scmp.ne.s32.totalorder %s34, %s37
      %p46 = scmp.eq.s32.totalorder %s15, 4
      %p47 = por %p45, %p46
      %p48 = scmp.ne.s32.totalorder %s37, %s38
      %p49 = scmp.eq.s32.totalorder %s15, 0
      %p50 = por %p48, %p49
      %p51 = scmp.ne.s32.totalorder %s37, %s38
      %p52 = scmp.eq.s32.totalorder %s16, 4
      %p53 = por %p51, %p52
      %p55 = scmp.ne.s32.totalorder %s38, %s54
      %p56 = scmp.eq.s32.totalorder %s16, 0
      %p57 = por %p55, %p56
      %s58 = ssub.s32 %s18, %s25
      %p59 = scmp.eq.s32.totalorder %s58, 0
      %s61 = sadd.s32 %s60, 1
      %s62 = scalar_select %p59, %s60, %s61
      %p65 = pneg %p59
      %p66 = scmp.eq.s32.totalorder %s10, 4
      %p67 = por %p65, %p66
      %p68 = scmp.ne.s32.totalorder %s60, %s63
      %p69 = scmp.eq.s32.totalorder %s10, 0
      %p70 = por %p68, %p69
      %p71 = scmp.ne.s32.totalorder %s60, %s63
      %p72 = scmp.eq.s32.totalorder %s15, 4
      %p73 = por %p71, %p72
      %p74 = scmp.ne.s32.totalorder %s63, %s64
      %p75 = scmp.eq.s32.totalorder %s15, 0
      %p76 = por %p74, %p75
      %p77 = scmp.ne.s32.totalorder %s63, %s64
      %p78 = scmp.eq.s32.totalorder %s16, 4
      %p79 = por %p77, %p78
      %p81 = scmp.ne.s32.totalorder %s64, %s80
      %p82 = scmp.eq.s32.totalorder %s16, 0
      %p83 = por %p81, %p82
      %s85 = sadd.s32 %s84, 1
      %p88 = scmp.eq.s32.totalorder %s10, 4
      %p89 = scmp.ne.s32.totalorder %s84, %s86
      %p90 = scmp.eq.s32.totalorder %s10, 0
      %p91 = por %p89, %p90
      %p92 = scmp.ne.s32.totalorder %s84, %s86
      %p93 = scmp.eq.s32.totalorder %s15, 4
      %p94 = por %p92, %p93
      %p95 = scmp.ne.s32.totalorder %s86, %s87
      %p96 = scmp.eq.s32.totalorder %s15, 0
      %p97 = por %p95, %p96
      %p98 = scmp.ne.s32.totalorder %s86, %s87
      %p99 = scmp.eq.s32.totalorder %s16, 4
      %p100 = por %p98, %p99
      %p102 = scmp.ne.s32.totalorder %s87, %s101
      %p103 = scmp.eq.s32.totalorder %s16, 0
      %p104 = por %p102, %p103
      %s106 = sadd.s32 %s105, 1
      %p109 = scmp.eq.s32.totalorder %s10, 4
      %p110 = scmp.ne.s32.totalorder %s105, %s107
      %p111 = scmp.eq.s32.totalorder %s10, 0
      %p112 = por %p110, %p111
      %p113 = scmp.ne.s32.totalorder %s105, %s107
      %p114 = scmp.eq.s32.totalorder %s15, 4
      %p115 = por %p113, %p114
      %p116 = scmp.ne.s32.totalorder %s107, %s108
      %p117 = scmp.eq.s32.totalorder %s15, 0
      %p118 = por %p116, %p117
      %p119 = scmp.ne.s32.totalorder %s107, %s108
      %p120 = scmp.eq.s32.totalorder %s16, 4
      %p121 = por %p119, %p120
      %p123 = scmp.ne.s32.totalorder %s108, %s122
      %p124 = scmp.eq.s32.totalorder %s16, 0
      %p125 = por %p123, %p124
      %s126 = ssub.s32 %s17, %s29
      %p127 = scmp.eq.s32.totalorder %s126, 0
      %s129 = sadd.s32 %s128, 1
      %s130 = scalar_select %p127, %s128, %s129
      %p133 = pneg %p127
      %p134 = scmp.eq.s32.totalorder %s10, 4
      %p135 = por %p133, %p134
      %p136 = scmp.ne.s32.totalorder %s128, %s131
      %p137 = scmp.eq.s32.totalorder %s10, 0
      %p138 = por %p136, %p137
      %p139 = scmp.ne.s32.totalorder %s128, %s131
      %p140 = scmp.eq.s32.totalorder %s15, 4
      %p141 = por %p139, %p140
      %p142 = scmp.ne.s32.totalorder %s131, %s132
      %p143 = scmp.eq.s32.totalorder %s15, 0
      %p144 = por %p142, %p143
      %p145 = scmp.ne.s32.totalorder %s131, %s132
      %p146 = scmp.eq.s32.totalorder %s16, 4
      %p147 = por %p145, %p146
      %p149 = scmp.ne.s32.totalorder %s132, %s148
      %p150 = scmp.eq.s32.totalorder %s16, 0
      %p151 = por %p149, %p150
      %p152 = scmp.le.s32.totalorder 1, %s10
      %p153 = scmp.lt.s32.totalorder %s10, 6
      %p154 = pnand %p152, %p153
      %p155 = pneg %p154
      // Predicated region
      $region9: #{_lambda_.23} parent=5 // pred_check
        _
      $region10: #{_lambda_.23} parent=5 // pred_check_branch
        %157 = sbr.rel (%p154) target = $region12
      $region11: #{_lambda_.23} parent=5 // pred_region
        %s158 = ssub.s32 %s10, 1
        // Predicated region
        $region13: #{_lambda_.23} parent=11 // pred_check
          %p159 = pneg %p76
        $region14: #{_lambda_.23} parent=11 // pred_check_branch
          %161 = sbr.rel (%p159) target = $region16
        $region15: #{_lambda_.23} parent=11 // pred_region
          %s162 = smul.u32 4, %s20
          %p163 = scmp.lt.s32.totalorder %s162, 3
          %s164 = scalar_select %p163, %s162, 3
          %s165 = smul.addr %s164, 4
          %s166 = scalar_lea.vmem %s1, %s165
          %s167 = smul.u32 4, %s20
        $region16: #{_lambda_.23} parent=11 // pred_fallthru
          _
        // Predicated region
        $region17: #{_lambda_.23} parent=11 // pred_check
          %p168 = pneg %p97
        $region18: #{_lambda_.23} parent=11 // pred_check_branch
          %170 = sbr.rel (%p168) target = $region20
        $region19: #{_lambda_.23} parent=11 // pred_region
          _
        $region20: #{_lambda_.23} parent=11 // pred_fallthru
          _
        // Predicated region
        $region21: #{_lambda_.23} parent=11 // pred_check
          %p171 = pneg %p118
        $region22: #{_lambda_.23} parent=11 // pred_check_branch
          %173 = sbr.rel (%p171) target = $region24
        $region23: #{_lambda_.23} parent=11 // pred_region
          _
        $region24: #{_lambda_.23} parent=11 // pred_fallthru
          _
      $region12: #{_lambda_.23} parent=5 // pred_fallthru
        _
      %p174 = scmp.lt.s32.totalorder %s10, 5
      // Predicated region
      $region25: #{_lambda_.23} parent=5 // pred_check
        %p175 = pneg %p174
      $region26: #{_lambda_.23} parent=5 // pred_check_branch
        %177 = sbr.rel (%p175) target = $region28
      $region27: #{_lambda_.23} parent=5 // pred_region
        // Predicated region
        $region29: #{_lambda_.23} parent=27 // pred_check
          %p178 = pneg %p44
        $region30: #{_lambda_.23} parent=27 // pred_check_branch
          %180 = sbr.rel (%p178) target = $region32
        $region31: #{_lambda_.23} parent=27 // pred_region
          %s181 = smul.u32 64, %s17
          %s182 = ssub.s32 273, %s181
          %p183 = scmp.lt.s32.totalorder %s182, 64
          %s184 = scalar_select %p183, %s182, 64
          %s185 = smul.u32 64, %s184
          %p186 = scmp.lt.s32.totalorder %s181, 272
          %s187 = scalar_select %p186, %s181, 272
          %p188 = scmp.lt.s32.totalorder %s18, 0
          %s189 = scalar_select %p188, %s18, 0
          %s190 = sadd.s32 %s189, %s187
          %s191 = smul.addr %s190, 4
          %s192 = scalar_lea.vmem %s0, %s191
          %s193 = smul.u32 64, %s17
          %s194 = ssub.s32 273, %s193
          %p195 = scmp.lt.s32.totalorder %s194, 64
          %s196 = scalar_select %p195, %s194, 64
          %s197 = smul.u32 64, %s196
        $region32: #{_lambda_.23} parent=27 // pred_fallthru
          _
      $region28: #{_lambda_.23} parent=5 // pred_fallthru
        _
      %p198 = scmp.le.s32.totalorder 1, %s10
      %p199 = scmp.lt.s32.totalorder %s10, 6
      %p200 = pnand %p198, %p199
      %p201 = pneg %p200
      // Predicated region
      $region33: #{_lambda_.23} parent=5 // pred_check
        _
      $region34: #{_lambda_.23} parent=5 // pred_check_branch
        %203 = sbr.rel (%p200) target = $region36
      $region35: #{_lambda_.23} parent=5 // pred_region
        %s204 = ssub.s32 %s10, 1
        %s205 = smul.u32 64, %s19
        %s206 = ssub.s32 273, %s205
        %p207 = scmp.lt.s32.totalorder %s206, 64
        %s208 = scalar_select %p207, %s206, 64
        %s209 = smul.u32 64, %s208
        %p210 = scmp.lt.s32.totalorder %s205, 272
        %s211 = scalar_select %p210, %s205, 272
        %p212 = scmp.lt.s32.totalorder %s20, 0
        %s213 = scalar_select %p212, %s20, 0
        %s214 = sadd.s32 %s213, %s211
        %s215 = smul.addr %s214, 4
        %s216 = scalar_lea.vmem %s0, %s215
        %p217 = pneg %p50
        %p218 = pneg %p47
        %s219 = smul.u32 4, %s20
        %p220 = scmp.lt.s32.totalorder %s219, 3
        %s221 = scalar_select %p220, %s219, 3
        %s222 = smul.addr %s221, 4
        %s223 = scalar_lea.vmem %s1, %s222
        %p224 = pneg %p76
        %p225 = pneg %p73
        %p226 = pneg %p97
        %p227 = pneg %p94
        %p228 = pneg %p118
        %p229 = pneg %p115
        %p230 = pneg %p144
        %p231 = pneg %p141
        %s232 = sand.u32 %s131, 1
        %s233 = sand.u32 %s131, 1
        %s234 = smul.addr %s233, 512
        %s235 = scalar_lea.vmem [#allocation3], %s234
        %s236 = smul.u32 64, %s19
        %s237 = ssub.s32 273, %s236
        %p238 = scmp.lt.s32.totalorder %s237, 64
        %s239 = scalar_select %p238, %s237, 64
        %s240 = smul.u32 64, %s239
        %p241 = scmp.lt.s32.totalorder %s236, 272
        %s242 = scalar_select %p241, %s236, 272
        %p243 = scmp.lt.s32.totalorder %s20, 0
        %s244 = scalar_select %p243, %s20, 0
        %s245 = sadd.s32 %s244, %s242
        %s246 = smul.addr %s245, 4
        %s247 = scalar_lea.vmem %s0, %s246
        %s248 = smul.u32 64, %s19
        %s249 = ssub.s32 273, %s248
        %p250 = scmp.lt.s32.totalorder %s249, 64
        %s251 = scalar_select %p250, %s249, 64
        %s252 = smul.u32 64, %s251
        %s253 = smul.u32 4, %s20
        %p254 = scmp.lt.s32.totalorder %s253, 3
        %s255 = scalar_select %p254, %s253, 3
        %s256 = smul.addr %s255, 4
        %s257 = scalar_lea.vmem %s1, %s256
        %s258 = smul.u32 4, %s20
        %s259 = smul.u32 64, %s19
        %s260 = ssub.s32 273, %s259
        %p261 = scmp.lt.s32.totalorder %s260, 64
        %s262 = scalar_select %p261, %s260, 64
        %s263 = smul.u32 128, %s262
        %p265 = scmp.eq.s32.totalorder %s20, 0
        // Predicated region
        $region37: #{_lambda_.23} parent=35 // pred_check
          %p266 = pneg %p265
        $region38: #{_lambda_.23} parent=35 // pred_check_branch
          %268 = sbr.rel (%p266) target = $region40
        $region39: #{_lambda_.23} parent=35 // pred_region
          %269 = vst [vmem:[#allocation2] sm:$0xff] 0.0
          %270 = vst [vmem:[#allocation2 + $0x8] sm:$0xff] 0.0
          %271 = vst [vmem:[#allocation2 + $0x10] sm:$0xff] 0.0
          %272 = vst [vmem:[#allocation2 + $0x18] sm:$0xff] 0.0
          %273 = vst [vmem:[#allocation2 + $0x20] sm:$0xff] 0.0
          %274 = vst [vmem:[#allocation2 + $0x28] sm:$0xff] 0.0
          %275 = vst [vmem:[#allocation2 + $0x30] sm:$0xff] 0.0
          %276 = vst [vmem:[#allocation2 + $0x38] sm:$0xff] 0.0
          %277 = vst [vmem:[#allocation2 + $0x40] sm:$0xff] 0.0
          %278 = vst [vmem:[#allocation2 + $0x48] sm:$0xff] 0.0
          %279 = vst [vmem:[#allocation2 + $0x50] sm:$0xff] 0.0
          %280 = vst [vmem:[#allocation2 + $0x58] sm:$0xff] 0.0
          %281 = vst [vmem:[#allocation2 + $0x60] sm:$0xff] 0.0
          %282 = vst [vmem:[#allocation2 + $0x68] sm:$0xff] 0.0
          %283 = vst [vmem:[#allocation2 + $0x70] sm:$0xff] 0.0
          %284 = vst [vmem:[#allocation2 + $0x78] sm:$0xff] 0.0
          %285 = vst [vmem:[#allocation2 + $0x80] sm:$0xff] 0.0
          %286 = vst [vmem:[#allocation2 + $0x88] sm:$0xff] 0.0
          %287 = vst [vmem:[#allocation2 + $0x90] sm:$0xff] 0.0
          %288 = vst [vmem:[#allocation2 + $0x98] sm:$0xff] 0.0
          %289 = vst [vmem:[#allocation2 + $0xa0] sm:$0xff] 0.0
          %290 = vst [vmem:[#allocation2 + $0xa8] sm:$0xff] 0.0
          %291 = vst [vmem:[#allocation2 + $0xb0] sm:$0xff] 0.0
          %292 = vst [vmem:[#allocation2 + $0xb8] sm:$0xff] 0.0
          %293 = vst [vmem:[#allocation2 + $0xc0] sm:$0xff] 0.0
          %294 = vst [vmem:[#allocation2 + $0xc8] sm:$0xff] 0.0
          %295 = vst [vmem:[#allocation2 + $0xd0] sm:$0xff] 0.0
          %296 = vst [vmem:[#allocation2 + $0xd8] sm:$0xff] 0.0
          %297 = vst [vmem:[#allocation2 + $0xe0] sm:$0xff] 0.0
          %298 = vst [vmem:[#allocation2 + $0xe8] sm:$0xff] 0.0
          %299 = vst [vmem:[#allocation2 + $0xf0] sm:$0xff] 0.0
          %300 = vst [vmem:[#allocation2 + $0xf8] sm:$0xff] 0.0
          %301 = vst [vmem:[#allocation2 + $0x100] sm:$0xff] 0.0
          %302 = vst [vmem:[#allocation2 + $0x108] sm:$0xff] 0.0
          %303 = vst [vmem:[#allocation2 + $0x110] sm:$0xff] 0.0
          %304 = vst [vmem:[#allocation2 + $0x118] sm:$0xff] 0.0
          %305 = vst [vmem:[#allocation2 + $0x120] sm:$0xff] 0.0
          %306 = vst [vmem:[#allocation2 + $0x128] sm:$0xff] 0.0
          %307 = vst [vmem:[#allocation2 + $0x130] sm:$0xff] 0.0
          %308 = vst [vmem:[#allocation2 + $0x138] sm:$0xff] 0.0
          %309 = vst [vmem:[#allocation2 + $0x140] sm:$0xff] 0.0
          %310 = vst [vmem:[#allocation2 + $0x148] sm:$0xff] 0.0
          %311 = vst [vmem:[#allocation2 + $0x150] sm:$0xff] 0.0
          %312 = vst [vmem:[#allocation2 + $0x158] sm:$0xff] 0.0
          %313 = vst [vmem:[#allocation2 + $0x160] sm:$0xff] 0.0
          %314 = vst [vmem:[#allocation2 + $0x168] sm:$0xff] 0.0
          %315 = vst [vmem:[#allocation2 + $0x170] sm:$0xff] 0.0
          %316 = vst [vmem:[#allocation2 + $0x178] sm:$0xff] 0.0
          %317 = vst [vmem:[#allocation2 + $0x180] sm:$0xff] 0.0
          %318 = vst [vmem:[#allocation2 + $0x188] sm:$0xff] 0.0
          %319 = vst [vmem:[#allocation2 + $0x190] sm:$0xff] 0.0
          %320 = vst [vmem:[#allocation2 + $0x198] sm:$0xff] 0.0
          %321 = vst [vmem:[#allocation2 + $0x1a0] sm:$0xff] 0.0
          %322 = vst [vmem:[#allocation2 + $0x1a8] sm:$0xff] 0.0
          %323 = vst [vmem:[#allocation2 + $0x1b0] sm:$0xff] 0.0
          %324 = vst [vmem:[#allocation2 + $0x1b8] sm:$0xff] 0.0
          %325 = vst [vmem:[#allocation2 + $0x1c0] sm:$0xff] 0.0
          %326 = vst [vmem:[#allocation2 + $0x1c8] sm:$0xff] 0.0
          %327 = vst [vmem:[#allocation2 + $0x1d0] sm:$0xff] 0.0
          %328 = vst [vmem:[#allocation2 + $0x1d8] sm:$0xff] 0.0
          %329 = vst [vmem:[#allocation2 + $0x1e0] sm:$0xff] 0.0
          %330 = vst [vmem:[#allocation2 + $0x1e8] sm:$0xff] 0.0
          %331 = vst [vmem:[#allocation2 + $0x1f0] sm:$0xff] 0.0
          %332 = vst [vmem:[#allocation2 + $0x1f8] sm:$0xff] 0.0
        $region40: #{_lambda_.23} parent=35 // pred_fallthru
          _
        %v333 = vld [vmem:[#allocation2] sm:$0xff]
        %v334 = vld [vmem:[#allocation2 + $0x8] sm:$0xff]
        %v335 = vld [vmem:[#allocation2 + $0x10] sm:$0xff]
        %v336 = vld [vmem:[#allocation2 + $0x18] sm:$0xff]
        %v337 = vld [vmem:[#allocation2 + $0x20] sm:$0xff]
        %v338 = vld [vmem:[#allocation2 + $0x28] sm:$0xff]
        %v339 = vld [vmem:[#allocation2 + $0x30] sm:$0xff]
        %v340 = vld [vmem:[#allocation2 + $0x38] sm:$0xff]
        %v341 = vld [vmem:[#allocation2 + $0x40] sm:$0xff]
        %v342 = vld [vmem:[#allocation2 + $0x48] sm:$0xff]
        %v343 = vld [vmem:[#allocation2 + $0x50] sm:$0xff]
        %v344 = vld [vmem:[#allocation2 + $0x58] sm:$0xff]
        %v345 = vld [vmem:[#allocation2 + $0x60] sm:$0xff]
        %v346 = vld [vmem:[#allocation2 + $0x68] sm:$0xff]
        %v347 = vld [vmem:[#allocation2 + $0x70] sm:$0xff]
        %v348 = vld [vmem:[#allocation2 + $0x78] sm:$0xff]
        %v349 = vld [vmem:[#allocation2 + $0x80] sm:$0xff]
        %v350 = vld [vmem:[#allocation2 + $0x88] sm:$0xff]
        %v351 = vld [vmem:[#allocation2 + $0x90] sm:$0xff]
        %v352 = vld [vmem:[#allocation2 + $0x98] sm:$0xff]
        %v353 = vld [vmem:[#allocation2 + $0xa0] sm:$0xff]
        %v354 = vld [vmem:[#allocation2 + $0xa8] sm:$0xff]
        %v355 = vld [vmem:[#allocation2 + $0xb0] sm:$0xff]
        %v356 = vld [vmem:[#allocation2 + $0xb8] sm:$0xff]
        %v357 = vld [vmem:[#allocation2 + $0xc0] sm:$0xff]
        %v358 = vld [vmem:[#allocation2 + $0xc8] sm:$0xff]
        %v359 = vld [vmem:[#allocation2 + $0xd0] sm:$0xff]
        %v360 = vld [vmem:[#allocation2 + $0xd8] sm:$0xff]
        %v361 = vld [vmem:[#allocation2 + $0xe0] sm:$0xff]
        %v362 = vld [vmem:[#allocation2 + $0xe8] sm:$0xff]
        %v363 = vld [vmem:[#allocation2 + $0xf0] sm:$0xff]
        %v364 = vld [vmem:[#allocation2 + $0xf8] sm:$0xff]
        %v365 = vld [vmem:[#allocation2 + $0x100] sm:$0xff]
        %v366 = vld [vmem:[#allocation2 + $0x108] sm:$0xff]
        %v367 = vld [vmem:[#allocation2 + $0x110] sm:$0xff]
        %v368 = vld [vmem:[#allocation2 + $0x118] sm:$0xff]
        %v369 = vld [vmem:[#allocation2 + $0x120] sm:$0xff]
        %v370 = vld [vmem:[#allocation2 + $0x128] sm:$0xff]
        %v371 = vld [vmem:[#allocation2 + $0x130] sm:$0xff]
        %v372 = vld [vmem:[#allocation2 + $0x138] sm:$0xff]
        %v373 = vld [vmem:[#allocation2 + $0x140] sm:$0xff]
        %v374 = vld [vmem:[#allocation2 + $0x148] sm:$0xff]
        %v375 = vld [vmem:[#allocation2 + $0x150] sm:$0xff]
        %v376 = vld [vmem:[#allocation2 + $0x158] sm:$0xff]
        %v377 = vld [vmem:[#allocation2 + $0x160] sm:$0xff]
        %v378 = vld [vmem:[#allocation2 + $0x168] sm:$0xff]
        %v379 = vld [vmem:[#allocation2 + $0x170] sm:$0xff]
        %v380 = vld [vmem:[#allocation2 + $0x178] sm:$0xff]
        %v381 = vld [vmem:[#allocation2 + $0x180] sm:$0xff]
        %v382 = vld [vmem:[#allocation2 + $0x188] sm:$0xff]
        %v383 = vld [vmem:[#allocation2 + $0x190] sm:$0xff]
        %v384 = vld [vmem:[#allocation2 + $0x198] sm:$0xff]
        %v385 = vld [vmem:[#allocation2 + $0x1a0] sm:$0xff]
        %v386 = vld [vmem:[#allocation2 + $0x1a8] sm:$0xff]
        %v387 = vld [vmem:[#allocation2 + $0x1b0] sm:$0xff]
        %v388 = vld [vmem:[#allocation2 + $0x1b8] sm:$0xff]
        %v389 = vld [vmem:[#allocation2 + $0x1c0] sm:$0xff]
        %v390 = vld [vmem:[#allocation2 + $0x1c8] sm:$0xff]
        %v391 = vld [vmem:[#allocation2 + $0x1d0] sm:$0xff]
        %v392 = vld [vmem:[#allocation2 + $0x1d8] sm:$0xff]
        %v393 = vld [vmem:[#allocation2 + $0x1e0] sm:$0xff]
        %v394 = vld [vmem:[#allocation2 + $0x1e8] sm:$0xff]
        %v395 = vld [vmem:[#allocation2 + $0x1f0] sm:$0xff]
        %v396 = vld [vmem:[#allocation2 + $0x1f8] sm:$0xff]
        %v397 = vld [vmem:[%s247] sm:$0xf]
        %v398 = vld [vmem:[%s247 + $0x4] sm:$0xf]
        %v399 = vld [vmem:[%s247 + $0x8] sm:$0xf]
        %v400 = vld [vmem:[%s247 + $0xc] sm:$0xf]
        %v401 = vld [vmem:[%s247 + $0x10] sm:$0xf]
        %v402 = vld [vmem:[%s247 + $0x14] sm:$0xf]
        %v403 = vld [vmem:[%s247 + $0x18] sm:$0xf]
        %v404 = vld [vmem:[%s247 + $0x1c] sm:$0xf]
        %v405 = vld [vmem:[%s247 + $0x20] sm:$0xf]
        %v406 = vld [vmem:[%s247 + $0x24] sm:$0xf]
        %v407 = vld [vmem:[%s247 + $0x28] sm:$0xf]
        %v408 = vld [vmem:[%s247 + $0x2c] sm:$0xf]
        %v409 = vld [vmem:[%s247 + $0x30] sm:$0xf]
        %v410 = vld [vmem:[%s247 + $0x34] sm:$0xf]
        %v411 = vld [vmem:[%s247 + $0x38] sm:$0xf]
        %v412 = vld [vmem:[%s247 + $0x3c] sm:$0xf]
        %v413 = vld [vmem:[%s247 + $0x40] sm:$0xf]
        %v414 = vld [vmem:[%s247 + $0x44] sm:$0xf]
        %v415 = vld [vmem:[%s247 + $0x48] sm:$0xf]
        %v416 = vld [vmem:[%s247 + $0x4c] sm:$0xf]
        %v417 = vld [vmem:[%s247 + $0x50] sm:$0xf]
        %v418 = vld [vmem:[%s247 + $0x54] sm:$0xf]
        %v419 = vld [vmem:[%s247 + $0x58] sm:$0xf]
        %v420 = vld [vmem:[%s247 + $0x5c] sm:$0xf]
        %v421 = vld [vmem:[%s247 + $0x60] sm:$0xf]
        %v422 = vld [vmem:[%s247 + $0x64] sm:$0xf]
        %v423 = vld [vmem:[%s247 + $0x68] sm:$0xf]
        %v424 = vld [vmem:[%s247 + $0x6c] sm:$0xf]
        %v425 = vld [vmem:[%s247 + $0x70] sm:$0xf]
        %v426 = vld [vmem:[%s247 + $0x74] sm:$0xf]
        %v427 = vld [vmem:[%s247 + $0x78] sm:$0xf]
        %v428 = vld [vmem:[%s247 + $0x7c] sm:$0xf]
        %v429 = vld [vmem:[%s247 + $0x80] sm:$0xf]
        %v430 = vld [vmem:[%s247 + $0x84] sm:$0xf]
        %v431 = vld [vmem:[%s247 + $0x88] sm:$0xf]
        %v432 = vld [vmem:[%s247 + $0x8c] sm:$0xf]
        %v433 = vld [vmem:[%s247 + $0x90] sm:$0xf]
        %v434 = vld [vmem:[%s247 + $0x94] sm:$0xf]
        %v435 = vld [vmem:[%s247 + $0x98] sm:$0xf]
        %v436 = vld [vmem:[%s247 + $0x9c] sm:$0xf]
        %v437 = vld [vmem:[%s247 + $0xa0] sm:$0xf]
        %v438 = vld [vmem:[%s247 + $0xa4] sm:$0xf]
        %v439 = vld [vmem:[%s247 + $0xa8] sm:$0xf]
        %v440 = vld [vmem:[%s247 + $0xac] sm:$0xf]
        %v441 = vld [vmem:[%s247 + $0xb0] sm:$0xf]
        %v442 = vld [vmem:[%s247 + $0xb4] sm:$0xf]
        %v443 = vld [vmem:[%s247 + $0xb8] sm:$0xf]
        %v444 = vld [vmem:[%s247 + $0xbc] sm:$0xf]
        %v445 = vld [vmem:[%s247 + $0xc0] sm:$0xf]
        %v446 = vld [vmem:[%s247 + $0xc4] sm:$0xf]
        %v447 = vld [vmem:[%s247 + $0xc8] sm:$0xf]
        %v448 = vld [vmem:[%s247 + $0xcc] sm:$0xf]
        %v449 = vld [vmem:[%s247 + $0xd0] sm:$0xf]
        %v450 = vld [vmem:[%s247 + $0xd4] sm:$0xf]
        %v451 = vld [vmem:[%s247 + $0xd8] sm:$0xf]
        %v452 = vld [vmem:[%s247 + $0xdc] sm:$0xf]
        %v453 = vld [vmem:[%s247 + $0xe0] sm:$0xf]
        %v454 = vld [vmem:[%s247 + $0xe4] sm:$0xf]
        %v455 = vld [vmem:[%s247 + $0xe8] sm:$0xf]
        %v456 = vld [vmem:[%s247 + $0xec] sm:$0xf]
        %v457 = vld [vmem:[%s247 + $0xf0] sm:$0xf]
        %v458 = vld [vmem:[%s247 + $0xf4] sm:$0xf]
        %v459 = vld [vmem:[%s247 + $0xf8] sm:$0xf]
        %v460 = vld [vmem:[%s247 + $0xfc] sm:$0xf]
        %v461 = vld [vmem:[%s257] sm:$0xf]
        %v462 = vld [vmem:[%s257 + $0x4] sm:$0xf]
        %v463 = vld [vmem:[%s257 + $0x8] sm:$0xf]
        %v464 = vld [vmem:[%s257 + $0xc] sm:$0xf]
        %v529 = vunpack.c.l.b16 %v397
        %v530 = vunpack.c.l.b16 %v398
        %v531 = vunpack.c.l.b16 %v399
        %v532 = vunpack.c.l.b16 %v400
        %v533 = vunpack.c.l.b16 %v401
        %v534 = vunpack.c.l.b16 %v402
        %v535 = vunpack.c.l.b16 %v403
        %v536 = vunpack.c.l.b16 %v404
        %v537 = vunpack.c.l.b16 %v405
        %v538 = vunpack.c.l.b16 %v406
        %v539 = vunpack.c.l.b16 %v407
        %v540 = vunpack.c.l.b16 %v408
        %v541 = vunpack.c.l.b16 %v409
        %v542 = vunpack.c.l.b16 %v410
        %v543 = vunpack.c.l.b16 %v411
        %v544 = vunpack.c.l.b16 %v412
        %v545 = vunpack.c.l.b16 %v413
        %v546 = vunpack.c.l.b16 %v414
        %v547 = vunpack.c.l.b16 %v415
        %v548 = vunpack.c.l.b16 %v416
        %v549 = vunpack.c.l.b16 %v417
        %v550 = vunpack.c.l.b16 %v418
        %v551 = vunpack.c.l.b16 %v419
        %v552 = vunpack.c.l.b16 %v420
        %v553 = vunpack.c.l.b16 %v421
        %v554 = vunpack.c.l.b16 %v422
        %v555 = vunpack.c.l.b16 %v423
        %v556 = vunpack.c.l.b16 %v424
        %v557 = vunpack.c.l.b16 %v425
        %v558 = vunpack.c.l.b16 %v426
        %v559 = vunpack.c.l.b16 %v427
        %v560 = vunpack.c.l.b16 %v428
        %v561 = vunpack.c.l.b16 %v429
        %v562 = vunpack.c.l.b16 %v430
        %v563 = vunpack.c.l.b16 %v431
        %v564 = vunpack.c.l.b16 %v432
        %v565 = vunpack.c.l.b16 %v433
        %v566 = vunpack.c.l.b16 %v434
        %v567 = vunpack.c.l.b16 %v435
        %v568 = vunpack.c.l.b16 %v436
        %v569 = vunpack.c.l.b16 %v437
        %v570 = vunpack.c.l.b16 %v438
        %v571 = vunpack.c.l.b16 %v439
        %v572 = vunpack.c.l.b16 %v440
        %v573 = vunpack.c.l.b16 %v441
        %v574 = vunpack.c.l.b16 %v442
        %v575 = vunpack.c.l.b16 %v443
        %v576 = vunpack.c.l.b16 %v444
        %v577 = vunpack.c.l.b16 %v445
        %v578 = vunpack.c.l.b16 %v446
        %v579 = vunpack.c.l.b16 %v447
        %v580 = vunpack.c.l.b16 %v448
        %v581 = vunpack.c.l.b16 %v449
        %v582 = vunpack.c.l.b16 %v450
        %v583 = vunpack.c.l.b16 %v451
        %v584 = vunpack.c.l.b16 %v452
        %v585 = vunpack.c.l.b16 %v453
        %v586 = vunpack.c.l.b16 %v454
        %v587 = vunpack.c.l.b16 %v455
        %v588 = vunpack.c.l.b16 %v456
        %v589 = vunpack.c.l.b16 %v457
        %v590 = vunpack.c.l.b16 %v458
        %v591 = vunpack.c.l.b16 %v459
        %v592 = vunpack.c.l.b16 %v460
        %v593 = vpack.c.b16 %v530, %v529
        %v594 = vpack.c.b16 %v532, %v531
        %v595 = vpack.c.b16 %v534, %v533
        %v596 = vpack.c.b16 %v536, %v535
        %v597 = vpack.c.b16 %v538, %v537
        %v598 = vpack.c.b16 %v540, %v539
        %v599 = vpack.c.b16 %v542, %v541
        %v600 = vpack.c.b16 %v544, %v543
        %v601 = vpack.c.b16 %v546, %v545
        %v602 = vpack.c.b16 %v548, %v547
        %v603 = vpack.c.b16 %v550, %v549
        %v604 = vpack.c.b16 %v552, %v551
        %v605 = vpack.c.b16 %v554, %v553
        %v606 = vpack.c.b16 %v556, %v555
        %v607 = vpack.c.b16 %v558, %v557
        %v608 = vpack.c.b16 %v560, %v559
        %v609 = vpack.c.b16 %v562, %v561
        %v610 = vpack.c.b16 %v564, %v563
        %v611 = vpack.c.b16 %v566, %v565
        %v612 = vpack.c.b16 %v568, %v567
        %v613 = vpack.c.b16 %v570, %v569
        %v614 = vpack.c.b16 %v572, %v571
        %v615 = vpack.c.b16 %v574, %v573
        %v616 = vpack.c.b16 %v576, %v575
        %v617 = vpack.c.b16 %v578, %v577
        %v618 = vpack.c.b16 %v580, %v579
        %v619 = vpack.c.b16 %v582, %v581
        %v620 = vpack.c.b16 %v584, %v583
        %v621 = vpack.c.b16 %v586, %v585
        %v622 = vpack.c.b16 %v588, %v587
        %v623 = vpack.c.b16 %v590, %v589
        %v624 = vpack.c.b16 %v592, %v591
        %v629 = vunpack.c.l.b16 %v461
        %v630 = vunpack.c.l.b16 %v462
        %v631 = vunpack.c.l.b16 %v463
        %v632 = vunpack.c.l.b16 %v464
        %v633 = vpack.c.b16 %v630, %v629
        %v634 = vpack.c.b16 %v632, %v631
        %vm637 = vcmask 261120
        %v639 = vsel %vm637, %v593, 0
        %v642 = vsel %vm637, %v594, 0
        %v645 = vsel %vm637, %v595, 0
        %v648 = vsel %vm637, %v596, 0
        %v651 = vsel %vm637, %v597, 0
        %v654 = vsel %vm637, %v598, 0
        %v657 = vsel %vm637, %v599, 0
        %v660 = vsel %vm637, %v600, 0
        %v663 = vsel %vm637, %v601, 0
        %v666 = vsel %vm637, %v602, 0
        %v669 = vsel %vm637, %v603, 0
        %v672 = vsel %vm637, %v604, 0
        %v675 = vsel %vm637, %v605, 0
        %v678 = vsel %vm637, %v606, 0
        %v681 = vsel %vm637, %v607, 0
        %v684 = vsel %vm637, %v608, 0
        %v687 = vsel %vm637, %v609, 0
        %v690 = vsel %vm637, %v610, 0
        %v693 = vsel %vm637, %v611, 0
        %v696 = vsel %vm637, %v612, 0
        %v699 = vsel %vm637, %v613, 0
        %v702 = vsel %vm637, %v614, 0
        %v705 = vsel %vm637, %v615, 0
        %v708 = vsel %vm637, %v616, 0
        %v711 = vsel %vm637, %v617, 0
        %v714 = vsel %vm637, %v618, 0
        %v717 = vsel %vm637, %v619, 0
        %v720 = vsel %vm637, %v620, 0
        %v723 = vsel %vm637, %v621, 0
        %v726 = vsel %vm637, %v622, 0
        %v729 = vsel %vm637, %v623, 0
        %v732 = vsel %vm637, %v624, 0
        %734 = vmatprep.subr.bf16.mxu0 0
        %735 = vmatpush1.bf16.msra.mxu0 0
        %736 = vmatprep.subr.bf16.mxu0 0
        %737 = vmatpush1.bf16.msra.mxu0 0
        %738 = vmatprep.subr.bf16.mxu0 0
        %739 = vmatpush1.bf16.msra.mxu0 0
        %740 = vmatprep.subr.bf16.mxu0 0
        %741 = vmatpush1.bf16.msra.mxu0 0
        %742 = vmatprep.subr.bf16.mxu0 0
        %743 = vmatpush1.bf16.msra.mxu0 0
        %744 = vmatprep.subr.bf16.mxu0 0
        %745 = vmatpush1.bf16.msra.mxu0 0
        %746 = vmatprep.subr.bf16.mxu0 0
        %747 = vmatpush1.bf16.msra.mxu0 %v634
        %748 = vmatprep.subr.bf16.mxu0 0
        %749 = vmatpush1.bf16.msra.mxu0 %v633
        %750 = vmatprep.subr.bf16.mxu0 0
        %751 = vmatpush2.bf16.msra.mxu0 0
        %752 = vmatprep.subr.bf16.mxu0 0
        %753 = vmatpush2.bf16.msra.mxu0 0
        %754 = vmatprep.subr.bf16.mxu0 0
        %755 = vmatpush2.bf16.msra.mxu0 0
        %756 = vmatprep.subr.bf16.mxu0 0
        %757 = vmatpush2.bf16.msra.mxu0 0
        %758 = vmatprep.subr.bf16.mxu0 0
        %759 = vmatpush2.bf16.msra.mxu0 0
        %760 = vmatprep.subr.bf16.mxu0 0
        %761 = vmatpush2.bf16.msra.mxu0 0
        %762 = vmatprep.subr.bf16.mxu0 0
        %763 = vmatpush2.bf16.msra.mxu0 0
        %764 = vmatprep.subr.bf16.mxu0 0
        %765 = vmatpush2.bf16.msra.mxu0 0
        %766 = vmatprep.mubr.bf16.mxu0 0
        %767 = vmatmul.mubr.bf16.gmra.mxu0 %v639
        %v768 = vpop.f32.mrf.mxu0
        %v769 = vadd.f32 0.0, %v768
        %v770 = vpop.f32.mrf.mxu0
        %v771 = vpop.f32.mrf.mxu0
        %v772 = vadd.f32 0.0, %v771
        %v773 = vpop.f32.mrf.mxu0
        %774 = vmatprep.mubr.bf16.mxu0 0
        %775 = vmatmul.mubr.bf16.gmra.mxu0 %v642
        %v776 = vpop.f32.mrf.mxu0
        %v777 = vadd.f32 0.0, %v776
        %v778 = vpop.f32.mrf.mxu0
        %v779 = vpop.f32.mrf.mxu0
        %v780 = vadd.f32 0.0, %v779
        %v781 = vpop.f32.mrf.mxu0
        %782 = vmatprep.mubr.bf16.mxu0 0
        %783 = vmatmul.mubr.bf16.gmra.mxu0 %v645
        %v784 = vpop.f32.mrf.mxu0
        %v785 = vadd.f32 0.0, %v784
        %v786 = vpop.f32.mrf.mxu0
        %v787 = vpop.f32.mrf.mxu0
        %v788 = vadd.f32 0.0, %v787
        %v789 = vpop.f32.mrf.mxu0
        %790 = vmatprep.mubr.bf16.mxu0 0
        %791 = vmatmul.mubr.bf16.gmra.mxu0 %v648
        %v792 = vpop.f32.mrf.mxu0
        %v793 = vadd.f32 0.0, %v792
        %v794 = vpop.f32.mrf.mxu0
        %v795 = vpop.f32.mrf.mxu0
        %v796 = vadd.f32 0.0, %v795
        %v797 = vpop.f32.mrf.mxu0
        %798 = vmatprep.mubr.bf16.mxu0 0
        %799 = vmatmul.mubr.bf16.gmra.mxu0 %v651
        %v800 = vpop.f32.mrf.mxu0
        %v801 = vadd.f32 0.0, %v800
        %v802 = vpop.f32.mrf.mxu0
        %v803 = vpop.f32.mrf.mxu0
        %v804 = vadd.f32 0.0, %v803
        %v805 = vpop.f32.mrf.mxu0
        %806 = vmatprep.mubr.bf16.mxu0 0
        %807 = vmatmul.mubr.bf16.gmra.mxu0 %v654
        %v808 = vpop.f32.mrf.mxu0
        %v809 = vadd.f32 0.0, %v808
        %v810 = vpop.f32.mrf.mxu0
        %v811 = vpop.f32.mrf.mxu0
        %v812 = vadd.f32 0.0, %v811
        %v813 = vpop.f32.mrf.mxu0
        %814 = vmatprep.mubr.bf16.mxu0 0
        %815 = vmatmul.mubr.bf16.gmra.mxu0 %v657
        %v816 = vpop.f32.mrf.mxu0
        %v817 = vadd.f32 0.0, %v816
        %v818 = vpop.f32.mrf.mxu0
        %v819 = vpop.f32.mrf.mxu0
        %v820 = vadd.f32 0.0, %v819
        %v821 = vpop.f32.mrf.mxu0
        %822 = vmatprep.mubr.bf16.mxu0 0
        %823 = vmatmul.mubr.bf16.gmra.mxu0 %v660
        %v824 = vpop.f32.mrf.mxu0
        %v825 = vadd.f32 0.0, %v824
        %v826 = vpop.f32.mrf.mxu0
        %v827 = vpop.f32.mrf.mxu0
        %v828 = vadd.f32 0.0, %v827
        %v829 = vpop.f32.mrf.mxu0
        %830 = vmatprep.mubr.bf16.mxu0 0
        %831 = vmatmul.mubr.bf16.gmra.mxu0 %v663
        %v832 = vpop.f32.mrf.mxu0
        %v833 = vadd.f32 0.0, %v832
        %v834 = vpop.f32.mrf.mxu0
        %v835 = vpop.f32.mrf.mxu0
        %v836 = vadd.f32 0.0, %v835
        %v837 = vpop.f32.mrf.mxu0
        %838 = vmatprep.mubr.bf16.mxu0 0
        %839 = vmatmul.mubr.bf16.gmra.mxu0 %v666
        %v840 = vpop.f32.mrf.mxu0
        %v841 = vadd.f32 0.0, %v840
        %v842 = vpop.f32.mrf.mxu0
        %v843 = vpop.f32.mrf.mxu0
        %v844 = vadd.f32 0.0, %v843
        %v845 = vpop.f32.mrf.mxu0
        %846 = vmatprep.mubr.bf16.mxu0 0
        %847 = vmatmul.mubr.bf16.gmra.mxu0 %v669
        %v848 = vpop.f32.mrf.mxu0
        %v849 = vadd.f32 0.0, %v848
        %v850 = vpop.f32.mrf.mxu0
        %v851 = vpop.f32.mrf.mxu0
        %v852 = vadd.f32 0.0, %v851
        %v853 = vpop.f32.mrf.mxu0
        %854 = vmatprep.mubr.bf16.mxu0 0
        %855 = vmatmul.mubr.bf16.gmra.mxu0 %v672
        %v856 = vpop.f32.mrf.mxu0
        %v857 = vadd.f32 0.0, %v856
        %v858 = vpop.f32.mrf.mxu0
        %v859 = vpop.f32.mrf.mxu0
        %v860 = vadd.f32 0.0, %v859
        %v861 = vpop.f32.mrf.mxu0
        %862 = vmatprep.mubr.bf16.mxu0 0
        %863 = vmatmul.mubr.bf16.gmra.mxu0 %v675
        %v864 = vpop.f32.mrf.mxu0
        %v865 = vadd.f32 0.0, %v864
        %v866 = vpop.f32.mrf.mxu0
        %v867 = vpop.f32.mrf.mxu0
        %v868 = vadd.f32 0.0, %v867
        %v869 = vpop.f32.mrf.mxu0
        %870 = vmatprep.mubr.bf16.mxu0 0
        %871 = vmatmul.mubr.bf16.gmra.mxu0 %v678
        %v872 = vpop.f32.mrf.mxu0
        %v873 = vadd.f32 0.0, %v872
        %v874 = vpop.f32.mrf.mxu0
        %v875 = vpop.f32.mrf.mxu0
        %v876 = vadd.f32 0.0, %v875
        %v877 = vpop.f32.mrf.mxu0
        %878 = vmatprep.mubr.bf16.mxu0 0
        %879 = vmatmul.mubr.bf16.gmra.mxu0 %v681
        %v880 = vpop.f32.mrf.mxu0
        %v881 = vadd.f32 0.0, %v880
        %v882 = vpop.f32.mrf.mxu0
        %v883 = vpop.f32.mrf.mxu0
        %v884 = vadd.f32 0.0, %v883
        %v885 = vpop.f32.mrf.mxu0
        %886 = vmatprep.mubr.bf16.mxu0 0
        %887 = vmatmul.mubr.bf16.gmra.mxu0 %v684
        %v888 = vpop.f32.mrf.mxu0
        %v889 = vadd.f32 0.0, %v888
        %v890 = vpop.f32.mrf.mxu0
        %v891 = vpop.f32.mrf.mxu0
        %v892 = vadd.f32 0.0, %v891
        %v893 = vpop.f32.mrf.mxu0
        %894 = vmatprep.mubr.bf16.mxu0 0
        %895 = vmatmul.mubr.bf16.gmra.mxu0 %v687
        %v896 = vpop.f32.mrf.mxu0
        %v897 = vadd.f32 0.0, %v896
        %v898 = vpop.f32.mrf.mxu0
        %v899 = vpop.f32.mrf.mxu0
        %v900 = vadd.f32 0.0, %v899
        %v901 = vpop.f32.mrf.mxu0
        %902 = vmatprep.mubr.bf16.mxu0 0
        %903 = vmatmul.mubr.bf16.gmra.mxu0 %v690
        %v904 = vpop.f32.mrf.mxu0
        %v905 = vadd.f32 0.0, %v904
        %v906 = vpop.f32.mrf.mxu0
        %v907 = vpop.f32.mrf.mxu0
        %v908 = vadd.f32 0.0, %v907
        %v909 = vpop.f32.mrf.mxu0
        %910 = vmatprep.mubr.bf16.mxu0 0
        %911 = vmatmul.mubr.bf16.gmra.mxu0 %v693
        %v912 = vpop.f32.mrf.mxu0
        %v913 = vadd.f32 0.0, %v912
        %v914 = vpop.f32.mrf.mxu0
        %v915 = vpop.f32.mrf.mxu0
        %v916 = vadd.f32 0.0, %v915
        %v917 = vpop.f32.mrf.mxu0
        %918 = vmatprep.mubr.bf16.mxu0 0
        %919 = vmatmul.mubr.bf16.gmra.mxu0 %v696
        %v920 = vpop.f32.mrf.mxu0
        %v921 = vadd.f32 0.0, %v920
        %v922 = vpop.f32.mrf.mxu0
        %v923 = vpop.f32.mrf.mxu0
        %v924 = vadd.f32 0.0, %v923
        %v925 = vpop.f32.mrf.mxu0
        %926 = vmatprep.mubr.bf16.mxu0 0
        %927 = vmatmul.mubr.bf16.gmra.mxu0 %v699
        %v928 = vpop.f32.mrf.mxu0
        %v929 = vadd.f32 0.0, %v928
        %v930 = vpop.f32.mrf.mxu0
        %v931 = vpop.f32.mrf.mxu0
        %v932 = vadd.f32 0.0, %v931
        %v933 = vpop.f32.mrf.mxu0
        %934 = vmatprep.mubr.bf16.mxu0 0
        %935 = vmatmul.mubr.bf16.gmra.mxu0 %v702
        %v936 = vpop.f32.mrf.mxu0
        %v937 = vadd.f32 0.0, %v936
        %v938 = vpop.f32.mrf.mxu0
        %v939 = vpop.f32.mrf.mxu0
        %v940 = vadd.f32 0.0, %v939
        %v941 = vpop.f32.mrf.mxu0
        %942 = vmatprep.mubr.bf16.mxu0 0
        %943 = vmatmul.mubr.bf16.gmra.mxu0 %v705
        %v944 = vpop.f32.mrf.mxu0
        %v945 = vadd.f32 0.0, %v944
        %v946 = vpop.f32.mrf.mxu0
        %v947 = vpop.f32.mrf.mxu0
        %v948 = vadd.f32 0.0, %v947
        %v949 = vpop.f32.mrf.mxu0
        %950 = vmatprep.mubr.bf16.mxu0 0
        %951 = vmatmul.mubr.bf16.gmra.mxu0 %v708
        %v952 = vpop.f32.mrf.mxu0
        %v953 = vadd.f32 0.0, %v952
        %v954 = vpop.f32.mrf.mxu0
        %v955 = vpop.f32.mrf.mxu0
        %v956 = vadd.f32 0.0, %v955
        %v957 = vpop.f32.mrf.mxu0
        %958 = vmatprep.mubr.bf16.mxu0 0
        %959 = vmatmul.mubr.bf16.gmra.mxu0 %v711
        %v960 = vpop.f32.mrf.mxu0
        %v961 = vadd.f32 0.0, %v960
        %v962 = vpop.f32.mrf.mxu0
        %v963 = vpop.f32.mrf.mxu0
        %v964 = vadd.f32 0.0, %v963
        %v965 = vpop.f32.mrf.mxu0
        %966 = vmatprep.mubr.bf16.mxu0 0
        %967 = vmatmul.mubr.bf16.gmra.mxu0 %v714
        %v968 = vpop.f32.mrf.mxu0
        %v969 = vadd.f32 0.0, %v968
        %v970 = vpop.f32.mrf.mxu0
        %v971 = vpop.f32.mrf.mxu0
        %v972 = vadd.f32 0.0, %v971
        %v973 = vpop.f32.mrf.mxu0
        %974 = vmatprep.mubr.bf16.mxu0 0
        %975 = vmatmul.mubr.bf16.gmra.mxu0 %v717
        %v976 = vpop.f32.mrf.mxu0
        %v977 = vadd.f32 0.0, %v976
        %v978 = vpop.f32.mrf.mxu0
        %v979 = vpop.f32.mrf.mxu0
        %v980 = vadd.f32 0.0, %v979
        %v981 = vpop.f32.mrf.mxu0
        %982 = vmatprep.mubr.bf16.mxu0 0
        %983 = vmatmul.mubr.bf16.gmra.mxu0 %v720
        %v984 = vpop.f32.mrf.mxu0
        %v985 = vadd.f32 0.0, %v984
        %v986 = vpop.f32.mrf.mxu0
        %v987 = vpop.f32.mrf.mxu0
        %v988 = vadd.f32 0.0, %v987
        %v989 = vpop.f32.mrf.mxu0
        %990 = vmatprep.mubr.bf16.mxu0 0
        %991 = vmatmul.mubr.bf16.gmra.mxu0 %v723
        %v992 = vpop.f32.mrf.mxu0
        %v993 = vadd.f32 0.0, %v992
        %v994 = vpop.f32.mrf.mxu0
        %v995 = vpop.f32.mrf.mxu0
        %v996 = vadd.f32 0.0, %v995
        %v997 = vpop.f32.mrf.mxu0
        %998 = vmatprep.mubr.bf16.mxu0 0
        %999 = vmatmul.mubr.bf16.gmra.mxu0 %v726
        %v1000 = vpop.f32.mrf.mxu0
        %v1001 = vadd.f32 0.0, %v1000
        %v1002 = vpop.f32.mrf.mxu0
        %v1003 = vpop.f32.mrf.mxu0
        %v1004 = vadd.f32 0.0, %v1003
        %v1005 = vpop.f32.mrf.mxu0
        %1006 = vmatprep.mubr.bf16.mxu0 0
        %1007 = vmatmul.mubr.bf16.gmra.mxu0 %v729
        %v1008 = vpop.f32.mrf.mxu0
        %v1009 = vadd.f32 0.0, %v1008
        %v1010 = vpop.f32.mrf.mxu0
        %v1011 = vpop.f32.mrf.mxu0
        %v1012 = vadd.f32 0.0, %v1011
        %v1013 = vpop.f32.mrf.mxu0
        %1014 = vmatprep.mubr.bf16.mxu0 0
        %1015 = vmatmul.mubr.bf16.gmra.mxu0 %v732
        %v1016 = vpop.f32.mrf.mxu0
        %v1017 = vadd.f32 0.0, %v1016
        %v1018 = vpop.f32.mrf.mxu0
        %v1019 = vpop.f32.mrf.mxu0
        %v1020 = vadd.f32 0.0, %v1019
        %v1021 = vpop.f32.mrf.mxu0
        %1022 = vdwg.mxu0
        %v1023 = vadd.f32 %v333, %v769
        %v1024 = vadd.f32 %v334, %v772
        %v1025 = vadd.f32 %v335, %v777
        %v1026 = vadd.f32 %v336, %v780
        %v1027 = vadd.f32 %v337, %v785
        %v1028 = vadd.f32 %v338, %v788
        %v1029 = vadd.f32 %v339, %v793
        %v1030 = vadd.f32 %v340, %v796
        %v1031 = vadd.f32 %v341, %v801
        %v1032 = vadd.f32 %v342, %v804
        %v1033 = vadd.f32 %v343, %v809
        %v1034 = vadd.f32 %v344, %v812
        %v1035 = vadd.f32 %v345, %v817
        %v1036 = vadd.f32 %v346, %v820
        %v1037 = vadd.f32 %v347, %v825
        %v1038 = vadd.f32 %v348, %v828
        %v1039 = vadd.f32 %v349, %v833
        %v1040 = vadd.f32 %v350, %v836
        %v1041 = vadd.f32 %v351, %v841
        %v1042 = vadd.f32 %v352, %v844
        %v1043 = vadd.f32 %v353, %v849
        %v1044 = vadd.f32 %v354, %v852
        %v1045 = vadd.f32 %v355, %v857
        %v1046 = vadd.f32 %v356, %v860
        %v1047 = vadd.f32 %v357, %v865
        %v1048 = vadd.f32 %v358, %v868
        %v1049 = vadd.f32 %v359, %v873
        %v1050 = vadd.f32 %v360, %v876
        %v1051 = vadd.f32 %v361, %v881
        %v1052 = vadd.f32 %v362, %v884
        %v1053 = vadd.f32 %v363, %v889
        %v1054 = vadd.f32 %v364, %v892
        %v1055 = vadd.f32 %v365, %v897
        %v1056 = vadd.f32 %v366, %v900
        %v1057 = vadd.f32 %v367, %v905
        %v1058 = vadd.f32 %v368, %v908
        %v1059 = vadd.f32 %v369, %v913
        %v1060 = vadd.f32 %v370, %v916
        %v1061 = vadd.f32 %v371, %v921
        %v1062 = vadd.f32 %v372, %v924
        %v1063 = vadd.f32 %v373, %v929
        %v1064 = vadd.f32 %v374, %v932
        %v1065 = vadd.f32 %v375, %v937
        %v1066 = vadd.f32 %v376, %v940
        %v1067 = vadd.f32 %v377, %v945
        %v1068 = vadd.f32 %v378, %v948
        %v1069 = vadd.f32 %v379, %v953
        %v1070 = vadd.f32 %v380, %v956
        %v1071 = vadd.f32 %v381, %v961
        %v1072 = vadd.f32 %v382, %v964
        %v1073 = vadd.f32 %v383, %v969
        %v1074 = vadd.f32 %v384, %v972
        %v1075 = vadd.f32 %v385, %v977
        %v1076 = vadd.f32 %v386, %v980
        %v1077 = vadd.f32 %v387, %v985
        %v1078 = vadd.f32 %v388, %v988
        %v1079 = vadd.f32 %v389, %v993
        %v1080 = vadd.f32 %v390, %v996
        %v1081 = vadd.f32 %v391, %v1001
        %v1082 = vadd.f32 %v392, %v1004
        %v1083 = vadd.f32 %v393, %v1009
        %v1084 = vadd.f32 %v394, %v1012
        %v1085 = vadd.f32 %v395, %v1017
        %v1086 = vadd.f32 %v396, %v1020
        %1087 = vst [vmem:[#allocation2] sm:$0xff] %v1023
        %1088 = vst [vmem:[#allocation2 + $0x8] sm:$0xff] %v1024
        %1089 = vst [vmem:[#allocation2 + $0x10] sm:$0xff] %v1025
        %1090 = vst [vmem:[#allocation2 + $0x18] sm:$0xff] %v1026
        %1091 = vst [vmem:[#allocation2 + $0x20] sm:$0xff] %v1027
        %1092 = vst [vmem:[#allocation2 + $0x28] sm:$0xff] %v1028
        %1093 = vst [vmem:[#allocation2 + $0x30] sm:$0xff] %v1029
        %1094 = vst [vmem:[#allocation2 + $0x38] sm:$0xff] %v1030
        %1095 = vst [vmem:[#allocation2 + $0x40] sm:$0xff] %v1031
        %1096 = vst [vmem:[#allocation2 + $0x48] sm:$0xff] %v1032
        %1097 = vst [vmem:[#allocation2 + $0x50] sm:$0xff] %v1033
        %1098 = vst [vmem:[#allocation2 + $0x58] sm:$0xff] %v1034
        %1099 = vst [vmem:[#allocation2 + $0x60] sm:$0xff] %v1035
        %1100 = vst [vmem:[#allocation2 + $0x68] sm:$0xff] %v1036
        %1101 = vst [vmem:[#allocation2 + $0x70] sm:$0xff] %v1037
        %1102 = vst [vmem:[#allocation2 + $0x78] sm:$0xff] %v1038
        %1103 = vst [vmem:[#allocation2 + $0x80] sm:$0xff] %v1039
        %1104 = vst [vmem:[#allocation2 + $0x88] sm:$0xff] %v1040
        %1105 = vst [vmem:[#allocation2 + $0x90] sm:$0xff] %v1041
        %1106 = vst [vmem:[#allocation2 + $0x98] sm:$0xff] %v1042
        %1107 = vst [vmem:[#allocation2 + $0xa0] sm:$0xff] %v1043
        %1108 = vst [vmem:[#allocation2 + $0xa8] sm:$0xff] %v1044
        %1109 = vst [vmem:[#allocation2 + $0xb0] sm:$0xff] %v1045
        %1110 = vst [vmem:[#allocation2 + $0xb8] sm:$0xff] %v1046
        %1111 = vst [vmem:[#allocation2 + $0xc0] sm:$0xff] %v1047
        %1112 = vst [vmem:[#allocation2 + $0xc8] sm:$0xff] %v1048
        %1113 = vst [vmem:[#allocation2 + $0xd0] sm:$0xff] %v1049
        %1114 = vst [vmem:[#allocation2 + $0xd8] sm:$0xff] %v1050
        %1115 = vst [vmem:[#allocation2 + $0xe0] sm:$0xff] %v1051
        %1116 = vst [vmem:[#allocation2 + $0xe8] sm:$0xff] %v1052
        %1117 = vst [vmem:[#allocation2 + $0xf0] sm:$0xff] %v1053
        %1118 = vst [vmem:[#allocation2 + $0xf8] sm:$0xff] %v1054
        %1119 = vst [vmem:[#allocation2 + $0x100] sm:$0xff] %v1055
        %1120 = vst [vmem:[#allocation2 + $0x108] sm:$0xff] %v1056
        %1121 = vst [vmem:[#allocation2 + $0x110] sm:$0xff] %v1057
        %1122 = vst [vmem:[#allocation2 + $0x118] sm:$0xff] %v1058
        %1123 = vst [vmem:[#allocation2 + $0x120] sm:$0xff] %v1059
        %1124 = vst [vmem:[#allocation2 + $0x128] sm:$0xff] %v1060
        %1125 = vst [vmem:[#allocation2 + $0x130] sm:$0xff] %v1061
        %1126 = vst [vmem:[#allocation2 + $0x138] sm:$0xff] %v1062
        %1127 = vst [vmem:[#allocation2 + $0x140] sm:$0xff] %v1063
        %1128 = vst [vmem:[#allocation2 + $0x148] sm:$0xff] %v1064
        %1129 = vst [vmem:[#allocation2 + $0x150] sm:$0xff] %v1065
        %1130 = vst [vmem:[#allocation2 + $0x158] sm:$0xff] %v1066
        %1131 = vst [vmem:[#allocation2 + $0x160] sm:$0xff] %v1067
        %1132 = vst [vmem:[#allocation2 + $0x168] sm:$0xff] %v1068
        %1133 = vst [vmem:[#allocation2 + $0x170] sm:$0xff] %v1069
        %1134 = vst [vmem:[#allocation2 + $0x178] sm:$0xff] %v1070
        %1135 = vst [vmem:[#allocation2 + $0x180] sm:$0xff] %v1071
        %1136 = vst [vmem:[#allocation2 + $0x188] sm:$0xff] %v1072
        %1137 = vst [vmem:[#allocation2 + $0x190] sm:$0xff] %v1073
        %1138 = vst [vmem:[#allocation2 + $0x198] sm:$0xff] %v1074
        %1139 = vst [vmem:[#allocation2 + $0x1a0] sm:$0xff] %v1075
        %1140 = vst [vmem:[#allocation2 + $0x1a8] sm:$0xff] %v1076
        %1141 = vst [vmem:[#allocation2 + $0x1b0] sm:$0xff] %v1077
        %1142 = vst [vmem:[#allocation2 + $0x1b8] sm:$0xff] %v1078
        %1143 = vst [vmem:[#allocation2 + $0x1c0] sm:$0xff] %v1079
        %1144 = vst [vmem:[#allocation2 + $0x1c8] sm:$0xff] %v1080
        %1145 = vst [vmem:[#allocation2 + $0x1d0] sm:$0xff] %v1081
        %1146 = vst [vmem:[#allocation2 + $0x1d8] sm:$0xff] %v1082
        %1147 = vst [vmem:[#allocation2 + $0x1e0] sm:$0xff] %v1083
        %1148 = vst [vmem:[#allocation2 + $0x1e8] sm:$0xff] %v1084
        %1149 = vst [vmem:[#allocation2 + $0x1f0] sm:$0xff] %v1085
        %1150 = vst [vmem:[#allocation2 + $0x1f8] sm:$0xff] %v1086
        // Predicated region
        $region41: #{_lambda_.23} parent=35 // pred_check
          %p1151 = pneg %p265
        $region42: #{_lambda_.23} parent=35 // pred_check_branch
          %1153 = sbr.rel (%p1151) target = $region44
        $region43: #{_lambda_.23} parent=35 // pred_region
          %v1154 = vld [vmem:[#allocation2] sm:$0xff]
          %v1155 = vld [vmem:[#allocation2 + $0x8] sm:$0xff]
          %v1156 = vld [vmem:[#allocation2 + $0x10] sm:$0xff]
          %v1157 = vld [vmem:[#allocation2 + $0x18] sm:$0xff]
          %v1158 = vld [vmem:[#allocation2 + $0x20] sm:$0xff]
          %v1159 = vld [vmem:[#allocation2 + $0x28] sm:$0xff]
          %v1160 = vld [vmem:[#allocation2 + $0x30] sm:$0xff]
          %v1161 = vld [vmem:[#allocation2 + $0x38] sm:$0xff]
          %v1162 = vld [vmem:[#allocation2 + $0x40] sm:$0xff]
          %v1163 = vld [vmem:[#allocation2 + $0x48] sm:$0xff]
          %v1164 = vld [vmem:[#allocation2 + $0x50] sm:$0xff]
          %v1165 = vld [vmem:[#allocation2 + $0x58] sm:$0xff]
          %v1166 = vld [vmem:[#allocation2 + $0x60] sm:$0xff]
          %v1167 = vld [vmem:[#allocation2 + $0x68] sm:$0xff]
          %v1168 = vld [vmem:[#allocation2 + $0x70] sm:$0xff]
          %v1169 = vld [vmem:[#allocation2 + $0x78] sm:$0xff]
          %v1170 = vld [vmem:[#allocation2 + $0x80] sm:$0xff]
          %v1171 = vld [vmem:[#allocation2 + $0x88] sm:$0xff]
          %v1172 = vld [vmem:[#allocation2 + $0x90] sm:$0xff]
          %v1173 = vld [vmem:[#allocation2 + $0x98] sm:$0xff]
          %v1174 = vld [vmem:[#allocation2 + $0xa0] sm:$0xff]
          %v1175 = vld [vmem:[#allocation2 + $0xa8] sm:$0xff]
          %v1176 = vld [vmem:[#allocation2 + $0xb0] sm:$0xff]
          %v1177 = vld [vmem:[#allocation2 + $0xb8] sm:$0xff]
          %v1178 = vld [vmem:[#allocation2 + $0xc0] sm:$0xff]
          %v1179 = vld [vmem:[#allocation2 + $0xc8] sm:$0xff]
          %v1180 = vld [vmem:[#allocation2 + $0xd0] sm:$0xff]
          %v1181 = vld [vmem:[#allocation2 + $0xd8] sm:$0xff]
          %v1182 = vld [vmem:[#allocation2 + $0xe0] sm:$0xff]
          %v1183 = vld [vmem:[#allocation2 + $0xe8] sm:$0xff]
          %v1184 = vld [vmem:[#allocation2 + $0xf0] sm:$0xff]
          %v1185 = vld [vmem:[#allocation2 + $0xf8] sm:$0xff]
          %v1186 = vld [vmem:[#allocation2 + $0x100] sm:$0xff]
          %v1187 = vld [vmem:[#allocation2 + $0x108] sm:$0xff]
          %v1188 = vld [vmem:[#allocation2 + $0x110] sm:$0xff]
          %v1189 = vld [vmem:[#allocation2 + $0x118] sm:$0xff]
          %v1190 = vld [vmem:[#allocation2 + $0x120] sm:$0xff]
          %v1191 = vld [vmem:[#allocation2 + $0x128] sm:$0xff]
          %v1192 = vld [vmem:[#allocation2 + $0x130] sm:$0xff]
          %v1193 = vld [vmem:[#allocation2 + $0x138] sm:$0xff]
          %v1194 = vld [vmem:[#allocation2 + $0x140] sm:$0xff]
          %v1195 = vld [vmem:[#allocation2 + $0x148] sm:$0xff]
          %v1196 = vld [vmem:[#allocation2 + $0x150] sm:$0xff]
          %v1197 = vld [vmem:[#allocation2 + $0x158] sm:$0xff]
          %v1198 = vld [vmem:[#allocation2 + $0x160] sm:$0xff]
          %v1199 = vld [vmem:[#allocation2 + $0x168] sm:$0xff]
          %v1200 = vld [vmem:[#allocation2 + $0x170] sm:$0xff]
          %v1201 = vld [vmem:[#allocation2 + $0x178] sm:$0xff]
          %v1202 = vld [vmem:[#allocation2 + $0x180] sm:$0xff]
          %v1203 = vld [vmem:[#allocation2 + $0x188] sm:$0xff]
          %v1204 = vld [vmem:[#allocation2 + $0x190] sm:$0xff]
          %v1205 = vld [vmem:[#allocation2 + $0x198] sm:$0xff]
          %v1206 = vld [vmem:[#allocation2 + $0x1a0] sm:$0xff]
          %v1207 = vld [vmem:[#allocation2 + $0x1a8] sm:$0xff]
          %v1208 = vld [vmem:[#allocation2 + $0x1b0] sm:$0xff]
          %v1209 = vld [vmem:[#allocation2 + $0x1b8] sm:$0xff]
          %v1210 = vld [vmem:[#allocation2 + $0x1c0] sm:$0xff]
          %v1211 = vld [vmem:[#allocation2 + $0x1c8] sm:$0xff]
          %v1212 = vld [vmem:[#allocation2 + $0x1d0] sm:$0xff]
          %v1213 = vld [vmem:[#allocation2 + $0x1d8] sm:$0xff]
          %v1214 = vld [vmem:[#allocation2 + $0x1e0] sm:$0xff]
          %v1215 = vld [vmem:[#allocation2 + $0x1e8] sm:$0xff]
          %v1216 = vld [vmem:[#allocation2 + $0x1f0] sm:$0xff]
          %v1217 = vld [vmem:[#allocation2 + $0x1f8] sm:$0xff]
          %v1218 = vld [vmem:[%s2] sm:$0x1]
          %v1220 = vlaneseq
          %v1221 = vshrl.u32 %v1220, 7
          %v1222 = vsub.s32 0, %v1221
          %v1223 = vrot.slane %v1218, %v1222
          %v1225 = vmul.f32 %v1154, %v1223
          %v1226 = vmul.f32 %v1155, %v1223
          %v1227 = vmul.f32 %v1156, %v1223
          %v1228 = vmul.f32 %v1157, %v1223
          %v1229 = vmul.f32 %v1158, %v1223
          %v1230 = vmul.f32 %v1159, %v1223
          %v1231 = vmul.f32 %v1160, %v1223
          %v1232 = vmul.f32 %v1161, %v1223
          %v1233 = vmul.f32 %v1162, %v1223
          %v1234 = vmul.f32 %v1163, %v1223
          %v1235 = vmul.f32 %v1164, %v1223
          %v1236 = vmul.f32 %v1165, %v1223
          %v1237 = vmul.f32 %v1166, %v1223
          %v1238 = vmul.f32 %v1167, %v1223
          %v1239 = vmul.f32 %v1168, %v1223
          %v1240 = vmul.f32 %v1169, %v1223
          %v1241 = vmul.f32 %v1170, %v1223
          %v1242 = vmul.f32 %v1171, %v1223
          %v1243 = vmul.f32 %v1172, %v1223
          %v1244 = vmul.f32 %v1173, %v1223
          %v1245 = vmul.f32 %v1174, %v1223
          %v1246 = vmul.f32 %v1175, %v1223
          %v1247 = vmul.f32 %v1176, %v1223
          %v1248 = vmul.f32 %v1177, %v1223
          %v1249 = vmul.f32 %v1178, %v1223
          %v1250 = vmul.f32 %v1179, %v1223
          %v1251 = vmul.f32 %v1180, %v1223
          %v1252 = vmul.f32 %v1181, %v1223
          %v1253 = vmul.f32 %v1182, %v1223
          %v1254 = vmul.f32 %v1183, %v1223
          %v1255 = vmul.f32 %v1184, %v1223
          %v1256 = vmul.f32 %v1185, %v1223
          %v1257 = vmul.f32 %v1186, %v1223
          %v1258 = vmul.f32 %v1187, %v1223
          %v1259 = vmul.f32 %v1188, %v1223
          %v1260 = vmul.f32 %v1189, %v1223
          %v1261 = vmul.f32 %v1190, %v1223
          %v1262 = vmul.f32 %v1191, %v1223
          %v1263 = vmul.f32 %v1192, %v1223
          %v1264 = vmul.f32 %v1193, %v1223
          %v1265 = vmul.f32 %v1194, %v1223
          %v1266 = vmul.f32 %v1195, %v1223
          %v1267 = vmul.f32 %v1196, %v1223
          %v1268 = vmul.f32 %v1197, %v1223
          %v1269 = vmul.f32 %v1198, %v1223
          %v1270 = vmul.f32 %v1199, %v1223
          %v1271 = vmul.f32 %v1200, %v1223
          %v1272 = vmul.f32 %v1201, %v1223
          %v1273 = vmul.f32 %v1202, %v1223
          %v1274 = vmul.f32 %v1203, %v1223
          %v1275 = vmul.f32 %v1204, %v1223
          %v1276 = vmul.f32 %v1205, %v1223
          %v1277 = vmul.f32 %v1206, %v1223
          %v1278 = vmul.f32 %v1207, %v1223
          %v1279 = vmul.f32 %v1208, %v1223
          %v1280 = vmul.f32 %v1209, %v1223
          %v1281 = vmul.f32 %v1210, %v1223
          %v1282 = vmul.f32 %v1211, %v1223
          %v1283 = vmul.f32 %v1212, %v1223
          %v1284 = vmul.f32 %v1213, %v1223
          %v1285 = vmul.f32 %v1214, %v1223
          %v1286 = vmul.f32 %v1215, %v1223
          %v1287 = vmul.f32 %v1216, %v1223
          %v1288 = vmul.f32 %v1217, %v1223
          %v1289 = vld [vmem:[%s3] sm:$0x1]
          %v1291 = vlaneseq
          %v1292 = vshrl.u32 %v1291, 7
          %v1293 = vsub.s32 0, %v1292
          %v1294 = vrot.slane %v1289, %v1293
          %v1296 = vadd.f32 %v1225, %v1294
          %v1297 = vadd.f32 %v1226, %v1294
          %v1298 = vadd.f32 %v1227, %v1294
          %v1299 = vadd.f32 %v1228, %v1294
          %v1300 = vadd.f32 %v1229, %v1294
          %v1301 = vadd.f32 %v1230, %v1294
          %v1302 = vadd.f32 %v1231, %v1294
          %v1303 = vadd.f32 %v1232, %v1294
          %v1304 = vadd.f32 %v1233, %v1294
          %v1305 = vadd.f32 %v1234, %v1294
          %v1306 = vadd.f32 %v1235, %v1294
          %v1307 = vadd.f32 %v1236, %v1294
          %v1308 = vadd.f32 %v1237, %v1294
          %v1309 = vadd.f32 %v1238, %v1294
          %v1310 = vadd.f32 %v1239, %v1294
          %v1311 = vadd.f32 %v1240, %v1294
          %v1312 = vadd.f32 %v1241, %v1294
          %v1313 = vadd.f32 %v1242, %v1294
          %v1314 = vadd.f32 %v1243, %v1294
          %v1315 = vadd.f32 %v1244, %v1294
          %v1316 = vadd.f32 %v1245, %v1294
          %v1317 = vadd.f32 %v1246, %v1294
          %v1318 = vadd.f32 %v1247, %v1294
          %v1319 = vadd.f32 %v1248, %v1294
          %v1320 = vadd.f32 %v1249, %v1294
          %v1321 = vadd.f32 %v1250, %v1294
          %v1322 = vadd.f32 %v1251, %v1294
          %v1323 = vadd.f32 %v1252, %v1294
          %v1324 = vadd.f32 %v1253, %v1294
          %v1325 = vadd.f32 %v1254, %v1294
          %v1326 = vadd.f32 %v1255, %v1294
          %v1327 = vadd.f32 %v1256, %v1294
          %v1328 = vadd.f32 %v1257, %v1294
          %v1329 = vadd.f32 %v1258, %v1294
          %v1330 = vadd.f32 %v1259, %v1294
          %v1331 = vadd.f32 %v1260, %v1294
          %v1332 = vadd.f32 %v1261, %v1294
          %v1333 = vadd.f32 %v1262, %v1294
          %v1334 = vadd.f32 %v1263, %v1294
          %v1335 = vadd.f32 %v1264, %v1294
          %v1336 = vadd.f32 %v1265, %v1294
          %v1337 = vadd.f32 %v1266, %v1294
          %v1338 = vadd.f32 %v1267, %v1294
          %v1339 = vadd.f32 %v1268, %v1294
          %v1340 = vadd.f32 %v1269, %v1294
          %v1341 = vadd.f32 %v1270, %v1294
          %v1342 = vadd.f32 %v1271, %v1294
          %v1343 = vadd.f32 %v1272, %v1294
          %v1344 = vadd.f32 %v1273, %v1294
          %v1345 = vadd.f32 %v1274, %v1294
          %v1346 = vadd.f32 %v1275, %v1294
          %v1347 = vadd.f32 %v1276, %v1294
          %v1348 = vadd.f32 %v1277, %v1294
          %v1349 = vadd.f32 %v1278, %v1294
          %v1350 = vadd.f32 %v1279, %v1294
          %v1351 = vadd.f32 %v1280, %v1294
          %v1352 = vadd.f32 %v1281, %v1294
          %v1353 = vadd.f32 %v1282, %v1294
          %v1354 = vadd.f32 %v1283, %v1294
          %v1355 = vadd.f32 %v1284, %v1294
          %v1356 = vadd.f32 %v1285, %v1294
          %v1357 = vadd.f32 %v1286, %v1294
          %v1358 = vadd.f32 %v1287, %v1294
          %v1359 = vadd.f32 %v1288, %v1294
          %v1360 = vtanh.pop %v1296
          %v1361 = vtanh.pop %v1297
          %v1362 = vtanh.pop %v1298
          %v1363 = vtanh.pop %v1299
          %v1364 = vtanh.pop %v1300
          %v1365 = vtanh.pop %v1301
          %v1366 = vtanh.pop %v1302
          %v1367 = vtanh.pop %v1303
          %v1368 = vtanh.pop %v1304
          %v1369 = vtanh.pop %v1305
          %v1370 = vtanh.pop %v1306
          %v1371 = vtanh.pop %v1307
          %v1372 = vtanh.pop %v1308
          %v1373 = vtanh.pop %v1309
          %v1374 = vtanh.pop %v1310
          %v1375 = vtanh.pop %v1311
          %v1376 = vtanh.pop %v1312
          %v1377 = vtanh.pop %v1313
          %v1378 = vtanh.pop %v1314
          %v1379 = vtanh.pop %v1315
          %v1380 = vtanh.pop %v1316
          %v1381 = vtanh.pop %v1317
          %v1382 = vtanh.pop %v1318
          %v1383 = vtanh.pop %v1319
          %v1384 = vtanh.pop %v1320
          %v1385 = vtanh.pop %v1321
          %v1386 = vtanh.pop %v1322
          %v1387 = vtanh.pop %v1323
          %v1388 = vtanh.pop %v1324
          %v1389 = vtanh.pop %v1325
          %v1390 = vtanh.pop %v1326
          %v1391 = vtanh.pop %v1327
          %v1392 = vtanh.pop %v1328
          %v1393 = vtanh.pop %v1329
          %v1394 = vtanh.pop %v1330
          %v1395 = vtanh.pop %v1331
          %v1396 = vtanh.pop %v1332
          %v1397 = vtanh.pop %v1333
          %v1398 = vtanh.pop %v1334
          %v1399 = vtanh.pop %v1335
          %v1400 = vtanh.pop %v1336
          %v1401 = vtanh.pop %v1337
          %v1402 = vtanh.pop %v1338
          %v1403 = vtanh.pop %v1339
          %v1404 = vtanh.pop %v1340
          %v1405 = vtanh.pop %v1341
          %v1406 = vtanh.pop %v1342
          %v1407 = vtanh.pop %v1343
          %v1408 = vtanh.pop %v1344
          %v1409 = vtanh.pop %v1345
          %v1410 = vtanh.pop %v1346
          %v1411 = vtanh.pop %v1347
          %v1412 = vtanh.pop %v1348
          %v1413 = vtanh.pop %v1349
          %v1414 = vtanh.pop %v1350
          %v1415 = vtanh.pop %v1351
          %v1416 = vtanh.pop %v1352
          %v1417 = vtanh.pop %v1353
          %v1418 = vtanh.pop %v1354
          %v1419 = vtanh.pop %v1355
          %v1420 = vtanh.pop %v1356
          %v1421 = vtanh.pop %v1357
          %v1422 = vtanh.pop %v1358
          %v1423 = vtanh.pop %v1359
          %1424 = vst [vmem:[%s235] sm:$0xff] %v1360
          %1425 = vst [vmem:[%s235 + $0x8] sm:$0xff] %v1361
          %1426 = vst [vmem:[%s235 + $0x10] sm:$0xff] %v1362
          %1427 = vst [vmem:[%s235 + $0x18] sm:$0xff] %v1363
          %1428 = vst [vmem:[%s235 + $0x20] sm:$0xff] %v1364
          %1429 = vst [vmem:[%s235 + $0x28] sm:$0xff] %v1365
          %1430 = vst [vmem:[%s235 + $0x30] sm:$0xff] %v1366
          %1431 = vst [vmem:[%s235 + $0x38] sm:$0xff] %v1367
          %1432 = vst [vmem:[%s235 + $0x40] sm:$0xff] %v1368
          %1433 = vst [vmem:[%s235 + $0x48] sm:$0xff] %v1369
          %1434 = vst [vmem:[%s235 + $0x50] sm:$0xff] %v1370
          %1435 = vst [vmem:[%s235 + $0x58] sm:$0xff] %v1371
          %1436 = vst [vmem:[%s235 + $0x60] sm:$0xff] %v1372
          %1437 = vst [vmem:[%s235 + $0x68] sm:$0xff] %v1373
          %1438 = vst [vmem:[%s235 + $0x70] sm:$0xff] %v1374
          %1439 = vst [vmem:[%s235 + $0x78] sm:$0xff] %v1375
          %1440 = vst [vmem:[%s235 + $0x80] sm:$0xff] %v1376
          %1441 = vst [vmem:[%s235 + $0x88] sm:$0xff] %v1377
          %1442 = vst [vmem:[%s235 + $0x90] sm:$0xff] %v1378
          %1443 = vst [vmem:[%s235 + $0x98] sm:$0xff] %v1379
          %1444 = vst [vmem:[%s235 + $0xa0] sm:$0xff] %v1380
          %1445 = vst [vmem:[%s235 + $0xa8] sm:$0xff] %v1381
          %1446 = vst [vmem:[%s235 + $0xb0] sm:$0xff] %v1382
          %1447 = vst [vmem:[%s235 + $0xb8] sm:$0xff] %v1383
          %1448 = vst [vmem:[%s235 + $0xc0] sm:$0xff] %v1384
          %1449 = vst [vmem:[%s235 + $0xc8] sm:$0xff] %v1385
          %1450 = vst [vmem:[%s235 + $0xd0] sm:$0xff] %v1386
          %1451 = vst [vmem:[%s235 + $0xd8] sm:$0xff] %v1387
          %1452 = vst [vmem:[%s235 + $0xe0] sm:$0xff] %v1388
          %1453 = vst [vmem:[%s235 + $0xe8] sm:$0xff] %v1389
          %1454 = vst [vmem:[%s235 + $0xf0] sm:$0xff] %v1390
          %1455 = vst [vmem:[%s235 + $0xf8] sm:$0xff] %v1391
          %1456 = vst [vmem:[%s235 + $0x100] sm:$0xff] %v1392
          %1457 = vst [vmem:[%s235 + $0x108] sm:$0xff] %v1393
          %1458 = vst [vmem:[%s235 + $0x110] sm:$0xff] %v1394
          %1459 = vst [vmem:[%s235 + $0x118] sm:$0xff] %v1395
          %1460 = vst [vmem:[%s235 + $0x120] sm:$0xff] %v1396
          %1461 = vst [vmem:[%s235 + $0x128] sm:$0xff] %v1397
          %1462 = vst [vmem:[%s235 + $0x130] sm:$0xff] %v1398
          %1463 = vst [vmem:[%s235 + $0x138] sm:$0xff] %v1399
          %1464 = vst [vmem:[%s235 + $0x140] sm:$0xff] %v1400
          %1465 = vst [vmem:[%s235 + $0x148] sm:$0xff] %v1401
          %1466 = vst [vmem:[%s235 + $0x150] sm:$0xff] %v1402
          %1467 = vst [vmem:[%s235 + $0x158] sm:$0xff] %v1403
          %1468 = vst [vmem:[%s235 + $0x160] sm:$0xff] %v1404
          %1469 = vst [vmem:[%s235 + $0x168] sm:$0xff] %v1405
          %1470 = vst [vmem:[%s235 + $0x170] sm:$0xff] %v1406
          %1471 = vst [vmem:[%s235 + $0x178] sm:$0xff] %v1407
          %1472 = vst [vmem:[%s235 + $0x180] sm:$0xff] %v1408
          %1473 = vst [vmem:[%s235 + $0x188] sm:$0xff] %v1409
          %1474 = vst [vmem:[%s235 + $0x190] sm:$0xff] %v1410
          %1475 = vst [vmem:[%s235 + $0x198] sm:$0xff] %v1411
          %1476 = vst [vmem:[%s235 + $0x1a0] sm:$0xff] %v1412
          %1477 = vst [vmem:[%s235 + $0x1a8] sm:$0xff] %v1413
          %1478 = vst [vmem:[%s235 + $0x1b0] sm:$0xff] %v1414
          %1479 = vst [vmem:[%s235 + $0x1b8] sm:$0xff] %v1415
          %1480 = vst [vmem:[%s235 + $0x1c0] sm:$0xff] %v1416
          %1481 = vst [vmem:[%s235 + $0x1c8] sm:$0xff] %v1417
          %1482 = vst [vmem:[%s235 + $0x1d0] sm:$0xff] %v1418
          %1483 = vst [vmem:[%s235 + $0x1d8] sm:$0xff] %v1419
          %1484 = vst [vmem:[%s235 + $0x1e0] sm:$0xff] %v1420
          %1485 = vst [vmem:[%s235 + $0x1e8] sm:$0xff] %v1421
          %1486 = vst [vmem:[%s235 + $0x1f0] sm:$0xff] %v1422
          %1487 = vst [vmem:[%s235 + $0x1f8] sm:$0xff] %v1423
        $region44: #{_lambda_.23} parent=35 // pred_fallthru
          _
        %s1488 = sand.u32 %s131, 1
        %s1489 = sand.u32 %s131, 1
        %s1490 = smul.addr %s1489, 512
        %s1491 = scalar_lea.vmem [#allocation3], %s1490
        // Predicated region
        $region45: #{_lambda_.23} parent=35 // pred_check
          %p1492 = pneg %p141
        $region46: #{_lambda_.23} parent=35 // pred_check_branch
          %1494 = sbr.rel (%p1492) target = $region48
        $region47: #{_lambda_.23} parent=35 // pred_region
          %s1495 = smul.u32 64, %s19
          %s1496 = ssub.s32 273, %s1495
          %p1497 = scmp.lt.s32.totalorder %s1496, 64
          %s1498 = scalar_select %p1497, %s1496, 64
          %s1499 = smul.u32 128, %s1498
          %p1500 = scmp.ne.s32.totalorder 0, %s1499
          %s1501 = smul.addr %s1495, 8
          %s1502 = scalar_lea.vmem %s4, %s1501
          // Predicated region
          $region49: #{_lambda_.23} parent=47 // pred_check
            %p1503 = pneg %p1500
          $region50: #{_lambda_.23} parent=47 // pred_check_branch
            %1505 = sbr.rel (%p1503) target = $region52
          $region51: #{_lambda_.23} parent=47 // pred_region
            // Predicated region
            $region53: #{_lambda_.23} parent=51 // pred_check
              _
            $region54: #{_lambda_.23} parent=51 // pred_check_branch
              %1507 = sbr.rel (0) target = $region56
            $region55: #{_lambda_.23} parent=51 // pred_region
              // Predicated region
              $region75: #{_lambda_.23} parent=55 // pred_check
                _
              $region76: #{_lambda_.23} parent=55 // pred_check_branch
                %1683 = sbr.rel (0) target = $region78
              $region77: #{_lambda_.23} parent=55 // pred_region
                %s1684 = sshrl.u32 %s1498, 6
                // While loop
                $region79: #{_lambda_.23} parent=77 // loop_pre_header
                  _
                $region80: #{_lambda_.23} parent=77 // loop_header
                  %s1686 = sphi 0, %s1688
                  %p1687 = scmp.ge.s32.totalorder %s1686, %s1684
                  %s1691 = sphi 0, %s1824
                  %s1692 = sphi %s1491, %s1827
                  %s1693 = sphi %s1502, %s1828
                $region81: #{_lambda_.23} parent=77 // loop_header_branch
                  %1690 = sbr.rel (%p1687) target = $region85
                $region82: #{_lambda_.23} parent=77 // loop_body
                  %v1694 = vld [vmem:[%s1692] sm:$0xff]
                  %1695 = vst [vmem:[%s1693] sm:$0xff] %v1694
                  %v1696 = vld [vmem:[%s1692 + $0x8] sm:$0xff]
                  %1697 = vst [vmem:[%s1693 + $0x8] sm:$0xff] %v1696
                  %v1698 = vld [vmem:[%s1692 + $0x10] sm:$0xff]
                  %1699 = vst [vmem:[%s1693 + $0x10] sm:$0xff] %v1698
                  %v1700 = vld [vmem:[%s1692 + $0x18] sm:$0xff]
                  %1701 = vst [vmem:[%s1693 + $0x18] sm:$0xff] %v1700
                  %v1702 = vld [vmem:[%s1692 + $0x20] sm:$0xff]
                  %1703 = vst [vmem:[%s1693 + $0x20] sm:$0xff] %v1702
                  %v1704 = vld [vmem:[%s1692 + $0x28] sm:$0xff]
                  %1705 = vst [vmem:[%s1693 + $0x28] sm:$0xff] %v1704
                  %v1706 = vld [vmem:[%s1692 + $0x30] sm:$0xff]
                  %1707 = vst [vmem:[%s1693 + $0x30] sm:$0xff] %v1706
                  %v1708 = vld [vmem:[%s1692 + $0x38] sm:$0xff]
                  %1709 = vst [vmem:[%s1693 + $0x38] sm:$0xff] %v1708
                  %v1710 = vld [vmem:[%s1692 + $0x40] sm:$0xff]
                  %1711 = vst [vmem:[%s1693 + $0x40] sm:$0xff] %v1710
                  %v1712 = vld [vmem:[%s1692 + $0x48] sm:$0xff]
                  %1713 = vst [vmem:[%s1693 + $0x48] sm:$0xff] %v1712
                  %v1714 = vld [vmem:[%s1692 + $0x50] sm:$0xff]
                  %1715 = vst [vmem:[%s1693 + $0x50] sm:$0xff] %v1714
                  %v1716 = vld [vmem:[%s1692 + $0x58] sm:$0xff]
                  %1717 = vst [vmem:[%s1693 + $0x58] sm:$0xff] %v1716
                  %v1718 = vld [vmem:[%s1692 + $0x60] sm:$0xff]
                  %1719 = vst [vmem:[%s1693 + $0x60] sm:$0xff] %v1718
                  %v1720 = vld [vmem:[%s1692 + $0x68] sm:$0xff]
                  %1721 = vst [vmem:[%s1693 + $0x68] sm:$0xff] %v1720
                  %v1722 = vld [vmem:[%s1692 + $0x70] sm:$0xff]
                  %1723 = vst [vmem:[%s1693 + $0x70] sm:$0xff] %v1722
                  %v1724 = vld [vmem:[%s1692 + $0x78] sm:$0xff]
                  %1725 = vst [vmem:[%s1693 + $0x78] sm:$0xff] %v1724
                  %v1726 = vld [vmem:[%s1692 + $0x80] sm:$0xff]
                  %1727 = vst [vmem:[%s1693 + $0x80] sm:$0xff] %v1726
                  %v1728 = vld [vmem:[%s1692 + $0x88] sm:$0xff]
                  %1729 = vst [vmem:[%s1693 + $0x88] sm:$0xff] %v1728
                  %v1730 = vld [vmem:[%s1692 + $0x90] sm:$0xff]
                  %1731 = vst [vmem:[%s1693 + $0x90] sm:$0xff] %v1730
                  %v1732 = vld [vmem:[%s1692 + $0x98] sm:$0xff]
                  %1733 = vst [vmem:[%s1693 + $0x98] sm:$0xff] %v1732
                  %v1734 = vld [vmem:[%s1692 + $0xa0] sm:$0xff]
                  %1735 = vst [vmem:[%s1693 + $0xa0] sm:$0xff] %v1734
                  %v1736 = vld [vmem:[%s1692 + $0xa8] sm:$0xff]
                  %1737 = vst [vmem:[%s1693 + $0xa8] sm:$0xff] %v1736
                  %v1738 = vld [vmem:[%s1692 + $0xb0] sm:$0xff]
                  %1739 = vst [vmem:[%s1693 + $0xb0] sm:$0xff] %v1738
                  %v1740 = vld [vmem:[%s1692 + $0xb8] sm:$0xff]
                  %1741 = vst [vmem:[%s1693 + $0xb8] sm:$0xff] %v1740
                  %v1742 = vld [vmem:[%s1692 + $0xc0] sm:$0xff]
                  %1743 = vst [vmem:[%s1693 + $0xc0] sm:$0xff] %v1742
                  %v1744 = vld [vmem:[%s1692 + $0xc8] sm:$0xff]
                  %1745 = vst [vmem:[%s1693 + $0xc8] sm:$0xff] %v1744
                  %v1746 = vld [vmem:[%s1692 + $0xd0] sm:$0xff]
                  %1747 = vst [vmem:[%s1693 + $0xd0] sm:$0xff] %v1746
                  %v1748 = vld [vmem:[%s1692 + $0xd8] sm:$0xff]
                  %1749 = vst [vmem:[%s1693 + $0xd8] sm:$0xff] %v1748
                  %v1750 = vld [vmem:[%s1692 + $0xe0] sm:$0xff]
                  %1751 = vst [vmem:[%s1693 + $0xe0] sm:$0xff] %v1750
                  %v1752 = vld [vmem:[%s1692 + $0xe8] sm:$0xff]
                  %1753 = vst [vmem:[%s1693 + $0xe8] sm:$0xff] %v1752
                  %v1754 = vld [vmem:[%s1692 + $0xf0] sm:$0xff]
                  %1755 = vst [vmem:[%s1693 + $0xf0] sm:$0xff] %v1754
                  %v1756 = vld [vmem:[%s1692 + $0xf8] sm:$0xff]
                  %1757 = vst [vmem:[%s1693 + $0xf8] sm:$0xff] %v1756
                  %v1758 = vld [vmem:[%s1692 + $0x100] sm:$0xff]
                  %1759 = vst [vmem:[%s1693 + $0x100] sm:$0xff] %v1758
                  %v1760 = vld [vmem:[%s1692 + $0x108] sm:$0xff]
                  %1761 = vst [vmem:[%s1693 + $0x108] sm:$0xff] %v1760
                  %v1762 = vld [vmem:[%s1692 + $0x110] sm:$0xff]
                  %1763 = vst [vmem:[%s1693 + $0x110] sm:$0xff] %v1762
                  %v1764 = vld [vmem:[%s1692 + $0x118] sm:$0xff]
                  %1765 = vst [vmem:[%s1693 + $0x118] sm:$0xff] %v1764
                  %v1766 = vld [vmem:[%s1692 + $0x120] sm:$0xff]
                  %1767 = vst [vmem:[%s1693 + $0x120] sm:$0xff] %v1766
                  %v1768 = vld [vmem:[%s1692 + $0x128] sm:$0xff]
                  %1769 = vst [vmem:[%s1693 + $0x128] sm:$0xff] %v1768
                  %v1770 = vld [vmem:[%s1692 + $0x130] sm:$0xff]
                  %1771 = vst [vmem:[%s1693 + $0x130] sm:$0xff] %v1770
                  %v1772 = vld [vmem:[%s1692 + $0x138] sm:$0xff]
                  %1773 = vst [vmem:[%s1693 + $0x138] sm:$0xff] %v1772
                  %v1774 = vld [vmem:[%s1692 + $0x140] sm:$0xff]
                  %1775 = vst [vmem:[%s1693 + $0x140] sm:$0xff] %v1774
                  %v1776 = vld [vmem:[%s1692 + $0x148] sm:$0xff]
                  %1777 = vst [vmem:[%s1693 + $0x148] sm:$0xff] %v1776
                  %v1778 = vld [vmem:[%s1692 + $0x150] sm:$0xff]
                  %1779 = vst [vmem:[%s1693 + $0x150] sm:$0xff] %v1778
                  %v1780 = vld [vmem:[%s1692 + $0x158] sm:$0xff]
                  %1781 = vst [vmem:[%s1693 + $0x158] sm:$0xff] %v1780
                  %v1782 = vld [vmem:[%s1692 + $0x160] sm:$0xff]
                  %1783 = vst [vmem:[%s1693 + $0x160] sm:$0xff] %v1782
                  %v1784 = vld [vmem:[%s1692 + $0x168] sm:$0xff]
                  %1785 = vst [vmem:[%s1693 + $0x168] sm:$0xff] %v1784
                  %v1786 = vld [vmem:[%s1692 + $0x170] sm:$0xff]
                  %1787 = vst [vmem:[%s1693 + $0x170] sm:$0xff] %v1786
                  %v1788 = vld [vmem:[%s1692 + $0x178] sm:$0xff]
                  %1789 = vst [vmem:[%s1693 + $0x178] sm:$0xff] %v1788
                  %v1790 = vld [vmem:[%s1692 + $0x180] sm:$0xff]
                  %1791 = vst [vmem:[%s1693 + $0x180] sm:$0xff] %v1790
                  %v1792 = vld [vmem:[%s1692 + $0x188] sm:$0xff]
                  %1793 = vst [vmem:[%s1693 + $0x188] sm:$0xff] %v1792
                  %v1794 = vld [vmem:[%s1692 + $0x190] sm:$0xff]
                  %1795 = vst [vmem:[%s1693 + $0x190] sm:$0xff] %v1794
                  %v1796 = vld [vmem:[%s1692 + $0x198] sm:$0xff]
                  %1797 = vst [vmem:[%s1693 + $0x198] sm:$0xff] %v1796
                  %v1798 = vld [vmem:[%s1692 + $0x1a0] sm:$0xff]
                  %1799 = vst [vmem:[%s1693 + $0x1a0] sm:$0xff] %v1798
                  %v1800 = vld [vmem:[%s1692 + $0x1a8] sm:$0xff]
                  %1801 = vst [vmem:[%s1693 + $0x1a8] sm:$0xff] %v1800
                  %v1802 = vld [vmem:[%s1692 + $0x1b0] sm:$0xff]
                  %1803 = vst [vmem:[%s1693 + $0x1b0] sm:$0xff] %v1802
                  %v1804 = vld [vmem:[%s1692 + $0x1b8] sm:$0xff]
                  %1805 = vst [vmem:[%s1693 + $0x1b8] sm:$0xff] %v1804
                  %v1806 = vld [vmem:[%s1692 + $0x1c0] sm:$0xff]
                  %1807 = vst [vmem:[%s1693 + $0x1c0] sm:$0xff] %v1806
                  %v1808 = vld [vmem:[%s1692 + $0x1c8] sm:$0xff]
                  %1809 = vst [vmem:[%s1693 + $0x1c8] sm:$0xff] %v1808
                  %v1810 = vld [vmem:[%s1692 + $0x1d0] sm:$0xff]
                  %1811 = vst [vmem:[%s1693 + $0x1d0] sm:$0xff] %v1810
                  %v1812 = vld [vmem:[%s1692 + $0x1d8] sm:$0xff]
                  %1813 = vst [vmem:[%s1693 + $0x1d8] sm:$0xff] %v1812
                  %v1814 = vld [vmem:[%s1692 + $0x1e0] sm:$0xff]
                  %1815 = vst [vmem:[%s1693 + $0x1e0] sm:$0xff] %v1814
                  %v1816 = vld [vmem:[%s1692 + $0x1e8] sm:$0xff]
                  %1817 = vst [vmem:[%s1693 + $0x1e8] sm:$0xff] %v1816
                  %v1818 = vld [vmem:[%s1692 + $0x1f0] sm:$0xff]
                  %1819 = vst [vmem:[%s1693 + $0x1f0] sm:$0xff] %v1818
                  %v1820 = vld [vmem:[%s1692 + $0x1f8] sm:$0xff]
                  %1821 = vst [vmem:[%s1693 + $0x1f8] sm:$0xff] %v1820
                  %s1822 = sadd.s32 1, %s1691
                  %p1823 = scmp.ge.s32.totalorder %s1822, %s1684
                  %s1824 = scalar_select %p1823, 0, %s1822
                  %s1825 = smul.u32 %s1824, 512
                  %s1826 = smul.u32 %s1824, 512
                  %s1827 = scalar_lea.vmem %s1491, %s1825 [#allocation3]
                  %s1828 = scalar_lea.vmem %s1502, %s1826
                $region83: #{_lambda_.23} parent=77 // loop_footer
                  %s1688 = sadd.s32 %s1686, 1
                $region84: #{_lambda_.23} parent=77 // loop_footer_branch
                  %1685 = sbr.rel target = $region80
                $region85: #{_lambda_.23} parent=77 // loop_exit
                  _
                %s1829 = sshrl.u32 %s1498, 6
                %s1830 = sand.u32 %s1498, 63
                %s1831 = smul.u32 %s1829, 64
                %s1832 = smul.u32 8, %s1831
                %s1833 = scalar_lea.vmem %s1491, %s1832 [#allocation3]
                %s1834 = smul.u32 8, %s1831
                %s1835 = scalar_lea.vmem %s1502, %s1834
                // While loop
                $region86: #{_lambda_.23} parent=77 // loop_pre_header
                  _
                $region87: #{_lambda_.23} parent=77 // loop_header
                  %s1837 = sphi 0, %s1839
                  %p1838 = scmp.ge.s32.totalorder %s1837, %s1830
                  %s1842 = sphi 0, %s1849
                  %s1843 = sphi %s1833, %s1852
                  %s1844 = sphi %s1835, %s1853
                $region88: #{_lambda_.23} parent=77 // loop_header_branch
                  %1841 = sbr.rel (%p1838) target = $region92
                $region89: #{_lambda_.23} parent=77 // loop_body
                  %v1845 = vld [vmem:[%s1843] sm:$0xff]
                  %1846 = vst [vmem:[%s1844] sm:$0xff] %v1845
                  %s1847 = sadd.s32 1, %s1842
                  %p1848 = scmp.ge.s32.totalorder %s1847, %s1830
                  %s1849 = scalar_select %p1848, 0, %s1847
                  %s1850 = smul.u32 %s1849, 8
                  %s1851 = smul.u32 %s1849, 8
                  %s1852 = scalar_lea.vmem %s1833, %s1850 [#allocation3]
                  %s1853 = scalar_lea.vmem %s1835, %s1851
                $region90: #{_lambda_.23} parent=77 // loop_footer
                  %s1839 = sadd.s32 %s1837, 1
                $region91: #{_lambda_.23} parent=77 // loop_footer_branch
                  %1836 = sbr.rel target = $region87
                $region92: #{_lambda_.23} parent=77 // loop_exit
                  _
              $region78: #{_lambda_.23} parent=55 // pred_fallthru
                _
              // Predicated region
              $region93: #{_lambda_.23} parent=55 // pred_check
                _
              $region94: #{_lambda_.23} parent=55 // pred_check_branch
                %1855 = sbr.rel target = $region96
              $region95: #{_lambda_.23} parent=55 // pred_region
                _
              $region96: #{_lambda_.23} parent=55 // pred_fallthru
                _
            $region56: #{_lambda_.23} parent=51 // pred_fallthru
              _
            // Predicated region
            $region57: #{_lambda_.23} parent=51 // pred_check
              _
            $region58: #{_lambda_.23} parent=51 // pred_check_branch
              %1509 = sbr.rel target = $region60
            $region59: #{_lambda_.23} parent=51 // pred_region
              %s1511 = ssub.s32 256, 1
              %s1512 = sshrl.u32 %s1498, 6
              // While loop
              $region61: #{_lambda_.23} parent=59 // loop_pre_header
                _
              $region62: #{_lambda_.23} parent=59 // loop_header
                %s1514 = sphi 0, %s1516
                %p1515 = scmp.ge.s32.totalorder %s1514, %s1512
                %s1519 = sphi 0, %s1652
                %s1520 = sphi %s1491, %s1655
                %s1521 = sphi %s1502, %s1656
              $region63: #{_lambda_.23} parent=59 // loop_header_branch
                %1518 = sbr.rel (%p1515) target = $region67
              $region64: #{_lambda_.23} parent=59 // loop_body
                %v1522 = vld [vmem:[%s1520] sm:%s1511]
                %1523 = vst [vmem:[%s1521] sm:%s1511] %v1522
                %v1524 = vld [vmem:[%s1520 + $0x8] sm:%s1511]
                %1525 = vst [vmem:[%s1521 + $0x8] sm:%s1511] %v1524
                %v1526 = vld [vmem:[%s1520 + $0x10] sm:%s1511]
                %1527 = vst [vmem:[%s1521 + $0x10] sm:%s1511] %v1526
                %v1528 = vld [vmem:[%s1520 + $0x18] sm:%s1511]
                %1529 = vst [vmem:[%s1521 + $0x18] sm:%s1511] %v1528
                %v1530 = vld [vmem:[%s1520 + $0x20] sm:%s1511]
                %1531 = vst [vmem:[%s1521 + $0x20] sm:%s1511] %v1530
                %v1532 = vld [vmem:[%s1520 + $0x28] sm:%s1511]
                %1533 = vst [vmem:[%s1521 + $0x28] sm:%s1511] %v1532
                %v1534 = vld [vmem:[%s1520 + $0x30] sm:%s1511]
                %1535 = vst [vmem:[%s1521 + $0x30] sm:%s1511] %v1534
                %v1536 = vld [vmem:[%s1520 + $0x38] sm:%s1511]
                %1537 = vst [vmem:[%s1521 + $0x38] sm:%s1511] %v1536
                %v1538 = vld [vmem:[%s1520 + $0x40] sm:%s1511]
                %1539 = vst [vmem:[%s1521 + $0x40] sm:%s1511] %v1538
                %v1540 = vld [vmem:[%s1520 + $0x48] sm:%s1511]
                %1541 = vst [vmem:[%s1521 + $0x48] sm:%s1511] %v1540
                %v1542 = vld [vmem:[%s1520 + $0x50] sm:%s1511]
                %1543 = vst [vmem:[%s1521 + $0x50] sm:%s1511] %v1542
                %v1544 = vld [vmem:[%s1520 + $0x58] sm:%s1511]
                %1545 = vst [vmem:[%s1521 + $0x58] sm:%s1511] %v1544
                %v1546 = vld [vmem:[%s1520 + $0x60] sm:%s1511]
                %1547 = vst [vmem:[%s1521 + $0x60] sm:%s1511] %v1546
                %v1548 = vld [vmem:[%s1520 + $0x68] sm:%s1511]
                %1549 = vst [vmem:[%s1521 + $0x68] sm:%s1511] %v1548
                %v1550 = vld [vmem:[%s1520 + $0x70] sm:%s1511]
                %1551 = vst [vmem:[%s1521 + $0x70] sm:%s1511] %v1550
                %v1552 = vld [vmem:[%s1520 + $0x78] sm:%s1511]
                %1553 = vst [vmem:[%s1521 + $0x78] sm:%s1511] %v1552
                %v1554 = vld [vmem:[%s1520 + $0x80] sm:%s1511]
                %1555 = vst [vmem:[%s1521 + $0x80] sm:%s1511] %v1554
                %v1556 = vld [vmem:[%s1520 + $0x88] sm:%s1511]
                %1557 = vst [vmem:[%s1521 + $0x88] sm:%s1511] %v1556
                %v1558 = vld [vmem:[%s1520 + $0x90] sm:%s1511]
                %1559 = vst [vmem:[%s1521 + $0x90] sm:%s1511] %v1558
                %v1560 = vld [vmem:[%s1520 + $0x98] sm:%s1511]
                %1561 = vst [vmem:[%s1521 + $0x98] sm:%s1511] %v1560
                %v1562 = vld [vmem:[%s1520 + $0xa0] sm:%s1511]
                %1563 = vst [vmem:[%s1521 + $0xa0] sm:%s1511] %v1562
                %v1564 = vld [vmem:[%s1520 + $0xa8] sm:%s1511]
                %1565 = vst [vmem:[%s1521 + $0xa8] sm:%s1511] %v1564
                %v1566 = vld [vmem:[%s1520 + $0xb0] sm:%s1511]
                %1567 = vst [vmem:[%s1521 + $0xb0] sm:%s1511] %v1566
                %v1568 = vld [vmem:[%s1520 + $0xb8] sm:%s1511]
                %1569 = vst [vmem:[%s1521 + $0xb8] sm:%s1511] %v1568
                %v1570 = vld [vmem:[%s1520 + $0xc0] sm:%s1511]
                %1571 = vst [vmem:[%s1521 + $0xc0] sm:%s1511] %v1570
                %v1572 = vld [vmem:[%s1520 + $0xc8] sm:%s1511]
                %1573 = vst [vmem:[%s1521 + $0xc8] sm:%s1511] %v1572
                %v1574 = vld [vmem:[%s1520 + $0xd0] sm:%s1511]
                %1575 = vst [vmem:[%s1521 + $0xd0] sm:%s1511] %v1574
                %v1576 = vld [vmem:[%s1520 + $0xd8] sm:%s1511]
                %1577 = vst [vmem:[%s1521 + $0xd8] sm:%s1511] %v1576
                %v1578 = vld [vmem:[%s1520 + $0xe0] sm:%s1511]
                %1579 = vst [vmem:[%s1521 + $0xe0] sm:%s1511] %v1578
                %v1580 = vld [vmem:[%s1520 + $0xe8] sm:%s1511]
                %1581 = vst [vmem:[%s1521 + $0xe8] sm:%s1511] %v1580
                %v1582 = vld [vmem:[%s1520 + $0xf0] sm:%s1511]
                %1583 = vst [vmem:[%s1521 + $0xf0] sm:%s1511] %v1582
                %v1584 = vld [vmem:[%s1520 + $0xf8] sm:%s1511]
                %1585 = vst [vmem:[%s1521 + $0xf8] sm:%s1511] %v1584
                %v1586 = vld [vmem:[%s1520 + $0x100] sm:%s1511]
                %1587 = vst [vmem:[%s1521 + $0x100] sm:%s1511] %v1586
                %v1588 = vld [vmem:[%s1520 + $0x108] sm:%s1511]
                %1589 = vst [vmem:[%s1521 + $0x108] sm:%s1511] %v1588
                %v1590 = vld [vmem:[%s1520 + $0x110] sm:%s1511]
                %1591 = vst [vmem:[%s1521 + $0x110] sm:%s1511] %v1590
                %v1592 = vld [vmem:[%s1520 + $0x118] sm:%s1511]
                %1593 = vst [vmem:[%s1521 + $0x118] sm:%s1511] %v1592
                %v1594 = vld [vmem:[%s1520 + $0x120] sm:%s1511]
                %1595 = vst [vmem:[%s1521 + $0x120] sm:%s1511] %v1594
                %v1596 = vld [vmem:[%s1520 + $0x128] sm:%s1511]
                %1597 = vst [vmem:[%s1521 + $0x128] sm:%s1511] %v1596
                %v1598 = vld [vmem:[%s1520 + $0x130] sm:%s1511]
                %1599 = vst [vmem:[%s1521 + $0x130] sm:%s1511] %v1598
                %v1600 = vld [vmem:[%s1520 + $0x138] sm:%s1511]
                %1601 = vst [vmem:[%s1521 + $0x138] sm:%s1511] %v1600
                %v1602 = vld [vmem:[%s1520 + $0x140] sm:%s1511]
                %1603 = vst [vmem:[%s1521 + $0x140] sm:%s1511] %v1602
                %v1604 = vld [vmem:[%s1520 + $0x148] sm:%s1511]
                %1605 = vst [vmem:[%s1521 + $0x148] sm:%s1511] %v1604
                %v1606 = vld [vmem:[%s1520 + $0x150] sm:%s1511]
                %1607 = vst [vmem:[%s1521 + $0x150] sm:%s1511] %v1606
                %v1608 = vld [vmem:[%s1520 + $0x158] sm:%s1511]
                %1609 = vst [vmem:[%s1521 + $0x158] sm:%s1511] %v1608
                %v1610 = vld [vmem:[%s1520 + $0x160] sm:%s1511]
                %1611 = vst [vmem:[%s1521 + $0x160] sm:%s1511] %v1610
                %v1612 = vld [vmem:[%s1520 + $0x168] sm:%s1511]
                %1613 = vst [vmem:[%s1521 + $0x168] sm:%s1511] %v1612
                %v1614 = vld [vmem:[%s1520 + $0x170] sm:%s1511]
                %1615 = vst [vmem:[%s1521 + $0x170] sm:%s1511] %v1614
                %v1616 = vld [vmem:[%s1520 + $0x178] sm:%s1511]
                %1617 = vst [vmem:[%s1521 + $0x178] sm:%s1511] %v1616
                %v1618 = vld [vmem:[%s1520 + $0x180] sm:%s1511]
                %1619 = vst [vmem:[%s1521 + $0x180] sm:%s1511] %v1618
                %v1620 = vld [vmem:[%s1520 + $0x188] sm:%s1511]
                %1621 = vst [vmem:[%s1521 + $0x188] sm:%s1511] %v1620
                %v1622 = vld [vmem:[%s1520 + $0x190] sm:%s1511]
                %1623 = vst [vmem:[%s1521 + $0x190] sm:%s1511] %v1622
                %v1624 = vld [vmem:[%s1520 + $0x198] sm:%s1511]
                %1625 = vst [vmem:[%s1521 + $0x198] sm:%s1511] %v1624
                %v1626 = vld [vmem:[%s1520 + $0x1a0] sm:%s1511]
                %1627 = vst [vmem:[%s1521 + $0x1a0] sm:%s1511] %v1626
                %v1628 = vld [vmem:[%s1520 + $0x1a8] sm:%s1511]
                %1629 = vst [vmem:[%s1521 + $0x1a8] sm:%s1511] %v1628
                %v1630 = vld [vmem:[%s1520 + $0x1b0] sm:%s1511]
                %1631 = vst [vmem:[%s1521 + $0x1b0] sm:%s1511] %v1630
                %v1632 = vld [vmem:[%s1520 + $0x1b8] sm:%s1511]
                %1633 = vst [vmem:[%s1521 + $0x1b8] sm:%s1511] %v1632
                %v1634 = vld [vmem:[%s1520 + $0x1c0] sm:%s1511]
                %1635 = vst [vmem:[%s1521 + $0x1c0] sm:%s1511] %v1634
                %v1636 = vld [vmem:[%s1520 + $0x1c8] sm:%s1511]
                %1637 = vst [vmem:[%s1521 + $0x1c8] sm:%s1511] %v1636
                %v1638 = vld [vmem:[%s1520 + $0x1d0] sm:%s1511]
                %1639 = vst [vmem:[%s1521 + $0x1d0] sm:%s1511] %v1638
                %v1640 = vld [vmem:[%s1520 + $0x1d8] sm:%s1511]
                %1641 = vst [vmem:[%s1521 + $0x1d8] sm:%s1511] %v1640
                %v1642 = vld [vmem:[%s1520 + $0x1e0] sm:%s1511]
                %1643 = vst [vmem:[%s1521 + $0x1e0] sm:%s1511] %v1642
                %v1644 = vld [vmem:[%s1520 + $0x1e8] sm:%s1511]
                %1645 = vst [vmem:[%s1521 + $0x1e8] sm:%s1511] %v1644
                %v1646 = vld [vmem:[%s1520 + $0x1f0] sm:%s1511]
                %1647 = vst [vmem:[%s1521 + $0x1f0] sm:%s1511] %v1646
                %v1648 = vld [vmem:[%s1520 + $0x1f8] sm:%s1511]
                %1649 = vst [vmem:[%s1521 + $0x1f8] sm:%s1511] %v1648
                %s1650 = sadd.s32 1, %s1519
                %p1651 = scmp.ge.s32.totalorder %s1650, %s1512
                %s1652 = scalar_select %p1651, 0, %s1650
                %s1653 = smul.u32 %s1652, 512
                %s1654 = smul.u32 %s1652, 512
                %s1655 = scalar_lea.vmem %s1491, %s1653 [#allocation3]
                %s1656 = scalar_lea.vmem %s1502, %s1654
              $region65: #{_lambda_.23} parent=59 // loop_footer
                %s1516 = sadd.s32 %s1514, 1
              $region66: #{_lambda_.23} parent=59 // loop_footer_branch
                %1513 = sbr.rel target = $region62
              $region67: #{_lambda_.23} parent=59 // loop_exit
                _
              %s1657 = sshrl.u32 %s1498, 6
              %s1658 = sand.u32 %s1498, 63
              %s1659 = smul.u32 %s1657, 64
              %s1660 = smul.u32 8, %s1659
              %s1661 = scalar_lea.vmem %s1491, %s1660 [#allocation3]
              %s1662 = smul.u32 8, %s1659
              %s1663 = scalar_lea.vmem %s1502, %s1662
              // While loop
              $region68: #{_lambda_.23} parent=59 // loop_pre_header
                _
              $region69: #{_lambda_.23} parent=59 // loop_header
                %s1665 = sphi 0, %s1667
                %p1666 = scmp.ge.s32.totalorder %s1665, %s1658
                %s1670 = sphi 0, %s1677
                %s1671 = sphi %s1661, %s1680
                %s1672 = sphi %s1663, %s1681
              $region70: #{_lambda_.23} parent=59 // loop_header_branch
                %1669 = sbr.rel (%p1666) target = $region74
              $region71: #{_lambda_.23} parent=59 // loop_body
                %v1673 = vld [vmem:[%s1671] sm:%s1511]
                %1674 = vst [vmem:[%s1672] sm:%s1511] %v1673
                %s1675 = sadd.s32 1, %s1670
                %p1676 = scmp.ge.s32.totalorder %s1675, %s1658
                %s1677 = scalar_select %p1676, 0, %s1675
                %s1678 = smul.u32 %s1677, 8
                %s1679 = smul.u32 %s1677, 8
                %s1680 = scalar_lea.vmem %s1661, %s1678 [#allocation3]
                %s1681 = scalar_lea.vmem %s1663, %s1679
              $region72: #{_lambda_.23} parent=59 // loop_footer
                %s1667 = sadd.s32 %s1665, 1
              $region73: #{_lambda_.23} parent=59 // loop_footer_branch
                %1664 = sbr.rel target = $region69
              $region74: #{_lambda_.23} parent=59 // loop_exit
                _
            $region60: #{_lambda_.23} parent=51 // pred_fallthru
              _
          $region52: #{_lambda_.23} parent=47 // pred_fallthru
            _
          %1856 = vnop
        $region48: #{_lambda_.23} parent=35 // pred_fallthru
          _
      $region36: #{_lambda_.23} parent=5 // pred_fallthru
        _
      %p1857 = scmp.le.s32.totalorder 2, %s10
      // Predicated region
      $region97: #{_lambda_.23} parent=5 // pred_check
        %p1858 = pneg %p1857
      $region98: #{_lambda_.23} parent=5 // pred_check_branch
        %1860 = sbr.rel (%p1858) target = $region100
      $region99: #{_lambda_.23} parent=5 // pred_region
        %s1861 = ssub.s32 %s10, 2
        // Predicated region
        $region101: #{_lambda_.23} parent=99 // pred_check
          %p1862 = pneg %p147
        $region102: #{_lambda_.23} parent=99 // pred_check_branch
          %1864 = sbr.rel (%p1862) target = $region104
        $region103: #{_lambda_.23} parent=99 // pred_region
          %s1865 = sand.u32 %s132, 1
          %s1866 = sand.u32 %s132, 1
          %s1867 = smul.addr %s1866, 512
          %s1868 = scalar_lea.vmem [#allocation3], %s1867
        $region104: #{_lambda_.23} parent=99 // pred_fallthru
          _
      $region100: #{_lambda_.23} parent=5 // pred_fallthru
        _
    $region6: #{_lambda_.23} parent=1 // loop_footer
      %s14 = sadd.s32 1, %s10
    $region7: #{_lambda_.23} parent=1 // loop_footer_branch
      %9 = sbr.rel target = $region3
    $region8: #{_lambda_.23} parent=1 // loop_exit
      _

</llo_original>
